<compile_context>
chip_gen: v7x
topology: tpu7x:2x2x1
jax: 0.10.0
libtpu: 0.0.40
codegen_flags: <defaults>
</compile_context>

<pallas_src>
import functools
import math

import jax
import jax.numpy as jnp
import numpy as np
from jax.experimental import pallas as pl
from jax.experimental.pallas import tpu as pltpu


# ------------------------------- fused kernel -------------------------------- #

def _sk_basic_fused_kernel(x_ref, w0_ref, w1_ref, s0_ref, b0_ref, s1_ref, b1_ref,
                           wr_ref, sa_ref, ba_ref, ws_ref, w2_ref, s2_ref, b2_ref,
                           o_ref, xpad_ref, skpad_ref, *, H, W, Cin, planes):
    """One batch element per grid step: SK conv1 + attention + conv2 + residual + ReLU.

    x_ref    : (1, H, W, Cin) f32        unpadded NHWC input block
    w0/w1    : (9*Cin/2, planes) bf16    im2col weights of the two 3x3 SK paths
    w2       : (9, planes, planes) bf16  per-tap weights of conv2
    s*/b*    : (1, C) f32                folded BN scale / bias (sa has 1/HW folded in)
    wr / ws  : (planes, attn) / (attn, 2*planes) f32   SK-attention 1x1 convs
    o_ref    : (1, H*W, planes) f32      output (pure-reshape store, no concat)
    xpad_ref : (2, H+4, W+4, Cin/2) f32  VMEM scratch: pad-2 input, one plane per SK path
    skpad_ref: (H+2, W+2, planes) f32    VMEM scratch: pad-1 SK output for conv2
    """
    Cin2 = Cin // 2
    HW = H * W
    f32 = jnp.float32
    bf16 = jnp.bfloat16

    x = x_ref[...][0]                                   # (H, W, Cin) f32

    # ---- in-kernel pad-2 halo (replaces wrapper jnp.pad: no padded-HBM round trip).
    # Only the border strips are zeroed; the interior is fully overwritten each step.
    zr = jnp.zeros((2, 2, W + 4, Cin2), f32)
    zc = jnp.zeros((2, H, 2, Cin2), f32)
    xpad_ref[:, 0:2, :, :] = zr
    xpad_ref[:, H + 2:H + 4, :, :] = zr
    xpad_ref[:, 2:2 + H, 0:2, :] = zc
    xpad_ref[:, 2:2 + H, W + 2:W + 4, :] = zc
    xpad_ref[0, 2:2 + H, 2:2 + W, :] = x[:, :, 0:Cin2]          # SK path 0 channels
    xpad_ref[1, 2:2 + H, 2:2 + W, :] = x[:, :, Cin2:Cin]        # SK path 1 channels

    # ---- conv1: ONE im2col matmul per SK path (bf16 operands, f32 accumulation).
    # Tap windows are loaded straight from the padded scratch and cast to bf16 BEFORE
    # the concat, so the (HW, 9*Cin2) operands only exist in bf16.
    cols0, cols1 = [], []
    for kh in range(3):
        for kw in range(3):
            # path 0: dilation 1, padding 1 -> offset +1 inside the pad-2 buffer
            cols0.append(xpad_ref[0, 1 + kh:1 + kh + H, 1 + kw:1 + kw + W, :]
                         .astype(bf16).reshape(HW, Cin2))
            # path 1: dilation 2, padding 2
            cols1.append(xpad_ref[1, 2 * kh:2 * kh + H, 2 * kw:2 * kw + W, :]
                         .astype(bf16).reshape(HW, Cin2))
    lhs0 = jnp.concatenate(cols0, axis=-1)                      # (HW, 9*Cin2) bf16
    lhs1 = jnp.concatenate(cols1, axis=-1)
    acc0 = jnp.dot(lhs0, w0_ref[...], preferred_element_type=f32)   # (HW, planes)
    acc1 = jnp.dot(lhs1, w1_ref[...], preferred_element_type=f32)

    path0 = jnp.maximum(acc0 * s0_ref[...] + b0_ref[...], 0.0)      # BN + ReLU (f32)
    path1 = jnp.maximum(acc1 * s1_ref[...] + b1_ref[...], 0.0)

    # ---- SelectiveKernelAttn (tiny 1x1 matmuls, f32).  1/(H*W) pre-folded into sa.
    pooled = (jnp.sum(path0, axis=0, keepdims=True)
              + jnp.sum(path1, axis=0, keepdims=True))              # (1, planes)
    z = jnp.dot(pooled, wr_ref[...], preferred_element_type=f32)
    z = jnp.maximum(z * sa_ref[...] + ba_ref[...], 0.0)
    logits = jnp.dot(z, ws_ref[...], preferred_element_type=f32)    # (1, 2*planes)
    l0 = logits[:, 0:planes]
    l1 = logits[:, planes:2 * planes]
    m = jnp.maximum(l0, l1)
    e0 = jnp.exp(l0 - m)
    e1 = jnp.exp(l1 - m)
    inv = pl.reciprocal(e0 + e1, approx=True)                       # softmax denom on EUP
    sk = path0 * (e0 * inv) + path1 * (e1 * inv)                    # (HW, planes) f32

    # ---- conv2 (pad 1) + BN in the same step.  Pad-1 halo via scratch (border strips
    # only); NO im2col concat: 9 per-tap dots accumulate into one f32 accumulator
    # (K = planes per tap already fills the MXU K dimension).
    zr2 = jnp.zeros((1, W + 2, planes), f32)
    zc2 = jnp.zeros((H, 1, planes), f32)
    skpad_ref[0:1, :, :] = zr2
    skpad_ref[H + 1:H + 2, :, :] = zr2
    skpad_ref[1:1 + H, 0:1, :] = zc2
    skpad_ref[1:1 + H, W + 1:W + 2, :] = zc2
    skpad_ref[1:1 + H, 1:1 + W, :] = sk.reshape(H, W, planes)

    acc2 = jnp.zeros((HW, planes), f32)
    for kh in range(3):
        for kw in range(3):
            tap = (skpad_ref[kh:kh + H, kw:kw + W, :]
                   .astype(bf16).reshape(HW, planes))
            acc2 = acc2 + jnp.dot(tap, w2_ref[3 * kh + kw],
                                  preferred_element_type=f32)
    y = acc2 * s2_ref[...] + b2_ref[...]

    # residual (identity shortcut, f32, straight from the unpadded input) + ReLU
    y = jnp.maximum(y + x.reshape(HW, Cin), 0.0)

    # direct reshape store (the old per-column slab concat was a semantic no-op)
    o_ref[...] = y.reshape(1, HW, planes)


# ------------------------------ pallas_call glue ------------------------------ #

def _vmem_limit_bytes():
    # Leave headroom under the physical VMEM: ~48 MiB on v7x (64 MiB phys),
    # ~96 MiB on v5e/v6e (128 MiB phys).
    try:
        cap = pltpu.get_tpu_info().vmem_capacity_bytes
    except Exception:
        cap = 64 * 1024 * 1024
    return int(min(cap * 3 // 4, 96 * 1024 * 1024))


def selective_kernel_basic_forward(x_nchw, p):
    """Full SelectiveKernelBasic forward. x_nchw: (N, C, H, W) float32 (PyTorch layout)."""
    N, C, H, W = x_nchw.shape
    planes = p['w0_hwio'].shape[-1]
    assert C % 2 == 0, "SelectiveKernel splits the input channels into 2 paths"
    assert planes == C, "identity shortcut assumes stride=1 and inplanes == planes"
    cin2 = C // 2

    x = jnp.transpose(x_nchw, (0, 2, 3, 1)).astype(jnp.float32)     # NHWC (channels -> lanes)

    # bf16 MXU weights (accumulation stays f32 in-kernel); conv2 pre-split per tap.
    w0b = p['w0_hwio'].reshape(9 * cin2, planes).astype(jnp.bfloat16)
    w1b = p['w1_hwio'].reshape(9 * cin2, planes).astype(jnp.bfloat16)
    w2b = p['w2_hwio'].reshape(9, planes, planes).astype(jnp.bfloat16)
    sa_hw = p['sa'] * (1.0 / (H * W))    # fold global-avg-pool 1/HW into the attn BN scale

    kern = functools.partial(_sk_basic_fused_kernel, H=H, W=W, Cin=C, planes=planes)

    def const_spec(a):
        if a.ndim == 2:
            return pl.BlockSpec(a.shape, lambda n: (0, 0))
        return pl.BlockSpec(a.shape, lambda n: (0, 0, 0))

    out = pl.pallas_call(
        kern,
        out_shape=jax.ShapeDtypeStruct((N, H * W, planes), jnp.float32),
        grid=(N,),
        in_specs=[pl.BlockSpec((1, H, W, C), lambda n: (n, 0, 0, 0)),
                  const_spec(w0b), const_spec(w1b),
                  const_spec(p['s0']), const_spec(p['b0']),
                  const_spec(p['s1']), const_spec(p['b1']),
                  const_spec(p['wr']), const_spec(sa_hw), const_spec(p['ba']),
                  const_spec(p['ws']),
                  const_spec(w2b), const_spec(p['s2']), const_spec(p['b2'])],
        out_specs=pl.BlockSpec((1, H * W, planes), lambda n: (n, 0, 0)),
        scratch_shapes=[pltpu.VMEM((2, H + 4, W + 4, cin2), jnp.float32),
                        pltpu.VMEM((H + 2, W + 2, planes), jnp.float32)],
        compiler_params=pltpu.CompilerParams(
            dimension_semantics=("parallel",),          # batch steps shard across v7x's 2 TCs
            vmem_limit_bytes=_vmem_limit_bytes()),
    )(x, w0b, w1b, p['s0'], p['b0'], p['s1'], p['b1'],
      p['wr'], sa_hw, p['ba'], p['ws'], w2b, p['s2'], p['b2'])

    out = out.reshape(N, H, W, planes)                  # wrapper-side layout plumbing
    return jnp.transpose(out, (0, 3, 1, 2))             # back to NCHW


# --------------------------- deterministic parameters ------------------------- #

def _make_divisible(v, divisor=8, min_value=None, round_limit=0.9):
    min_value = min_value or divisor
    new_v = max(min_value, int(v + divisor / 2) // divisor * divisor)
    if new_v < round_limit * v:
        new_v += divisor
    return new_v


def init_params(key, inplanes, planes):
    attn_ch = _make_divisible(planes / 16.0, 8)
    ks = jax.random.split(key, 9)

    def conv_w(k, kh, kw, ci, co):
        fan_in = kh * kw * ci
        return (jax.random.normal(k, (kh, kw, ci, co), jnp.float32)
                * (1.0 / math.sqrt(fan_in)))

    def bn_fold(k, c):
        # Inference-mode BatchNorm folded into (scale, bias). Deterministic init.
        kg, kb, km, kv = jax.random.split(k, 4)
        gamma = 1.0 + 0.1 * jax.random.normal(kg, (c,), jnp.float32)
        beta = 0.1 * jax.random.normal(kb, (c,), jnp.float32)
        mean = 0.1 * jax.random.normal(km, (c,), jnp.float32)
        var = 1.0 + 0.1 * jax.random.uniform(kv, (c,), jnp.float32)
        scale = gamma / jnp.sqrt(var + 1e-5)
        bias = beta - mean * scale
        return scale.reshape(1, c), bias.reshape(1, c)

    cin2 = inplanes // 2
    p = {}
    p['w0_hwio'] = conv_w(ks[0], 3, 3, cin2, planes)      # SK path 0 (dil 1)
    p['w1_hwio'] = conv_w(ks[1], 3, 3, cin2, planes)      # SK path 1 (dil 2)
    p['s0'], p['b0'] = bn_fold(ks[2], planes)
    p['s1'], p['b1'] = bn_fold(ks[3], planes)
    p['wr'] = conv_w(ks[4], 1, 1, planes, attn_ch).reshape(planes, attn_ch)
    p['sa'], p['ba'] = bn_fold(ks[5], attn_ch)
    p['ws'] = conv_w(ks[6], 1, 1, attn_ch, 2 * planes).reshape(attn_ch, 2 * planes)
    p['w2_hwio'] = conv_w(ks[7], 3, 3, planes, planes)    # conv2
    p['s2'], p['b2'] = bn_fold(ks[8], planes)
    return p


# ------------------------------ pure-JAX reference ----------------------------- #

def _ref_forward(x_nchw, p, match_kernel_precision=False):
    """Reference. match_kernel_precision=True mirrors the kernel's bf16 conv operands
    (f32 accumulation, f32 BN/softmax), isolating structural correctness."""
    x = jnp.transpose(x_nchw, (0, 2, 3, 1)).astype(jnp.float32)
    planes = p['w0_hwio'].shape[-1]
    cin2 = x.shape[-1] // 2

    def mmd(a):
        return a.astype(jnp.bfloat16) if match_kernel_precision else a

    def conv3(inp, w, dil):
        return jax.lax.conv_general_dilated(
            mmd(inp), mmd(w), window_strides=(1, 1),
            padding=[(dil, dil), (dil, dil)], rhs_dilation=(dil, dil),
            dimension_numbers=('NHWC', 'HWIO', 'NHWC'),
            preferred_element_type=jnp.float32)

    p0 = jnp.maximum(conv3(x[..., :cin2], p['w0_hwio'], 1) * p['s0'] + p['b0'], 0.0)
    p1 = jnp.maximum(conv3(x[..., cin2:], p['w1_hwio'], 2) * p['s1'] + p['b1'], 0.0)
    pooled = jnp.mean(p0 + p1, axis=(1, 2))                              # (N, planes)
    z = jnp.maximum(pooled @ p['wr'] * p['sa'] + p['ba'], 0.0)
    logits = (z @ p['ws']).reshape(-1, 2, planes)
    a = jax.nn.softmax(logits, axis=1)
    sk = p0 * a[:, 0][:, None, None, :] + p1 * a[:, 1][:, None, None, :]
    y = conv3(sk, p['w2_hwio'], 1) * p['s2'] + p['b2']
    y = jnp.maximum(y + x, 0.0)
    return jnp.transpose(y, (0, 3, 1, 2))


# ------------------------------------- main ------------------------------------ #

if __name__ == "__main__":
    N, C, H, W = 2, 8, 16, 16          # inplanes == planes (identity shortcut), C % 2 == 0
    x = jax.random.normal(jax.random.PRNGKey(0), (N, C, H, W), jnp.float32)
    params = init_params(jax.random.PRNGKey(1), inplanes=C, planes=C)

    out = jax.block_until_ready(selective_kernel_basic_forward(x, params))
    assert out.shape == (N, C, H, W)

    # (a) structural check against a precision-matched reference (bf16 conv operands,
    #     f32 accumulation) -- tight-ish tolerance.
    ref_matched = jax.block_until_ready(_ref_forward(x, params, match_kernel_precision=True))
    np.testing.assert_allclose(np.asarray(out), np.asarray(ref_matched), rtol=1e-2, atol=1e-2)

    # (b) end-to-end check against the full-f32 reference; tolerance reflects the
    #     intentional bf16 MXU-operand rounding (accumulation is f32).
    ref_f32 = jax.block_until_ready(_ref_forward(x, params, match_kernel_precision=False))
    np.testing.assert_allclose(np.asarray(out), np.asarray(ref_f32), rtol=2e-2, atol=2e-2)

    print("KERNEL_OK")
</pallas_src>

<mosaic_0001>
module attributes {stable_mosaic.version = 11 : i64} {
  func.func @_sk_basic_fused_kernel(%arg0: i32, %arg1: memref<1x16x16x8xf32, #tpu.memory_space<vmem>>, %arg2: memref<36x8xbf16, #tpu.memory_space<vmem>>, %arg3: memref<36x8xbf16, #tpu.memory_space<vmem>>, %arg4: memref<1x8xf32, #tpu.memory_space<vmem>>, %arg5: memref<1x8xf32, #tpu.memory_space<vmem>>, %arg6: memref<1x8xf32, #tpu.memory_space<vmem>>, %arg7: memref<1x8xf32, #tpu.memory_space<vmem>>, %arg8: memref<8x8xf32, #tpu.memory_space<vmem>>, %arg9: memref<1x8xf32, #tpu.memory_space<vmem>>, %arg10: memref<1x8xf32, #tpu.memory_space<vmem>>, %arg11: memref<8x16xf32, #tpu.memory_space<vmem>>, %arg12: memref<9x8x8xbf16, #tpu.memory_space<vmem>>, %arg13: memref<1x8xf32, #tpu.memory_space<vmem>>, %arg14: memref<1x8xf32, #tpu.memory_space<vmem>>, %arg15: memref<1x256x8xf32, #tpu.memory_space<vmem>>, %arg16: memref<2x20x20x4xf32, #tpu.memory_space<vmem>>, %arg17: memref<18x18x8xf32, #tpu.memory_space<vmem>>) attributes {dimension_semantics = [#tpu.dimension_semantics<parallel>], iteration_bounds = array<i64: 2>, scalar_prefetch = 0 : i64, scratch_operands = 2 : i64, tpu.core_type = #tpu.core_type<tc>, window_params = [{transform_indices = @transform_0, window_bounds = array<i64: 1, 16, 16, 8>}, {pipeline_mode = #tpu.pipeline_mode<synchronous>, transform_indices = @transform_1, window_bounds = array<i64: 36, 8>}, {pipeline_mode = #tpu.pipeline_mode<synchronous>, transform_indices = @transform_2, window_bounds = array<i64: 36, 8>}, {pipeline_mode = #tpu.pipeline_mode<synchronous>, transform_indices = @transform_3, window_bounds = array<i64: 1, 8>}, {pipeline_mode = #tpu.pipeline_mode<synchronous>, transform_indices = @transform_4, window_bounds = array<i64: 1, 8>}, {pipeline_mode = #tpu.pipeline_mode<synchronous>, transform_indices = @transform_5, window_bounds = array<i64: 1, 8>}, {pipeline_mode = #tpu.pipeline_mode<synchronous>, transform_indices = @transform_6, window_bounds = array<i64: 1, 8>}, {pipeline_mode = #tpu.pipeline_mode<synchronous>, transform_indices = @transform_7, window_bounds = array<i64: 8, 8>}, {pipeline_mode = #tpu.pipeline_mode<synchronous>, transform_indices = @transform_8, window_bounds = array<i64: 1, 8>}, {pipeline_mode = #tpu.pipeline_mode<synchronous>, transform_indices = @transform_9, window_bounds = array<i64: 1, 8>}, {pipeline_mode = #tpu.pipeline_mode<synchronous>, transform_indices = @transform_10, window_bounds = array<i64: 8, 16>}, {pipeline_mode = #tpu.pipeline_mode<synchronous>, transform_indices = @transform_11, window_bounds = array<i64: 9, 8, 8>}, {pipeline_mode = #tpu.pipeline_mode<synchronous>, transform_indices = @transform_12, window_bounds = array<i64: 1, 8>}, {pipeline_mode = #tpu.pipeline_mode<synchronous>, transform_indices = @transform_13, window_bounds = array<i64: 1, 8>}, {transform_indices = @transform_14, window_bounds = array<i64: 1, 256, 8>}]} {
    %c0 = arith.constant 0 : index
    %c0_0 = arith.constant 0 : index
    %c0_1 = arith.constant 0 : index
    %c0_2 = arith.constant 0 : index
    %0 = vector.load %arg1[%c0, %c0_0, %c0_1, %c0_2] : memref<1x16x16x8xf32, #tpu.memory_space<vmem>>, vector<1x16x16x8xf32>
    %1 = vector.shape_cast %0 : vector<1x16x16x8xf32> to vector<16x16x8xf32>
    %cst = arith.constant 0.000000e+00 : f32
    %2 = vector.broadcast %cst : f32 to vector<2x2x20x4xf32>
    %cst_3 = arith.constant 0.000000e+00 : f32
    %3 = vector.broadcast %cst_3 : f32 to vector<2x16x2x4xf32>
    %c0_4 = arith.constant 0 : index
    %c0_5 = arith.constant 0 : index
    %c0_6 = arith.constant 0 : index
    %c0_7 = arith.constant 0 : index
    %4 = vector.load %arg16[%c0_4, %c0_5, %c0_6, %c0_7] : memref<2x20x20x4xf32, #tpu.memory_space<vmem>>, vector<2x2x20x4xf32>
    tpu.vector_store %arg16[%c0_4, %c0_5, %c0_6, %c0_7], %2 {strides = array<i32>} : memref<2x20x20x4xf32, #tpu.memory_space<vmem>>, vector<2x2x20x4xf32>,
    %c0_8 = arith.constant 0 : index
    %c18 = arith.constant 18 : index
    %c0_9 = arith.constant 0 : index
    %c0_10 = arith.constant 0 : index
    %5 = vector.load %arg16[%c0_8, %c18, %c0_9, %c0_10] : memref<2x20x20x4xf32, #tpu.memory_space<vmem>>, vector<2x2x20x4xf32>
    tpu.vector_store %arg16[%c0_8, %c18, %c0_9, %c0_10], %2 {strides = array<i32>} : memref<2x20x20x4xf32, #tpu.memory_space<vmem>>, vector<2x2x20x4xf32>,
    %c0_11 = arith.constant 0 : index
    %c2 = arith.constant 2 : index
    %c0_12 = arith.constant 0 : index
    %c0_13 = arith.constant 0 : index
    %6 = vector.load %arg16[%c0_11, %c2, %c0_12, %c0_13] : memref<2x20x20x4xf32, #tpu.memory_space<vmem>>, vector<2x16x2x4xf32>
    tpu.vector_store %arg16[%c0_11, %c2, %c0_12, %c0_13], %3 {strides = array<i32>} : memref<2x20x20x4xf32, #tpu.memory_space<vmem>>, vector<2x16x2x4xf32>,
    %c0_14 = arith.constant 0 : index
    %c2_15 = arith.constant 2 : index
    %c18_16 = arith.constant 18 : index
    %c0_17 = arith.constant 0 : index
    %7 = vector.load %arg16[%c0_14, %c2_15, %c18_16, %c0_17] : memref<2x20x20x4xf32, #tpu.memory_space<vmem>>, vector<2x16x2x4xf32>
    tpu.vector_store %arg16[%c0_14, %c2_15, %c18_16, %c0_17], %3 {strides = array<i32>} : memref<2x20x20x4xf32, #tpu.memory_space<vmem>>, vector<2x16x2x4xf32>,
    %8 = vector.extract_strided_slice %1 {offsets = [0, 0, 0], sizes = [16, 16, 4], strides = [1, 1, 1]} : vector<16x16x8xf32> to vector<16x16x4xf32>
    %c0_18 = arith.constant 0 : index
    %c2_19 = arith.constant 2 : index
    %c2_20 = arith.constant 2 : index
    %c0_21 = arith.constant 0 : index
    %9 = vector.load %arg16[%c0_18, %c2_19, %c2_20, %c0_21] : memref<2x20x20x4xf32, #tpu.memory_space<vmem>>, vector<1x16x16x4xf32>
    %10 = vector.shape_cast %9 : vector<1x16x16x4xf32> to vector<16x16x4xf32>
    %11 = vector.shape_cast %8 : vector<16x16x4xf32> to vector<1x16x16x4xf32>
    tpu.vector_store %arg16[%c0_18, %c2_19, %c2_20, %c0_21], %11 {strides = array<i32>} : memref<2x20x20x4xf32, #tpu.memory_space<vmem>>, vector<1x16x16x4xf32>,
    %12 = vector.extract_strided_slice %1 {offsets = [0, 0, 4], sizes = [16, 16, 4], strides = [1, 1, 1]} : vector<16x16x8xf32> to vector<16x16x4xf32>
    %c1 = arith.constant 1 : index
    %c2_22 = arith.constant 2 : index
    %c2_23 = arith.constant 2 : index
    %c0_24 = arith.constant 0 : index
    %13 = vector.load %arg16[%c1, %c2_22, %c2_23, %c0_24] : memref<2x20x20x4xf32, #tpu.memory_space<vmem>>, vector<1x16x16x4xf32>
    %14 = vector.shape_cast %13 : vector<1x16x16x4xf32> to vector<16x16x4xf32>
    %15 = vector.shape_cast %12 : vector<16x16x4xf32> to vector<1x16x16x4xf32>
    tpu.vector_store %arg16[%c1, %c2_22, %c2_23, %c0_24], %15 {strides = array<i32>} : memref<2x20x20x4xf32, #tpu.memory_space<vmem>>, vector<1x16x16x4xf32>,
    %c0_25 = arith.constant 0 : index
    %c1_26 = arith.constant 1 : index
    %c1_27 = arith.constant 1 : index
    %c0_28 = arith.constant 0 : index
    %16 = vector.load %arg16[%c0_25, %c1_26, %c1_27, %c0_28] : memref<2x20x20x4xf32, #tpu.memory_space<vmem>>, vector<1x16x16x4xf32>
    %17 = vector.shape_cast %16 : vector<1x16x16x4xf32> to vector<16x16x4xf32>
    %18 = arith.truncf %17 : vector<16x16x4xf32> to vector<16x16x4xbf16>
    %19 = vector.shape_cast %18 : vector<16x16x4xbf16> to vector<256x4xbf16>
    %c1_29 = arith.constant 1 : index
    %c0_30 = arith.constant 0 : index
    %c0_31 = arith.constant 0 : index
    %c0_32 = arith.constant 0 : index
    %20 = vector.load %arg16[%c1_29, %c0_30, %c0_31, %c0_32] : memref<2x20x20x4xf32, #tpu.memory_space<vmem>>, vector<1x16x16x4xf32>
    %21 = vector.shape_cast %20 : vector<1x16x16x4xf32> to vector<16x16x4xf32>
    %22 = arith.truncf %21 : vector<16x16x4xf32> to vector<16x16x4xbf16>
    %23 = vector.shape_cast %22 : vector<16x16x4xbf16> to vector<256x4xbf16>
    %c0_33 = arith.constant 0 : index
    %c1_34 = arith.constant 1 : index
    %c2_35 = arith.constant 2 : index
    %c0_36 = arith.constant 0 : index
    %24 = vector.load %arg16[%c0_33, %c1_34, %c2_35, %c0_36] : memref<2x20x20x4xf32, #tpu.memory_space<vmem>>, vector<1x16x16x4xf32>
    %25 = vector.shape_cast %24 : vector<1x16x16x4xf32> to vector<16x16x4xf32>
    %26 = arith.truncf %25 : vector<16x16x4xf32> to vector<16x16x4xbf16>
    %27 = vector.shape_cast %26 : vector<16x16x4xbf16> to vector<256x4xbf16>
    %c1_37 = arith.constant 1 : index
    %c0_38 = arith.constant 0 : index
    %c2_39 = arith.constant 2 : index
    %c0_40 = arith.constant 0 : index
    %28 = vector.load %arg16[%c1_37, %c0_38, %c2_39, %c0_40] : memref<2x20x20x4xf32, #tpu.memory_space<vmem>>, vector<1x16x16x4xf32>
    %29 = vector.shape_cast %28 : vector<1x16x16x4xf32> to vector<16x16x4xf32>
    %30 = arith.truncf %29 : vector<16x16x4xf32> to vector<16x16x4xbf16>
    %31 = vector.shape_cast %30 : vector<16x16x4xbf16> to vector<256x4xbf16>
    %c0_41 = arith.constant 0 : index
    %c1_42 = arith.constant 1 : index
    %c3 = arith.constant 3 : index
    %c0_43 = arith.constant 0 : index
    %32 = vector.load %arg16[%c0_41, %c1_42, %c3, %c0_43] : memref<2x20x20x4xf32, #tpu.memory_space<vmem>>, vector<1x16x16x4xf32>
    %33 = vector.shape_cast %32 : vector<1x16x16x4xf32> to vector<16x16x4xf32>
    %34 = arith.truncf %33 : vector<16x16x4xf32> to vector<16x16x4xbf16>
    %35 = vector.shape_cast %34 : vector<16x16x4xbf16> to vector<256x4xbf16>
    %c1_44 = arith.constant 1 : index
    %c0_45 = arith.constant 0 : index
    %c4 = arith.constant 4 : index
    %c0_46 = arith.constant 0 : index
    %36 = vector.load %arg16[%c1_44, %c0_45, %c4, %c0_46] : memref<2x20x20x4xf32, #tpu.memory_space<vmem>>, vector<1x16x16x4xf32>
    %37 = vector.shape_cast %36 : vector<1x16x16x4xf32> to vector<16x16x4xf32>
    %38 = arith.truncf %37 : vector<16x16x4xf32> to vector<16x16x4xbf16>
    %39 = vector.shape_cast %38 : vector<16x16x4xbf16> to vector<256x4xbf16>
    %c0_47 = arith.constant 0 : index
    %c2_48 = arith.constant 2 : index
    %c1_49 = arith.constant 1 : index
    %c0_50 = arith.constant 0 : index
    %40 = vector.load %arg16[%c0_47, %c2_48, %c1_49, %c0_50] : memref<2x20x20x4xf32, #tpu.memory_space<vmem>>, vector<1x16x16x4xf32>
    %41 = vector.shape_cast %40 : vector<1x16x16x4xf32> to vector<16x16x4xf32>
    %42 = arith.truncf %41 : vector<16x16x4xf32> to vector<16x16x4xbf16>
    %43 = vector.shape_cast %42 : vector<16x16x4xbf16> to vector<256x4xbf16>
    %c1_51 = arith.constant 1 : index
    %c2_52 = arith.constant 2 : index
    %c0_53 = arith.constant 0 : index
    %c0_54 = arith.constant 0 : index
    %44 = vector.load %arg16[%c1_51, %c2_52, %c0_53, %c0_54] : memref<2x20x20x4xf32, #tpu.memory_space<vmem>>, vector<1x16x16x4xf32>
    %45 = vector.shape_cast %44 : vector<1x16x16x4xf32> to vector<16x16x4xf32>
    %46 = arith.truncf %45 : vector<16x16x4xf32> to vector<16x16x4xbf16>
    %47 = vector.shape_cast %46 : vector<16x16x4xbf16> to vector<256x4xbf16>
    %c0_55 = arith.constant 0 : index
    %c2_56 = arith.constant 2 : index
    %c2_57 = arith.constant 2 : index
    %c0_58 = arith.constant 0 : index
    %48 = vector.load %arg16[%c0_55, %c2_56, %c2_57, %c0_58] : memref<2x20x20x4xf32, #tpu.memory_space<vmem>>, vector<1x16x16x4xf32>
    %49 = vector.shape_cast %48 : vector<1x16x16x4xf32> to vector<16x16x4xf32>
    %50 = arith.truncf %49 : vector<16x16x4xf32> to vector<16x16x4xbf16>
    %51 = vector.shape_cast %50 : vector<16x16x4xbf16> to vector<256x4xbf16>
    %c1_59 = arith.constant 1 : index
    %c2_60 = arith.constant 2 : index
    %c2_61 = arith.constant 2 : index
    %c0_62 = arith.constant 0 : index
    %52 = vector.load %arg16[%c1_59, %c2_60, %c2_61, %c0_62] : memref<2x20x20x4xf32, #tpu.memory_space<vmem>>, vector<1x16x16x4xf32>
    %53 = vector.shape_cast %52 : vector<1x16x16x4xf32> to vector<16x16x4xf32>
    %54 = arith.truncf %53 : vector<16x16x4xf32> to vector<16x16x4xbf16>
    %55 = vector.shape_cast %54 : vector<16x16x4xbf16> to vector<256x4xbf16>
    %c0_63 = arith.constant 0 : index
    %c2_64 = arith.constant 2 : index
    %c3_65 = arith.constant 3 : index
    %c0_66 = arith.constant 0 : index
    %56 = vector.load %arg16[%c0_63, %c2_64, %c3_65, %c0_66] : memref<2x20x20x4xf32, #tpu.memory_space<vmem>>, vector<1x16x16x4xf32>
    %57 = vector.shape_cast %56 : vector<1x16x16x4xf32> to vector<16x16x4xf32>
    %58 = arith.truncf %57 : vector<16x16x4xf32> to vector<16x16x4xbf16>
    %59 = vector.shape_cast %58 : vector<16x16x4xbf16> to vector<256x4xbf16>
    %c1_67 = arith.constant 1 : index
    %c2_68 = arith.constant 2 : index
    %c4_69 = arith.constant 4 : index
    %c0_70 = arith.constant 0 : index
    %60 = vector.load %arg16[%c1_67, %c2_68, %c4_69, %c0_70] : memref<2x20x20x4xf32, #tpu.memory_space<vmem>>, vector<1x16x16x4xf32>
    %61 = vector.shape_cast %60 : vector<1x16x16x4xf32> to vector<16x16x4xf32>
    %62 = arith.truncf %61 : vector<16x16x4xf32> to vector<16x16x4xbf16>
    %63 = vector.shape_cast %62 : vector<16x16x4xbf16> to vector<256x4xbf16>
    %c0_71 = arith.constant 0 : index
    %c3_72 = arith.constant 3 : index
    %c1_73 = arith.constant 1 : index
    %c0_74 = arith.constant 0 : index
    %64 = vector.load %arg16[%c0_71, %c3_72, %c1_73, %c0_74] : memref<2x20x20x4xf32, #tpu.memory_space<vmem>>, vector<1x16x16x4xf32>
    %65 = vector.shape_cast %64 : vector<1x16x16x4xf32> to vector<16x16x4xf32>
    %66 = arith.truncf %65 : vector<16x16x4xf32> to vector<16x16x4xbf16>
    %67 = vector.shape_cast %66 : vector<16x16x4xbf16> to vector<256x4xbf16>
    %c1_75 = arith.constant 1 : index
    %c4_76 = arith.constant 4 : index
    %c0_77 = arith.constant 0 : index
    %c0_78 = arith.constant 0 : index
    %68 = vector.load %arg16[%c1_75, %c4_76, %c0_77, %c0_78] : memref<2x20x20x4xf32, #tpu.memory_space<vmem>>, vector<1x16x16x4xf32>
    %69 = vector.shape_cast %68 : vector<1x16x16x4xf32> to vector<16x16x4xf32>
    %70 = arith.truncf %69 : vector<16x16x4xf32> to vector<16x16x4xbf16>
    %71 = vector.shape_cast %70 : vector<16x16x4xbf16> to vector<256x4xbf16>
    %c0_79 = arith.constant 0 : index
    %c3_80 = arith.constant 3 : index
    %c2_81 = arith.constant 2 : index
    %c0_82 = arith.constant 0 : index
    %72 = vector.load %arg16[%c0_79, %c3_80, %c2_81, %c0_82] : memref<2x20x20x4xf32, #tpu.memory_space<vmem>>, vector<1x16x16x4xf32>
    %73 = vector.shape_cast %72 : vector<1x16x16x4xf32> to vector<16x16x4xf32>
    %74 = arith.truncf %73 : vector<16x16x4xf32> to vector<16x16x4xbf16>
    %75 = vector.shape_cast %74 : vector<16x16x4xbf16> to vector<256x4xbf16>
    %c1_83 = arith.constant 1 : index
    %c4_84 = arith.constant 4 : index
    %c2_85 = arith.constant 2 : index
    %c0_86 = arith.constant 0 : index
    %76 = vector.load %arg16[%c1_83, %c4_84, %c2_85, %c0_86] : memref<2x20x20x4xf32, #tpu.memory_space<vmem>>, vector<1x16x16x4xf32>
    %77 = vector.shape_cast %76 : vector<1x16x16x4xf32> to vector<16x16x4xf32>
    %78 = arith.truncf %77 : vector<16x16x4xf32> to vector<16x16x4xbf16>
    %79 = vector.shape_cast %78 : vector<16x16x4xbf16> to vector<256x4xbf16>
    %c0_87 = arith.constant 0 : index
    %c3_88 = arith.constant 3 : index
    %c3_89 = arith.constant 3 : index
    %c0_90 = arith.constant 0 : index
    %80 = vector.load %arg16[%c0_87, %c3_88, %c3_89, %c0_90] : memref<2x20x20x4xf32, #tpu.memory_space<vmem>>, vector<1x16x16x4xf32>
    %81 = vector.shape_cast %80 : vector<1x16x16x4xf32> to vector<16x16x4xf32>
    %82 = arith.truncf %81 : vector<16x16x4xf32> to vector<16x16x4xbf16>
    %83 = vector.shape_cast %82 : vector<16x16x4xbf16> to vector<256x4xbf16>
    %c1_91 = arith.constant 1 : index
    %c4_92 = arith.constant 4 : index
    %c4_93 = arith.constant 4 : index
    %c0_94 = arith.constant 0 : index
    %84 = vector.load %arg16[%c1_91, %c4_92, %c4_93, %c0_94] : memref<2x20x20x4xf32, #tpu.memory_space<vmem>>, vector<1x16x16x4xf32>
    %85 = vector.shape_cast %84 : vector<1x16x16x4xf32> to vector<16x16x4xf32>
    %86 = arith.truncf %85 : vector<16x16x4xf32> to vector<16x16x4xbf16>
    %87 = vector.shape_cast %86 : vector<16x16x4xbf16> to vector<256x4xbf16>
    %88 = tpu.concatenate %19, %27, %35, %43, %51, %59, %67, %75, %83 in 1 : vector<256x4xbf16>, vector<256x4xbf16>, vector<256x4xbf16>, vector<256x4xbf16>, vector<256x4xbf16>, vector<256x4xbf16>, vector<256x4xbf16>, vector<256x4xbf16>, vector<256x4xbf16> -> vector<256x36xbf16>
    %89 = tpu.concatenate %23, %31, %39, %47, %55, %63, %71, %79, %87 in 1 : vector<256x4xbf16>, vector<256x4xbf16>, vector<256x4xbf16>, vector<256x4xbf16>, vector<256x4xbf16>, vector<256x4xbf16>, vector<256x4xbf16>, vector<256x4xbf16>, vector<256x4xbf16> -> vector<256x36xbf16>
    %c0_95 = arith.constant 0 : index
    %c0_96 = arith.constant 0 : index
    %90 = vector.load %arg2[%c0_95, %c0_96] : memref<36x8xbf16, #tpu.memory_space<vmem>>, vector<36x8xbf16>
    %cst_97 = arith.constant dense<0.000000e+00> : vector<256x8xf32>
    %91 = tpu.matmul %88, %90, %cst_97 {dimension_numbers = #tpu.dot_dimension_numbers<[1], [0], [0], [1], [0, 0, 1, 1], [], []>} : vector<256x36xbf16>, vector<36x8xbf16>, vector<256x8xf32> -> vector<256x8xf32>
    %c0_98 = arith.constant 0 : index
    %c0_99 = arith.constant 0 : index
    %92 = vector.load %arg3[%c0_98, %c0_99] : memref<36x8xbf16, #tpu.memory_space<vmem>>, vector<36x8xbf16>
    %cst_100 = arith.constant dense<0.000000e+00> : vector<256x8xf32>
    %93 = tpu.matmul %89, %92, %cst_100 {dimension_numbers = #tpu.dot_dimension_numbers<[1], [0], [0], [1], [0, 0, 1, 1], [], []>} : vector<256x36xbf16>, vector<36x8xbf16>, vector<256x8xf32> -> vector<256x8xf32>
    %c0_101 = arith.constant 0 : index
    %c0_102 = arith.constant 0 : index
    %94 = vector.load %arg4[%c0_101, %c0_102] : memref<1x8xf32, #tpu.memory_space<vmem>>, vector<1x8xf32>
    %95 = vector.broadcast %94 : vector<1x8xf32> to vector<256x8xf32>
    %96 = arith.mulf %91, %95 : vector<256x8xf32>
    %c0_103 = arith.constant 0 : index
    %c0_104 = arith.constant 0 : index
    %97 = vector.load %arg5[%c0_103, %c0_104] : memref<1x8xf32, #tpu.memory_space<vmem>>, vector<1x8xf32>
    %98 = vector.broadcast %97 : vector<1x8xf32> to vector<256x8xf32>
    %99 = arith.addf %96, %98 : vector<256x8xf32>
    %cst_105 = arith.constant 0.000000e+00 : f32
    %100 = vector.broadcast %cst_105 : f32 to vector<256x8xf32>
    %101 = arith.maximumf %99, %100 : vector<256x8xf32>
    %c0_106 = arith.constant 0 : index
    %c0_107 = arith.constant 0 : index
    %102 = vector.load %arg6[%c0_106, %c0_107] : memref<1x8xf32, #tpu.memory_space<vmem>>, vector<1x8xf32>
    %103 = vector.broadcast %102 : vector<1x8xf32> to vector<256x8xf32>
    %104 = arith.mulf %93, %103 : vector<256x8xf32>
    %c0_108 = arith.constant 0 : index
    %c0_109 = arith.constant 0 : index
    %105 = vector.load %arg7[%c0_108, %c0_109] : memref<1x8xf32, #tpu.memory_space<vmem>>, vector<1x8xf32>
    %106 = vector.broadcast %105 : vector<1x8xf32> to vector<256x8xf32>
    %107 = arith.addf %104, %106 : vector<256x8xf32>
    %cst_110 = arith.constant 0.000000e+00 : f32
    %108 = vector.broadcast %cst_110 : f32 to vector<256x8xf32>
    %109 = arith.maximumf %107, %108 : vector<256x8xf32>
    %cst_111 = arith.constant dense<0.000000e+00> : vector<8xf32>
    %110 = vector.multi_reduction <add>, %101, %cst_111 [0] : vector<256x8xf32> to vector<8xf32>
    %111 = vector.shape_cast %110 : vector<8xf32> to vector<1x8xf32>
    %cst_112 = arith.constant dense<0.000000e+00> : vector<8xf32>
    %112 = vector.multi_reduction <add>, %109, %cst_112 [0] : vector<256x8xf32> to vector<8xf32>
    %113 = vector.shape_cast %112 : vector<8xf32> to vector<1x8xf32>
    %114 = arith.addf %111, %113 : vector<1x8xf32>
    %c0_113 = arith.constant 0 : index
    %c0_114 = arith.constant 0 : index
    %115 = vector.load %arg8[%c0_113, %c0_114] : memref<8x8xf32, #tpu.memory_space<vmem>>, vector<8x8xf32>
    %cst_115 = arith.constant dense<0.000000e+00> : vector<1x8xf32>
    %116 = tpu.matmul %114, %115, %cst_115 {dimension_numbers = #tpu.dot_dimension_numbers<[1], [0], [0], [1], [0, 0, 1, 1], [], []>} : vector<1x8xf32>, vector<8x8xf32>, vector<1x8xf32> -> vector<1x8xf32>
    %c0_116 = arith.constant 0 : index
    %c0_117 = arith.constant 0 : index
    %117 = vector.load %arg9[%c0_116, %c0_117] : memref<1x8xf32, #tpu.memory_space<vmem>>, vector<1x8xf32>
    %118 = arith.mulf %116, %117 : vector<1x8xf32>
    %c0_118 = arith.constant 0 : index
    %c0_119 = arith.constant 0 : index
    %119 = vector.load %arg10[%c0_118, %c0_119] : memref<1x8xf32, #tpu.memory_space<vmem>>, vector<1x8xf32>
    %120 = arith.addf %118, %119 : vector<1x8xf32>
    %cst_120 = arith.constant 0.000000e+00 : f32
    %121 = vector.broadcast %cst_120 : f32 to vector<1x8xf32>
    %122 = arith.maximumf %120, %121 : vector<1x8xf32>
    %c0_121 = arith.constant 0 : index
    %c0_122 = arith.constant 0 : index
    %123 = vector.load %arg11[%c0_121, %c0_122] : memref<8x16xf32, #tpu.memory_space<vmem>>, vector<8x16xf32>
    %cst_123 = arith.constant dense<0.000000e+00> : vector<1x16xf32>
    %124 = tpu.matmul %122, %123, %cst_123 {dimension_numbers = #tpu.dot_dimension_numbers<[1], [0], [0], [1], [0, 0, 1, 1], [], []>} : vector<1x8xf32>, vector<8x16xf32>, vector<1x16xf32> -> vector<1x16xf32>
    %125 = vector.extract_strided_slice %124 {offsets = [0, 0], sizes = [1, 8], strides = [1, 1]} : vector<1x16xf32> to vector<1x8xf32>
    %126 = vector.extract_strided_slice %124 {offsets = [0, 8], sizes = [1, 8], strides = [1, 1]} : vector<1x16xf32> to vector<1x8xf32>
    %127 = arith.maximumf %125, %126 : vector<1x8xf32>
    %128 = arith.subf %125, %127 : vector<1x8xf32>
    %129 = math.exp %128 : vector<1x8xf32>
    %130 = arith.subf %126, %127 : vector<1x8xf32>
    %131 = math.exp %130 : vector<1x8xf32>
    %132 = arith.addf %129, %131 : vector<1x8xf32>
    %133 = tpu.reciprocal %132 {approx = true} : vector<1x8xf32> -> vector<1x8xf32>
    %134 = arith.mulf %129, %133 : vector<1x8xf32>
    %135 = vector.broadcast %134 : vector<1x8xf32> to vector<256x8xf32>
    %136 = arith.mulf %101, %135 : vector<256x8xf32>
    %137 = arith.mulf %131, %133 : vector<1x8xf32>
    %138 = vector.broadcast %137 : vector<1x8xf32> to vector<256x8xf32>
    %139 = arith.mulf %109, %138 : vector<256x8xf32>
    %140 = arith.addf %136, %139 : vector<256x8xf32>
    %cst_124 = arith.constant 0.000000e+00 : f32
    %141 = vector.broadcast %cst_124 : f32 to vector<1x18x8xf32>
    %cst_125 = arith.constant 0.000000e+00 : f32
    %142 = vector.broadcast %cst_125 : f32 to vector<16x1x8xf32>
    %c0_126 = arith.constant 0 : index
    %c0_127 = arith.constant 0 : index
    %c0_128 = arith.constant 0 : index
    %143 = vector.load %arg17[%c0_126, %c0_127, %c0_128] : memref<18x18x8xf32, #tpu.memory_space<vmem>>, vector<1x18x8xf32>
    tpu.vector_store %arg17[%c0_126, %c0_127, %c0_128], %141 {strides = array<i32>} : memref<18x18x8xf32, #tpu.memory_space<vmem>>, vector<1x18x8xf32>,
    %c17 = arith.constant 17 : index
    %c0_129 = arith.constant 0 : index
    %c0_130 = arith.constant 0 : index
    %144 = vector.load %arg17[%c17, %c0_129, %c0_130] : memref<18x18x8xf32, #tpu.memory_space<vmem>>, vector<1x18x8xf32>
    tpu.vector_store %arg17[%c17, %c0_129, %c0_130], %141 {strides = array<i32>} : memref<18x18x8xf32, #tpu.memory_space<vmem>>, vector<1x18x8xf32>,
    %c1_131 = arith.constant 1 : index
    %c0_132 = arith.constant 0 : index
    %c0_133 = arith.constant 0 : index
    %145 = vector.load %arg17[%c1_131, %c0_132, %c0_133] : memref<18x18x8xf32, #tpu.memory_space<vmem>>, vector<16x1x8xf32>
    tpu.vector_store %arg17[%c1_131, %c0_132, %c0_133], %142 {strides = array<i32>} : memref<18x18x8xf32, #tpu.memory_space<vmem>>, vector<16x1x8xf32>,
    %c1_134 = arith.constant 1 : index
    %c17_135 = arith.constant 17 : index
    %c0_136 = arith.constant 0 : index
    %146 = vector.load %arg17[%c1_134, %c17_135, %c0_136] : memref<18x18x8xf32, #tpu.memory_space<vmem>>, vector<16x1x8xf32>
    tpu.vector_store %arg17[%c1_134, %c17_135, %c0_136], %142 {strides = array<i32>} : memref<18x18x8xf32, #tpu.memory_space<vmem>>, vector<16x1x8xf32>,
    %147 = vector.shape_cast %140 : vector<256x8xf32> to vector<16x16x8xf32>
    %c1_137 = arith.constant 1 : index
    %c1_138 = arith.constant 1 : index
    %c0_139 = arith.constant 0 : index
    %148 = vector.load %arg17[%c1_137, %c1_138, %c0_139] : memref<18x18x8xf32, #tpu.memory_space<vmem>>, vector<16x16x8xf32>
    tpu.vector_store %arg17[%c1_137, %c1_138, %c0_139], %147 {strides = array<i32>} : memref<18x18x8xf32, #tpu.memory_space<vmem>>, vector<16x16x8xf32>,
    %cst_140 = arith.constant 0.000000e+00 : f32
    %149 = vector.broadcast %cst_140 : f32 to vector<256x8xf32>
    %c0_141 = arith.constant 0 : index
    %c0_142 = arith.constant 0 : index
    %c0_143 = arith.constant 0 : index
    %150 = vector.load %arg17[%c0_141, %c0_142, %c0_143] : memref<18x18x8xf32, #tpu.memory_space<vmem>>, vector<16x16x8xf32>
    %151 = arith.truncf %150 : vector<16x16x8xf32> to vector<16x16x8xbf16>
    %152 = vector.shape_cast %151 : vector<16x16x8xbf16> to vector<256x8xbf16>
    %c0_144 = arith.constant 0 : index
    %c0_145 = arith.constant 0 : index
    %c0_146 = arith.constant 0 : index
    %153 = vector.load %arg12[%c0_144, %c0_145, %c0_146] : memref<9x8x8xbf16, #tpu.memory_space<vmem>>, vector<1x8x8xbf16>
    %154 = vector.shape_cast %153 : vector<1x8x8xbf16> to vector<8x8xbf16>
    %cst_147 = arith.constant dense<0.000000e+00> : vector<256x8xf32>
    %155 = tpu.matmul %152, %154, %cst_147 {dimension_numbers = #tpu.dot_dimension_numbers<[1], [0], [0], [1], [0, 0, 1, 1], [], []>} : vector<256x8xbf16>, vector<8x8xbf16>, vector<256x8xf32> -> vector<256x8xf32>
    %156 = arith.addf %149, %155 : vector<256x8xf32>
    %c0_148 = arith.constant 0 : index
    %c1_149 = arith.constant 1 : index
    %c0_150 = arith.constant 0 : index
    %157 = vector.load %arg17[%c0_148, %c1_149, %c0_150] : memref<18x18x8xf32, #tpu.memory_space<vmem>>, vector<16x16x8xf32>
    %158 = arith.truncf %157 : vector<16x16x8xf32> to vector<16x16x8xbf16>
    %159 = vector.shape_cast %158 : vector<16x16x8xbf16> to vector<256x8xbf16>
    %c1_151 = arith.constant 1 : index
    %c0_152 = arith.constant 0 : index
    %c0_153 = arith.constant 0 : index
    %160 = vector.load %arg12[%c1_151, %c0_152, %c0_153] : memref<9x8x8xbf16, #tpu.memory_space<vmem>>, vector<1x8x8xbf16>
    %161 = vector.shape_cast %160 : vector<1x8x8xbf16> to vector<8x8xbf16>
    %cst_154 = arith.constant dense<0.000000e+00> : vector<256x8xf32>
    %162 = tpu.matmul %159, %161, %cst_154 {dimension_numbers = #tpu.dot_dimension_numbers<[1], [0], [0], [1], [0, 0, 1, 1], [], []>} : vector<256x8xbf16>, vector<8x8xbf16>, vector<256x8xf32> -> vector<256x8xf32>
    %163 = arith.addf %156, %162 : vector<256x8xf32>
    %c0_155 = arith.constant 0 : index
    %c2_156 = arith.constant 2 : index
    %c0_157 = arith.constant 0 : index
    %164 = vector.load %arg17[%c0_155, %c2_156, %c0_157] : memref<18x18x8xf32, #tpu.memory_space<vmem>>, vector<16x16x8xf32>
    %165 = arith.truncf %164 : vector<16x16x8xf32> to vector<16x16x8xbf16>
    %166 = vector.shape_cast %165 : vector<16x16x8xbf16> to vector<256x8xbf16>
    %c2_158 = arith.constant 2 : index
    %c0_159 = arith.constant 0 : index
    %c0_160 = arith.constant 0 : index
    %167 = vector.load %arg12[%c2_158, %c0_159, %c0_160] : memref<9x8x8xbf16, #tpu.memory_space<vmem>>, vector<1x8x8xbf16>
    %168 = vector.shape_cast %167 : vector<1x8x8xbf16> to vector<8x8xbf16>
    %cst_161 = arith.constant dense<0.000000e+00> : vector<256x8xf32>
    %169 = tpu.matmul %166, %168, %cst_161 {dimension_numbers = #tpu.dot_dimension_numbers<[1], [0], [0], [1], [0, 0, 1, 1], [], []>} : vector<256x8xbf16>, vector<8x8xbf16>, vector<256x8xf32> -> vector<256x8xf32>
    %170 = arith.addf %163, %169 : vector<256x8xf32>
    %c1_162 = arith.constant 1 : index
    %c0_163 = arith.constant 0 : index
    %c0_164 = arith.constant 0 : index
    %171 = vector.load %arg17[%c1_162, %c0_163, %c0_164] : memref<18x18x8xf32, #tpu.memory_space<vmem>>, vector<16x16x8xf32>
    %172 = arith.truncf %171 : vector<16x16x8xf32> to vector<16x16x8xbf16>
    %173 = vector.shape_cast %172 : vector<16x16x8xbf16> to vector<256x8xbf16>
    %c3_165 = arith.constant 3 : index
    %c0_166 = arith.constant 0 : index
    %c0_167 = arith.constant 0 : index
    %174 = vector.load %arg12[%c3_165, %c0_166, %c0_167] : memref<9x8x8xbf16, #tpu.memory_space<vmem>>, vector<1x8x8xbf16>
    %175 = vector.shape_cast %174 : vector<1x8x8xbf16> to vector<8x8xbf16>
    %cst_168 = arith.constant dense<0.000000e+00> : vector<256x8xf32>
    %176 = tpu.matmul %173, %175, %cst_168 {dimension_numbers = #tpu.dot_dimension_numbers<[1], [0], [0], [1], [0, 0, 1, 1], [], []>} : vector<256x8xbf16>, vector<8x8xbf16>, vector<256x8xf32> -> vector<256x8xf32>
    %177 = arith.addf %170, %176 : vector<256x8xf32>
    %c1_169 = arith.constant 1 : index
    %c1_170 = arith.constant 1 : index
    %c0_171 = arith.constant 0 : index
    %178 = vector.load %arg17[%c1_169, %c1_170, %c0_171] : memref<18x18x8xf32, #tpu.memory_space<vmem>>, vector<16x16x8xf32>
    %179 = arith.truncf %178 : vector<16x16x8xf32> to vector<16x16x8xbf16>
    %180 = vector.shape_cast %179 : vector<16x16x8xbf16> to vector<256x8xbf16>
    %c4_172 = arith.constant 4 : index
    %c0_173 = arith.constant 0 : index
    %c0_174 = arith.constant 0 : index
    %181 = vector.load %arg12[%c4_172, %c0_173, %c0_174] : memref<9x8x8xbf16, #tpu.memory_space<vmem>>, vector<1x8x8xbf16>
    %182 = vector.shape_cast %181 : vector<1x8x8xbf16> to vector<8x8xbf16>
    %cst_175 = arith.constant dense<0.000000e+00> : vector<256x8xf32>
    %183 = tpu.matmul %180, %182, %cst_175 {dimension_numbers = #tpu.dot_dimension_numbers<[1], [0], [0], [1], [0, 0, 1, 1], [], []>} : vector<256x8xbf16>, vector<8x8xbf16>, vector<256x8xf32> -> vector<256x8xf32>
    %184 = arith.addf %177, %183 : vector<256x8xf32>
    %c1_176 = arith.constant 1 : index
    %c2_177 = arith.constant 2 : index
    %c0_178 = arith.constant 0 : index
    %185 = vector.load %arg17[%c1_176, %c2_177, %c0_178] : memref<18x18x8xf32, #tpu.memory_space<vmem>>, vector<16x16x8xf32>
    %186 = arith.truncf %185 : vector<16x16x8xf32> to vector<16x16x8xbf16>
    %187 = vector.shape_cast %186 : vector<16x16x8xbf16> to vector<256x8xbf16>
    %c5 = arith.constant 5 : index
    %c0_179 = arith.constant 0 : index
    %c0_180 = arith.constant 0 : index
    %188 = vector.load %arg12[%c5, %c0_179, %c0_180] : memref<9x8x8xbf16, #tpu.memory_space<vmem>>, vector<1x8x8xbf16>
    %189 = vector.shape_cast %188 : vector<1x8x8xbf16> to vector<8x8xbf16>
    %cst_181 = arith.constant dense<0.000000e+00> : vector<256x8xf32>
    %190 = tpu.matmul %187, %189, %cst_181 {dimension_numbers = #tpu.dot_dimension_numbers<[1], [0], [0], [1], [0, 0, 1, 1], [], []>} : vector<256x8xbf16>, vector<8x8xbf16>, vector<256x8xf32> -> vector<256x8xf32>
    %191 = arith.addf %184, %190 : vector<256x8xf32>
    %c2_182 = arith.constant 2 : index
    %c0_183 = arith.constant 0 : index
    %c0_184 = arith.constant 0 : index
    %192 = vector.load %arg17[%c2_182, %c0_183, %c0_184] : memref<18x18x8xf32, #tpu.memory_space<vmem>>, vector<16x16x8xf32>
    %193 = arith.truncf %192 : vector<16x16x8xf32> to vector<16x16x8xbf16>
    %194 = vector.shape_cast %193 : vector<16x16x8xbf16> to vector<256x8xbf16>
    %c6 = arith.constant 6 : index
    %c0_185 = arith.constant 0 : index
    %c0_186 = arith.constant 0 : index
    %195 = vector.load %arg12[%c6, %c0_185, %c0_186] : memref<9x8x8xbf16, #tpu.memory_space<vmem>>, vector<1x8x8xbf16>
    %196 = vector.shape_cast %195 : vector<1x8x8xbf16> to vector<8x8xbf16>
    %cst_187 = arith.constant dense<0.000000e+00> : vector<256x8xf32>
    %197 = tpu.matmul %194, %196, %cst_187 {dimension_numbers = #tpu.dot_dimension_numbers<[1], [0], [0], [1], [0, 0, 1, 1], [], []>} : vector<256x8xbf16>, vector<8x8xbf16>, vector<256x8xf32> -> vector<256x8xf32>
    %198 = arith.addf %191, %197 : vector<256x8xf32>
    %c2_188 = arith.constant 2 : index
    %c1_189 = arith.constant 1 : index
    %c0_190 = arith.constant 0 : index
    %199 = vector.load %arg17[%c2_188, %c1_189, %c0_190] : memref<18x18x8xf32, #tpu.memory_space<vmem>>, vector<16x16x8xf32>
    %200 = arith.truncf %199 : vector<16x16x8xf32> to vector<16x16x8xbf16>
    %201 = vector.shape_cast %200 : vector<16x16x8xbf16> to vector<256x8xbf16>
    %c7 = arith.constant 7 : index
    %c0_191 = arith.constant 0 : index
    %c0_192 = arith.constant 0 : index
    %202 = vector.load %arg12[%c7, %c0_191, %c0_192] : memref<9x8x8xbf16, #tpu.memory_space<vmem>>, vector<1x8x8xbf16>
    %203 = vector.shape_cast %202 : vector<1x8x8xbf16> to vector<8x8xbf16>
    %cst_193 = arith.constant dense<0.000000e+00> : vector<256x8xf32>
    %204 = tpu.matmul %201, %203, %cst_193 {dimension_numbers = #tpu.dot_dimension_numbers<[1], [0], [0], [1], [0, 0, 1, 1], [], []>} : vector<256x8xbf16>, vector<8x8xbf16>, vector<256x8xf32> -> vector<256x8xf32>
    %205 = arith.addf %198, %204 : vector<256x8xf32>
    %c2_194 = arith.constant 2 : index
    %c2_195 = arith.constant 2 : index
    %c0_196 = arith.constant 0 : index
    %206 = vector.load %arg17[%c2_194, %c2_195, %c0_196] : memref<18x18x8xf32, #tpu.memory_space<vmem>>, vector<16x16x8xf32>
    %207 = arith.truncf %206 : vector<16x16x8xf32> to vector<16x16x8xbf16>
    %208 = vector.shape_cast %207 : vector<16x16x8xbf16> to vector<256x8xbf16>
    %c8 = arith.constant 8 : index
    %c0_197 = arith.constant 0 : index
    %c0_198 = arith.constant 0 : index
    %209 = vector.load %arg12[%c8, %c0_197, %c0_198] : memref<9x8x8xbf16, #tpu.memory_space<vmem>>, vector<1x8x8xbf16>
    %210 = vector.shape_cast %209 : vector<1x8x8xbf16> to vector<8x8xbf16>
    %cst_199 = arith.constant dense<0.000000e+00> : vector<256x8xf32>
    %211 = tpu.matmul %208, %210, %cst_199 {dimension_numbers = #tpu.dot_dimension_numbers<[1], [0], [0], [1], [0, 0, 1, 1], [], []>} : vector<256x8xbf16>, vector<8x8xbf16>, vector<256x8xf32> -> vector<256x8xf32>
    %212 = arith.addf %205, %211 : vector<256x8xf32>
    %c0_200 = arith.constant 0 : index
    %c0_201 = arith.constant 0 : index
    %213 = vector.load %arg13[%c0_200, %c0_201] : memref<1x8xf32, #tpu.memory_space<vmem>>, vector<1x8xf32>
    %214 = vector.broadcast %213 : vector<1x8xf32> to vector<256x8xf32>
    %215 = arith.mulf %212, %214 : vector<256x8xf32>
    %c0_202 = arith.constant 0 : index
    %c0_203 = arith.constant 0 : index
    %216 = vector.load %arg14[%c0_202, %c0_203] : memref<1x8xf32, #tpu.memory_space<vmem>>, vector<1x8xf32>
    %217 = vector.broadcast %216 : vector<1x8xf32> to vector<256x8xf32>
    %218 = arith.addf %215, %217 : vector<256x8xf32>
    %219 = vector.shape_cast %1 : vector<16x16x8xf32> to vector<256x8xf32>
    %220 = arith.addf %218, %219 : vector<256x8xf32>
    %cst_204 = arith.constant 0.000000e+00 : f32
    %221 = vector.broadcast %cst_204 : f32 to vector<256x8xf32>
    %222 = arith.maximumf %220, %221 : vector<256x8xf32>
    %223 = vector.shape_cast %222 : vector<256x8xf32> to vector<1x256x8xf32>
    %c0_205 = arith.constant 0 : index
    %c0_206 = arith.constant 0 : index
    %c0_207 = arith.constant 0 : index
    %224 = vector.load %arg15[%c0_205, %c0_206, %c0_207] : memref<1x256x8xf32, #tpu.memory_space<vmem>>, vector<1x256x8xf32>
    tpu.vector_store %arg15[%c0_205, %c0_206, %c0_207], %223 {strides = array<i32>} : memref<1x256x8xf32, #tpu.memory_space<vmem>>, vector<1x256x8xf32>,
    return
  }
  func.func @transform_0(%arg0: i32) -> (i32, i32, i32, i32) {
    %c0_i32 = arith.constant 0 : i32
    %c0_i32_0 = arith.constant 0 : i32
    %c0_i32_1 = arith.constant 0 : i32
    %c0_i32_2 = arith.constant 0 : i32
    return %arg0, %c0_i32, %c0_i32_0, %c0_i32_1 : i32, i32, i32, i32
  }
  func.func @transform_1(%arg0: i32) -> (i32, i32) {
    %c0_i32 = arith.constant 0 : i32
    %c0_i32_0 = arith.constant 0 : i32
    %c0_i32_1 = arith.constant 0 : i32
    return %c0_i32, %c0_i32_0 : i32, i32
  }
  func.func @transform_2(%arg0: i32) -> (i32, i32) {
    %c0_i32 = arith.constant 0 : i32
    %c0_i32_0 = arith.constant 0 : i32
    %c0_i32_1 = arith.constant 0 : i32
    return %c0_i32, %c0_i32_0 : i32, i32
  }
  func.func @transform_3(%arg0: i32) -> (i32, i32) {
    %c0_i32 = arith.constant 0 : i32
    %c0_i32_0 = arith.constant 0 : i32
    %c0_i32_1 = arith.constant 0 : i32
    return %c0_i32, %c0_i32_0 : i32, i32
  }
  func.func @transform_4(%arg0: i32) -> (i32, i32) {
    %c0_i32 = arith.constant 0 : i32
    %c0_i32_0 = arith.constant 0 : i32
    %c0_i32_1 = arith.constant 0 : i32
    return %c0_i32, %c0_i32_0 : i32, i32
  }
  func.func @transform_5(%arg0: i32) -> (i32, i32) {
    %c0_i32 = arith.constant 0 : i32
    %c0_i32_0 = arith.constant 0 : i32
    %c0_i32_1 = arith.constant 0 : i32
    return %c0_i32, %c0_i32_0 : i32, i32
  }
  func.func @transform_6(%arg0: i32) -> (i32, i32) {
    %c0_i32 = arith.constant 0 : i32
    %c0_i32_0 = arith.constant 0 : i32
    %c0_i32_1 = arith.constant 0 : i32
    return %c0_i32, %c0_i32_0 : i32, i32
  }
  func.func @transform_7(%arg0: i32) -> (i32, i32) {
    %c0_i32 = arith.constant 0 : i32
    %c0_i32_0 = arith.constant 0 : i32
    %c0_i32_1 = arith.constant 0 : i32
    return %c0_i32, %c0_i32_0 : i32, i32
  }
  func.func @transform_8(%arg0: i32) -> (i32, i32) {
    %c0_i32 = arith.constant 0 : i32
    %c0_i32_0 = arith.constant 0 : i32
    %c0_i32_1 = arith.constant 0 : i32
    return %c0_i32, %c0_i32_0 : i32, i32
  }
  func.func @transform_9(%arg0: i32) -> (i32, i32) {
    %c0_i32 = arith.constant 0 : i32
    %c0_i32_0 = arith.constant 0 : i32
    %c0_i32_1 = arith.constant 0 : i32
    return %c0_i32, %c0_i32_0 : i32, i32
  }
  func.func @transform_10(%arg0: i32) -> (i32, i32) {
    %c0_i32 = arith.constant 0 : i32
    %c0_i32_0 = arith.constant 0 : i32
    %c0_i32_1 = arith.constant 0 : i32
    return %c0_i32, %c0_i32_0 : i32, i32
  }
  func.func @transform_11(%arg0: i32) -> (i32, i32, i32) {
    %c0_i32 = arith.constant 0 : i32
    %c0_i32_0 = arith.constant 0 : i32
    %c0_i32_1 = arith.constant 0 : i32
    %c0_i32_2 = arith.constant 0 : i32
    return %c0_i32, %c0_i32_0, %c0_i32_1 : i32, i32, i32
  }
  func.func @transform_12(%arg0: i32) -> (i32, i32) {
    %c0_i32 = arith.constant 0 : i32
    %c0_i32_0 = arith.constant 0 : i32
    %c0_i32_1 = arith.constant 0 : i32
    return %c0_i32, %c0_i32_0 : i32, i32
  }
  func.func @transform_13(%arg0: i32) -> (i32, i32) {
    %c0_i32 = arith.constant 0 : i32
    %c0_i32_0 = arith.constant 0 : i32
    %c0_i32_1 = arith.constant 0 : i32
    return %c0_i32, %c0_i32_0 : i32, i32
  }
  func.func @transform_14(%arg0: i32) -> (i32, i32, i32) {
    %c0_i32 = arith.constant 0 : i32
    %c0_i32_0 = arith.constant 0 : i32
    %c0_i32_1 = arith.constant 0 : i32
    return %arg0, %c0_i32, %c0_i32_0 : i32, i32, i32
  }
}

</mosaic_0001>

<llo_original>
// kernel: tpu_custom_call.1
$region0: #{tpu_custom_call.1}
  #allocation0 [shape = 'u32[]', space=smem, size = 0x4, offset = 0x4, fixed_abs, tag = 'smem constant byte address 0x4 - core index']
  #allocation1 [shape = 'u32[144,128]{1,0:T(1,128)}', space=vmem, size = 0x12000, scoped, tag = 'internal scratch']
  #allocation2 [shape = 'f32[2,20,20,4]{3,2,1,0:T(8,128)}', space=vmem, size = 0x78000, scoped, tag = 'scratch operand']
  #allocation3 [shape = 'f32[18,18,8]{2,1,0:T(8,128)}', space=vmem, size = 0x36000, scoped, tag = 'scratch operand']
  %s0 = inlined_call_operand.vmem [shape: f32[2,16,16,8], index: 0, kind: input, shape index: {}]
  %s1 = inlined_call_operand.vmem [shape: bf16[36,8], index: 1, kind: input, shape index: {}]
  %s2 = inlined_call_operand.vmem [shape: bf16[36,8], index: 2, kind: input, shape index: {}]
  %s3 = inlined_call_operand.vmem [shape: f32[1,8], index: 3, kind: input, shape index: {}]
  %s4 = inlined_call_operand.vmem [shape: f32[1,8], index: 4, kind: input, shape index: {}]
  %s5 = inlined_call_operand.vmem [shape: f32[1,8], index: 5, kind: input, shape index: {}]
  %s6 = inlined_call_operand.vmem [shape: f32[1,8], index: 6, kind: input, shape index: {}]
  %s7 = inlined_call_operand.vmem [shape: f32[8,8], index: 7, kind: input, shape index: {}]
  %s8 = inlined_call_operand.vmem [shape: f32[1,8], index: 8, kind: input, shape index: {}]
  %s9 = inlined_call_operand.vmem [shape: f32[1,8], index: 9, kind: input, shape index: {}]
  %s10 = inlined_call_operand.vmem [shape: f32[8,16], index: 10, kind: input, shape index: {}]
  %s11 = inlined_call_operand.vmem [shape: bf16[9,8,8], index: 11, kind: input, shape index: {}]
  %s12 = inlined_call_operand.vmem [shape: f32[1,8], index: 12, kind: input, shape index: {}]
  %s13 = inlined_call_operand.vmem [shape: f32[1,8], index: 13, kind: input, shape index: {}]
  %s14 = inlined_call_operand.vmem [shape: f32[2,256,8], index: 14, kind: output, shape index: {}]
  %s15 = sld [smem:[#allocation0]]
  $region89: #{tpu_custom_call.1} parent=0
    _
  %s17 = ssub.s32 1, %s15
  %s18 = scalar_select 0, %s17, %s15
  loop: start=0, step=1, limit=4
  $region2: #{tpu_custom_call.1} parent=0 // loop_pre_header
    _
  $region3: #{tpu_custom_call.1} parent=0 // loop_header
    %s20 = sphi 0, %s24
    %p21 = scmp.ge.s32.totalorder %s20, 4
    %s30 = sphi 0, %s32
    %s33 = sphi 0, %s30
    %s34 = sphi 0, %s33
    %s50 = sphi 0, %s34
    %s54 = sphi 0, %s54
    %s56 = sphi 0, %s54
    %s57 = sphi 0, %s56
    %s71 = sphi 0, %s57
    %s75 = sphi 0, %s75
    %s77 = sphi 0, %s75
    %s78 = sphi 0, %s77
    %s92 = sphi 0, %s78
    %s96 = sphi 0, %s96
    %s98 = sphi 0, %s96
    %s99 = sphi 0, %s98
    %s113 = sphi 0, %s99
    %s117 = sphi 0, %s117
    %s119 = sphi 0, %s117
    %s120 = sphi 0, %s119
    %s134 = sphi 0, %s120
    %s138 = sphi 0, %s138
    %s140 = sphi 0, %s138
    %s141 = sphi 0, %s140
    %s155 = sphi 0, %s141
    %s159 = sphi 0, %s159
    %s161 = sphi 0, %s159
    %s162 = sphi 0, %s161
    %s176 = sphi 0, %s162
    %s180 = sphi 0, %s180
    %s182 = sphi 0, %s180
    %s183 = sphi 0, %s182
    %s197 = sphi 0, %s183
    %s201 = sphi 0, %s201
    %s203 = sphi 0, %s201
    %s204 = sphi 0, %s203
    %s218 = sphi 0, %s204
    %s222 = sphi 0, %s222
    %s224 = sphi 0, %s222
    %s225 = sphi 0, %s224
    %s239 = sphi 0, %s225
    %s243 = sphi 0, %s243
    %s245 = sphi 0, %s243
    %s246 = sphi 0, %s245
    %s260 = sphi 0, %s246
    %s264 = sphi 0, %s264
    %s266 = sphi 0, %s264
    %s267 = sphi 0, %s266
    %s281 = sphi 0, %s267
    %s285 = sphi 0, %s285
    %s287 = sphi 0, %s285
    %s288 = sphi 0, %s287
    %s302 = sphi 0, %s288
    %s306 = sphi 0, %s306
    %s308 = sphi 0, %s306
    %s309 = sphi 0, %s308
    %s323 = sphi 0, %s309
    %s329 = sphi 0, %s331
    %s332 = sphi 0, %s329
    %s333 = sphi 0, %s332
    %s349 = sphi 0, %s333
  $region4: #{tpu_custom_call.1} parent=0 // loop_header_branch
    %23 = sbr.rel (%p21) target = $region8
  $region5: #{tpu_custom_call.1} parent=0 // loop_body
    %s25 = ssub.s32 %s20, 1
    %s26 = ssub.s32 %s20, 2
    %s27 = sadd.s32 %s20, 1
    %s28 = ssub.s32 %s20, %s27
    %p29 = scmp.eq.s32.totalorder %s28, 0
    %s31 = sadd.s32 %s30, 1
    %s32 = scalar_select %p29, %s30, %s31
    %p35 = pneg %p29
    %p36 = scmp.eq.s32.totalorder %s20, 1
    %p37 = por %p35, %p36
    %p38 = scmp.ne.s32.totalorder %s30, %s33
    %p39 = scmp.eq.s32.totalorder %s20, 0
    %p40 = por %p38, %p39
    %p41 = scmp.ne.s32.totalorder %s30, %s33
    %p42 = scmp.eq.s32.totalorder %s25, 1
    %p43 = por %p41, %p42
    %p44 = scmp.ne.s32.totalorder %s33, %s34
    %p45 = scmp.eq.s32.totalorder %s25, 0
    %p46 = por %p44, %p45
    %p47 = scmp.ne.s32.totalorder %s33, %s34
    %p48 = scmp.eq.s32.totalorder %s26, 1
    %p49 = por %p47, %p48
    %p51 = scmp.ne.s32.totalorder %s34, %s50
    %p52 = scmp.eq.s32.totalorder %s26, 0
    %p53 = por %p51, %p52
    %s55 = sadd.s32 %s54, 1
    %p58 = scmp.eq.s32.totalorder %s20, 1
    %p59 = scmp.ne.s32.totalorder %s54, %s56
    %p60 = scmp.eq.s32.totalorder %s20, 0
    %p61 = por %p59, %p60
    %p62 = scmp.ne.s32.totalorder %s54, %s56
    %p63 = scmp.eq.s32.totalorder %s25, 1
    %p64 = por %p62, %p63
    %p65 = scmp.ne.s32.totalorder %s56, %s57
    %p66 = scmp.eq.s32.totalorder %s25, 0
    %p67 = por %p65, %p66
    %p68 = scmp.ne.s32.totalorder %s56, %s57
    %p69 = scmp.eq.s32.totalorder %s26, 1
    %p70 = por %p68, %p69
    %p72 = scmp.ne.s32.totalorder %s57, %s71
    %p73 = scmp.eq.s32.totalorder %s26, 0
    %p74 = por %p72, %p73
    %s76 = sadd.s32 %s75, 1
    %p79 = scmp.eq.s32.totalorder %s20, 1
    %p80 = scmp.ne.s32.totalorder %s75, %s77
    %p81 = scmp.eq.s32.totalorder %s20, 0
    %p82 = por %p80, %p81
    %p83 = scmp.ne.s32.totalorder %s75, %s77
    %p84 = scmp.eq.s32.totalorder %s25, 1
    %p85 = por %p83, %p84
    %p86 = scmp.ne.s32.totalorder %s77, %s78
    %p87 = scmp.eq.s32.totalorder %s25, 0
    %p88 = por %p86, %p87
    %p89 = scmp.ne.s32.totalorder %s77, %s78
    %p90 = scmp.eq.s32.totalorder %s26, 1
    %p91 = por %p89, %p90
    %p93 = scmp.ne.s32.totalorder %s78, %s92
    %p94 = scmp.eq.s32.totalorder %s26, 0
    %p95 = por %p93, %p94
    %s97 = sadd.s32 %s96, 1
    %p100 = scmp.eq.s32.totalorder %s20, 1
    %p101 = scmp.ne.s32.totalorder %s96, %s98
    %p102 = scmp.eq.s32.totalorder %s20, 0
    %p103 = por %p101, %p102
    %p104 = scmp.ne.s32.totalorder %s96, %s98
    %p105 = scmp.eq.s32.totalorder %s25, 1
    %p106 = por %p104, %p105
    %p107 = scmp.ne.s32.totalorder %s98, %s99
    %p108 = scmp.eq.s32.totalorder %s25, 0
    %p109 = por %p107, %p108
    %p110 = scmp.ne.s32.totalorder %s98, %s99
    %p111 = scmp.eq.s32.totalorder %s26, 1
    %p112 = por %p110, %p111
    %p114 = scmp.ne.s32.totalorder %s99, %s113
    %p115 = scmp.eq.s32.totalorder %s26, 0
    %p116 = por %p114, %p115
    %s118 = sadd.s32 %s117, 1
    %p121 = scmp.eq.s32.totalorder %s20, 1
    %p122 = scmp.ne.s32.totalorder %s117, %s119
    %p123 = scmp.eq.s32.totalorder %s20, 0
    %p124 = por %p122, %p123
    %p125 = scmp.ne.s32.totalorder %s117, %s119
    %p126 = scmp.eq.s32.totalorder %s25, 1
    %p127 = por %p125, %p126
    %p128 = scmp.ne.s32.totalorder %s119, %s120
    %p129 = scmp.eq.s32.totalorder %s25, 0
    %p130 = por %p128, %p129
    %p131 = scmp.ne.s32.totalorder %s119, %s120
    %p132 = scmp.eq.s32.totalorder %s26, 1
    %p133 = por %p131, %p132
    %p135 = scmp.ne.s32.totalorder %s120, %s134
    %p136 = scmp.eq.s32.totalorder %s26, 0
    %p137 = por %p135, %p136
    %s139 = sadd.s32 %s138, 1
    %p142 = scmp.eq.s32.totalorder %s20, 1
    %p143 = scmp.ne.s32.totalorder %s138, %s140
    %p144 = scmp.eq.s32.totalorder %s20, 0
    %p145 = por %p143, %p144
    %p146 = scmp.ne.s32.totalorder %s138, %s140
    %p147 = scmp.eq.s32.totalorder %s25, 1
    %p148 = por %p146, %p147
    %p149 = scmp.ne.s32.totalorder %s140, %s141
    %p150 = scmp.eq.s32.totalorder %s25, 0
    %p151 = por %p149, %p150
    %p152 = scmp.ne.s32.totalorder %s140, %s141
    %p153 = scmp.eq.s32.totalorder %s26, 1
    %p154 = por %p152, %p153
    %p156 = scmp.ne.s32.totalorder %s141, %s155
    %p157 = scmp.eq.s32.totalorder %s26, 0
    %p158 = por %p156, %p157
    %s160 = sadd.s32 %s159, 1
    %p163 = scmp.eq.s32.totalorder %s20, 1
    %p164 = scmp.ne.s32.totalorder %s159, %s161
    %p165 = scmp.eq.s32.totalorder %s20, 0
    %p166 = por %p164, %p165
    %p167 = scmp.ne.s32.totalorder %s159, %s161
    %p168 = scmp.eq.s32.totalorder %s25, 1
    %p169 = por %p167, %p168
    %p170 = scmp.ne.s32.totalorder %s161, %s162
    %p171 = scmp.eq.s32.totalorder %s25, 0
    %p172 = por %p170, %p171
    %p173 = scmp.ne.s32.totalorder %s161, %s162
    %p174 = scmp.eq.s32.totalorder %s26, 1
    %p175 = por %p173, %p174
    %p177 = scmp.ne.s32.totalorder %s162, %s176
    %p178 = scmp.eq.s32.totalorder %s26, 0
    %p179 = por %p177, %p178
    %s181 = sadd.s32 %s180, 1
    %p184 = scmp.eq.s32.totalorder %s20, 1
    %p185 = scmp.ne.s32.totalorder %s180, %s182
    %p186 = scmp.eq.s32.totalorder %s20, 0
    %p187 = por %p185, %p186
    %p188 = scmp.ne.s32.totalorder %s180, %s182
    %p189 = scmp.eq.s32.totalorder %s25, 1
    %p190 = por %p188, %p189
    %p191 = scmp.ne.s32.totalorder %s182, %s183
    %p192 = scmp.eq.s32.totalorder %s25, 0
    %p193 = por %p191, %p192
    %p194 = scmp.ne.s32.totalorder %s182, %s183
    %p195 = scmp.eq.s32.totalorder %s26, 1
    %p196 = por %p194, %p195
    %p198 = scmp.ne.s32.totalorder %s183, %s197
    %p199 = scmp.eq.s32.totalorder %s26, 0
    %p200 = por %p198, %p199
    %s202 = sadd.s32 %s201, 1
    %p205 = scmp.eq.s32.totalorder %s20, 1
    %p206 = scmp.ne.s32.totalorder %s201, %s203
    %p207 = scmp.eq.s32.totalorder %s20, 0
    %p208 = por %p206, %p207
    %p209 = scmp.ne.s32.totalorder %s201, %s203
    %p210 = scmp.eq.s32.totalorder %s25, 1
    %p211 = por %p209, %p210
    %p212 = scmp.ne.s32.totalorder %s203, %s204
    %p213 = scmp.eq.s32.totalorder %s25, 0
    %p214 = por %p212, %p213
    %p215 = scmp.ne.s32.totalorder %s203, %s204
    %p216 = scmp.eq.s32.totalorder %s26, 1
    %p217 = por %p215, %p216
    %p219 = scmp.ne.s32.totalorder %s204, %s218
    %p220 = scmp.eq.s32.totalorder %s26, 0
    %p221 = por %p219, %p220
    %s223 = sadd.s32 %s222, 1
    %p226 = scmp.eq.s32.totalorder %s20, 1
    %p227 = scmp.ne.s32.totalorder %s222, %s224
    %p228 = scmp.eq.s32.totalorder %s20, 0
    %p229 = por %p227, %p228
    %p230 = scmp.ne.s32.totalorder %s222, %s224
    %p231 = scmp.eq.s32.totalorder %s25, 1
    %p232 = por %p230, %p231
    %p233 = scmp.ne.s32.totalorder %s224, %s225
    %p234 = scmp.eq.s32.totalorder %s25, 0
    %p235 = por %p233, %p234
    %p236 = scmp.ne.s32.totalorder %s224, %s225
    %p237 = scmp.eq.s32.totalorder %s26, 1
    %p238 = por %p236, %p237
    %p240 = scmp.ne.s32.totalorder %s225, %s239
    %p241 = scmp.eq.s32.totalorder %s26, 0
    %p242 = por %p240, %p241
    %s244 = sadd.s32 %s243, 1
    %p247 = scmp.eq.s32.totalorder %s20, 1
    %p248 = scmp.ne.s32.totalorder %s243, %s245
    %p249 = scmp.eq.s32.totalorder %s20, 0
    %p250 = por %p248, %p249
    %p251 = scmp.ne.s32.totalorder %s243, %s245
    %p252 = scmp.eq.s32.totalorder %s25, 1
    %p253 = por %p251, %p252
    %p254 = scmp.ne.s32.totalorder %s245, %s246
    %p255 = scmp.eq.s32.totalorder %s25, 0
    %p256 = por %p254, %p255
    %p257 = scmp.ne.s32.totalorder %s245, %s246
    %p258 = scmp.eq.s32.totalorder %s26, 1
    %p259 = por %p257, %p258
    %p261 = scmp.ne.s32.totalorder %s246, %s260
    %p262 = scmp.eq.s32.totalorder %s26, 0
    %p263 = por %p261, %p262
    %s265 = sadd.s32 %s264, 1
    %p268 = scmp.eq.s32.totalorder %s20, 1
    %p269 = scmp.ne.s32.totalorder %s264, %s266
    %p270 = scmp.eq.s32.totalorder %s20, 0
    %p271 = por %p269, %p270
    %p272 = scmp.ne.s32.totalorder %s264, %s266
    %p273 = scmp.eq.s32.totalorder %s25, 1
    %p274 = por %p272, %p273
    %p275 = scmp.ne.s32.totalorder %s266, %s267
    %p276 = scmp.eq.s32.totalorder %s25, 0
    %p277 = por %p275, %p276
    %p278 = scmp.ne.s32.totalorder %s266, %s267
    %p279 = scmp.eq.s32.totalorder %s26, 1
    %p280 = por %p278, %p279
    %p282 = scmp.ne.s32.totalorder %s267, %s281
    %p283 = scmp.eq.s32.totalorder %s26, 0
    %p284 = por %p282, %p283
    %s286 = sadd.s32 %s285, 1
    %p289 = scmp.eq.s32.totalorder %s20, 1
    %p290 = scmp.ne.s32.totalorder %s285, %s287
    %p291 = scmp.eq.s32.totalorder %s20, 0
    %p292 = por %p290, %p291
    %p293 = scmp.ne.s32.totalorder %s285, %s287
    %p294 = scmp.eq.s32.totalorder %s25, 1
    %p295 = por %p293, %p294
    %p296 = scmp.ne.s32.totalorder %s287, %s288
    %p297 = scmp.eq.s32.totalorder %s25, 0
    %p298 = por %p296, %p297
    %p299 = scmp.ne.s32.totalorder %s287, %s288
    %p300 = scmp.eq.s32.totalorder %s26, 1
    %p301 = por %p299, %p300
    %p303 = scmp.ne.s32.totalorder %s288, %s302
    %p304 = scmp.eq.s32.totalorder %s26, 0
    %p305 = por %p303, %p304
    %s307 = sadd.s32 %s306, 1
    %p310 = scmp.eq.s32.totalorder %s20, 1
    %p311 = scmp.ne.s32.totalorder %s306, %s308
    %p312 = scmp.eq.s32.totalorder %s20, 0
    %p313 = por %p311, %p312
    %p314 = scmp.ne.s32.totalorder %s306, %s308
    %p315 = scmp.eq.s32.totalorder %s25, 1
    %p316 = por %p314, %p315
    %p317 = scmp.ne.s32.totalorder %s308, %s309
    %p318 = scmp.eq.s32.totalorder %s25, 0
    %p319 = por %p317, %p318
    %p320 = scmp.ne.s32.totalorder %s308, %s309
    %p321 = scmp.eq.s32.totalorder %s26, 1
    %p322 = por %p320, %p321
    %p324 = scmp.ne.s32.totalorder %s309, %s323
    %p325 = scmp.eq.s32.totalorder %s26, 0
    %p326 = por %p324, %p325
    %s327 = ssub.s32 %s20, %s27
    %p328 = scmp.eq.s32.totalorder %s327, 0
    %s330 = sadd.s32 %s329, 1
    %s331 = scalar_select %p328, %s329, %s330
    %p334 = pneg %p328
    %p335 = scmp.eq.s32.totalorder %s20, 1
    %p336 = por %p334, %p335
    %p337 = scmp.ne.s32.totalorder %s329, %s332
    %p338 = scmp.eq.s32.totalorder %s20, 0
    %p339 = por %p337, %p338
    %p340 = scmp.ne.s32.totalorder %s329, %s332
    %p341 = scmp.eq.s32.totalorder %s25, 1
    %p342 = por %p340, %p341
    %p343 = scmp.ne.s32.totalorder %s332, %s333
    %p344 = scmp.eq.s32.totalorder %s25, 0
    %p345 = por %p343, %p344
    %p346 = scmp.ne.s32.totalorder %s332, %s333
    %p347 = scmp.eq.s32.totalorder %s26, 1
    %p348 = por %p346, %p347
    %p350 = scmp.ne.s32.totalorder %s333, %s349
    %p351 = scmp.eq.s32.totalorder %s26, 0
    %p352 = por %p350, %p351
    %p353 = scmp.le.s32.totalorder 1, %s20
    %p354 = scmp.lt.s32.totalorder %s20, 3
    %p355 = pnand %p353, %p354
    %p356 = pneg %p355
    // Predicated region
    $region9: #{tpu_custom_call.1} parent=5 // pred_check
      _
    $region10: #{tpu_custom_call.1} parent=5 // pred_check_branch
      %358 = sbr.rel (%p355) target = $region12
    $region11: #{tpu_custom_call.1} parent=5 // pred_region
      %s359 = ssub.s32 %s20, 1
      // Predicated region
      $region13: #{tpu_custom_call.1} parent=11 // pred_check
        %p360 = pneg %p67
      $region14: #{tpu_custom_call.1} parent=11 // pred_check_branch
        %362 = sbr.rel (%p360) target = $region16
      $region15: #{tpu_custom_call.1} parent=11 // pred_region
        _
      $region16: #{tpu_custom_call.1} parent=11 // pred_fallthru
        _
      // Predicated region
      $region17: #{tpu_custom_call.1} parent=11 // pred_check
        %p363 = pneg %p88
      $region18: #{tpu_custom_call.1} parent=11 // pred_check_branch
        %365 = sbr.rel (%p363) target = $region20
      $region19: #{tpu_custom_call.1} parent=11 // pred_region
        _
      $region20: #{tpu_custom_call.1} parent=11 // pred_fallthru
        _
      // Predicated region
      $region21: #{tpu_custom_call.1} parent=11 // pred_check
        %p366 = pneg %p109
      $region22: #{tpu_custom_call.1} parent=11 // pred_check_branch
        %368 = sbr.rel (%p366) target = $region24
      $region23: #{tpu_custom_call.1} parent=11 // pred_region
        _
      $region24: #{tpu_custom_call.1} parent=11 // pred_fallthru
        _
      // Predicated region
      $region25: #{tpu_custom_call.1} parent=11 // pred_check
        %p369 = pneg %p130
      $region26: #{tpu_custom_call.1} parent=11 // pred_check_branch
        %371 = sbr.rel (%p369) target = $region28
      $region27: #{tpu_custom_call.1} parent=11 // pred_region
        _
      $region28: #{tpu_custom_call.1} parent=11 // pred_fallthru
        _
      // Predicated region
      $region29: #{tpu_custom_call.1} parent=11 // pred_check
        %p372 = pneg %p151
      $region30: #{tpu_custom_call.1} parent=11 // pred_check_branch
        %374 = sbr.rel (%p372) target = $region32
      $region31: #{tpu_custom_call.1} parent=11 // pred_region
        _
      $region32: #{tpu_custom_call.1} parent=11 // pred_fallthru
        _
      // Predicated region
      $region33: #{tpu_custom_call.1} parent=11 // pred_check
        %p375 = pneg %p172
      $region34: #{tpu_custom_call.1} parent=11 // pred_check_branch
        %377 = sbr.rel (%p375) target = $region36
      $region35: #{tpu_custom_call.1} parent=11 // pred_region
        _
      $region36: #{tpu_custom_call.1} parent=11 // pred_fallthru
        _
      // Predicated region
      $region37: #{tpu_custom_call.1} parent=11 // pred_check
        %p378 = pneg %p193
      $region38: #{tpu_custom_call.1} parent=11 // pred_check_branch
        %380 = sbr.rel (%p378) target = $region40
      $region39: #{tpu_custom_call.1} parent=11 // pred_region
        _
      $region40: #{tpu_custom_call.1} parent=11 // pred_fallthru
        _
      // Predicated region
      $region41: #{tpu_custom_call.1} parent=11 // pred_check
        %p381 = pneg %p214
      $region42: #{tpu_custom_call.1} parent=11 // pred_check_branch
        %383 = sbr.rel (%p381) target = $region44
      $region43: #{tpu_custom_call.1} parent=11 // pred_region
        _
      $region44: #{tpu_custom_call.1} parent=11 // pred_fallthru
        _
      // Predicated region
      $region45: #{tpu_custom_call.1} parent=11 // pred_check
        %p384 = pneg %p235
      $region46: #{tpu_custom_call.1} parent=11 // pred_check_branch
        %386 = sbr.rel (%p384) target = $region48
      $region47: #{tpu_custom_call.1} parent=11 // pred_region
        _
      $region48: #{tpu_custom_call.1} parent=11 // pred_fallthru
        _
      // Predicated region
      $region49: #{tpu_custom_call.1} parent=11 // pred_check
        %p387 = pneg %p256
      $region50: #{tpu_custom_call.1} parent=11 // pred_check_branch
        %389 = sbr.rel (%p387) target = $region52
      $region51: #{tpu_custom_call.1} parent=11 // pred_region
        _
      $region52: #{tpu_custom_call.1} parent=11 // pred_fallthru
        _
      // Predicated region
      $region53: #{tpu_custom_call.1} parent=11 // pred_check
        %p390 = pneg %p277
      $region54: #{tpu_custom_call.1} parent=11 // pred_check_branch
        %392 = sbr.rel (%p390) target = $region56
      $region55: #{tpu_custom_call.1} parent=11 // pred_region
        _
      $region56: #{tpu_custom_call.1} parent=11 // pred_fallthru
        _
      // Predicated region
      $region57: #{tpu_custom_call.1} parent=11 // pred_check
        %p393 = pneg %p298
      $region58: #{tpu_custom_call.1} parent=11 // pred_check_branch
        %395 = sbr.rel (%p393) target = $region60
      $region59: #{tpu_custom_call.1} parent=11 // pred_region
        _
      $region60: #{tpu_custom_call.1} parent=11 // pred_fallthru
        _
      // Predicated region
      $region61: #{tpu_custom_call.1} parent=11 // pred_check
        %p396 = pneg %p319
      $region62: #{tpu_custom_call.1} parent=11 // pred_check_branch
        %398 = sbr.rel (%p396) target = $region64
      $region63: #{tpu_custom_call.1} parent=11 // pred_region
        _
      $region64: #{tpu_custom_call.1} parent=11 // pred_fallthru
        _
    $region12: #{tpu_custom_call.1} parent=5 // pred_fallthru
      _
    %p399 = scmp.lt.s32.totalorder %s20, 2
    // Predicated region
    $region65: #{tpu_custom_call.1} parent=5 // pred_check
      %p400 = pneg %p399
    $region66: #{tpu_custom_call.1} parent=5 // pred_check_branch
      %402 = sbr.rel (%p400) target = $region68
    $region67: #{tpu_custom_call.1} parent=5 // pred_region
      // Predicated region
      $region69: #{tpu_custom_call.1} parent=67 // pred_check
        %p403 = pneg %p40
      $region70: #{tpu_custom_call.1} parent=67 // pred_check_branch
        %405 = sbr.rel (%p403) target = $region72
      $region71: #{tpu_custom_call.1} parent=67 // pred_region
        %p406 = scmp.lt.s32.totalorder %s20, 1
        %s407 = scalar_select %p406, %s20, 1
        %s408 = smul.addr %s407, 32
        %s409 = smul.addr %s408, 8
        %s410 = scalar_lea.vmem %s0, %s409
      $region72: #{tpu_custom_call.1} parent=67 // pred_fallthru
        _
    $region68: #{tpu_custom_call.1} parent=5 // pred_fallthru
      _
    %p411 = scmp.le.s32.totalorder 1, %s20
    %p412 = scmp.lt.s32.totalorder %s20, 3
    %p413 = pnand %p411, %p412
    %p414 = pneg %p413
    // Predicated region
    $region73: #{tpu_custom_call.1} parent=5 // pred_check
      _
    $region74: #{tpu_custom_call.1} parent=5 // pred_check_branch
      %416 = sbr.rel (%p413) target = $region76
    $region75: #{tpu_custom_call.1} parent=5 // pred_region
      %s417 = ssub.s32 %s20, 1
      %p418 = scmp.lt.s32.totalorder %s25, 1
      %s419 = scalar_select %p418, %s25, 1
      %s420 = smul.addr %s419, 32
      %s421 = smul.addr %s420, 8
      %s422 = scalar_lea.vmem %s0, %s421
      %p423 = pneg %p46
      %p424 = pneg %p43
      %p425 = pneg %p67
      %p426 = pneg %p64
      %p427 = pneg %p88
      %p428 = pneg %p85
      %p429 = pneg %p109
      %p430 = pneg %p106
      %p431 = pneg %p130
      %p432 = pneg %p127
      %p433 = pneg %p151
      %p434 = pneg %p148
      %p435 = pneg %p172
      %p436 = pneg %p169
      %p437 = pneg %p193
      %p438 = pneg %p190
      %p439 = pneg %p214
      %p440 = pneg %p211
      %p441 = pneg %p235
      %p442 = pneg %p232
      %p443 = pneg %p256
      %p444 = pneg %p253
      %p445 = pneg %p277
      %p446 = pneg %p274
      %p447 = pneg %p298
      %p448 = pneg %p295
      %p449 = pneg %p319
      %p450 = pneg %p316
      %p451 = pneg %p345
      %p452 = pneg %p342
      %p453 = scmp.lt.s32.totalorder %s25, 1
      %s454 = scalar_select %p453, %s25, 1
      %s455 = smul.addr %s454, 32
      %s456 = smul.addr %s455, 8
      %s457 = scalar_lea.vmem %s14, %s456
      %p458 = scmp.lt.s32.totalorder %s25, 1
      %s459 = scalar_select %p458, %s25, 1
      %s460 = smul.addr %s459, 32
      %s461 = smul.addr %s460, 8
      %s462 = scalar_lea.vmem %s0, %s461
      %p463 = scmp.lt.s32.totalorder %s25, 1
      %s464 = scalar_select %p463, %s25, 1
      %s465 = smul.addr %s464, 32
      %s466 = smul.addr %s465, 8
      %s467 = scalar_lea.vmem %s14, %s466
      %v469 = vld [vmem:[%s462] sm:$0xff]
      %v470 = vld [vmem:[%s462 + $0x8] sm:$0xff]
      %v471 = vld [vmem:[%s462 + $0x10] sm:$0xff]
      %v472 = vld [vmem:[%s462 + $0x18] sm:$0xff]
      %v473 = vld [vmem:[%s462 + $0x20] sm:$0xff]
      %v474 = vld [vmem:[%s462 + $0x28] sm:$0xff]
      %v475 = vld [vmem:[%s462 + $0x30] sm:$0xff]
      %v476 = vld [vmem:[%s462 + $0x38] sm:$0xff]
      %v477 = vld [vmem:[%s462 + $0x40] sm:$0xff]
      %v478 = vld [vmem:[%s462 + $0x48] sm:$0xff]
      %v479 = vld [vmem:[%s462 + $0x50] sm:$0xff]
      %v480 = vld [vmem:[%s462 + $0x58] sm:$0xff]
      %v481 = vld [vmem:[%s462 + $0x60] sm:$0xff]
      %v482 = vld [vmem:[%s462 + $0x68] sm:$0xff]
      %v483 = vld [vmem:[%s462 + $0x70] sm:$0xff]
      %v484 = vld [vmem:[%s462 + $0x78] sm:$0xff]
      %v485 = vld [vmem:[%s462 + $0x80] sm:$0xff]
      %v486 = vld [vmem:[%s462 + $0x88] sm:$0xff]
      %v487 = vld [vmem:[%s462 + $0x90] sm:$0xff]
      %v488 = vld [vmem:[%s462 + $0x98] sm:$0xff]
      %v489 = vld [vmem:[%s462 + $0xa0] sm:$0xff]
      %v490 = vld [vmem:[%s462 + $0xa8] sm:$0xff]
      %v491 = vld [vmem:[%s462 + $0xb0] sm:$0xff]
      %v492 = vld [vmem:[%s462 + $0xb8] sm:$0xff]
      %v493 = vld [vmem:[%s462 + $0xc0] sm:$0xff]
      %v494 = vld [vmem:[%s462 + $0xc8] sm:$0xff]
      %v495 = vld [vmem:[%s462 + $0xd0] sm:$0xff]
      %v496 = vld [vmem:[%s462 + $0xd8] sm:$0xff]
      %v497 = vld [vmem:[%s462 + $0xe0] sm:$0xff]
      %v498 = vld [vmem:[%s462 + $0xe8] sm:$0xff]
      %v499 = vld [vmem:[%s462 + $0xf0] sm:$0xff]
      %v500 = vld [vmem:[%s462 + $0xf8] sm:$0xff]
      %vm501 = vcmask 31744
      %502 = vst.msk [vmem:[#allocation2] sm:$0xff] %vm501, 0.0
      %503 = vst.msk [vmem:[#allocation2 + $0x8] sm:$0xff] %vm501, 0.0
      %vm504 = vcmask 27648
      %505 = vst.msk [vmem:[#allocation2 + $0x10] sm:$0xf] %vm504, 0.0
      %506 = vst.msk [vmem:[#allocation2 + $0x18] sm:$0xff] %vm501, 0.0
      %507 = vst.msk [vmem:[#allocation2 + $0x20] sm:$0xff] %vm501, 0.0
      %508 = vst.msk [vmem:[#allocation2 + $0x28] sm:$0xf] %vm504, 0.0
      %509 = vst.msk [vmem:[#allocation2 + $0x1e0] sm:$0xff] %vm501, 0.0
      %510 = vst.msk [vmem:[#allocation2 + $0x1e8] sm:$0xff] %vm501, 0.0
      %511 = vst.msk [vmem:[#allocation2 + $0x1f0] sm:$0xf] %vm504, 0.0
      %512 = vst.msk [vmem:[#allocation2 + $0x1f8] sm:$0xff] %vm501, 0.0
      %513 = vst.msk [vmem:[#allocation2 + $0x200] sm:$0xff] %vm501, 0.0
      %514 = vst.msk [vmem:[#allocation2 + $0x208] sm:$0xf] %vm504, 0.0
      %s515 = scalar_lea.vmem [#allocation2], 432
      %516 = vst.msk [vmem:[%s515] sm:$0xff] %vm501, 0.0
      %517 = vst.msk [vmem:[%s515 + $0x8] sm:$0xff] %vm501, 0.0
      %518 = vst.msk [vmem:[%s515 + $0x10] sm:$0xf] %vm504, 0.0
      %519 = vst.msk [vmem:[%s515 + $0x18] sm:$0xff] %vm501, 0.0
      %520 = vst.msk [vmem:[%s515 + $0x20] sm:$0xff] %vm501, 0.0
      %521 = vst.msk [vmem:[%s515 + $0x28] sm:$0xf] %vm504, 0.0
      %522 = vst.msk [vmem:[%s515 + $0x1e0] sm:$0xff] %vm501, 0.0
      %523 = vst.msk [vmem:[%s515 + $0x1e8] sm:$0xff] %vm501, 0.0
      %524 = vst.msk [vmem:[%s515 + $0x1f0] sm:$0xf] %vm504, 0.0
      %525 = vst.msk [vmem:[%s515 + $0x1f8] sm:$0xff] %vm501, 0.0
      %526 = vst.msk [vmem:[%s515 + $0x200] sm:$0xff] %vm501, 0.0
      %527 = vst.msk [vmem:[%s515 + $0x208] sm:$0xf] %vm504, 0.0
      %s528 = scalar_lea.vmem [#allocation2], 48
      %vm529 = vcmask 25600
      %530 = vst.msk [vmem:[%s528] sm:$0x3] %vm529, 0.0
      %531 = vst.msk [vmem:[%s528 + $0x18] sm:$0x3] %vm529, 0.0
      %532 = vst.msk [vmem:[%s528 + $0x30] sm:$0x3] %vm529, 0.0
      %533 = vst.msk [vmem:[%s528 + $0x48] sm:$0x3] %vm529, 0.0
      %534 = vst.msk [vmem:[%s528 + $0x60] sm:$0x3] %vm529, 0.0
      %535 = vst.msk [vmem:[%s528 + $0x78] sm:$0x3] %vm529, 0.0
      %536 = vst.msk [vmem:[%s528 + $0x90] sm:$0x3] %vm529, 0.0
      %537 = vst.msk [vmem:[%s528 + $0xa8] sm:$0x3] %vm529, 0.0
      %538 = vst.msk [vmem:[%s528 + $0xc0] sm:$0x3] %vm529, 0.0
      %539 = vst.msk [vmem:[%s528 + $0xd8] sm:$0x3] %vm529, 0.0
      %540 = vst.msk [vmem:[%s528 + $0xf0] sm:$0x3] %vm529, 0.0
      %541 = vst.msk [vmem:[%s528 + $0x108] sm:$0x3] %vm529, 0.0
      %542 = vst.msk [vmem:[%s528 + $0x120] sm:$0x3] %vm529, 0.0
      %543 = vst.msk [vmem:[%s528 + $0x138] sm:$0x3] %vm529, 0.0
      %544 = vst.msk [vmem:[%s528 + $0x150] sm:$0x3] %vm529, 0.0
      %545 = vst.msk [vmem:[%s528 + $0x168] sm:$0x3] %vm529, 0.0
      %546 = vst.msk [vmem:[%s528 + $0x1e0] sm:$0x3] %vm529, 0.0
      %547 = vst.msk [vmem:[%s528 + $0x1f8] sm:$0x3] %vm529, 0.0
      %548 = vst.msk [vmem:[%s528 + $0x210] sm:$0x3] %vm529, 0.0
      %549 = vst.msk [vmem:[%s528 + $0x228] sm:$0x3] %vm529, 0.0
      %550 = vst.msk [vmem:[%s528 + $0x240] sm:$0x3] %vm529, 0.0
      %551 = vst.msk [vmem:[%s528 + $0x258] sm:$0x3] %vm529, 0.0
      %552 = vst.msk [vmem:[%s528 + $0x270] sm:$0x3] %vm529, 0.0
      %553 = vst.msk [vmem:[%s528 + $0x288] sm:$0x3] %vm529, 0.0
      %554 = vst.msk [vmem:[%s528 + $0x2a0] sm:$0x3] %vm529, 0.0
      %555 = vst.msk [vmem:[%s528 + $0x2b8] sm:$0x3] %vm529, 0.0
      %556 = vst.msk [vmem:[%s528 + $0x2d0] sm:$0x3] %vm529, 0.0
      %557 = vst.msk [vmem:[%s528 + $0x2e8] sm:$0x3] %vm529, 0.0
      %558 = vst.msk [vmem:[%s528 + $0x300] sm:$0x3] %vm529, 0.0
      %559 = vst.msk [vmem:[%s528 + $0x318] sm:$0x3] %vm529, 0.0
      %560 = vst.msk [vmem:[%s528 + $0x330] sm:$0x3] %vm529, 0.0
      %561 = vst.msk [vmem:[%s528 + $0x348] sm:$0x3] %vm529, 0.0
      %562 = vst.msk [vmem:[%s528 + $0x12] sm:$0x3] %vm529, 0.0
      %563 = vst.msk [vmem:[%s528 + $0x2a] sm:$0x3] %vm529, 0.0
      %564 = vst.msk [vmem:[%s528 + $0x42] sm:$0x3] %vm529, 0.0
      %565 = vst.msk [vmem:[%s528 + $0x5a] sm:$0x3] %vm529, 0.0
      %566 = vst.msk [vmem:[%s528 + $0x72] sm:$0x3] %vm529, 0.0
      %567 = vst.msk [vmem:[%s528 + $0x8a] sm:$0x3] %vm529, 0.0
      %568 = vst.msk [vmem:[%s528 + $0xa2] sm:$0x3] %vm529, 0.0
      %569 = vst.msk [vmem:[%s528 + $0xba] sm:$0x3] %vm529, 0.0
      %570 = vst.msk [vmem:[%s528 + $0xd2] sm:$0x3] %vm529, 0.0
      %571 = vst.msk [vmem:[%s528 + $0xea] sm:$0x3] %vm529, 0.0
      %572 = vst.msk [vmem:[%s528 + $0x102] sm:$0x3] %vm529, 0.0
      %573 = vst.msk [vmem:[%s528 + $0x11a] sm:$0x3] %vm529, 0.0
      %574 = vst.msk [vmem:[%s528 + $0x132] sm:$0x3] %vm529, 0.0
      %575 = vst.msk [vmem:[%s528 + $0x14a] sm:$0x3] %vm529, 0.0
      %576 = vst.msk [vmem:[%s528 + $0x162] sm:$0x3] %vm529, 0.0
      %577 = vst.msk [vmem:[%s528 + $0x17a] sm:$0x3] %vm529, 0.0
      %578 = vst.msk [vmem:[%s528 + $0x1f2] sm:$0x3] %vm529, 0.0
      %579 = vst.msk [vmem:[%s528 + $0x20a] sm:$0x3] %vm529, 0.0
      %580 = vst.msk [vmem:[%s528 + $0x222] sm:$0x3] %vm529, 0.0
      %581 = vst.msk [vmem:[%s528 + $0x23a] sm:$0x3] %vm529, 0.0
      %582 = vst.msk [vmem:[%s528 + $0x252] sm:$0x3] %vm529, 0.0
      %583 = vst.msk [vmem:[%s528 + $0x26a] sm:$0x3] %vm529, 0.0
      %584 = vst.msk [vmem:[%s528 + $0x282] sm:$0x3] %vm529, 0.0
      %585 = vst.msk [vmem:[%s528 + $0x29a] sm:$0x3] %vm529, 0.0
      %586 = vst.msk [vmem:[%s528 + $0x2b2] sm:$0x3] %vm529, 0.0
      %587 = vst.msk [vmem:[%s528 + $0x2ca] sm:$0x3] %vm529, 0.0
      %588 = vst.msk [vmem:[%s528 + $0x2e2] sm:$0x3] %vm529, 0.0
      %589 = vst.msk [vmem:[%s528 + $0x2fa] sm:$0x3] %vm529, 0.0
      %590 = vst.msk [vmem:[%s528 + $0x312] sm:$0x3] %vm529, 0.0
      %591 = vst.msk [vmem:[%s528 + $0x32a] sm:$0x3] %vm529, 0.0
      %592 = vst.msk [vmem:[%s528 + $0x342] sm:$0x3] %vm529, 0.0
      %593 = vst.msk [vmem:[%s528 + $0x35a] sm:$0x3] %vm529, 0.0
      %594 = vst.msk [vmem:[%s528 + $0x2] sm:$0xff] %vm501, %v469
      %595 = vst.msk [vmem:[%s528 + $0xa] sm:$0xff] %vm501, %v470
      %596 = vst.msk [vmem:[%s528 + $0x1a] sm:$0xff] %vm501, %v471
      %597 = vst.msk [vmem:[%s528 + $0x22] sm:$0xff] %vm501, %v472
      %598 = vst.msk [vmem:[%s528 + $0x32] sm:$0xff] %vm501, %v473
      %599 = vst.msk [vmem:[%s528 + $0x3a] sm:$0xff] %vm501, %v474
      %600 = vst.msk [vmem:[%s528 + $0x4a] sm:$0xff] %vm501, %v475
      %601 = vst.msk [vmem:[%s528 + $0x52] sm:$0xff] %vm501, %v476
      %602 = vst.msk [vmem:[%s528 + $0x62] sm:$0xff] %vm501, %v477
      %603 = vst.msk [vmem:[%s528 + $0x6a] sm:$0xff] %vm501, %v478
      %604 = vst.msk [vmem:[%s528 + $0x7a] sm:$0xff] %vm501, %v479
      %605 = vst.msk [vmem:[%s528 + $0x82] sm:$0xff] %vm501, %v480
      %606 = vst.msk [vmem:[%s528 + $0x92] sm:$0xff] %vm501, %v481
      %607 = vst.msk [vmem:[%s528 + $0x9a] sm:$0xff] %vm501, %v482
      %608 = vst.msk [vmem:[%s528 + $0xaa] sm:$0xff] %vm501, %v483
      %609 = vst.msk [vmem:[%s528 + $0xb2] sm:$0xff] %vm501, %v484
      %610 = vst.msk [vmem:[%s528 + $0xc2] sm:$0xff] %vm501, %v485
      %611 = vst.msk [vmem:[%s528 + $0xca] sm:$0xff] %vm501, %v486
      %612 = vst.msk [vmem:[%s528 + $0xda] sm:$0xff] %vm501, %v487
      %613 = vst.msk [vmem:[%s528 + $0xe2] sm:$0xff] %vm501, %v488
      %614 = vst.msk [vmem:[%s528 + $0xf2] sm:$0xff] %vm501, %v489
      %615 = vst.msk [vmem:[%s528 + $0xfa] sm:$0xff] %vm501, %v490
      %616 = vst.msk [vmem:[%s528 + $0x10a] sm:$0xff] %vm501, %v491
      %617 = vst.msk [vmem:[%s528 + $0x112] sm:$0xff] %vm501, %v492
      %618 = vst.msk [vmem:[%s528 + $0x122] sm:$0xff] %vm501, %v493
      %619 = vst.msk [vmem:[%s528 + $0x12a] sm:$0xff] %vm501, %v494
      %620 = vst.msk [vmem:[%s528 + $0x13a] sm:$0xff] %vm501, %v495
      %621 = vst.msk [vmem:[%s528 + $0x142] sm:$0xff] %vm501, %v496
      %622 = vst.msk [vmem:[%s528 + $0x152] sm:$0xff] %vm501, %v497
      %623 = vst.msk [vmem:[%s528 + $0x15a] sm:$0xff] %vm501, %v498
      %624 = vst.msk [vmem:[%s528 + $0x16a] sm:$0xff] %vm501, %v499
      %625 = vst.msk [vmem:[%s528 + $0x172] sm:$0xff] %vm501, %v500
      %658 = vrot.lane.b32.xlu0 %v469, 124
      %v659 = vpop.permute.xlu0 %658
      %660 = vrot.lane.b32.xlu0 %v470, 124
      %v661 = vpop.permute.xlu0 %660
      %662 = vrot.lane.b32.xlu0 %v471, 124
      %v663 = vpop.permute.xlu0 %662
      %664 = vrot.lane.b32.xlu0 %v472, 124
      %v665 = vpop.permute.xlu0 %664
      %666 = vrot.lane.b32.xlu0 %v473, 124
      %v667 = vpop.permute.xlu0 %666
      %668 = vrot.lane.b32.xlu0 %v474, 124
      %v669 = vpop.permute.xlu0 %668
      %670 = vrot.lane.b32.xlu0 %v475, 124
      %v671 = vpop.permute.xlu0 %670
      %672 = vrot.lane.b32.xlu0 %v476, 124
      %v673 = vpop.permute.xlu0 %672
      %674 = vrot.lane.b32.xlu0 %v477, 124
      %v675 = vpop.permute.xlu0 %674
      %676 = vrot.lane.b32.xlu0 %v478, 124
      %v677 = vpop.permute.xlu0 %676
      %678 = vrot.lane.b32.xlu0 %v479, 124
      %v679 = vpop.permute.xlu0 %678
      %680 = vrot.lane.b32.xlu0 %v480, 124
      %v681 = vpop.permute.xlu0 %680
      %682 = vrot.lane.b32.xlu0 %v481, 124
      %v683 = vpop.permute.xlu0 %682
      %684 = vrot.lane.b32.xlu0 %v482, 124
      %v685 = vpop.permute.xlu0 %684
      %686 = vrot.lane.b32.xlu0 %v483, 124
      %v687 = vpop.permute.xlu0 %686
      %688 = vrot.lane.b32.xlu0 %v484, 124
      %v689 = vpop.permute.xlu0 %688
      %690 = vrot.lane.b32.xlu0 %v485, 124
      %v691 = vpop.permute.xlu0 %690
      %692 = vrot.lane.b32.xlu0 %v486, 124
      %v693 = vpop.permute.xlu0 %692
      %694 = vrot.lane.b32.xlu0 %v487, 124
      %v695 = vpop.permute.xlu0 %694
      %696 = vrot.lane.b32.xlu0 %v488, 124
      %v697 = vpop.permute.xlu0 %696
      %698 = vrot.lane.b32.xlu0 %v489, 124
      %v699 = vpop.permute.xlu0 %698
      %700 = vrot.lane.b32.xlu0 %v490, 124
      %v701 = vpop.permute.xlu0 %700
      %702 = vrot.lane.b32.xlu0 %v491, 124
      %v703 = vpop.permute.xlu0 %702
      %704 = vrot.lane.b32.xlu0 %v492, 124
      %v705 = vpop.permute.xlu0 %704
      %706 = vrot.lane.b32.xlu0 %v493, 124
      %v707 = vpop.permute.xlu0 %706
      %708 = vrot.lane.b32.xlu0 %v494, 124
      %v709 = vpop.permute.xlu0 %708
      %710 = vrot.lane.b32.xlu0 %v495, 124
      %v711 = vpop.permute.xlu0 %710
      %712 = vrot.lane.b32.xlu0 %v496, 124
      %v713 = vpop.permute.xlu0 %712
      %714 = vrot.lane.b32.xlu0 %v497, 124
      %v715 = vpop.permute.xlu0 %714
      %716 = vrot.lane.b32.xlu0 %v498, 124
      %v717 = vpop.permute.xlu0 %716
      %718 = vrot.lane.b32.xlu0 %v499, 124
      %v719 = vpop.permute.xlu0 %718
      %720 = vrot.lane.b32.xlu0 %v500, 124
      %v721 = vpop.permute.xlu0 %720
      %s754 = scalar_lea.vmem [#allocation2], 528
      %755 = vst.msk [vmem:[%s754 + $0x2] sm:$0xff] %vm501, %v659
      %756 = vst.msk [vmem:[%s754 + $0xa] sm:$0xff] %vm501, %v661
      %757 = vst.msk [vmem:[%s754 + $0x1a] sm:$0xff] %vm501, %v663
      %758 = vst.msk [vmem:[%s754 + $0x22] sm:$0xff] %vm501, %v665
      %759 = vst.msk [vmem:[%s754 + $0x32] sm:$0xff] %vm501, %v667
      %760 = vst.msk [vmem:[%s754 + $0x3a] sm:$0xff] %vm501, %v669
      %761 = vst.msk [vmem:[%s754 + $0x4a] sm:$0xff] %vm501, %v671
      %762 = vst.msk [vmem:[%s754 + $0x52] sm:$0xff] %vm501, %v673
      %763 = vst.msk [vmem:[%s754 + $0x62] sm:$0xff] %vm501, %v675
      %764 = vst.msk [vmem:[%s754 + $0x6a] sm:$0xff] %vm501, %v677
      %765 = vst.msk [vmem:[%s754 + $0x7a] sm:$0xff] %vm501, %v679
      %766 = vst.msk [vmem:[%s754 + $0x82] sm:$0xff] %vm501, %v681
      %767 = vst.msk [vmem:[%s754 + $0x92] sm:$0xff] %vm501, %v683
      %768 = vst.msk [vmem:[%s754 + $0x9a] sm:$0xff] %vm501, %v685
      %769 = vst.msk [vmem:[%s754 + $0xaa] sm:$0xff] %vm501, %v687
      %770 = vst.msk [vmem:[%s754 + $0xb2] sm:$0xff] %vm501, %v689
      %771 = vst.msk [vmem:[%s754 + $0xc2] sm:$0xff] %vm501, %v691
      %772 = vst.msk [vmem:[%s754 + $0xca] sm:$0xff] %vm501, %v693
      %773 = vst.msk [vmem:[%s754 + $0xda] sm:$0xff] %vm501, %v695
      %774 = vst.msk [vmem:[%s754 + $0xe2] sm:$0xff] %vm501, %v697
      %775 = vst.msk [vmem:[%s754 + $0xf2] sm:$0xff] %vm501, %v699
      %776 = vst.msk [vmem:[%s754 + $0xfa] sm:$0xff] %vm501, %v701
      %777 = vst.msk [vmem:[%s754 + $0x10a] sm:$0xff] %vm501, %v703
      %778 = vst.msk [vmem:[%s754 + $0x112] sm:$0xff] %vm501, %v705
      %779 = vst.msk [vmem:[%s754 + $0x122] sm:$0xff] %vm501, %v707
      %780 = vst.msk [vmem:[%s754 + $0x12a] sm:$0xff] %vm501, %v709
      %781 = vst.msk [vmem:[%s754 + $0x13a] sm:$0xff] %vm501, %v711
      %782 = vst.msk [vmem:[%s754 + $0x142] sm:$0xff] %vm501, %v713
      %783 = vst.msk [vmem:[%s754 + $0x152] sm:$0xff] %vm501, %v715
      %784 = vst.msk [vmem:[%s754 + $0x15a] sm:$0xff] %vm501, %v717
      %785 = vst.msk [vmem:[%s754 + $0x16a] sm:$0xff] %vm501, %v719
      %786 = vst.msk [vmem:[%s754 + $0x172] sm:$0xff] %vm501, %v721
      %s787 = scalar_lea.vmem [#allocation2], 24
      %v788 = vld [vmem:[%s787 + $0x1] sm:$0xff]
      %v789 = vld [vmem:[%s787 + $0x9] sm:$0xff]
      %v790 = vld [vmem:[%s787 + $0x19] sm:$0xff]
      %v791 = vld [vmem:[%s787 + $0x21] sm:$0xff]
      %v792 = vld [vmem:[%s787 + $0x31] sm:$0xff]
      %v793 = vld [vmem:[%s787 + $0x39] sm:$0xff]
      %v794 = vld [vmem:[%s787 + $0x49] sm:$0xff]
      %v795 = vld [vmem:[%s787 + $0x51] sm:$0xff]
      %v796 = vld [vmem:[%s787 + $0x61] sm:$0xff]
      %v797 = vld [vmem:[%s787 + $0x69] sm:$0xff]
      %v798 = vld [vmem:[%s787 + $0x79] sm:$0xff]
      %v799 = vld [vmem:[%s787 + $0x81] sm:$0xff]
      %v800 = vld [vmem:[%s787 + $0x91] sm:$0xff]
      %v801 = vld [vmem:[%s787 + $0x99] sm:$0xff]
      %v802 = vld [vmem:[%s787 + $0xa9] sm:$0xff]
      %v803 = vld [vmem:[%s787 + $0xb1] sm:$0xff]
      %v804 = vld [vmem:[%s787 + $0xc1] sm:$0xff]
      %v805 = vld [vmem:[%s787 + $0xc9] sm:$0xff]
      %v806 = vld [vmem:[%s787 + $0xd9] sm:$0xff]
      %v807 = vld [vmem:[%s787 + $0xe1] sm:$0xff]
      %v808 = vld [vmem:[%s787 + $0xf1] sm:$0xff]
      %v809 = vld [vmem:[%s787 + $0xf9] sm:$0xff]
      %v810 = vld [vmem:[%s787 + $0x109] sm:$0xff]
      %v811 = vld [vmem:[%s787 + $0x111] sm:$0xff]
      %v812 = vld [vmem:[%s787 + $0x121] sm:$0xff]
      %v813 = vld [vmem:[%s787 + $0x129] sm:$0xff]
      %v814 = vld [vmem:[%s787 + $0x139] sm:$0xff]
      %v815 = vld [vmem:[%s787 + $0x141] sm:$0xff]
      %v816 = vld [vmem:[%s787 + $0x151] sm:$0xff]
      %v817 = vld [vmem:[%s787 + $0x159] sm:$0xff]
      %v818 = vld [vmem:[%s787 + $0x169] sm:$0xff]
      %v819 = vld [vmem:[%s787 + $0x171] sm:$0xff]
      %v820 = vpack.c.bf16 %v789, %v788
      %v821 = vpack.c.bf16 %v791, %v790
      %v822 = vpack.c.bf16 %v793, %v792
      %v823 = vpack.c.bf16 %v795, %v794
      %v824 = vpack.c.bf16 %v797, %v796
      %v825 = vpack.c.bf16 %v799, %v798
      %v826 = vpack.c.bf16 %v801, %v800
      %v827 = vpack.c.bf16 %v803, %v802
      %v828 = vpack.c.bf16 %v805, %v804
      %v829 = vpack.c.bf16 %v807, %v806
      %v830 = vpack.c.bf16 %v809, %v808
      %v831 = vpack.c.bf16 %v811, %v810
      %v832 = vpack.c.bf16 %v813, %v812
      %v833 = vpack.c.bf16 %v815, %v814
      %v834 = vpack.c.bf16 %v817, %v816
      %v835 = vpack.c.bf16 %v819, %v818
      %s836 = scalar_lea.vmem [#allocation2], 480
      %v837 = vld [vmem:[%s836] sm:$0xff]
      %v838 = vld [vmem:[%s836 + $0x8] sm:$0xff]
      %v839 = vld [vmem:[%s836 + $0x18] sm:$0xff]
      %v840 = vld [vmem:[%s836 + $0x20] sm:$0xff]
      %v841 = vld [vmem:[%s836 + $0x30] sm:$0xff]
      %v842 = vld [vmem:[%s836 + $0x38] sm:$0xff]
      %v843 = vld [vmem:[%s836 + $0x48] sm:$0xff]
      %v844 = vld [vmem:[%s836 + $0x50] sm:$0xff]
      %v845 = vld [vmem:[%s836 + $0x60] sm:$0xff]
      %v846 = vld [vmem:[%s836 + $0x68] sm:$0xff]
      %v847 = vld [vmem:[%s836 + $0x78] sm:$0xff]
      %v848 = vld [vmem:[%s836 + $0x80] sm:$0xff]
      %v849 = vld [vmem:[%s836 + $0x90] sm:$0xff]
      %v850 = vld [vmem:[%s836 + $0x98] sm:$0xff]
      %v851 = vld [vmem:[%s836 + $0xa8] sm:$0xff]
      %v852 = vld [vmem:[%s836 + $0xb0] sm:$0xff]
      %v853 = vld [vmem:[%s836 + $0xc0] sm:$0xff]
      %v854 = vld [vmem:[%s836 + $0xc8] sm:$0xff]
      %v855 = vld [vmem:[%s836 + $0xd8] sm:$0xff]
      %v856 = vld [vmem:[%s836 + $0xe0] sm:$0xff]
      %v857 = vld [vmem:[%s836 + $0xf0] sm:$0xff]
      %v858 = vld [vmem:[%s836 + $0xf8] sm:$0xff]
      %v859 = vld [vmem:[%s836 + $0x108] sm:$0xff]
      %v860 = vld [vmem:[%s836 + $0x110] sm:$0xff]
      %v861 = vld [vmem:[%s836 + $0x120] sm:$0xff]
      %v862 = vld [vmem:[%s836 + $0x128] sm:$0xff]
      %v863 = vld [vmem:[%s836 + $0x138] sm:$0xff]
      %v864 = vld [vmem:[%s836 + $0x140] sm:$0xff]
      %v865 = vld [vmem:[%s836 + $0x150] sm:$0xff]
      %v866 = vld [vmem:[%s836 + $0x158] sm:$0xff]
      %v867 = vld [vmem:[%s836 + $0x168] sm:$0xff]
      %v868 = vld [vmem:[%s836 + $0x170] sm:$0xff]
      %v869 = vpack.c.bf16 %v838, %v837
      %v870 = vpack.c.bf16 %v840, %v839
      %v871 = vpack.c.bf16 %v842, %v841
      %v872 = vpack.c.bf16 %v844, %v843
      %v873 = vpack.c.bf16 %v846, %v845
      %v874 = vpack.c.bf16 %v848, %v847
      %v875 = vpack.c.bf16 %v850, %v849
      %v876 = vpack.c.bf16 %v852, %v851
      %v877 = vpack.c.bf16 %v854, %v853
      %v878 = vpack.c.bf16 %v856, %v855
      %v879 = vpack.c.bf16 %v858, %v857
      %v880 = vpack.c.bf16 %v860, %v859
      %v881 = vpack.c.bf16 %v862, %v861
      %v882 = vpack.c.bf16 %v864, %v863
      %v883 = vpack.c.bf16 %v866, %v865
      %v884 = vpack.c.bf16 %v868, %v867
      %v885 = vld [vmem:[%s787 + $0x2] sm:$0xff]
      %v886 = vld [vmem:[%s787 + $0xa] sm:$0xff]
      %v887 = vld [vmem:[%s787 + $0x1a] sm:$0xff]
      %v888 = vld [vmem:[%s787 + $0x22] sm:$0xff]
      %v889 = vld [vmem:[%s787 + $0x32] sm:$0xff]
      %v890 = vld [vmem:[%s787 + $0x3a] sm:$0xff]
      %v891 = vld [vmem:[%s787 + $0x4a] sm:$0xff]
      %v892 = vld [vmem:[%s787 + $0x52] sm:$0xff]
      %v893 = vld [vmem:[%s787 + $0x62] sm:$0xff]
      %v894 = vld [vmem:[%s787 + $0x6a] sm:$0xff]
      %v895 = vld [vmem:[%s787 + $0x7a] sm:$0xff]
      %v896 = vld [vmem:[%s787 + $0x82] sm:$0xff]
      %v897 = vld [vmem:[%s787 + $0x92] sm:$0xff]
      %v898 = vld [vmem:[%s787 + $0x9a] sm:$0xff]
      %v899 = vld [vmem:[%s787 + $0xaa] sm:$0xff]
      %v900 = vld [vmem:[%s787 + $0xb2] sm:$0xff]
      %v901 = vld [vmem:[%s787 + $0xc2] sm:$0xff]
      %v902 = vld [vmem:[%s787 + $0xca] sm:$0xff]
      %v903 = vld [vmem:[%s787 + $0xda] sm:$0xff]
      %v904 = vld [vmem:[%s787 + $0xe2] sm:$0xff]
      %v905 = vld [vmem:[%s787 + $0xf2] sm:$0xff]
      %v906 = vld [vmem:[%s787 + $0xfa] sm:$0xff]
      %v907 = vld [vmem:[%s787 + $0x10a] sm:$0xff]
      %v908 = vld [vmem:[%s787 + $0x112] sm:$0xff]
      %v909 = vld [vmem:[%s787 + $0x122] sm:$0xff]
      %v910 = vld [vmem:[%s787 + $0x12a] sm:$0xff]
      %v911 = vld [vmem:[%s787 + $0x13a] sm:$0xff]
      %v912 = vld [vmem:[%s787 + $0x142] sm:$0xff]
      %v913 = vld [vmem:[%s787 + $0x152] sm:$0xff]
      %v914 = vld [vmem:[%s787 + $0x15a] sm:$0xff]
      %v915 = vld [vmem:[%s787 + $0x16a] sm:$0xff]
      %v916 = vld [vmem:[%s787 + $0x172] sm:$0xff]
      %v917 = vpack.c.bf16 %v886, %v885
      %v918 = vpack.c.bf16 %v888, %v887
      %v919 = vpack.c.bf16 %v890, %v889
      %v920 = vpack.c.bf16 %v892, %v891
      %v921 = vpack.c.bf16 %v894, %v893
      %v922 = vpack.c.bf16 %v896, %v895
      %v923 = vpack.c.bf16 %v898, %v897
      %v924 = vpack.c.bf16 %v900, %v899
      %v925 = vpack.c.bf16 %v902, %v901
      %v926 = vpack.c.bf16 %v904, %v903
      %v927 = vpack.c.bf16 %v906, %v905
      %v928 = vpack.c.bf16 %v908, %v907
      %v929 = vpack.c.bf16 %v910, %v909
      %v930 = vpack.c.bf16 %v912, %v911
      %v931 = vpack.c.bf16 %v914, %v913
      %v932 = vpack.c.bf16 %v916, %v915
      %v933 = vld [vmem:[%s836 + $0x2] sm:$0xff]
      %v934 = vld [vmem:[%s836 + $0xa] sm:$0xff]
      %v935 = vld [vmem:[%s836 + $0x1a] sm:$0xff]
      %v936 = vld [vmem:[%s836 + $0x22] sm:$0xff]
      %v937 = vld [vmem:[%s836 + $0x32] sm:$0xff]
      %v938 = vld [vmem:[%s836 + $0x3a] sm:$0xff]
      %v939 = vld [vmem:[%s836 + $0x4a] sm:$0xff]
      %v940 = vld [vmem:[%s836 + $0x52] sm:$0xff]
      %v941 = vld [vmem:[%s836 + $0x62] sm:$0xff]
      %v942 = vld [vmem:[%s836 + $0x6a] sm:$0xff]
      %v943 = vld [vmem:[%s836 + $0x7a] sm:$0xff]
      %v944 = vld [vmem:[%s836 + $0x82] sm:$0xff]
      %v945 = vld [vmem:[%s836 + $0x92] sm:$0xff]
      %v946 = vld [vmem:[%s836 + $0x9a] sm:$0xff]
      %v947 = vld [vmem:[%s836 + $0xaa] sm:$0xff]
      %v948 = vld [vmem:[%s836 + $0xb2] sm:$0xff]
      %v949 = vld [vmem:[%s836 + $0xc2] sm:$0xff]
      %v950 = vld [vmem:[%s836 + $0xca] sm:$0xff]
      %v951 = vld [vmem:[%s836 + $0xda] sm:$0xff]
      %v952 = vld [vmem:[%s836 + $0xe2] sm:$0xff]
      %v953 = vld [vmem:[%s836 + $0xf2] sm:$0xff]
      %v954 = vld [vmem:[%s836 + $0xfa] sm:$0xff]
      %v955 = vld [vmem:[%s836 + $0x10a] sm:$0xff]
      %v956 = vld [vmem:[%s836 + $0x112] sm:$0xff]
      %v957 = vld [vmem:[%s836 + $0x122] sm:$0xff]
      %v958 = vld [vmem:[%s836 + $0x12a] sm:$0xff]
      %v959 = vld [vmem:[%s836 + $0x13a] sm:$0xff]
      %v960 = vld [vmem:[%s836 + $0x142] sm:$0xff]
      %v961 = vld [vmem:[%s836 + $0x152] sm:$0xff]
      %v962 = vld [vmem:[%s836 + $0x15a] sm:$0xff]
      %v963 = vld [vmem:[%s836 + $0x16a] sm:$0xff]
      %v964 = vld [vmem:[%s836 + $0x172] sm:$0xff]
      %v965 = vpack.c.bf16 %v934, %v933
      %v966 = vpack.c.bf16 %v936, %v935
      %v967 = vpack.c.bf16 %v938, %v937
      %v968 = vpack.c.bf16 %v940, %v939
      %v969 = vpack.c.bf16 %v942, %v941
      %v970 = vpack.c.bf16 %v944, %v943
      %v971 = vpack.c.bf16 %v946, %v945
      %v972 = vpack.c.bf16 %v948, %v947
      %v973 = vpack.c.bf16 %v950, %v949
      %v974 = vpack.c.bf16 %v952, %v951
      %v975 = vpack.c.bf16 %v954, %v953
      %v976 = vpack.c.bf16 %v956, %v955
      %v977 = vpack.c.bf16 %v958, %v957
      %v978 = vpack.c.bf16 %v960, %v959
      %v979 = vpack.c.bf16 %v962, %v961
      %v980 = vpack.c.bf16 %v964, %v963
      %v981 = vld [vmem:[%s787 + $0x3] sm:$0xff]
      %v982 = vld [vmem:[%s787 + $0xb] sm:$0xff]
      %v983 = vld [vmem:[%s787 + $0x1b] sm:$0xff]
      %v984 = vld [vmem:[%s787 + $0x23] sm:$0xff]
      %v985 = vld [vmem:[%s787 + $0x33] sm:$0xff]
      %v986 = vld [vmem:[%s787 + $0x3b] sm:$0xff]
      %v987 = vld [vmem:[%s787 + $0x4b] sm:$0xff]
      %v988 = vld [vmem:[%s787 + $0x53] sm:$0xff]
      %v989 = vld [vmem:[%s787 + $0x63] sm:$0xff]
      %v990 = vld [vmem:[%s787 + $0x6b] sm:$0xff]
      %v991 = vld [vmem:[%s787 + $0x7b] sm:$0xff]
      %v992 = vld [vmem:[%s787 + $0x83] sm:$0xff]
      %v993 = vld [vmem:[%s787 + $0x93] sm:$0xff]
      %v994 = vld [vmem:[%s787 + $0x9b] sm:$0xff]
      %v995 = vld [vmem:[%s787 + $0xab] sm:$0xff]
      %v996 = vld [vmem:[%s787 + $0xb3] sm:$0xff]
      %v997 = vld [vmem:[%s787 + $0xc3] sm:$0xff]
      %v998 = vld [vmem:[%s787 + $0xcb] sm:$0xff]
      %v999 = vld [vmem:[%s787 + $0xdb] sm:$0xff]
      %v1000 = vld [vmem:[%s787 + $0xe3] sm:$0xff]
      %v1001 = vld [vmem:[%s787 + $0xf3] sm:$0xff]
      %v1002 = vld [vmem:[%s787 + $0xfb] sm:$0xff]
      %v1003 = vld [vmem:[%s787 + $0x10b] sm:$0xff]
      %v1004 = vld [vmem:[%s787 + $0x113] sm:$0xff]
      %v1005 = vld [vmem:[%s787 + $0x123] sm:$0xff]
      %v1006 = vld [vmem:[%s787 + $0x12b] sm:$0xff]
      %v1007 = vld [vmem:[%s787 + $0x13b] sm:$0xff]
      %v1008 = vld [vmem:[%s787 + $0x143] sm:$0xff]
      %v1009 = vld [vmem:[%s787 + $0x153] sm:$0xff]
      %v1010 = vld [vmem:[%s787 + $0x15b] sm:$0xff]
      %v1011 = vld [vmem:[%s787 + $0x16b] sm:$0xff]
      %v1012 = vld [vmem:[%s787 + $0x173] sm:$0xff]
      %v1013 = vpack.c.bf16 %v982, %v981
      %v1014 = vpack.c.bf16 %v984, %v983
      %v1015 = vpack.c.bf16 %v986, %v985
      %v1016 = vpack.c.bf16 %v988, %v987
      %v1017 = vpack.c.bf16 %v990, %v989
      %v1018 = vpack.c.bf16 %v992, %v991
      %v1019 = vpack.c.bf16 %v994, %v993
      %v1020 = vpack.c.bf16 %v996, %v995
      %v1021 = vpack.c.bf16 %v998, %v997
      %v1022 = vpack.c.bf16 %v1000, %v999
      %v1023 = vpack.c.bf16 %v1002, %v1001
      %v1024 = vpack.c.bf16 %v1004, %v1003
      %v1025 = vpack.c.bf16 %v1006, %v1005
      %v1026 = vpack.c.bf16 %v1008, %v1007
      %v1027 = vpack.c.bf16 %v1010, %v1009
      %v1028 = vpack.c.bf16 %v1012, %v1011
      %v1029 = vld [vmem:[%s836 + $0x4] sm:$0xff]
      %v1030 = vld [vmem:[%s836 + $0xc] sm:$0xff]
      %v1031 = vld [vmem:[%s836 + $0x1c] sm:$0xff]
      %v1032 = vld [vmem:[%s836 + $0x24] sm:$0xff]
      %v1033 = vld [vmem:[%s836 + $0x34] sm:$0xff]
      %v1034 = vld [vmem:[%s836 + $0x3c] sm:$0xff]
      %v1035 = vld [vmem:[%s836 + $0x4c] sm:$0xff]
      %v1036 = vld [vmem:[%s836 + $0x54] sm:$0xff]
      %v1037 = vld [vmem:[%s836 + $0x64] sm:$0xff]
      %v1038 = vld [vmem:[%s836 + $0x6c] sm:$0xff]
      %v1039 = vld [vmem:[%s836 + $0x7c] sm:$0xff]
      %v1040 = vld [vmem:[%s836 + $0x84] sm:$0xff]
      %v1041 = vld [vmem:[%s836 + $0x94] sm:$0xff]
      %v1042 = vld [vmem:[%s836 + $0x9c] sm:$0xff]
      %v1043 = vld [vmem:[%s836 + $0xac] sm:$0xff]
      %v1044 = vld [vmem:[%s836 + $0xb4] sm:$0xff]
      %v1045 = vld [vmem:[%s836 + $0xc4] sm:$0xff]
      %v1046 = vld [vmem:[%s836 + $0xcc] sm:$0xff]
      %v1047 = vld [vmem:[%s836 + $0xdc] sm:$0xff]
      %v1048 = vld [vmem:[%s836 + $0xe4] sm:$0xff]
      %v1049 = vld [vmem:[%s836 + $0xf4] sm:$0xff]
      %v1050 = vld [vmem:[%s836 + $0xfc] sm:$0xff]
      %v1051 = vld [vmem:[%s836 + $0x10c] sm:$0xff]
      %v1052 = vld [vmem:[%s836 + $0x114] sm:$0xff]
      %v1053 = vld [vmem:[%s836 + $0x124] sm:$0xff]
      %v1054 = vld [vmem:[%s836 + $0x12c] sm:$0xff]
      %v1055 = vld [vmem:[%s836 + $0x13c] sm:$0xff]
      %v1056 = vld [vmem:[%s836 + $0x144] sm:$0xff]
      %v1057 = vld [vmem:[%s836 + $0x154] sm:$0xff]
      %v1058 = vld [vmem:[%s836 + $0x15c] sm:$0xff]
      %v1059 = vld [vmem:[%s836 + $0x16c] sm:$0xff]
      %v1060 = vld [vmem:[%s836 + $0x174] sm:$0xff]
      %v1061 = vpack.c.bf16 %v1030, %v1029
      %v1062 = vpack.c.bf16 %v1032, %v1031
      %v1063 = vpack.c.bf16 %v1034, %v1033
      %v1064 = vpack.c.bf16 %v1036, %v1035
      %v1065 = vpack.c.bf16 %v1038, %v1037
      %v1066 = vpack.c.bf16 %v1040, %v1039
      %v1067 = vpack.c.bf16 %v1042, %v1041
      %v1068 = vpack.c.bf16 %v1044, %v1043
      %v1069 = vpack.c.bf16 %v1046, %v1045
      %v1070 = vpack.c.bf16 %v1048, %v1047
      %v1071 = vpack.c.bf16 %v1050, %v1049
      %v1072 = vpack.c.bf16 %v1052, %v1051
      %v1073 = vpack.c.bf16 %v1054, %v1053
      %v1074 = vpack.c.bf16 %v1056, %v1055
      %v1075 = vpack.c.bf16 %v1058, %v1057
      %v1076 = vpack.c.bf16 %v1060, %v1059
      %v1077 = vld [vmem:[%s528 + $0x1] sm:$0xff]
      %v1078 = vld [vmem:[%s528 + $0x9] sm:$0xff]
      %v1079 = vld [vmem:[%s528 + $0x19] sm:$0xff]
      %v1080 = vld [vmem:[%s528 + $0x21] sm:$0xff]
      %v1081 = vld [vmem:[%s528 + $0x31] sm:$0xff]
      %v1082 = vld [vmem:[%s528 + $0x39] sm:$0xff]
      %v1083 = vld [vmem:[%s528 + $0x49] sm:$0xff]
      %v1084 = vld [vmem:[%s528 + $0x51] sm:$0xff]
      %v1085 = vld [vmem:[%s528 + $0x61] sm:$0xff]
      %v1086 = vld [vmem:[%s528 + $0x69] sm:$0xff]
      %v1087 = vld [vmem:[%s528 + $0x79] sm:$0xff]
      %v1088 = vld [vmem:[%s528 + $0x81] sm:$0xff]
      %v1089 = vld [vmem:[%s528 + $0x91] sm:$0xff]
      %v1090 = vld [vmem:[%s528 + $0x99] sm:$0xff]
      %v1091 = vld [vmem:[%s528 + $0xa9] sm:$0xff]
      %v1092 = vld [vmem:[%s528 + $0xb1] sm:$0xff]
      %v1093 = vld [vmem:[%s528 + $0xc1] sm:$0xff]
      %v1094 = vld [vmem:[%s528 + $0xc9] sm:$0xff]
      %v1095 = vld [vmem:[%s528 + $0xd9] sm:$0xff]
      %v1096 = vld [vmem:[%s528 + $0xe1] sm:$0xff]
      %v1097 = vld [vmem:[%s528 + $0xf1] sm:$0xff]
      %v1098 = vld [vmem:[%s528 + $0xf9] sm:$0xff]
      %v1099 = vld [vmem:[%s528 + $0x109] sm:$0xff]
      %v1100 = vld [vmem:[%s528 + $0x111] sm:$0xff]
      %v1101 = vld [vmem:[%s528 + $0x121] sm:$0xff]
      %v1102 = vld [vmem:[%s528 + $0x129] sm:$0xff]
      %v1103 = vld [vmem:[%s528 + $0x139] sm:$0xff]
      %v1104 = vld [vmem:[%s528 + $0x141] sm:$0xff]
      %v1105 = vld [vmem:[%s528 + $0x151] sm:$0xff]
      %v1106 = vld [vmem:[%s528 + $0x159] sm:$0xff]
      %v1107 = vld [vmem:[%s528 + $0x169] sm:$0xff]
      %v1108 = vld [vmem:[%s528 + $0x171] sm:$0xff]
      %v1109 = vpack.c.bf16 %v1078, %v1077
      %v1110 = vpack.c.bf16 %v1080, %v1079
      %v1111 = vpack.c.bf16 %v1082, %v1081
      %v1112 = vpack.c.bf16 %v1084, %v1083
      %v1113 = vpack.c.bf16 %v1086, %v1085
      %v1114 = vpack.c.bf16 %v1088, %v1087
      %v1115 = vpack.c.bf16 %v1090, %v1089
      %v1116 = vpack.c.bf16 %v1092, %v1091
      %v1117 = vpack.c.bf16 %v1094, %v1093
      %v1118 = vpack.c.bf16 %v1096, %v1095
      %v1119 = vpack.c.bf16 %v1098, %v1097
      %v1120 = vpack.c.bf16 %v1100, %v1099
      %v1121 = vpack.c.bf16 %v1102, %v1101
      %v1122 = vpack.c.bf16 %v1104, %v1103
      %v1123 = vpack.c.bf16 %v1106, %v1105
      %v1124 = vpack.c.bf16 %v1108, %v1107
      %v1125 = vld [vmem:[%s754] sm:$0xff]
      %v1126 = vld [vmem:[%s754 + $0x8] sm:$0xff]
      %v1127 = vld [vmem:[%s754 + $0x18] sm:$0xff]
      %v1128 = vld [vmem:[%s754 + $0x20] sm:$0xff]
      %v1129 = vld [vmem:[%s754 + $0x30] sm:$0xff]
      %v1130 = vld [vmem:[%s754 + $0x38] sm:$0xff]
      %v1131 = vld [vmem:[%s754 + $0x48] sm:$0xff]
      %v1132 = vld [vmem:[%s754 + $0x50] sm:$0xff]
      %v1133 = vld [vmem:[%s754 + $0x60] sm:$0xff]
      %v1134 = vld [vmem:[%s754 + $0x68] sm:$0xff]
      %v1135 = vld [vmem:[%s754 + $0x78] sm:$0xff]
      %v1136 = vld [vmem:[%s754 + $0x80] sm:$0xff]
      %v1137 = vld [vmem:[%s754 + $0x90] sm:$0xff]
      %v1138 = vld [vmem:[%s754 + $0x98] sm:$0xff]
      %v1139 = vld [vmem:[%s754 + $0xa8] sm:$0xff]
      %v1140 = vld [vmem:[%s754 + $0xb0] sm:$0xff]
      %v1141 = vld [vmem:[%s754 + $0xc0] sm:$0xff]
      %v1142 = vld [vmem:[%s754 + $0xc8] sm:$0xff]
      %v1143 = vld [vmem:[%s754 + $0xd8] sm:$0xff]
      %v1144 = vld [vmem:[%s754 + $0xe0] sm:$0xff]
      %v1145 = vld [vmem:[%s754 + $0xf0] sm:$0xff]
      %v1146 = vld [vmem:[%s754 + $0xf8] sm:$0xff]
      %v1147 = vld [vmem:[%s754 + $0x108] sm:$0xff]
      %v1148 = vld [vmem:[%s754 + $0x110] sm:$0xff]
      %v1149 = vld [vmem:[%s754 + $0x120] sm:$0xff]
      %v1150 = vld [vmem:[%s754 + $0x128] sm:$0xff]
      %v1151 = vld [vmem:[%s754 + $0x138] sm:$0xff]
      %v1152 = vld [vmem:[%s754 + $0x140] sm:$0xff]
      %v1153 = vld [vmem:[%s754 + $0x150] sm:$0xff]
      %v1154 = vld [vmem:[%s754 + $0x158] sm:$0xff]
      %v1155 = vld [vmem:[%s754 + $0x168] sm:$0xff]
      %v1156 = vld [vmem:[%s754 + $0x170] sm:$0xff]
      %v1157 = vpack.c.bf16 %v1126, %v1125
      %v1158 = vpack.c.bf16 %v1128, %v1127
      %v1159 = vpack.c.bf16 %v1130, %v1129
      %v1160 = vpack.c.bf16 %v1132, %v1131
      %v1161 = vpack.c.bf16 %v1134, %v1133
      %v1162 = vpack.c.bf16 %v1136, %v1135
      %v1163 = vpack.c.bf16 %v1138, %v1137
      %v1164 = vpack.c.bf16 %v1140, %v1139
      %v1165 = vpack.c.bf16 %v1142, %v1141
      %v1166 = vpack.c.bf16 %v1144, %v1143
      %v1167 = vpack.c.bf16 %v1146, %v1145
      %v1168 = vpack.c.bf16 %v1148, %v1147
      %v1169 = vpack.c.bf16 %v1150, %v1149
      %v1170 = vpack.c.bf16 %v1152, %v1151
      %v1171 = vpack.c.bf16 %v1154, %v1153
      %v1172 = vpack.c.bf16 %v1156, %v1155
      %v1173 = vld [vmem:[%s528 + $0x2] sm:$0xff]
      %v1174 = vld [vmem:[%s528 + $0xa] sm:$0xff]
      %v1175 = vld [vmem:[%s528 + $0x1a] sm:$0xff]
      %v1176 = vld [vmem:[%s528 + $0x22] sm:$0xff]
      %v1177 = vld [vmem:[%s528 + $0x32] sm:$0xff]
      %v1178 = vld [vmem:[%s528 + $0x3a] sm:$0xff]
      %v1179 = vld [vmem:[%s528 + $0x4a] sm:$0xff]
      %v1180 = vld [vmem:[%s528 + $0x52] sm:$0xff]
      %v1181 = vld [vmem:[%s528 + $0x62] sm:$0xff]
      %v1182 = vld [vmem:[%s528 + $0x6a] sm:$0xff]
      %v1183 = vld [vmem:[%s528 + $0x7a] sm:$0xff]
      %v1184 = vld [vmem:[%s528 + $0x82] sm:$0xff]
      %v1185 = vld [vmem:[%s528 + $0x92] sm:$0xff]
      %v1186 = vld [vmem:[%s528 + $0x9a] sm:$0xff]
      %v1187 = vld [vmem:[%s528 + $0xaa] sm:$0xff]
      %v1188 = vld [vmem:[%s528 + $0xb2] sm:$0xff]
      %v1189 = vld [vmem:[%s528 + $0xc2] sm:$0xff]
      %v1190 = vld [vmem:[%s528 + $0xca] sm:$0xff]
      %v1191 = vld [vmem:[%s528 + $0xda] sm:$0xff]
      %v1192 = vld [vmem:[%s528 + $0xe2] sm:$0xff]
      %v1193 = vld [vmem:[%s528 + $0xf2] sm:$0xff]
      %v1194 = vld [vmem:[%s528 + $0xfa] sm:$0xff]
      %v1195 = vld [vmem:[%s528 + $0x10a] sm:$0xff]
      %v1196 = vld [vmem:[%s528 + $0x112] sm:$0xff]
      %v1197 = vld [vmem:[%s528 + $0x122] sm:$0xff]
      %v1198 = vld [vmem:[%s528 + $0x12a] sm:$0xff]
      %v1199 = vld [vmem:[%s528 + $0x13a] sm:$0xff]
      %v1200 = vld [vmem:[%s528 + $0x142] sm:$0xff]
      %v1201 = vld [vmem:[%s528 + $0x152] sm:$0xff]
      %v1202 = vld [vmem:[%s528 + $0x15a] sm:$0xff]
      %v1203 = vld [vmem:[%s528 + $0x16a] sm:$0xff]
      %v1204 = vld [vmem:[%s528 + $0x172] sm:$0xff]
      %v1205 = vpack.c.bf16 %v1174, %v1173
      %v1206 = vpack.c.bf16 %v1176, %v1175
      %v1207 = vpack.c.bf16 %v1178, %v1177
      %v1208 = vpack.c.bf16 %v1180, %v1179
      %v1209 = vpack.c.bf16 %v1182, %v1181
      %v1210 = vpack.c.bf16 %v1184, %v1183
      %v1211 = vpack.c.bf16 %v1186, %v1185
      %v1212 = vpack.c.bf16 %v1188, %v1187
      %v1213 = vpack.c.bf16 %v1190, %v1189
      %v1214 = vpack.c.bf16 %v1192, %v1191
      %v1215 = vpack.c.bf16 %v1194, %v1193
      %v1216 = vpack.c.bf16 %v1196, %v1195
      %v1217 = vpack.c.bf16 %v1198, %v1197
      %v1218 = vpack.c.bf16 %v1200, %v1199
      %v1219 = vpack.c.bf16 %v1202, %v1201
      %v1220 = vpack.c.bf16 %v1204, %v1203
      %v1221 = vld [vmem:[%s754 + $0x2] sm:$0xff]
      %v1222 = vld [vmem:[%s754 + $0xa] sm:$0xff]
      %v1223 = vld [vmem:[%s754 + $0x1a] sm:$0xff]
      %v1224 = vld [vmem:[%s754 + $0x22] sm:$0xff]
      %v1225 = vld [vmem:[%s754 + $0x32] sm:$0xff]
      %v1226 = vld [vmem:[%s754 + $0x3a] sm:$0xff]
      %v1227 = vld [vmem:[%s754 + $0x4a] sm:$0xff]
      %v1228 = vld [vmem:[%s754 + $0x52] sm:$0xff]
      %v1229 = vld [vmem:[%s754 + $0x62] sm:$0xff]
      %v1230 = vld [vmem:[%s754 + $0x6a] sm:$0xff]
      %v1231 = vld [vmem:[%s754 + $0x7a] sm:$0xff]
      %v1232 = vld [vmem:[%s754 + $0x82] sm:$0xff]
      %v1233 = vld [vmem:[%s754 + $0x92] sm:$0xff]
      %v1234 = vld [vmem:[%s754 + $0x9a] sm:$0xff]
      %v1235 = vld [vmem:[%s754 + $0xaa] sm:$0xff]
      %v1236 = vld [vmem:[%s754 + $0xb2] sm:$0xff]
      %v1237 = vld [vmem:[%s754 + $0xc2] sm:$0xff]
      %v1238 = vld [vmem:[%s754 + $0xca] sm:$0xff]
      %v1239 = vld [vmem:[%s754 + $0xda] sm:$0xff]
      %v1240 = vld [vmem:[%s754 + $0xe2] sm:$0xff]
      %v1241 = vld [vmem:[%s754 + $0xf2] sm:$0xff]
      %v1242 = vld [vmem:[%s754 + $0xfa] sm:$0xff]
      %v1243 = vld [vmem:[%s754 + $0x10a] sm:$0xff]
      %v1244 = vld [vmem:[%s754 + $0x112] sm:$0xff]
      %v1245 = vld [vmem:[%s754 + $0x122] sm:$0xff]
      %v1246 = vld [vmem:[%s754 + $0x12a] sm:$0xff]
      %v1247 = vld [vmem:[%s754 + $0x13a] sm:$0xff]
      %v1248 = vld [vmem:[%s754 + $0x142] sm:$0xff]
      %v1249 = vld [vmem:[%s754 + $0x152] sm:$0xff]
      %v1250 = vld [vmem:[%s754 + $0x15a] sm:$0xff]
      %v1251 = vld [vmem:[%s754 + $0x16a] sm:$0xff]
      %v1252 = vld [vmem:[%s754 + $0x172] sm:$0xff]
      %v1253 = vpack.c.bf16 %v1222, %v1221
      %v1254 = vpack.c.bf16 %v1224, %v1223
      %v1255 = vpack.c.bf16 %v1226, %v1225
      %v1256 = vpack.c.bf16 %v1228, %v1227
      %v1257 = vpack.c.bf16 %v1230, %v1229
      %v1258 = vpack.c.bf16 %v1232, %v1231
      %v1259 = vpack.c.bf16 %v1234, %v1233
      %v1260 = vpack.c.bf16 %v1236, %v1235
      %v1261 = vpack.c.bf16 %v1238, %v1237
      %v1262 = vpack.c.bf16 %v1240, %v1239
      %v1263 = vpack.c.bf16 %v1242, %v1241
      %v1264 = vpack.c.bf16 %v1244, %v1243
      %v1265 = vpack.c.bf16 %v1246, %v1245
      %v1266 = vpack.c.bf16 %v1248, %v1247
      %v1267 = vpack.c.bf16 %v1250, %v1249
      %v1268 = vpack.c.bf16 %v1252, %v1251
      %v1269 = vld [vmem:[%s528 + $0x3] sm:$0xff]
      %v1270 = vld [vmem:[%s528 + $0xb] sm:$0xff]
      %v1271 = vld [vmem:[%s528 + $0x1b] sm:$0xff]
      %v1272 = vld [vmem:[%s528 + $0x23] sm:$0xff]
      %v1273 = vld [vmem:[%s528 + $0x33] sm:$0xff]
      %v1274 = vld [vmem:[%s528 + $0x3b] sm:$0xff]
      %v1275 = vld [vmem:[%s528 + $0x4b] sm:$0xff]
      %v1276 = vld [vmem:[%s528 + $0x53] sm:$0xff]
      %v1277 = vld [vmem:[%s528 + $0x63] sm:$0xff]
      %v1278 = vld [vmem:[%s528 + $0x6b] sm:$0xff]
      %v1279 = vld [vmem:[%s528 + $0x7b] sm:$0xff]
      %v1280 = vld [vmem:[%s528 + $0x83] sm:$0xff]
      %v1281 = vld [vmem:[%s528 + $0x93] sm:$0xff]
      %v1282 = vld [vmem:[%s528 + $0x9b] sm:$0xff]
      %v1283 = vld [vmem:[%s528 + $0xab] sm:$0xff]
      %v1284 = vld [vmem:[%s528 + $0xb3] sm:$0xff]
      %v1285 = vld [vmem:[%s528 + $0xc3] sm:$0xff]
      %v1286 = vld [vmem:[%s528 + $0xcb] sm:$0xff]
      %v1287 = vld [vmem:[%s528 + $0xdb] sm:$0xff]
      %v1288 = vld [vmem:[%s528 + $0xe3] sm:$0xff]
      %v1289 = vld [vmem:[%s528 + $0xf3] sm:$0xff]
      %v1290 = vld [vmem:[%s528 + $0xfb] sm:$0xff]
      %v1291 = vld [vmem:[%s528 + $0x10b] sm:$0xff]
      %v1292 = vld [vmem:[%s528 + $0x113] sm:$0xff]
      %v1293 = vld [vmem:[%s528 + $0x123] sm:$0xff]
      %v1294 = vld [vmem:[%s528 + $0x12b] sm:$0xff]
      %v1295 = vld [vmem:[%s528 + $0x13b] sm:$0xff]
      %v1296 = vld [vmem:[%s528 + $0x143] sm:$0xff]
      %v1297 = vld [vmem:[%s528 + $0x153] sm:$0xff]
      %v1298 = vld [vmem:[%s528 + $0x15b] sm:$0xff]
      %v1299 = vld [vmem:[%s528 + $0x16b] sm:$0xff]
      %v1300 = vld [vmem:[%s528 + $0x173] sm:$0xff]
      %v1301 = vpack.c.bf16 %v1270, %v1269
      %v1302 = vpack.c.bf16 %v1272, %v1271
      %v1303 = vpack.c.bf16 %v1274, %v1273
      %v1304 = vpack.c.bf16 %v1276, %v1275
      %v1305 = vpack.c.bf16 %v1278, %v1277
      %v1306 = vpack.c.bf16 %v1280, %v1279
      %v1307 = vpack.c.bf16 %v1282, %v1281
      %v1308 = vpack.c.bf16 %v1284, %v1283
      %v1309 = vpack.c.bf16 %v1286, %v1285
      %v1310 = vpack.c.bf16 %v1288, %v1287
      %v1311 = vpack.c.bf16 %v1290, %v1289
      %v1312 = vpack.c.bf16 %v1292, %v1291
      %v1313 = vpack.c.bf16 %v1294, %v1293
      %v1314 = vpack.c.bf16 %v1296, %v1295
      %v1315 = vpack.c.bf16 %v1298, %v1297
      %v1316 = vpack.c.bf16 %v1300, %v1299
      %v1317 = vld [vmem:[%s754 + $0x4] sm:$0xff]
      %v1318 = vld [vmem:[%s754 + $0xc] sm:$0xff]
      %v1319 = vld [vmem:[%s754 + $0x1c] sm:$0xff]
      %v1320 = vld [vmem:[%s754 + $0x24] sm:$0xff]
      %v1321 = vld [vmem:[%s754 + $0x34] sm:$0xff]
      %v1322 = vld [vmem:[%s754 + $0x3c] sm:$0xff]
      %v1323 = vld [vmem:[%s754 + $0x4c] sm:$0xff]
      %v1324 = vld [vmem:[%s754 + $0x54] sm:$0xff]
      %v1325 = vld [vmem:[%s754 + $0x64] sm:$0xff]
      %v1326 = vld [vmem:[%s754 + $0x6c] sm:$0xff]
      %v1327 = vld [vmem:[%s754 + $0x7c] sm:$0xff]
      %v1328 = vld [vmem:[%s754 + $0x84] sm:$0xff]
      %v1329 = vld [vmem:[%s754 + $0x94] sm:$0xff]
      %v1330 = vld [vmem:[%s754 + $0x9c] sm:$0xff]
      %v1331 = vld [vmem:[%s754 + $0xac] sm:$0xff]
      %v1332 = vld [vmem:[%s754 + $0xb4] sm:$0xff]
      %v1333 = vld [vmem:[%s754 + $0xc4] sm:$0xff]
      %v1334 = vld [vmem:[%s754 + $0xcc] sm:$0xff]
      %v1335 = vld [vmem:[%s754 + $0xdc] sm:$0xff]
      %v1336 = vld [vmem:[%s754 + $0xe4] sm:$0xff]
      %v1337 = vld [vmem:[%s754 + $0xf4] sm:$0xff]
      %v1338 = vld [vmem:[%s754 + $0xfc] sm:$0xff]
      %v1339 = vld [vmem:[%s754 + $0x10c] sm:$0xff]
      %v1340 = vld [vmem:[%s754 + $0x114] sm:$0xff]
      %v1341 = vld [vmem:[%s754 + $0x124] sm:$0xff]
      %v1342 = vld [vmem:[%s754 + $0x12c] sm:$0xff]
      %v1343 = vld [vmem:[%s754 + $0x13c] sm:$0xff]
      %v1344 = vld [vmem:[%s754 + $0x144] sm:$0xff]
      %v1345 = vld [vmem:[%s754 + $0x154] sm:$0xff]
      %v1346 = vld [vmem:[%s754 + $0x15c] sm:$0xff]
      %v1347 = vld [vmem:[%s754 + $0x16c] sm:$0xff]
      %v1348 = vld [vmem:[%s754 + $0x174] sm:$0xff]
      %v1349 = vpack.c.bf16 %v1318, %v1317
      %v1350 = vpack.c.bf16 %v1320, %v1319
      %v1351 = vpack.c.bf16 %v1322, %v1321
      %v1352 = vpack.c.bf16 %v1324, %v1323
      %v1353 = vpack.c.bf16 %v1326, %v1325
      %v1354 = vpack.c.bf16 %v1328, %v1327
      %v1355 = vpack.c.bf16 %v1330, %v1329
      %v1356 = vpack.c.bf16 %v1332, %v1331
      %v1357 = vpack.c.bf16 %v1334, %v1333
      %v1358 = vpack.c.bf16 %v1336, %v1335
      %v1359 = vpack.c.bf16 %v1338, %v1337
      %v1360 = vpack.c.bf16 %v1340, %v1339
      %v1361 = vpack.c.bf16 %v1342, %v1341
      %v1362 = vpack.c.bf16 %v1344, %v1343
      %v1363 = vpack.c.bf16 %v1346, %v1345
      %v1364 = vpack.c.bf16 %v1348, %v1347
      %s1365 = scalar_lea.vmem [#allocation2], 72
      %v1366 = vld [vmem:[%s1365 + $0x1] sm:$0xff]
      %v1367 = vld [vmem:[%s1365 + $0x9] sm:$0xff]
      %v1368 = vld [vmem:[%s1365 + $0x19] sm:$0xff]
      %v1369 = vld [vmem:[%s1365 + $0x21] sm:$0xff]
      %v1370 = vld [vmem:[%s1365 + $0x31] sm:$0xff]
      %v1371 = vld [vmem:[%s1365 + $0x39] sm:$0xff]
      %v1372 = vld [vmem:[%s1365 + $0x49] sm:$0xff]
      %v1373 = vld [vmem:[%s1365 + $0x51] sm:$0xff]
      %v1374 = vld [vmem:[%s1365 + $0x61] sm:$0xff]
      %v1375 = vld [vmem:[%s1365 + $0x69] sm:$0xff]
      %v1376 = vld [vmem:[%s1365 + $0x79] sm:$0xff]
      %v1377 = vld [vmem:[%s1365 + $0x81] sm:$0xff]
      %v1378 = vld [vmem:[%s1365 + $0x91] sm:$0xff]
      %v1379 = vld [vmem:[%s1365 + $0x99] sm:$0xff]
      %v1380 = vld [vmem:[%s1365 + $0xa9] sm:$0xff]
      %v1381 = vld [vmem:[%s1365 + $0xb1] sm:$0xff]
      %v1382 = vld [vmem:[%s1365 + $0xc1] sm:$0xff]
      %v1383 = vld [vmem:[%s1365 + $0xc9] sm:$0xff]
      %v1384 = vld [vmem:[%s1365 + $0xd9] sm:$0xff]
      %v1385 = vld [vmem:[%s1365 + $0xe1] sm:$0xff]
      %v1386 = vld [vmem:[%s1365 + $0xf1] sm:$0xff]
      %v1387 = vld [vmem:[%s1365 + $0xf9] sm:$0xff]
      %v1388 = vld [vmem:[%s1365 + $0x109] sm:$0xff]
      %v1389 = vld [vmem:[%s1365 + $0x111] sm:$0xff]
      %v1390 = vld [vmem:[%s1365 + $0x121] sm:$0xff]
      %v1391 = vld [vmem:[%s1365 + $0x129] sm:$0xff]
      %v1392 = vld [vmem:[%s1365 + $0x139] sm:$0xff]
      %v1393 = vld [vmem:[%s1365 + $0x141] sm:$0xff]
      %v1394 = vld [vmem:[%s1365 + $0x151] sm:$0xff]
      %v1395 = vld [vmem:[%s1365 + $0x159] sm:$0xff]
      %v1396 = vld [vmem:[%s1365 + $0x169] sm:$0xff]
      %v1397 = vld [vmem:[%s1365 + $0x171] sm:$0xff]
      %v1398 = vpack.c.bf16 %v1367, %v1366
      %v1399 = vpack.c.bf16 %v1369, %v1368
      %v1400 = vpack.c.bf16 %v1371, %v1370
      %v1401 = vpack.c.bf16 %v1373, %v1372
      %v1402 = vpack.c.bf16 %v1375, %v1374
      %v1403 = vpack.c.bf16 %v1377, %v1376
      %v1404 = vpack.c.bf16 %v1379, %v1378
      %v1405 = vpack.c.bf16 %v1381, %v1380
      %v1406 = vpack.c.bf16 %v1383, %v1382
      %v1407 = vpack.c.bf16 %v1385, %v1384
      %v1408 = vpack.c.bf16 %v1387, %v1386
      %v1409 = vpack.c.bf16 %v1389, %v1388
      %v1410 = vpack.c.bf16 %v1391, %v1390
      %v1411 = vpack.c.bf16 %v1393, %v1392
      %v1412 = vpack.c.bf16 %v1395, %v1394
      %v1413 = vpack.c.bf16 %v1397, %v1396
      %s1414 = scalar_lea.vmem [#allocation2], 576
      %v1415 = vld [vmem:[%s1414] sm:$0xff]
      %v1416 = vld [vmem:[%s1414 + $0x8] sm:$0xff]
      %v1417 = vld [vmem:[%s1414 + $0x18] sm:$0xff]
      %v1418 = vld [vmem:[%s1414 + $0x20] sm:$0xff]
      %v1419 = vld [vmem:[%s1414 + $0x30] sm:$0xff]
      %v1420 = vld [vmem:[%s1414 + $0x38] sm:$0xff]
      %v1421 = vld [vmem:[%s1414 + $0x48] sm:$0xff]
      %v1422 = vld [vmem:[%s1414 + $0x50] sm:$0xff]
      %v1423 = vld [vmem:[%s1414 + $0x60] sm:$0xff]
      %v1424 = vld [vmem:[%s1414 + $0x68] sm:$0xff]
      %v1425 = vld [vmem:[%s1414 + $0x78] sm:$0xff]
      %v1426 = vld [vmem:[%s1414 + $0x80] sm:$0xff]
      %v1427 = vld [vmem:[%s1414 + $0x90] sm:$0xff]
      %v1428 = vld [vmem:[%s1414 + $0x98] sm:$0xff]
      %v1429 = vld [vmem:[%s1414 + $0xa8] sm:$0xff]
      %v1430 = vld [vmem:[%s1414 + $0xb0] sm:$0xff]
      %v1431 = vld [vmem:[%s1414 + $0xc0] sm:$0xff]
      %v1432 = vld [vmem:[%s1414 + $0xc8] sm:$0xff]
      %v1433 = vld [vmem:[%s1414 + $0xd8] sm:$0xff]
      %v1434 = vld [vmem:[%s1414 + $0xe0] sm:$0xff]
      %v1435 = vld [vmem:[%s1414 + $0xf0] sm:$0xff]
      %v1436 = vld [vmem:[%s1414 + $0xf8] sm:$0xff]
      %v1437 = vld [vmem:[%s1414 + $0x108] sm:$0xff]
      %v1438 = vld [vmem:[%s1414 + $0x110] sm:$0xff]
      %v1439 = vld [vmem:[%s1414 + $0x120] sm:$0xff]
      %v1440 = vld [vmem:[%s1414 + $0x128] sm:$0xff]
      %v1441 = vld [vmem:[%s1414 + $0x138] sm:$0xff]
      %v1442 = vld [vmem:[%s1414 + $0x140] sm:$0xff]
      %v1443 = vld [vmem:[%s1414 + $0x150] sm:$0xff]
      %v1444 = vld [vmem:[%s1414 + $0x158] sm:$0xff]
      %v1445 = vld [vmem:[%s1414 + $0x168] sm:$0xff]
      %v1446 = vld [vmem:[%s1414 + $0x170] sm:$0xff]
      %v1447 = vpack.c.bf16 %v1416, %v1415
      %v1448 = vpack.c.bf16 %v1418, %v1417
      %v1449 = vpack.c.bf16 %v1420, %v1419
      %v1450 = vpack.c.bf16 %v1422, %v1421
      %v1451 = vpack.c.bf16 %v1424, %v1423
      %v1452 = vpack.c.bf16 %v1426, %v1425
      %v1453 = vpack.c.bf16 %v1428, %v1427
      %v1454 = vpack.c.bf16 %v1430, %v1429
      %v1455 = vpack.c.bf16 %v1432, %v1431
      %v1456 = vpack.c.bf16 %v1434, %v1433
      %v1457 = vpack.c.bf16 %v1436, %v1435
      %v1458 = vpack.c.bf16 %v1438, %v1437
      %v1459 = vpack.c.bf16 %v1440, %v1439
      %v1460 = vpack.c.bf16 %v1442, %v1441
      %v1461 = vpack.c.bf16 %v1444, %v1443
      %v1462 = vpack.c.bf16 %v1446, %v1445
      %v1463 = vld [vmem:[%s1365 + $0x2] sm:$0xff]
      %v1464 = vld [vmem:[%s1365 + $0xa] sm:$0xff]
      %v1465 = vld [vmem:[%s1365 + $0x1a] sm:$0xff]
      %v1466 = vld [vmem:[%s1365 + $0x22] sm:$0xff]
      %v1467 = vld [vmem:[%s1365 + $0x32] sm:$0xff]
      %v1468 = vld [vmem:[%s1365 + $0x3a] sm:$0xff]
      %v1469 = vld [vmem:[%s1365 + $0x4a] sm:$0xff]
      %v1470 = vld [vmem:[%s1365 + $0x52] sm:$0xff]
      %v1471 = vld [vmem:[%s1365 + $0x62] sm:$0xff]
      %v1472 = vld [vmem:[%s1365 + $0x6a] sm:$0xff]
      %v1473 = vld [vmem:[%s1365 + $0x7a] sm:$0xff]
      %v1474 = vld [vmem:[%s1365 + $0x82] sm:$0xff]
      %v1475 = vld [vmem:[%s1365 + $0x92] sm:$0xff]
      %v1476 = vld [vmem:[%s1365 + $0x9a] sm:$0xff]
      %v1477 = vld [vmem:[%s1365 + $0xaa] sm:$0xff]
      %v1478 = vld [vmem:[%s1365 + $0xb2] sm:$0xff]
      %v1479 = vld [vmem:[%s1365 + $0xc2] sm:$0xff]
      %v1480 = vld [vmem:[%s1365 + $0xca] sm:$0xff]
      %v1481 = vld [vmem:[%s1365 + $0xda] sm:$0xff]
      %v1482 = vld [vmem:[%s1365 + $0xe2] sm:$0xff]
      %v1483 = vld [vmem:[%s1365 + $0xf2] sm:$0xff]
      %v1484 = vld [vmem:[%s1365 + $0xfa] sm:$0xff]
      %v1485 = vld [vmem:[%s1365 + $0x10a] sm:$0xff]
      %v1486 = vld [vmem:[%s1365 + $0x112] sm:$0xff]
      %v1487 = vld [vmem:[%s1365 + $0x122] sm:$0xff]
      %v1488 = vld [vmem:[%s1365 + $0x12a] sm:$0xff]
      %v1489 = vld [vmem:[%s1365 + $0x13a] sm:$0xff]
      %v1490 = vld [vmem:[%s1365 + $0x142] sm:$0xff]
      %v1491 = vld [vmem:[%s1365 + $0x152] sm:$0xff]
      %v1492 = vld [vmem:[%s1365 + $0x15a] sm:$0xff]
      %v1493 = vld [vmem:[%s1365 + $0x16a] sm:$0xff]
      %v1494 = vld [vmem:[%s1365 + $0x172] sm:$0xff]
      %v1495 = vpack.c.bf16 %v1464, %v1463
      %v1496 = vpack.c.bf16 %v1466, %v1465
      %v1497 = vpack.c.bf16 %v1468, %v1467
      %v1498 = vpack.c.bf16 %v1470, %v1469
      %v1499 = vpack.c.bf16 %v1472, %v1471
      %v1500 = vpack.c.bf16 %v1474, %v1473
      %v1501 = vpack.c.bf16 %v1476, %v1475
      %v1502 = vpack.c.bf16 %v1478, %v1477
      %v1503 = vpack.c.bf16 %v1480, %v1479
      %v1504 = vpack.c.bf16 %v1482, %v1481
      %v1505 = vpack.c.bf16 %v1484, %v1483
      %v1506 = vpack.c.bf16 %v1486, %v1485
      %v1507 = vpack.c.bf16 %v1488, %v1487
      %v1508 = vpack.c.bf16 %v1490, %v1489
      %v1509 = vpack.c.bf16 %v1492, %v1491
      %v1510 = vpack.c.bf16 %v1494, %v1493
      %v1511 = vld [vmem:[%s1414 + $0x2] sm:$0xff]
      %v1512 = vld [vmem:[%s1414 + $0xa] sm:$0xff]
      %v1513 = vld [vmem:[%s1414 + $0x1a] sm:$0xff]
      %v1514 = vld [vmem:[%s1414 + $0x22] sm:$0xff]
      %v1515 = vld [vmem:[%s1414 + $0x32] sm:$0xff]
      %v1516 = vld [vmem:[%s1414 + $0x3a] sm:$0xff]
      %v1517 = vld [vmem:[%s1414 + $0x4a] sm:$0xff]
      %v1518 = vld [vmem:[%s1414 + $0x52] sm:$0xff]
      %v1519 = vld [vmem:[%s1414 + $0x62] sm:$0xff]
      %v1520 = vld [vmem:[%s1414 + $0x6a] sm:$0xff]
      %v1521 = vld [vmem:[%s1414 + $0x7a] sm:$0xff]
      %v1522 = vld [vmem:[%s1414 + $0x82] sm:$0xff]
      %v1523 = vld [vmem:[%s1414 + $0x92] sm:$0xff]
      %v1524 = vld [vmem:[%s1414 + $0x9a] sm:$0xff]
      %v1525 = vld [vmem:[%s1414 + $0xaa] sm:$0xff]
      %v1526 = vld [vmem:[%s1414 + $0xb2] sm:$0xff]
      %v1527 = vld [vmem:[%s1414 + $0xc2] sm:$0xff]
      %v1528 = vld [vmem:[%s1414 + $0xca] sm:$0xff]
      %v1529 = vld [vmem:[%s1414 + $0xda] sm:$0xff]
      %v1530 = vld [vmem:[%s1414 + $0xe2] sm:$0xff]
      %v1531 = vld [vmem:[%s1414 + $0xf2] sm:$0xff]
      %v1532 = vld [vmem:[%s1414 + $0xfa] sm:$0xff]
      %v1533 = vld [vmem:[%s1414 + $0x10a] sm:$0xff]
      %v1534 = vld [vmem:[%s1414 + $0x112] sm:$0xff]
      %v1535 = vld [vmem:[%s1414 + $0x122] sm:$0xff]
      %v1536 = vld [vmem:[%s1414 + $0x12a] sm:$0xff]
      %v1537 = vld [vmem:[%s1414 + $0x13a] sm:$0xff]
      %v1538 = vld [vmem:[%s1414 + $0x142] sm:$0xff]
      %v1539 = vld [vmem:[%s1414 + $0x152] sm:$0xff]
      %v1540 = vld [vmem:[%s1414 + $0x15a] sm:$0xff]
      %v1541 = vld [vmem:[%s1414 + $0x16a] sm:$0xff]
      %v1542 = vld [vmem:[%s1414 + $0x172] sm:$0xff]
      %v1543 = vpack.c.bf16 %v1512, %v1511
      %v1544 = vpack.c.bf16 %v1514, %v1513
      %v1545 = vpack.c.bf16 %v1516, %v1515
      %v1546 = vpack.c.bf16 %v1518, %v1517
      %v1547 = vpack.c.bf16 %v1520, %v1519
      %v1548 = vpack.c.bf16 %v1522, %v1521
      %v1549 = vpack.c.bf16 %v1524, %v1523
      %v1550 = vpack.c.bf16 %v1526, %v1525
      %v1551 = vpack.c.bf16 %v1528, %v1527
      %v1552 = vpack.c.bf16 %v1530, %v1529
      %v1553 = vpack.c.bf16 %v1532, %v1531
      %v1554 = vpack.c.bf16 %v1534, %v1533
      %v1555 = vpack.c.bf16 %v1536, %v1535
      %v1556 = vpack.c.bf16 %v1538, %v1537
      %v1557 = vpack.c.bf16 %v1540, %v1539
      %v1558 = vpack.c.bf16 %v1542, %v1541
      %v1559 = vld [vmem:[%s1365 + $0x3] sm:$0xff]
      %v1560 = vld [vmem:[%s1365 + $0xb] sm:$0xff]
      %v1561 = vld [vmem:[%s1365 + $0x1b] sm:$0xff]
      %v1562 = vld [vmem:[%s1365 + $0x23] sm:$0xff]
      %v1563 = vld [vmem:[%s1365 + $0x33] sm:$0xff]
      %v1564 = vld [vmem:[%s1365 + $0x3b] sm:$0xff]
      %v1565 = vld [vmem:[%s1365 + $0x4b] sm:$0xff]
      %v1566 = vld [vmem:[%s1365 + $0x53] sm:$0xff]
      %v1567 = vld [vmem:[%s1365 + $0x63] sm:$0xff]
      %v1568 = vld [vmem:[%s1365 + $0x6b] sm:$0xff]
      %v1569 = vld [vmem:[%s1365 + $0x7b] sm:$0xff]
      %v1570 = vld [vmem:[%s1365 + $0x83] sm:$0xff]
      %v1571 = vld [vmem:[%s1365 + $0x93] sm:$0xff]
      %v1572 = vld [vmem:[%s1365 + $0x9b] sm:$0xff]
      %v1573 = vld [vmem:[%s1365 + $0xab] sm:$0xff]
      %v1574 = vld [vmem:[%s1365 + $0xb3] sm:$0xff]
      %v1575 = vld [vmem:[%s1365 + $0xc3] sm:$0xff]
      %v1576 = vld [vmem:[%s1365 + $0xcb] sm:$0xff]
      %v1577 = vld [vmem:[%s1365 + $0xdb] sm:$0xff]
      %v1578 = vld [vmem:[%s1365 + $0xe3] sm:$0xff]
      %v1579 = vld [vmem:[%s1365 + $0xf3] sm:$0xff]
      %v1580 = vld [vmem:[%s1365 + $0xfb] sm:$0xff]
      %v1581 = vld [vmem:[%s1365 + $0x10b] sm:$0xff]
      %v1582 = vld [vmem:[%s1365 + $0x113] sm:$0xff]
      %v1583 = vld [vmem:[%s1365 + $0x123] sm:$0xff]
      %v1584 = vld [vmem:[%s1365 + $0x12b] sm:$0xff]
      %v1585 = vld [vmem:[%s1365 + $0x13b] sm:$0xff]
      %v1586 = vld [vmem:[%s1365 + $0x143] sm:$0xff]
      %v1587 = vld [vmem:[%s1365 + $0x153] sm:$0xff]
      %v1588 = vld [vmem:[%s1365 + $0x15b] sm:$0xff]
      %v1589 = vld [vmem:[%s1365 + $0x16b] sm:$0xff]
      %v1590 = vld [vmem:[%s1365 + $0x173] sm:$0xff]
      %v1591 = vpack.c.bf16 %v1560, %v1559
      %v1592 = vpack.c.bf16 %v1562, %v1561
      %v1593 = vpack.c.bf16 %v1564, %v1563
      %v1594 = vpack.c.bf16 %v1566, %v1565
      %v1595 = vpack.c.bf16 %v1568, %v1567
      %v1596 = vpack.c.bf16 %v1570, %v1569
      %v1597 = vpack.c.bf16 %v1572, %v1571
      %v1598 = vpack.c.bf16 %v1574, %v1573
      %v1599 = vpack.c.bf16 %v1576, %v1575
      %v1600 = vpack.c.bf16 %v1578, %v1577
      %v1601 = vpack.c.bf16 %v1580, %v1579
      %v1602 = vpack.c.bf16 %v1582, %v1581
      %v1603 = vpack.c.bf16 %v1584, %v1583
      %v1604 = vpack.c.bf16 %v1586, %v1585
      %v1605 = vpack.c.bf16 %v1588, %v1587
      %v1606 = vpack.c.bf16 %v1590, %v1589
      %v1607 = vld [vmem:[%s1414 + $0x4] sm:$0xff]
      %v1608 = vld [vmem:[%s1414 + $0xc] sm:$0xff]
      %v1609 = vld [vmem:[%s1414 + $0x1c] sm:$0xff]
      %v1610 = vld [vmem:[%s1414 + $0x24] sm:$0xff]
      %v1611 = vld [vmem:[%s1414 + $0x34] sm:$0xff]
      %v1612 = vld [vmem:[%s1414 + $0x3c] sm:$0xff]
      %v1613 = vld [vmem:[%s1414 + $0x4c] sm:$0xff]
      %v1614 = vld [vmem:[%s1414 + $0x54] sm:$0xff]
      %v1615 = vld [vmem:[%s1414 + $0x64] sm:$0xff]
      %v1616 = vld [vmem:[%s1414 + $0x6c] sm:$0xff]
      %v1617 = vld [vmem:[%s1414 + $0x7c] sm:$0xff]
      %v1618 = vld [vmem:[%s1414 + $0x84] sm:$0xff]
      %v1619 = vld [vmem:[%s1414 + $0x94] sm:$0xff]
      %v1620 = vld [vmem:[%s1414 + $0x9c] sm:$0xff]
      %v1621 = vld [vmem:[%s1414 + $0xac] sm:$0xff]
      %v1622 = vld [vmem:[%s1414 + $0xb4] sm:$0xff]
      %v1623 = vld [vmem:[%s1414 + $0xc4] sm:$0xff]
      %v1624 = vld [vmem:[%s1414 + $0xcc] sm:$0xff]
      %v1625 = vld [vmem:[%s1414 + $0xdc] sm:$0xff]
      %v1626 = vld [vmem:[%s1414 + $0xe4] sm:$0xff]
      %v1627 = vld [vmem:[%s1414 + $0xf4] sm:$0xff]
      %v1628 = vld [vmem:[%s1414 + $0xfc] sm:$0xff]
      %v1629 = vld [vmem:[%s1414 + $0x10c] sm:$0xff]
      %v1630 = vld [vmem:[%s1414 + $0x114] sm:$0xff]
      %v1631 = vld [vmem:[%s1414 + $0x124] sm:$0xff]
      %v1632 = vld [vmem:[%s1414 + $0x12c] sm:$0xff]
      %v1633 = vld [vmem:[%s1414 + $0x13c] sm:$0xff]
      %v1634 = vld [vmem:[%s1414 + $0x144] sm:$0xff]
      %v1635 = vld [vmem:[%s1414 + $0x154] sm:$0xff]
      %v1636 = vld [vmem:[%s1414 + $0x15c] sm:$0xff]
      %v1637 = vld [vmem:[%s1414 + $0x16c] sm:$0xff]
      %v1638 = vld [vmem:[%s1414 + $0x174] sm:$0xff]
      %v1639 = vpack.c.bf16 %v1608, %v1607
      %v1640 = vpack.c.bf16 %v1610, %v1609
      %v1641 = vpack.c.bf16 %v1612, %v1611
      %v1642 = vpack.c.bf16 %v1614, %v1613
      %v1643 = vpack.c.bf16 %v1616, %v1615
      %v1644 = vpack.c.bf16 %v1618, %v1617
      %v1645 = vpack.c.bf16 %v1620, %v1619
      %v1646 = vpack.c.bf16 %v1622, %v1621
      %v1647 = vpack.c.bf16 %v1624, %v1623
      %v1648 = vpack.c.bf16 %v1626, %v1625
      %v1649 = vpack.c.bf16 %v1628, %v1627
      %v1650 = vpack.c.bf16 %v1630, %v1629
      %v1651 = vpack.c.bf16 %v1632, %v1631
      %v1652 = vpack.c.bf16 %v1634, %v1633
      %v1653 = vpack.c.bf16 %v1636, %v1635
      %v1654 = vpack.c.bf16 %v1638, %v1637
      %1671 = vrot.lane.b32.xlu0 %v917, 4
      %v1672 = vpop.permute.xlu0 %1671
      %1673 = vrot.lane.b32.xlu0 %v918, 4
      %v1674 = vpop.permute.xlu0 %1673
      %1675 = vrot.lane.b32.xlu0 %v919, 4
      %v1676 = vpop.permute.xlu0 %1675
      %1677 = vrot.lane.b32.xlu0 %v920, 4
      %v1678 = vpop.permute.xlu0 %1677
      %1679 = vrot.lane.b32.xlu0 %v921, 4
      %v1680 = vpop.permute.xlu0 %1679
      %1681 = vrot.lane.b32.xlu0 %v922, 4
      %v1682 = vpop.permute.xlu0 %1681
      %1683 = vrot.lane.b32.xlu0 %v923, 4
      %v1684 = vpop.permute.xlu0 %1683
      %1685 = vrot.lane.b32.xlu0 %v924, 4
      %v1686 = vpop.permute.xlu0 %1685
      %1687 = vrot.lane.b32.xlu0 %v925, 4
      %v1688 = vpop.permute.xlu0 %1687
      %1689 = vrot.lane.b32.xlu0 %v926, 4
      %v1690 = vpop.permute.xlu0 %1689
      %1691 = vrot.lane.b32.xlu0 %v927, 4
      %v1692 = vpop.permute.xlu0 %1691
      %1693 = vrot.lane.b32.xlu0 %v928, 4
      %v1694 = vpop.permute.xlu0 %1693
      %1695 = vrot.lane.b32.xlu0 %v929, 4
      %v1696 = vpop.permute.xlu0 %1695
      %1697 = vrot.lane.b32.xlu0 %v930, 4
      %v1698 = vpop.permute.xlu0 %1697
      %1699 = vrot.lane.b32.xlu0 %v931, 4
      %v1700 = vpop.permute.xlu0 %1699
      %1701 = vrot.lane.b32.xlu0 %v932, 4
      %v1702 = vpop.permute.xlu0 %1701
      %1719 = vrot.lane.b32.xlu0 %v1013, 8
      %v1720 = vpop.permute.xlu0 %1719
      %1721 = vrot.lane.b32.xlu0 %v1014, 8
      %v1722 = vpop.permute.xlu0 %1721
      %1723 = vrot.lane.b32.xlu0 %v1015, 8
      %v1724 = vpop.permute.xlu0 %1723
      %1725 = vrot.lane.b32.xlu0 %v1016, 8
      %v1726 = vpop.permute.xlu0 %1725
      %1727 = vrot.lane.b32.xlu0 %v1017, 8
      %v1728 = vpop.permute.xlu0 %1727
      %1729 = vrot.lane.b32.xlu0 %v1018, 8
      %v1730 = vpop.permute.xlu0 %1729
      %1731 = vrot.lane.b32.xlu0 %v1019, 8
      %v1732 = vpop.permute.xlu0 %1731
      %1733 = vrot.lane.b32.xlu0 %v1020, 8
      %v1734 = vpop.permute.xlu0 %1733
      %1735 = vrot.lane.b32.xlu0 %v1021, 8
      %v1736 = vpop.permute.xlu0 %1735
      %1737 = vrot.lane.b32.xlu0 %v1022, 8
      %v1738 = vpop.permute.xlu0 %1737
      %1739 = vrot.lane.b32.xlu0 %v1023, 8
      %v1740 = vpop.permute.xlu0 %1739
      %1741 = vrot.lane.b32.xlu0 %v1024, 8
      %v1742 = vpop.permute.xlu0 %1741
      %1743 = vrot.lane.b32.xlu0 %v1025, 8
      %v1744 = vpop.permute.xlu0 %1743
      %1745 = vrot.lane.b32.xlu0 %v1026, 8
      %v1746 = vpop.permute.xlu0 %1745
      %1747 = vrot.lane.b32.xlu0 %v1027, 8
      %v1748 = vpop.permute.xlu0 %1747
      %1749 = vrot.lane.b32.xlu0 %v1028, 8
      %v1750 = vpop.permute.xlu0 %1749
      %1767 = vrot.lane.b32.xlu0 %v1109, 12
      %v1768 = vpop.permute.xlu0 %1767
      %1769 = vrot.lane.b32.xlu0 %v1110, 12
      %v1770 = vpop.permute.xlu0 %1769
      %1771 = vrot.lane.b32.xlu0 %v1111, 12
      %v1772 = vpop.permute.xlu0 %1771
      %1773 = vrot.lane.b32.xlu0 %v1112, 12
      %v1774 = vpop.permute.xlu0 %1773
      %1775 = vrot.lane.b32.xlu0 %v1113, 12
      %v1776 = vpop.permute.xlu0 %1775
      %1777 = vrot.lane.b32.xlu0 %v1114, 12
      %v1778 = vpop.permute.xlu0 %1777
      %1779 = vrot.lane.b32.xlu0 %v1115, 12
      %v1780 = vpop.permute.xlu0 %1779
      %1781 = vrot.lane.b32.xlu0 %v1116, 12
      %v1782 = vpop.permute.xlu0 %1781
      %1783 = vrot.lane.b32.xlu0 %v1117, 12
      %v1784 = vpop.permute.xlu0 %1783
      %1785 = vrot.lane.b32.xlu0 %v1118, 12
      %v1786 = vpop.permute.xlu0 %1785
      %1787 = vrot.lane.b32.xlu0 %v1119, 12
      %v1788 = vpop.permute.xlu0 %1787
      %1789 = vrot.lane.b32.xlu0 %v1120, 12
      %v1790 = vpop.permute.xlu0 %1789
      %1791 = vrot.lane.b32.xlu0 %v1121, 12
      %v1792 = vpop.permute.xlu0 %1791
      %1793 = vrot.lane.b32.xlu0 %v1122, 12
      %v1794 = vpop.permute.xlu0 %1793
      %1795 = vrot.lane.b32.xlu0 %v1123, 12
      %v1796 = vpop.permute.xlu0 %1795
      %1797 = vrot.lane.b32.xlu0 %v1124, 12
      %v1798 = vpop.permute.xlu0 %1797
      %1815 = vrot.lane.b32.xlu0 %v1205, 16
      %v1816 = vpop.permute.xlu0 %1815
      %1817 = vrot.lane.b32.xlu0 %v1206, 16
      %v1818 = vpop.permute.xlu0 %1817
      %1819 = vrot.lane.b32.xlu0 %v1207, 16
      %v1820 = vpop.permute.xlu0 %1819
      %1821 = vrot.lane.b32.xlu0 %v1208, 16
      %v1822 = vpop.permute.xlu0 %1821
      %1823 = vrot.lane.b32.xlu0 %v1209, 16
      %v1824 = vpop.permute.xlu0 %1823
      %1825 = vrot.lane.b32.xlu0 %v1210, 16
      %v1826 = vpop.permute.xlu0 %1825
      %1827 = vrot.lane.b32.xlu0 %v1211, 16
      %v1828 = vpop.permute.xlu0 %1827
      %1829 = vrot.lane.b32.xlu0 %v1212, 16
      %v1830 = vpop.permute.xlu0 %1829
      %1831 = vrot.lane.b32.xlu0 %v1213, 16
      %v1832 = vpop.permute.xlu0 %1831
      %1833 = vrot.lane.b32.xlu0 %v1214, 16
      %v1834 = vpop.permute.xlu0 %1833
      %1835 = vrot.lane.b32.xlu0 %v1215, 16
      %v1836 = vpop.permute.xlu0 %1835
      %1837 = vrot.lane.b32.xlu0 %v1216, 16
      %v1838 = vpop.permute.xlu0 %1837
      %1839 = vrot.lane.b32.xlu0 %v1217, 16
      %v1840 = vpop.permute.xlu0 %1839
      %1841 = vrot.lane.b32.xlu0 %v1218, 16
      %v1842 = vpop.permute.xlu0 %1841
      %1843 = vrot.lane.b32.xlu0 %v1219, 16
      %v1844 = vpop.permute.xlu0 %1843
      %1845 = vrot.lane.b32.xlu0 %v1220, 16
      %v1846 = vpop.permute.xlu0 %1845
      %1863 = vrot.lane.b32.xlu0 %v1301, 20
      %v1864 = vpop.permute.xlu0 %1863
      %1865 = vrot.lane.b32.xlu0 %v1302, 20
      %v1866 = vpop.permute.xlu0 %1865
      %1867 = vrot.lane.b32.xlu0 %v1303, 20
      %v1868 = vpop.permute.xlu0 %1867
      %1869 = vrot.lane.b32.xlu0 %v1304, 20
      %v1870 = vpop.permute.xlu0 %1869
      %1871 = vrot.lane.b32.xlu0 %v1305, 20
      %v1872 = vpop.permute.xlu0 %1871
      %1873 = vrot.lane.b32.xlu0 %v1306, 20
      %v1874 = vpop.permute.xlu0 %1873
      %1875 = vrot.lane.b32.xlu0 %v1307, 20
      %v1876 = vpop.permute.xlu0 %1875
      %1877 = vrot.lane.b32.xlu0 %v1308, 20
      %v1878 = vpop.permute.xlu0 %1877
      %1879 = vrot.lane.b32.xlu0 %v1309, 20
      %v1880 = vpop.permute.xlu0 %1879
      %1881 = vrot.lane.b32.xlu0 %v1310, 20
      %v1882 = vpop.permute.xlu0 %1881
      %1883 = vrot.lane.b32.xlu0 %v1311, 20
      %v1884 = vpop.permute.xlu0 %1883
      %1885 = vrot.lane.b32.xlu0 %v1312, 20
      %v1886 = vpop.permute.xlu0 %1885
      %1887 = vrot.lane.b32.xlu0 %v1313, 20
      %v1888 = vpop.permute.xlu0 %1887
      %1889 = vrot.lane.b32.xlu0 %v1314, 20
      %v1890 = vpop.permute.xlu0 %1889
      %1891 = vrot.lane.b32.xlu0 %v1315, 20
      %v1892 = vpop.permute.xlu0 %1891
      %1893 = vrot.lane.b32.xlu0 %v1316, 20
      %v1894 = vpop.permute.xlu0 %1893
      %1911 = vrot.lane.b32.xlu0 %v1398, 24
      %v1912 = vpop.permute.xlu0 %1911
      %1913 = vrot.lane.b32.xlu0 %v1399, 24
      %v1914 = vpop.permute.xlu0 %1913
      %1915 = vrot.lane.b32.xlu0 %v1400, 24
      %v1916 = vpop.permute.xlu0 %1915
      %1917 = vrot.lane.b32.xlu0 %v1401, 24
      %v1918 = vpop.permute.xlu0 %1917
      %1919 = vrot.lane.b32.xlu0 %v1402, 24
      %v1920 = vpop.permute.xlu0 %1919
      %1921 = vrot.lane.b32.xlu0 %v1403, 24
      %v1922 = vpop.permute.xlu0 %1921
      %1923 = vrot.lane.b32.xlu0 %v1404, 24
      %v1924 = vpop.permute.xlu0 %1923
      %1925 = vrot.lane.b32.xlu0 %v1405, 24
      %v1926 = vpop.permute.xlu0 %1925
      %1927 = vrot.lane.b32.xlu0 %v1406, 24
      %v1928 = vpop.permute.xlu0 %1927
      %1929 = vrot.lane.b32.xlu0 %v1407, 24
      %v1930 = vpop.permute.xlu0 %1929
      %1931 = vrot.lane.b32.xlu0 %v1408, 24
      %v1932 = vpop.permute.xlu0 %1931
      %1933 = vrot.lane.b32.xlu0 %v1409, 24
      %v1934 = vpop.permute.xlu0 %1933
      %1935 = vrot.lane.b32.xlu0 %v1410, 24
      %v1936 = vpop.permute.xlu0 %1935
      %1937 = vrot.lane.b32.xlu0 %v1411, 24
      %v1938 = vpop.permute.xlu0 %1937
      %1939 = vrot.lane.b32.xlu0 %v1412, 24
      %v1940 = vpop.permute.xlu0 %1939
      %1941 = vrot.lane.b32.xlu0 %v1413, 24
      %v1942 = vpop.permute.xlu0 %1941
      %1959 = vrot.lane.b32.xlu0 %v1495, 28
      %v1960 = vpop.permute.xlu0 %1959
      %1961 = vrot.lane.b32.xlu0 %v1496, 28
      %v1962 = vpop.permute.xlu0 %1961
      %1963 = vrot.lane.b32.xlu0 %v1497, 28
      %v1964 = vpop.permute.xlu0 %1963
      %1965 = vrot.lane.b32.xlu0 %v1498, 28
      %v1966 = vpop.permute.xlu0 %1965
      %1967 = vrot.lane.b32.xlu0 %v1499, 28
      %v1968 = vpop.permute.xlu0 %1967
      %1969 = vrot.lane.b32.xlu0 %v1500, 28
      %v1970 = vpop.permute.xlu0 %1969
      %1971 = vrot.lane.b32.xlu0 %v1501, 28
      %v1972 = vpop.permute.xlu0 %1971
      %1973 = vrot.lane.b32.xlu0 %v1502, 28
      %v1974 = vpop.permute.xlu0 %1973
      %1975 = vrot.lane.b32.xlu0 %v1503, 28
      %v1976 = vpop.permute.xlu0 %1975
      %1977 = vrot.lane.b32.xlu0 %v1504, 28
      %v1978 = vpop.permute.xlu0 %1977
      %1979 = vrot.lane.b32.xlu0 %v1505, 28
      %v1980 = vpop.permute.xlu0 %1979
      %1981 = vrot.lane.b32.xlu0 %v1506, 28
      %v1982 = vpop.permute.xlu0 %1981
      %1983 = vrot.lane.b32.xlu0 %v1507, 28
      %v1984 = vpop.permute.xlu0 %1983
      %1985 = vrot.lane.b32.xlu0 %v1508, 28
      %v1986 = vpop.permute.xlu0 %1985
      %1987 = vrot.lane.b32.xlu0 %v1509, 28
      %v1988 = vpop.permute.xlu0 %1987
      %1989 = vrot.lane.b32.xlu0 %v1510, 28
      %v1990 = vpop.permute.xlu0 %1989
      %2007 = vrot.lane.b32.xlu0 %v1591, 32
      %v2008 = vpop.permute.xlu0 %2007
      %2009 = vrot.lane.b32.xlu0 %v1592, 32
      %v2010 = vpop.permute.xlu0 %2009
      %2011 = vrot.lane.b32.xlu0 %v1593, 32
      %v2012 = vpop.permute.xlu0 %2011
      %2013 = vrot.lane.b32.xlu0 %v1594, 32
      %v2014 = vpop.permute.xlu0 %2013
      %2015 = vrot.lane.b32.xlu0 %v1595, 32
      %v2016 = vpop.permute.xlu0 %2015
      %2017 = vrot.lane.b32.xlu0 %v1596, 32
      %v2018 = vpop.permute.xlu0 %2017
      %2019 = vrot.lane.b32.xlu0 %v1597, 32
      %v2020 = vpop.permute.xlu0 %2019
      %2021 = vrot.lane.b32.xlu0 %v1598, 32
      %v2022 = vpop.permute.xlu0 %2021
      %2023 = vrot.lane.b32.xlu0 %v1599, 32
      %v2024 = vpop.permute.xlu0 %2023
      %2025 = vrot.lane.b32.xlu0 %v1600, 32
      %v2026 = vpop.permute.xlu0 %2025
      %2027 = vrot.lane.b32.xlu0 %v1601, 32
      %v2028 = vpop.permute.xlu0 %2027
      %2029 = vrot.lane.b32.xlu0 %v1602, 32
      %v2030 = vpop.permute.xlu0 %2029
      %2031 = vrot.lane.b32.xlu0 %v1603, 32
      %v2032 = vpop.permute.xlu0 %2031
      %2033 = vrot.lane.b32.xlu0 %v1604, 32
      %v2034 = vpop.permute.xlu0 %2033
      %2035 = vrot.lane.b32.xlu0 %v1605, 32
      %v2036 = vpop.permute.xlu0 %2035
      %2037 = vrot.lane.b32.xlu0 %v1606, 32
      %v2038 = vpop.permute.xlu0 %2037
      %v2041 = vsel %vm501, %v820, %v1672
      %v2044 = vsel %vm501, %v821, %v1674
      %v2047 = vsel %vm501, %v822, %v1676
      %v2050 = vsel %vm501, %v823, %v1678
      %v2053 = vsel %vm501, %v824, %v1680
      %v2056 = vsel %vm501, %v825, %v1682
      %v2059 = vsel %vm501, %v826, %v1684
      %v2062 = vsel %vm501, %v827, %v1686
      %v2065 = vsel %vm501, %v828, %v1688
      %v2068 = vsel %vm501, %v829, %v1690
      %v2071 = vsel %vm501, %v830, %v1692
      %v2074 = vsel %vm501, %v831, %v1694
      %v2077 = vsel %vm501, %v832, %v1696
      %v2080 = vsel %vm501, %v833, %v1698
      %v2083 = vsel %vm501, %v834, %v1700
      %v2086 = vsel %vm501, %v835, %v1702
      %vm2087 = vcmask 64512
      %v2089 = vsel %vm2087, %v2041, %v1720
      %v2091 = vsel %vm2087, %v2044, %v1722
      %v2093 = vsel %vm2087, %v2047, %v1724
      %v2095 = vsel %vm2087, %v2050, %v1726
      %v2097 = vsel %vm2087, %v2053, %v1728
      %v2099 = vsel %vm2087, %v2056, %v1730
      %v2101 = vsel %vm2087, %v2059, %v1732
      %v2103 = vsel %vm2087, %v2062, %v1734
      %v2105 = vsel %vm2087, %v2065, %v1736
      %v2107 = vsel %vm2087, %v2068, %v1738
      %v2109 = vsel %vm2087, %v2071, %v1740
      %v2111 = vsel %vm2087, %v2074, %v1742
      %v2113 = vsel %vm2087, %v2077, %v1744
      %v2115 = vsel %vm2087, %v2080, %v1746
      %v2117 = vsel %vm2087, %v2083, %v1748
      %v2119 = vsel %vm2087, %v2086, %v1750
      %vm2120 = vcmask 97280
      %v2122 = vsel %vm2120, %v2089, %v1768
      %v2124 = vsel %vm2120, %v2091, %v1770
      %v2126 = vsel %vm2120, %v2093, %v1772
      %v2128 = vsel %vm2120, %v2095, %v1774
      %v2130 = vsel %vm2120, %v2097, %v1776
      %v2132 = vsel %vm2120, %v2099, %v1778
      %v2134 = vsel %vm2120, %v2101, %v1780
      %v2136 = vsel %vm2120, %v2103, %v1782
      %v2138 = vsel %vm2120, %v2105, %v1784
      %v2140 = vsel %vm2120, %v2107, %v1786
      %v2142 = vsel %vm2120, %v2109, %v1788
      %v2144 = vsel %vm2120, %v2111, %v1790
      %v2146 = vsel %vm2120, %v2113, %v1792
      %v2148 = vsel %vm2120, %v2115, %v1794
      %v2150 = vsel %vm2120, %v2117, %v1796
      %v2152 = vsel %vm2120, %v2119, %v1798
      %vm2153 = vcmask 130048
      %v2155 = vsel %vm2153, %v2122, %v1816
      %v2157 = vsel %vm2153, %v2124, %v1818
      %v2159 = vsel %vm2153, %v2126, %v1820
      %v2161 = vsel %vm2153, %v2128, %v1822
      %v2163 = vsel %vm2153, %v2130, %v1824
      %v2165 = vsel %vm2153, %v2132, %v1826
      %v2167 = vsel %vm2153, %v2134, %v1828
      %v2169 = vsel %vm2153, %v2136, %v1830
      %v2171 = vsel %vm2153, %v2138, %v1832
      %v2173 = vsel %vm2153, %v2140, %v1834
      %v2175 = vsel %vm2153, %v2142, %v1836
      %v2177 = vsel %vm2153, %v2144, %v1838
      %v2179 = vsel %vm2153, %v2146, %v1840
      %v2181 = vsel %vm2153, %v2148, %v1842
      %v2183 = vsel %vm2153, %v2150, %v1844
      %v2185 = vsel %vm2153, %v2152, %v1846
      %vm2186 = vcmask 162816
      %v2188 = vsel %vm2186, %v2155, %v1864
      %v2190 = vsel %vm2186, %v2157, %v1866
      %v2192 = vsel %vm2186, %v2159, %v1868
      %v2194 = vsel %vm2186, %v2161, %v1870
      %v2196 = vsel %vm2186, %v2163, %v1872
      %v2198 = vsel %vm2186, %v2165, %v1874
      %v2200 = vsel %vm2186, %v2167, %v1876
      %v2202 = vsel %vm2186, %v2169, %v1878
      %v2204 = vsel %vm2186, %v2171, %v1880
      %v2206 = vsel %vm2186, %v2173, %v1882
      %v2208 = vsel %vm2186, %v2175, %v1884
      %v2210 = vsel %vm2186, %v2177, %v1886
      %v2212 = vsel %vm2186, %v2179, %v1888
      %v2214 = vsel %vm2186, %v2181, %v1890
      %v2216 = vsel %vm2186, %v2183, %v1892
      %v2218 = vsel %vm2186, %v2185, %v1894
      %vm2219 = vcmask 195584
      %v2221 = vsel %vm2219, %v2188, %v1912
      %v2223 = vsel %vm2219, %v2190, %v1914
      %v2225 = vsel %vm2219, %v2192, %v1916
      %v2227 = vsel %vm2219, %v2194, %v1918
      %v2229 = vsel %vm2219, %v2196, %v1920
      %v2231 = vsel %vm2219, %v2198, %v1922
      %v2233 = vsel %vm2219, %v2200, %v1924
      %v2235 = vsel %vm2219, %v2202, %v1926
      %v2237 = vsel %vm2219, %v2204, %v1928
      %v2239 = vsel %vm2219, %v2206, %v1930
      %v2241 = vsel %vm2219, %v2208, %v1932
      %v2243 = vsel %vm2219, %v2210, %v1934
      %v2245 = vsel %vm2219, %v2212, %v1936
      %v2247 = vsel %vm2219, %v2214, %v1938
      %v2249 = vsel %vm2219, %v2216, %v1940
      %v2251 = vsel %vm2219, %v2218, %v1942
      %vm2252 = vcmask 228352
      %v2254 = vsel %vm2252, %v2221, %v1960
      %v2256 = vsel %vm2252, %v2223, %v1962
      %v2258 = vsel %vm2252, %v2225, %v1964
      %v2260 = vsel %vm2252, %v2227, %v1966
      %v2262 = vsel %vm2252, %v2229, %v1968
      %v2264 = vsel %vm2252, %v2231, %v1970
      %v2266 = vsel %vm2252, %v2233, %v1972
      %v2268 = vsel %vm2252, %v2235, %v1974
      %v2270 = vsel %vm2252, %v2237, %v1976
      %v2272 = vsel %vm2252, %v2239, %v1978
      %v2274 = vsel %vm2252, %v2241, %v1980
      %v2276 = vsel %vm2252, %v2243, %v1982
      %v2278 = vsel %vm2252, %v2245, %v1984
      %v2280 = vsel %vm2252, %v2247, %v1986
      %v2282 = vsel %vm2252, %v2249, %v1988
      %v2284 = vsel %vm2252, %v2251, %v1990
      %vm2285 = vcmask 261120
      %v2287 = vsel %vm2285, %v2254, %v2008
      %v2289 = vsel %vm2285, %v2256, %v2010
      %v2291 = vsel %vm2285, %v2258, %v2012
      %v2293 = vsel %vm2285, %v2260, %v2014
      %v2295 = vsel %vm2285, %v2262, %v2016
      %v2297 = vsel %vm2285, %v2264, %v2018
      %v2299 = vsel %vm2285, %v2266, %v2020
      %v2301 = vsel %vm2285, %v2268, %v2022
      %v2303 = vsel %vm2285, %v2270, %v2024
      %v2305 = vsel %vm2285, %v2272, %v2026
      %v2307 = vsel %vm2285, %v2274, %v2028
      %v2309 = vsel %vm2285, %v2276, %v2030
      %v2311 = vsel %vm2285, %v2278, %v2032
      %v2313 = vsel %vm2285, %v2280, %v2034
      %v2315 = vsel %vm2285, %v2282, %v2036
      %v2317 = vsel %vm2285, %v2284, %v2038
      %2334 = vrot.lane.b32.xlu0 %v965, 4
      %v2335 = vpop.permute.xlu0 %2334
      %2336 = vrot.lane.b32.xlu0 %v966, 4
      %v2337 = vpop.permute.xlu0 %2336
      %2338 = vrot.lane.b32.xlu0 %v967, 4
      %v2339 = vpop.permute.xlu0 %2338
      %2340 = vrot.lane.b32.xlu0 %v968, 4
      %v2341 = vpop.permute.xlu0 %2340
      %2342 = vrot.lane.b32.xlu0 %v969, 4
      %v2343 = vpop.permute.xlu0 %2342
      %2344 = vrot.lane.b32.xlu0 %v970, 4
      %v2345 = vpop.permute.xlu0 %2344
      %2346 = vrot.lane.b32.xlu0 %v971, 4
      %v2347 = vpop.permute.xlu0 %2346
      %2348 = vrot.lane.b32.xlu0 %v972, 4
      %v2349 = vpop.permute.xlu0 %2348
      %2350 = vrot.lane.b32.xlu0 %v973, 4
      %v2351 = vpop.permute.xlu0 %2350
      %2352 = vrot.lane.b32.xlu0 %v974, 4
      %v2353 = vpop.permute.xlu0 %2352
      %2354 = vrot.lane.b32.xlu0 %v975, 4
      %v2355 = vpop.permute.xlu0 %2354
      %2356 = vrot.lane.b32.xlu0 %v976, 4
      %v2357 = vpop.permute.xlu0 %2356
      %2358 = vrot.lane.b32.xlu0 %v977, 4
      %v2359 = vpop.permute.xlu0 %2358
      %2360 = vrot.lane.b32.xlu0 %v978, 4
      %v2361 = vpop.permute.xlu0 %2360
      %2362 = vrot.lane.b32.xlu0 %v979, 4
      %v2363 = vpop.permute.xlu0 %2362
      %2364 = vrot.lane.b32.xlu0 %v980, 4
      %v2365 = vpop.permute.xlu0 %2364
      %2382 = vrot.lane.b32.xlu0 %v1061, 8
      %v2383 = vpop.permute.xlu0 %2382
      %2384 = vrot.lane.b32.xlu0 %v1062, 8
      %v2385 = vpop.permute.xlu0 %2384
      %2386 = vrot.lane.b32.xlu0 %v1063, 8
      %v2387 = vpop.permute.xlu0 %2386
      %2388 = vrot.lane.b32.xlu0 %v1064, 8
      %v2389 = vpop.permute.xlu0 %2388
      %2390 = vrot.lane.b32.xlu0 %v1065, 8
      %v2391 = vpop.permute.xlu0 %2390
      %2392 = vrot.lane.b32.xlu0 %v1066, 8
      %v2393 = vpop.permute.xlu0 %2392
      %2394 = vrot.lane.b32.xlu0 %v1067, 8
      %v2395 = vpop.permute.xlu0 %2394
      %2396 = vrot.lane.b32.xlu0 %v1068, 8
      %v2397 = vpop.permute.xlu0 %2396
      %2398 = vrot.lane.b32.xlu0 %v1069, 8
      %v2399 = vpop.permute.xlu0 %2398
      %2400 = vrot.lane.b32.xlu0 %v1070, 8
      %v2401 = vpop.permute.xlu0 %2400
      %2402 = vrot.lane.b32.xlu0 %v1071, 8
      %v2403 = vpop.permute.xlu0 %2402
      %2404 = vrot.lane.b32.xlu0 %v1072, 8
      %v2405 = vpop.permute.xlu0 %2404
      %2406 = vrot.lane.b32.xlu0 %v1073, 8
      %v2407 = vpop.permute.xlu0 %2406
      %2408 = vrot.lane.b32.xlu0 %v1074, 8
      %v2409 = vpop.permute.xlu0 %2408
      %2410 = vrot.lane.b32.xlu0 %v1075, 8
      %v2411 = vpop.permute.xlu0 %2410
      %2412 = vrot.lane.b32.xlu0 %v1076, 8
      %v2413 = vpop.permute.xlu0 %2412
      %2430 = vrot.lane.b32.xlu0 %v1157, 12
      %v2431 = vpop.permute.xlu0 %2430
      %2432 = vrot.lane.b32.xlu0 %v1158, 12
      %v2433 = vpop.permute.xlu0 %2432
      %2434 = vrot.lane.b32.xlu0 %v1159, 12
      %v2435 = vpop.permute.xlu0 %2434
      %2436 = vrot.lane.b32.xlu0 %v1160, 12
      %v2437 = vpop.permute.xlu0 %2436
      %2438 = vrot.lane.b32.xlu0 %v1161, 12
      %v2439 = vpop.permute.xlu0 %2438
      %2440 = vrot.lane.b32.xlu0 %v1162, 12
      %v2441 = vpop.permute.xlu0 %2440
      %2442 = vrot.lane.b32.xlu0 %v1163, 12
      %v2443 = vpop.permute.xlu0 %2442
      %2444 = vrot.lane.b32.xlu0 %v1164, 12
      %v2445 = vpop.permute.xlu0 %2444
      %2446 = vrot.lane.b32.xlu0 %v1165, 12
      %v2447 = vpop.permute.xlu0 %2446
      %2448 = vrot.lane.b32.xlu0 %v1166, 12
      %v2449 = vpop.permute.xlu0 %2448
      %2450 = vrot.lane.b32.xlu0 %v1167, 12
      %v2451 = vpop.permute.xlu0 %2450
      %2452 = vrot.lane.b32.xlu0 %v1168, 12
      %v2453 = vpop.permute.xlu0 %2452
      %2454 = vrot.lane.b32.xlu0 %v1169, 12
      %v2455 = vpop.permute.xlu0 %2454
      %2456 = vrot.lane.b32.xlu0 %v1170, 12
      %v2457 = vpop.permute.xlu0 %2456
      %2458 = vrot.lane.b32.xlu0 %v1171, 12
      %v2459 = vpop.permute.xlu0 %2458
      %2460 = vrot.lane.b32.xlu0 %v1172, 12
      %v2461 = vpop.permute.xlu0 %2460
      %2478 = vrot.lane.b32.xlu0 %v1253, 16
      %v2479 = vpop.permute.xlu0 %2478
      %2480 = vrot.lane.b32.xlu0 %v1254, 16
      %v2481 = vpop.permute.xlu0 %2480
      %2482 = vrot.lane.b32.xlu0 %v1255, 16
      %v2483 = vpop.permute.xlu0 %2482
      %2484 = vrot.lane.b32.xlu0 %v1256, 16
      %v2485 = vpop.permute.xlu0 %2484
      %2486 = vrot.lane.b32.xlu0 %v1257, 16
      %v2487 = vpop.permute.xlu0 %2486
      %2488 = vrot.lane.b32.xlu0 %v1258, 16
      %v2489 = vpop.permute.xlu0 %2488
      %2490 = vrot.lane.b32.xlu0 %v1259, 16
      %v2491 = vpop.permute.xlu0 %2490
      %2492 = vrot.lane.b32.xlu0 %v1260, 16
      %v2493 = vpop.permute.xlu0 %2492
      %2494 = vrot.lane.b32.xlu0 %v1261, 16
      %v2495 = vpop.permute.xlu0 %2494
      %2496 = vrot.lane.b32.xlu0 %v1262, 16
      %v2497 = vpop.permute.xlu0 %2496
      %2498 = vrot.lane.b32.xlu0 %v1263, 16
      %v2499 = vpop.permute.xlu0 %2498
      %2500 = vrot.lane.b32.xlu0 %v1264, 16
      %v2501 = vpop.permute.xlu0 %2500
      %2502 = vrot.lane.b32.xlu0 %v1265, 16
      %v2503 = vpop.permute.xlu0 %2502
      %2504 = vrot.lane.b32.xlu0 %v1266, 16
      %v2505 = vpop.permute.xlu0 %2504
      %2506 = vrot.lane.b32.xlu0 %v1267, 16
      %v2507 = vpop.permute.xlu0 %2506
      %2508 = vrot.lane.b32.xlu0 %v1268, 16
      %v2509 = vpop.permute.xlu0 %2508
      %2526 = vrot.lane.b32.xlu0 %v1349, 20
      %v2527 = vpop.permute.xlu0 %2526
      %2528 = vrot.lane.b32.xlu0 %v1350, 20
      %v2529 = vpop.permute.xlu0 %2528
      %2530 = vrot.lane.b32.xlu0 %v1351, 20
      %v2531 = vpop.permute.xlu0 %2530
      %2532 = vrot.lane.b32.xlu0 %v1352, 20
      %v2533 = vpop.permute.xlu0 %2532
      %2534 = vrot.lane.b32.xlu0 %v1353, 20
      %v2535 = vpop.permute.xlu0 %2534
      %2536 = vrot.lane.b32.xlu0 %v1354, 20
      %v2537 = vpop.permute.xlu0 %2536
      %2538 = vrot.lane.b32.xlu0 %v1355, 20
      %v2539 = vpop.permute.xlu0 %2538
      %2540 = vrot.lane.b32.xlu0 %v1356, 20
      %v2541 = vpop.permute.xlu0 %2540
      %2542 = vrot.lane.b32.xlu0 %v1357, 20
      %v2543 = vpop.permute.xlu0 %2542
      %2544 = vrot.lane.b32.xlu0 %v1358, 20
      %v2545 = vpop.permute.xlu0 %2544
      %2546 = vrot.lane.b32.xlu0 %v1359, 20
      %v2547 = vpop.permute.xlu0 %2546
      %2548 = vrot.lane.b32.xlu0 %v1360, 20
      %v2549 = vpop.permute.xlu0 %2548
      %2550 = vrot.lane.b32.xlu0 %v1361, 20
      %v2551 = vpop.permute.xlu0 %2550
      %2552 = vrot.lane.b32.xlu0 %v1362, 20
      %v2553 = vpop.permute.xlu0 %2552
      %2554 = vrot.lane.b32.xlu0 %v1363, 20
      %v2555 = vpop.permute.xlu0 %2554
      %2556 = vrot.lane.b32.xlu0 %v1364, 20
      %v2557 = vpop.permute.xlu0 %2556
      %2574 = vrot.lane.b32.xlu0 %v1447, 24
      %v2575 = vpop.permute.xlu0 %2574
      %2576 = vrot.lane.b32.xlu0 %v1448, 24
      %v2577 = vpop.permute.xlu0 %2576
      %2578 = vrot.lane.b32.xlu0 %v1449, 24
      %v2579 = vpop.permute.xlu0 %2578
      %2580 = vrot.lane.b32.xlu0 %v1450, 24
      %v2581 = vpop.permute.xlu0 %2580
      %2582 = vrot.lane.b32.xlu0 %v1451, 24
      %v2583 = vpop.permute.xlu0 %2582
      %2584 = vrot.lane.b32.xlu0 %v1452, 24
      %v2585 = vpop.permute.xlu0 %2584
      %2586 = vrot.lane.b32.xlu0 %v1453, 24
      %v2587 = vpop.permute.xlu0 %2586
      %2588 = vrot.lane.b32.xlu0 %v1454, 24
      %v2589 = vpop.permute.xlu0 %2588
      %2590 = vrot.lane.b32.xlu0 %v1455, 24
      %v2591 = vpop.permute.xlu0 %2590
      %2592 = vrot.lane.b32.xlu0 %v1456, 24
      %v2593 = vpop.permute.xlu0 %2592
      %2594 = vrot.lane.b32.xlu0 %v1457, 24
      %v2595 = vpop.permute.xlu0 %2594
      %2596 = vrot.lane.b32.xlu0 %v1458, 24
      %v2597 = vpop.permute.xlu0 %2596
      %2598 = vrot.lane.b32.xlu0 %v1459, 24
      %v2599 = vpop.permute.xlu0 %2598
      %2600 = vrot.lane.b32.xlu0 %v1460, 24
      %v2601 = vpop.permute.xlu0 %2600
      %2602 = vrot.lane.b32.xlu0 %v1461, 24
      %v2603 = vpop.permute.xlu0 %2602
      %2604 = vrot.lane.b32.xlu0 %v1462, 24
      %v2605 = vpop.permute.xlu0 %2604
      %2622 = vrot.lane.b32.xlu0 %v1543, 28
      %v2623 = vpop.permute.xlu0 %2622
      %2624 = vrot.lane.b32.xlu0 %v1544, 28
      %v2625 = vpop.permute.xlu0 %2624
      %2626 = vrot.lane.b32.xlu0 %v1545, 28
      %v2627 = vpop.permute.xlu0 %2626
      %2628 = vrot.lane.b32.xlu0 %v1546, 28
      %v2629 = vpop.permute.xlu0 %2628
      %2630 = vrot.lane.b32.xlu0 %v1547, 28
      %v2631 = vpop.permute.xlu0 %2630
      %2632 = vrot.lane.b32.xlu0 %v1548, 28
      %v2633 = vpop.permute.xlu0 %2632
      %2634 = vrot.lane.b32.xlu0 %v1549, 28
      %v2635 = vpop.permute.xlu0 %2634
      %2636 = vrot.lane.b32.xlu0 %v1550, 28
      %v2637 = vpop.permute.xlu0 %2636
      %2638 = vrot.lane.b32.xlu0 %v1551, 28
      %v2639 = vpop.permute.xlu0 %2638
      %2640 = vrot.lane.b32.xlu0 %v1552, 28
      %v2641 = vpop.permute.xlu0 %2640
      %2642 = vrot.lane.b32.xlu0 %v1553, 28
      %v2643 = vpop.permute.xlu0 %2642
      %2644 = vrot.lane.b32.xlu0 %v1554, 28
      %v2645 = vpop.permute.xlu0 %2644
      %2646 = vrot.lane.b32.xlu0 %v1555, 28
      %v2647 = vpop.permute.xlu0 %2646
      %2648 = vrot.lane.b32.xlu0 %v1556, 28
      %v2649 = vpop.permute.xlu0 %2648
      %2650 = vrot.lane.b32.xlu0 %v1557, 28
      %v2651 = vpop.permute.xlu0 %2650
      %2652 = vrot.lane.b32.xlu0 %v1558, 28
      %v2653 = vpop.permute.xlu0 %2652
      %2670 = vrot.lane.b32.xlu0 %v1639, 32
      %v2671 = vpop.permute.xlu0 %2670
      %2672 = vrot.lane.b32.xlu0 %v1640, 32
      %v2673 = vpop.permute.xlu0 %2672
      %2674 = vrot.lane.b32.xlu0 %v1641, 32
      %v2675 = vpop.permute.xlu0 %2674
      %2676 = vrot.lane.b32.xlu0 %v1642, 32
      %v2677 = vpop.permute.xlu0 %2676
      %2678 = vrot.lane.b32.xlu0 %v1643, 32
      %v2679 = vpop.permute.xlu0 %2678
      %2680 = vrot.lane.b32.xlu0 %v1644, 32
      %v2681 = vpop.permute.xlu0 %2680
      %2682 = vrot.lane.b32.xlu0 %v1645, 32
      %v2683 = vpop.permute.xlu0 %2682
      %2684 = vrot.lane.b32.xlu0 %v1646, 32
      %v2685 = vpop.permute.xlu0 %2684
      %2686 = vrot.lane.b32.xlu0 %v1647, 32
      %v2687 = vpop.permute.xlu0 %2686
      %2688 = vrot.lane.b32.xlu0 %v1648, 32
      %v2689 = vpop.permute.xlu0 %2688
      %2690 = vrot.lane.b32.xlu0 %v1649, 32
      %v2691 = vpop.permute.xlu0 %2690
      %2692 = vrot.lane.b32.xlu0 %v1650, 32
      %v2693 = vpop.permute.xlu0 %2692
      %2694 = vrot.lane.b32.xlu0 %v1651, 32
      %v2695 = vpop.permute.xlu0 %2694
      %2696 = vrot.lane.b32.xlu0 %v1652, 32
      %v2697 = vpop.permute.xlu0 %2696
      %2698 = vrot.lane.b32.xlu0 %v1653, 32
      %v2699 = vpop.permute.xlu0 %2698
      %2700 = vrot.lane.b32.xlu0 %v1654, 32
      %v2701 = vpop.permute.xlu0 %2700
      %v2704 = vsel %vm501, %v869, %v2335
      %v2707 = vsel %vm501, %v870, %v2337
      %v2710 = vsel %vm501, %v871, %v2339
      %v2713 = vsel %vm501, %v872, %v2341
      %v2716 = vsel %vm501, %v873, %v2343
      %v2719 = vsel %vm501, %v874, %v2345
      %v2722 = vsel %vm501, %v875, %v2347
      %v2725 = vsel %vm501, %v876, %v2349
      %v2728 = vsel %vm501, %v877, %v2351
      %v2731 = vsel %vm501, %v878, %v2353
      %v2734 = vsel %vm501, %v879, %v2355
      %v2737 = vsel %vm501, %v880, %v2357
      %v2740 = vsel %vm501, %v881, %v2359
      %v2743 = vsel %vm501, %v882, %v2361
      %v2746 = vsel %vm501, %v883, %v2363
      %v2749 = vsel %vm501, %v884, %v2365
      %v2751 = vsel %vm2087, %v2704, %v2383
      %v2753 = vsel %vm2087, %v2707, %v2385
      %v2755 = vsel %vm2087, %v2710, %v2387
      %v2757 = vsel %vm2087, %v2713, %v2389
      %v2759 = vsel %vm2087, %v2716, %v2391
      %v2761 = vsel %vm2087, %v2719, %v2393
      %v2763 = vsel %vm2087, %v2722, %v2395
      %v2765 = vsel %vm2087, %v2725, %v2397
      %v2767 = vsel %vm2087, %v2728, %v2399
      %v2769 = vsel %vm2087, %v2731, %v2401
      %v2771 = vsel %vm2087, %v2734, %v2403
      %v2773 = vsel %vm2087, %v2737, %v2405
      %v2775 = vsel %vm2087, %v2740, %v2407
      %v2777 = vsel %vm2087, %v2743, %v2409
      %v2779 = vsel %vm2087, %v2746, %v2411
      %v2781 = vsel %vm2087, %v2749, %v2413
      %v2783 = vsel %vm2120, %v2751, %v2431
      %v2785 = vsel %vm2120, %v2753, %v2433
      %v2787 = vsel %vm2120, %v2755, %v2435
      %v2789 = vsel %vm2120, %v2757, %v2437
      %v2791 = vsel %vm2120, %v2759, %v2439
      %v2793 = vsel %vm2120, %v2761, %v2441
      %v2795 = vsel %vm2120, %v2763, %v2443
      %v2797 = vsel %vm2120, %v2765, %v2445
      %v2799 = vsel %vm2120, %v2767, %v2447
      %v2801 = vsel %vm2120, %v2769, %v2449
      %v2803 = vsel %vm2120, %v2771, %v2451
      %v2805 = vsel %vm2120, %v2773, %v2453
      %v2807 = vsel %vm2120, %v2775, %v2455
      %v2809 = vsel %vm2120, %v2777, %v2457
      %v2811 = vsel %vm2120, %v2779, %v2459
      %v2813 = vsel %vm2120, %v2781, %v2461
      %v2815 = vsel %vm2153, %v2783, %v2479
      %v2817 = vsel %vm2153, %v2785, %v2481
      %v2819 = vsel %vm2153, %v2787, %v2483
      %v2821 = vsel %vm2153, %v2789, %v2485
      %v2823 = vsel %vm2153, %v2791, %v2487
      %v2825 = vsel %vm2153, %v2793, %v2489
      %v2827 = vsel %vm2153, %v2795, %v2491
      %v2829 = vsel %vm2153, %v2797, %v2493
      %v2831 = vsel %vm2153, %v2799, %v2495
      %v2833 = vsel %vm2153, %v2801, %v2497
      %v2835 = vsel %vm2153, %v2803, %v2499
      %v2837 = vsel %vm2153, %v2805, %v2501
      %v2839 = vsel %vm2153, %v2807, %v2503
      %v2841 = vsel %vm2153, %v2809, %v2505
      %v2843 = vsel %vm2153, %v2811, %v2507
      %v2845 = vsel %vm2153, %v2813, %v2509
      %v2847 = vsel %vm2186, %v2815, %v2527
      %v2849 = vsel %vm2186, %v2817, %v2529
      %v2851 = vsel %vm2186, %v2819, %v2531
      %v2853 = vsel %vm2186, %v2821, %v2533
      %v2855 = vsel %vm2186, %v2823, %v2535
      %v2857 = vsel %vm2186, %v2825, %v2537
      %v2859 = vsel %vm2186, %v2827, %v2539
      %v2861 = vsel %vm2186, %v2829, %v2541
      %v2863 = vsel %vm2186, %v2831, %v2543
      %v2865 = vsel %vm2186, %v2833, %v2545
      %v2867 = vsel %vm2186, %v2835, %v2547
      %v2869 = vsel %vm2186, %v2837, %v2549
      %v2871 = vsel %vm2186, %v2839, %v2551
      %v2873 = vsel %vm2186, %v2841, %v2553
      %v2875 = vsel %vm2186, %v2843, %v2555
      %v2877 = vsel %vm2186, %v2845, %v2557
      %v2879 = vsel %vm2219, %v2847, %v2575
      %v2881 = vsel %vm2219, %v2849, %v2577
      %v2883 = vsel %vm2219, %v2851, %v2579
      %v2885 = vsel %vm2219, %v2853, %v2581
      %v2887 = vsel %vm2219, %v2855, %v2583
      %v2889 = vsel %vm2219, %v2857, %v2585
      %v2891 = vsel %vm2219, %v2859, %v2587
      %v2893 = vsel %vm2219, %v2861, %v2589
      %v2895 = vsel %vm2219, %v2863, %v2591
      %v2897 = vsel %vm2219, %v2865, %v2593
      %v2899 = vsel %vm2219, %v2867, %v2595
      %v2901 = vsel %vm2219, %v2869, %v2597
      %v2903 = vsel %vm2219, %v2871, %v2599
      %v2905 = vsel %vm2219, %v2873, %v2601
      %v2907 = vsel %vm2219, %v2875, %v2603
      %v2909 = vsel %vm2219, %v2877, %v2605
      %v2911 = vsel %vm2252, %v2879, %v2623
      %v2913 = vsel %vm2252, %v2881, %v2625
      %v2915 = vsel %vm2252, %v2883, %v2627
      %v2917 = vsel %vm2252, %v2885, %v2629
      %v2919 = vsel %vm2252, %v2887, %v2631
      %v2921 = vsel %vm2252, %v2889, %v2633
      %v2923 = vsel %vm2252, %v2891, %v2635
      %v2925 = vsel %vm2252, %v2893, %v2637
      %v2927 = vsel %vm2252, %v2895, %v2639
      %v2929 = vsel %vm2252, %v2897, %v2641
      %v2931 = vsel %vm2252, %v2899, %v2643
      %v2933 = vsel %vm2252, %v2901, %v2645
      %v2935 = vsel %vm2252, %v2903, %v2647
      %v2937 = vsel %vm2252, %v2905, %v2649
      %v2939 = vsel %vm2252, %v2907, %v2651
      %v2941 = vsel %vm2252, %v2909, %v2653
      %v2943 = vsel %vm2285, %v2911, %v2671
      %v2945 = vsel %vm2285, %v2913, %v2673
      %v2947 = vsel %vm2285, %v2915, %v2675
      %v2949 = vsel %vm2285, %v2917, %v2677
      %v2951 = vsel %vm2285, %v2919, %v2679
      %v2953 = vsel %vm2285, %v2921, %v2681
      %v2955 = vsel %vm2285, %v2923, %v2683
      %v2957 = vsel %vm2285, %v2925, %v2685
      %v2959 = vsel %vm2285, %v2927, %v2687
      %v2961 = vsel %vm2285, %v2929, %v2689
      %v2963 = vsel %vm2285, %v2931, %v2691
      %v2965 = vsel %vm2285, %v2933, %v2693
      %v2967 = vsel %vm2285, %v2935, %v2695
      %v2969 = vsel %vm2285, %v2937, %v2697
      %v2971 = vsel %vm2285, %v2939, %v2699
      %v2973 = vsel %vm2285, %v2941, %v2701
      %v2974 = vld [vmem:[%s1] sm:$0xf]
      %v2975 = vld [vmem:[%s1 + $0x4] sm:$0xf]
      %v2976 = vld [vmem:[%s1 + $0x8] sm:$0xf]
      %v2977 = vld [vmem:[%s1 + $0xc] sm:$0xf]
      %v2978 = vld [vmem:[%s1 + $0x10] sm:$0x3]
      %v2984 = vunpack.c.l.b16 %v2974
      %v2985 = vunpack.c.l.b16 %v2975
      %v2986 = vunpack.c.l.b16 %v2976
      %v2987 = vunpack.c.l.b16 %v2977
      %v2988 = vunpack.c.l.b16 %v2978
      %v2989 = vpack.c.b16 %v2985, %v2984
      %v2990 = vpack.c.b16 %v2987, %v2986
      %v2991 = vpack.c.b16 %v2988, %v2988
      %vm2994 = vcmask 293888
      %v2995 = vsel %vm2994, %v2287, 0
      %v2997 = vsel %vm2994, %v2289, 0
      %v2999 = vsel %vm2994, %v2291, 0
      %v3001 = vsel %vm2994, %v2293, 0
      %v3003 = vsel %vm2994, %v2295, 0
      %v3005 = vsel %vm2994, %v2297, 0
      %v3007 = vsel %vm2994, %v2299, 0
      %v3009 = vsel %vm2994, %v2301, 0
      %v3011 = vsel %vm2994, %v2303, 0
      %v3013 = vsel %vm2994, %v2305, 0
      %v3015 = vsel %vm2994, %v2307, 0
      %v3017 = vsel %vm2994, %v2309, 0
      %v3019 = vsel %vm2994, %v2311, 0
      %v3021 = vsel %vm2994, %v2313, 0
      %v3023 = vsel %vm2994, %v2315, 0
      %v3025 = vsel %vm2994, %v2317, 0
      %vm3027 = vcmask 1041408
      %v3029 = vsel %vm3027, %v2991, 0
      %3031 = vmatprep.subr.bf16.mxu0 0
      %3032 = vmatpush1.bf16.msra.mxu0 %v2989
      %3033 = vmatprep.subr.bf16.mxu0 0
      %3034 = vmatpush1.bf16.msra.mxu0 %v2990
      %3035 = vmatprep.subr.bf16.mxu0 0
      %3036 = vmatpush1.bf16.msra.mxu0 %v3029
      %3037 = vmatprep.subr.bf16.mxu0 0
      %3038 = vmatpush1.bf16.msra.mxu0 0
      %3039 = vmatprep.subr.bf16.mxu0 0
      %3040 = vmatpush1.bf16.msra.mxu0 0
      %3041 = vmatprep.subr.bf16.mxu0 0
      %3042 = vmatpush1.bf16.msra.mxu0 0
      %3043 = vmatprep.subr.bf16.mxu0 0
      %3044 = vmatpush1.bf16.msra.mxu0 0
      %3045 = vmatprep.subr.bf16.mxu0 0
      %3046 = vmatpush1.bf16.msra.mxu0 0
      %3047 = vmatprep.subr.bf16.mxu0 0
      %3048 = vmatpush1.bf16.msra.mxu0 0
      %3049 = vmatprep.subr.bf16.mxu0 0
      %3050 = vmatpush1.bf16.msra.mxu0 0
      %3051 = vmatprep.subr.bf16.mxu0 0
      %3052 = vmatpush1.bf16.msra.mxu0 0
      %3053 = vmatprep.subr.bf16.mxu0 0
      %3054 = vmatpush1.bf16.msra.mxu0 0
      %3055 = vmatprep.subr.bf16.mxu0 0
      %3056 = vmatpush1.bf16.msra.mxu0 0
      %3057 = vmatprep.subr.bf16.mxu0 0
      %3058 = vmatpush1.bf16.msra.mxu0 0
      %3059 = vmatprep.subr.bf16.mxu0 0
      %3060 = vmatpush1.bf16.msra.mxu0 0
      %3061 = vmatprep.subr.bf16.mxu0 0
      %3062 = vmatpush1.bf16.msra.mxu0 0
      %3063 = vmatprep.mubr.bf16.mxu0 0
      %3064 = vmatmul.mubr.bf16.gmra.mrb[0].mxu0 %v2995
      %v3065 = vpop.f32.mrb[0].mxu0
      %v3066 = vadd.f32 0.0, %v3065
      %v3067 = vpop.f32.mrb[0].mxu0
      %v3068 = vpop.f32.mrb[0].mxu0
      %v3069 = vadd.f32 0.0, %v3068
      %v3070 = vpop.f32.mrb[0].mxu0
      %3071 = vmatprep.mubr.bf16.mxu0 0
      %3072 = vmatmul.mubr.bf16.gmra.mrb[0].mxu0 %v2997
      %v3073 = vpop.f32.mrb[0].mxu0
      %v3074 = vadd.f32 0.0, %v3073
      %v3075 = vpop.f32.mrb[0].mxu0
      %v3076 = vpop.f32.mrb[0].mxu0
      %v3077 = vadd.f32 0.0, %v3076
      %v3078 = vpop.f32.mrb[0].mxu0
      %3079 = vmatprep.mubr.bf16.mxu0 0
      %3080 = vmatmul.mubr.bf16.gmra.mrb[0].mxu0 %v2999
      %v3081 = vpop.f32.mrb[0].mxu0
      %v3082 = vadd.f32 0.0, %v3081
      %v3083 = vpop.f32.mrb[0].mxu0
      %v3084 = vpop.f32.mrb[0].mxu0
      %v3085 = vadd.f32 0.0, %v3084
      %v3086 = vpop.f32.mrb[0].mxu0
      %3087 = vmatprep.mubr.bf16.mxu0 0
      %3088 = vmatmul.mubr.bf16.gmra.mrb[0].mxu0 %v3001
      %v3089 = vpop.f32.mrb[0].mxu0
      %v3090 = vadd.f32 0.0, %v3089
      %v3091 = vpop.f32.mrb[0].mxu0
      %v3092 = vpop.f32.mrb[0].mxu0
      %v3093 = vadd.f32 0.0, %v3092
      %v3094 = vpop.f32.mrb[0].mxu0
      %3095 = vmatprep.mubr.bf16.mxu0 0
      %3096 = vmatmul.mubr.bf16.gmra.mrb[0].mxu0 %v3003
      %v3097 = vpop.f32.mrb[0].mxu0
      %v3098 = vadd.f32 0.0, %v3097
      %v3099 = vpop.f32.mrb[0].mxu0
      %v3100 = vpop.f32.mrb[0].mxu0
      %v3101 = vadd.f32 0.0, %v3100
      %v3102 = vpop.f32.mrb[0].mxu0
      %3103 = vmatprep.mubr.bf16.mxu0 0
      %3104 = vmatmul.mubr.bf16.gmra.mrb[0].mxu0 %v3005
      %v3105 = vpop.f32.mrb[0].mxu0
      %v3106 = vadd.f32 0.0, %v3105
      %v3107 = vpop.f32.mrb[0].mxu0
      %v3108 = vpop.f32.mrb[0].mxu0
      %v3109 = vadd.f32 0.0, %v3108
      %v3110 = vpop.f32.mrb[0].mxu0
      %3111 = vmatprep.mubr.bf16.mxu0 0
      %3112 = vmatmul.mubr.bf16.gmra.mrb[0].mxu0 %v3007
      %v3113 = vpop.f32.mrb[0].mxu0
      %v3114 = vadd.f32 0.0, %v3113
      %v3115 = vpop.f32.mrb[0].mxu0
      %v3116 = vpop.f32.mrb[0].mxu0
      %v3117 = vadd.f32 0.0, %v3116
      %v3118 = vpop.f32.mrb[0].mxu0
      %3119 = vmatprep.mubr.bf16.mxu0 0
      %3120 = vmatmul.mubr.bf16.gmra.mrb[0].mxu0 %v3009
      %v3121 = vpop.f32.mrb[0].mxu0
      %v3122 = vadd.f32 0.0, %v3121
      %v3123 = vpop.f32.mrb[0].mxu0
      %v3124 = vpop.f32.mrb[0].mxu0
      %v3125 = vadd.f32 0.0, %v3124
      %v3126 = vpop.f32.mrb[0].mxu0
      %3127 = vmatprep.mubr.bf16.mxu0 0
      %3128 = vmatmul.mubr.bf16.gmra.mrb[0].mxu0 %v3011
      %v3129 = vpop.f32.mrb[0].mxu0
      %v3130 = vadd.f32 0.0, %v3129
      %v3131 = vpop.f32.mrb[0].mxu0
      %v3132 = vpop.f32.mrb[0].mxu0
      %v3133 = vadd.f32 0.0, %v3132
      %v3134 = vpop.f32.mrb[0].mxu0
      %3135 = vmatprep.mubr.bf16.mxu0 0
      %3136 = vmatmul.mubr.bf16.gmra.mrb[0].mxu0 %v3013
      %v3137 = vpop.f32.mrb[0].mxu0
      %v3138 = vadd.f32 0.0, %v3137
      %v3139 = vpop.f32.mrb[0].mxu0
      %v3140 = vpop.f32.mrb[0].mxu0
      %v3141 = vadd.f32 0.0, %v3140
      %v3142 = vpop.f32.mrb[0].mxu0
      %3143 = vmatprep.mubr.bf16.mxu0 0
      %3144 = vmatmul.mubr.bf16.gmra.mrb[0].mxu0 %v3015
      %v3145 = vpop.f32.mrb[0].mxu0
      %v3146 = vadd.f32 0.0, %v3145
      %v3147 = vpop.f32.mrb[0].mxu0
      %v3148 = vpop.f32.mrb[0].mxu0
      %v3149 = vadd.f32 0.0, %v3148
      %v3150 = vpop.f32.mrb[0].mxu0
      %3151 = vmatprep.mubr.bf16.mxu0 0
      %3152 = vmatmul.mubr.bf16.gmra.mrb[0].mxu0 %v3017
      %v3153 = vpop.f32.mrb[0].mxu0
      %v3154 = vadd.f32 0.0, %v3153
      %v3155 = vpop.f32.mrb[0].mxu0
      %v3156 = vpop.f32.mrb[0].mxu0
      %v3157 = vadd.f32 0.0, %v3156
      %v3158 = vpop.f32.mrb[0].mxu0
      %3159 = vmatprep.mubr.bf16.mxu0 0
      %3160 = vmatmul.mubr.bf16.gmra.mrb[0].mxu0 %v3019
      %v3161 = vpop.f32.mrb[0].mxu0
      %v3162 = vadd.f32 0.0, %v3161
      %v3163 = vpop.f32.mrb[0].mxu0
      %v3164 = vpop.f32.mrb[0].mxu0
      %v3165 = vadd.f32 0.0, %v3164
      %v3166 = vpop.f32.mrb[0].mxu0
      %3167 = vmatprep.mubr.bf16.mxu0 0
      %3168 = vmatmul.mubr.bf16.gmra.mrb[0].mxu0 %v3021
      %v3169 = vpop.f32.mrb[0].mxu0
      %v3170 = vadd.f32 0.0, %v3169
      %v3171 = vpop.f32.mrb[0].mxu0
      %v3172 = vpop.f32.mrb[0].mxu0
      %v3173 = vadd.f32 0.0, %v3172
      %v3174 = vpop.f32.mrb[0].mxu0
      %3175 = vmatprep.mubr.bf16.mxu0 0
      %3176 = vmatmul.mubr.bf16.gmra.mrb[0].mxu0 %v3023
      %v3177 = vpop.f32.mrb[0].mxu0
      %v3178 = vadd.f32 0.0, %v3177
      %v3179 = vpop.f32.mrb[0].mxu0
      %v3180 = vpop.f32.mrb[0].mxu0
      %v3181 = vadd.f32 0.0, %v3180
      %v3182 = vpop.f32.mrb[0].mxu0
      %3183 = vmatprep.mubr.bf16.mxu0 0
      %3184 = vmatmul.mubr.bf16.gmra.mrb[0].mxu0 %v3025
      %v3185 = vpop.f32.mrb[0].mxu0
      %v3186 = vadd.f32 0.0, %v3185
      %v3187 = vpop.f32.mrb[0].mxu0
      %v3188 = vpop.f32.mrb[0].mxu0
      %v3189 = vadd.f32 0.0, %v3188
      %v3190 = vpop.f32.mrb[0].mxu0
      %3191 = vdwg.mxu0
      %v3192 = vld [vmem:[%s2] sm:$0xf]
      %v3193 = vld [vmem:[%s2 + $0x4] sm:$0xf]
      %v3194 = vld [vmem:[%s2 + $0x8] sm:$0xf]
      %v3195 = vld [vmem:[%s2 + $0xc] sm:$0xf]
      %v3196 = vld [vmem:[%s2 + $0x10] sm:$0x3]
      %v3202 = vunpack.c.l.b16 %v3192
      %v3203 = vunpack.c.l.b16 %v3193
      %v3204 = vunpack.c.l.b16 %v3194
      %v3205 = vunpack.c.l.b16 %v3195
      %v3206 = vunpack.c.l.b16 %v3196
      %v3207 = vpack.c.b16 %v3203, %v3202
      %v3208 = vpack.c.b16 %v3205, %v3204
      %v3209 = vpack.c.b16 %v3206, %v3206
      %v3212 = vsel %vm2994, %v2943, 0
      %v3214 = vsel %vm2994, %v2945, 0
      %v3216 = vsel %vm2994, %v2947, 0
      %v3218 = vsel %vm2994, %v2949, 0
      %v3220 = vsel %vm2994, %v2951, 0
      %v3222 = vsel %vm2994, %v2953, 0
      %v3224 = vsel %vm2994, %v2955, 0
      %v3226 = vsel %vm2994, %v2957, 0
      %v3228 = vsel %vm2994, %v2959, 0
      %v3230 = vsel %vm2994, %v2961, 0
      %v3232 = vsel %vm2994, %v2963, 0
      %v3234 = vsel %vm2994, %v2965, 0
      %v3236 = vsel %vm2994, %v2967, 0
      %v3238 = vsel %vm2994, %v2969, 0
      %v3240 = vsel %vm2994, %v2971, 0
      %v3242 = vsel %vm2994, %v2973, 0
      %v3245 = vsel %vm3027, %v3209, 0
      %3247 = vmatprep.subr.bf16.mxu0 0
      %3248 = vmatpush1.bf16.msra.mxu0 %v3207
      %3249 = vmatprep.subr.bf16.mxu0 0
      %3250 = vmatpush1.bf16.msra.mxu0 %v3208
      %3251 = vmatprep.subr.bf16.mxu0 0
      %3252 = vmatpush1.bf16.msra.mxu0 %v3245
      %3253 = vmatprep.subr.bf16.mxu0 0
      %3254 = vmatpush1.bf16.msra.mxu0 0
      %3255 = vmatprep.subr.bf16.mxu0 0
      %3256 = vmatpush1.bf16.msra.mxu0 0
      %3257 = vmatprep.subr.bf16.mxu0 0
      %3258 = vmatpush1.bf16.msra.mxu0 0
      %3259 = vmatprep.subr.bf16.mxu0 0
      %3260 = vmatpush1.bf16.msra.mxu0 0
      %3261 = vmatprep.subr.bf16.mxu0 0
      %3262 = vmatpush1.bf16.msra.mxu0 0
      %3263 = vmatprep.subr.bf16.mxu0 0
      %3264 = vmatpush1.bf16.msra.mxu0 0
      %3265 = vmatprep.subr.bf16.mxu0 0
      %3266 = vmatpush1.bf16.msra.mxu0 0
      %3267 = vmatprep.subr.bf16.mxu0 0
      %3268 = vmatpush1.bf16.msra.mxu0 0
      %3269 = vmatprep.subr.bf16.mxu0 0
      %3270 = vmatpush1.bf16.msra.mxu0 0
      %3271 = vmatprep.subr.bf16.mxu0 0
      %3272 = vmatpush1.bf16.msra.mxu0 0
      %3273 = vmatprep.subr.bf16.mxu0 0
      %3274 = vmatpush1.bf16.msra.mxu0 0
      %3275 = vmatprep.subr.bf16.mxu0 0
      %3276 = vmatpush1.bf16.msra.mxu0 0
      %3277 = vmatprep.subr.bf16.mxu0 0
      %3278 = vmatpush1.bf16.msra.mxu0 0
      %3279 = vmatprep.mubr.bf16.mxu0 0
      %3280 = vmatmul.mubr.bf16.gmra.mrb[0].mxu0 %v3212
      %v3281 = vpop.f32.mrb[0].mxu0
      %v3282 = vadd.f32 0.0, %v3281
      %v3283 = vpop.f32.mrb[0].mxu0
      %v3284 = vpop.f32.mrb[0].mxu0
      %v3285 = vadd.f32 0.0, %v3284
      %v3286 = vpop.f32.mrb[0].mxu0
      %3287 = vmatprep.mubr.bf16.mxu0 0
      %3288 = vmatmul.mubr.bf16.gmra.mrb[0].mxu0 %v3214
      %v3289 = vpop.f32.mrb[0].mxu0
      %v3290 = vadd.f32 0.0, %v3289
      %v3291 = vpop.f32.mrb[0].mxu0
      %v3292 = vpop.f32.mrb[0].mxu0
      %v3293 = vadd.f32 0.0, %v3292
      %v3294 = vpop.f32.mrb[0].mxu0
      %3295 = vmatprep.mubr.bf16.mxu0 0
      %3296 = vmatmul.mubr.bf16.gmra.mrb[0].mxu0 %v3216
      %v3297 = vpop.f32.mrb[0].mxu0
      %v3298 = vadd.f32 0.0, %v3297
      %v3299 = vpop.f32.mrb[0].mxu0
      %v3300 = vpop.f32.mrb[0].mxu0
      %v3301 = vadd.f32 0.0, %v3300
      %v3302 = vpop.f32.mrb[0].mxu0
      %3303 = vmatprep.mubr.bf16.mxu0 0
      %3304 = vmatmul.mubr.bf16.gmra.mrb[0].mxu0 %v3218
      %v3305 = vpop.f32.mrb[0].mxu0
      %v3306 = vadd.f32 0.0, %v3305
      %v3307 = vpop.f32.mrb[0].mxu0
      %v3308 = vpop.f32.mrb[0].mxu0
      %v3309 = vadd.f32 0.0, %v3308
      %v3310 = vpop.f32.mrb[0].mxu0
      %3311 = vmatprep.mubr.bf16.mxu0 0
      %3312 = vmatmul.mubr.bf16.gmra.mrb[0].mxu0 %v3220
      %v3313 = vpop.f32.mrb[0].mxu0
      %v3314 = vadd.f32 0.0, %v3313
      %v3315 = vpop.f32.mrb[0].mxu0
      %v3316 = vpop.f32.mrb[0].mxu0
      %v3317 = vadd.f32 0.0, %v3316
      %v3318 = vpop.f32.mrb[0].mxu0
      %3319 = vmatprep.mubr.bf16.mxu0 0
      %3320 = vmatmul.mubr.bf16.gmra.mrb[0].mxu0 %v3222
      %v3321 = vpop.f32.mrb[0].mxu0
      %v3322 = vadd.f32 0.0, %v3321
      %v3323 = vpop.f32.mrb[0].mxu0
      %v3324 = vpop.f32.mrb[0].mxu0
      %v3325 = vadd.f32 0.0, %v3324
      %v3326 = vpop.f32.mrb[0].mxu0
      %3327 = vmatprep.mubr.bf16.mxu0 0
      %3328 = vmatmul.mubr.bf16.gmra.mrb[0].mxu0 %v3224
      %v3329 = vpop.f32.mrb[0].mxu0
      %v3330 = vadd.f32 0.0, %v3329
      %v3331 = vpop.f32.mrb[0].mxu0
      %v3332 = vpop.f32.mrb[0].mxu0
      %v3333 = vadd.f32 0.0, %v3332
      %v3334 = vpop.f32.mrb[0].mxu0
      %3335 = vmatprep.mubr.bf16.mxu0 0
      %3336 = vmatmul.mubr.bf16.gmra.mrb[0].mxu0 %v3226
      %v3337 = vpop.f32.mrb[0].mxu0
      %v3338 = vadd.f32 0.0, %v3337
      %v3339 = vpop.f32.mrb[0].mxu0
      %v3340 = vpop.f32.mrb[0].mxu0
      %v3341 = vadd.f32 0.0, %v3340
      %v3342 = vpop.f32.mrb[0].mxu0
      %3343 = vmatprep.mubr.bf16.mxu0 0
      %3344 = vmatmul.mubr.bf16.gmra.mrb[0].mxu0 %v3228
      %v3345 = vpop.f32.mrb[0].mxu0
      %v3346 = vadd.f32 0.0, %v3345
      %v3347 = vpop.f32.mrb[0].mxu0
      %v3348 = vpop.f32.mrb[0].mxu0
      %v3349 = vadd.f32 0.0, %v3348
      %v3350 = vpop.f32.mrb[0].mxu0
      %3351 = vmatprep.mubr.bf16.mxu0 0
      %3352 = vmatmul.mubr.bf16.gmra.mrb[0].mxu0 %v3230
      %v3353 = vpop.f32.mrb[0].mxu0
      %v3354 = vadd.f32 0.0, %v3353
      %v3355 = vpop.f32.mrb[0].mxu0
      %v3356 = vpop.f32.mrb[0].mxu0
      %v3357 = vadd.f32 0.0, %v3356
      %v3358 = vpop.f32.mrb[0].mxu0
      %3359 = vmatprep.mubr.bf16.mxu0 0
      %3360 = vmatmul.mubr.bf16.gmra.mrb[0].mxu0 %v3232
      %v3361 = vpop.f32.mrb[0].mxu0
      %v3362 = vadd.f32 0.0, %v3361
      %v3363 = vpop.f32.mrb[0].mxu0
      %v3364 = vpop.f32.mrb[0].mxu0
      %v3365 = vadd.f32 0.0, %v3364
      %v3366 = vpop.f32.mrb[0].mxu0
      %3367 = vmatprep.mubr.bf16.mxu0 0
      %3368 = vmatmul.mubr.bf16.gmra.mrb[0].mxu0 %v3234
      %v3369 = vpop.f32.mrb[0].mxu0
      %v3370 = vadd.f32 0.0, %v3369
      %v3371 = vpop.f32.mrb[0].mxu0
      %v3372 = vpop.f32.mrb[0].mxu0
      %v3373 = vadd.f32 0.0, %v3372
      %v3374 = vpop.f32.mrb[0].mxu0
      %3375 = vmatprep.mubr.bf16.mxu0 0
      %3376 = vmatmul.mubr.bf16.gmra.mrb[0].mxu0 %v3236
      %v3377 = vpop.f32.mrb[0].mxu0
      %v3378 = vadd.f32 0.0, %v3377
      %v3379 = vpop.f32.mrb[0].mxu0
      %v3380 = vpop.f32.mrb[0].mxu0
      %v3381 = vadd.f32 0.0, %v3380
      %v3382 = vpop.f32.mrb[0].mxu0
      %3383 = vmatprep.mubr.bf16.mxu0 0
      %3384 = vmatmul.mubr.bf16.gmra.mrb[0].mxu0 %v3238
      %v3385 = vpop.f32.mrb[0].mxu0
      %v3386 = vadd.f32 0.0, %v3385
      %v3387 = vpop.f32.mrb[0].mxu0
      %v3388 = vpop.f32.mrb[0].mxu0
      %v3389 = vadd.f32 0.0, %v3388
      %v3390 = vpop.f32.mrb[0].mxu0
      %3391 = vmatprep.mubr.bf16.mxu0 0
      %3392 = vmatmul.mubr.bf16.gmra.mrb[0].mxu0 %v3240
      %v3393 = vpop.f32.mrb[0].mxu0
      %v3394 = vadd.f32 0.0, %v3393
      %v3395 = vpop.f32.mrb[0].mxu0
      %v3396 = vpop.f32.mrb[0].mxu0
      %v3397 = vadd.f32 0.0, %v3396
      %v3398 = vpop.f32.mrb[0].mxu0
      %3399 = vmatprep.mubr.bf16.mxu0 0
      %3400 = vmatmul.mubr.bf16.gmra.mrb[0].mxu0 %v3242
      %v3401 = vpop.f32.mrb[0].mxu0
      %v3402 = vadd.f32 0.0, %v3401
      %v3403 = vpop.f32.mrb[0].mxu0
      %v3404 = vpop.f32.mrb[0].mxu0
      %v3405 = vadd.f32 0.0, %v3404
      %v3406 = vpop.f32.mrb[0].mxu0
      %3407 = vdwg.mxu0
      %v3408 = vld [vmem:[%s3] sm:$0x1]
      %v3410 = vlaneseq
      %v3411 = vshrl.u32 %v3410, 7
      %v3412 = vsub.s32 0, %v3411
      %v3413 = vrot.slane %v3408, %v3412
      %v3415 = vmul.f32 %v3066, %v3413
      %v3416 = vmul.f32 %v3069, %v3413
      %v3417 = vmul.f32 %v3074, %v3413
      %v3418 = vmul.f32 %v3077, %v3413
      %v3419 = vmul.f32 %v3082, %v3413
      %v3420 = vmul.f32 %v3085, %v3413
      %v3421 = vmul.f32 %v3090, %v3413
      %v3422 = vmul.f32 %v3093, %v3413
      %v3423 = vmul.f32 %v3098, %v3413
      %v3424 = vmul.f32 %v3101, %v3413
      %v3425 = vmul.f32 %v3106, %v3413
      %v3426 = vmul.f32 %v3109, %v3413
      %v3427 = vmul.f32 %v3114, %v3413
      %v3428 = vmul.f32 %v3117, %v3413
      %v3429 = vmul.f32 %v3122, %v3413
      %v3430 = vmul.f32 %v3125, %v3413
      %v3431 = vmul.f32 %v3130, %v3413
      %v3432 = vmul.f32 %v3133, %v3413
      %v3433 = vmul.f32 %v3138, %v3413
      %v3434 = vmul.f32 %v3141, %v3413
      %v3435 = vmul.f32 %v3146, %v3413
      %v3436 = vmul.f32 %v3149, %v3413
      %v3437 = vmul.f32 %v3154, %v3413
      %v3438 = vmul.f32 %v3157, %v3413
      %v3439 = vmul.f32 %v3162, %v3413
      %v3440 = vmul.f32 %v3165, %v3413
      %v3441 = vmul.f32 %v3170, %v3413
      %v3442 = vmul.f32 %v3173, %v3413
      %v3443 = vmul.f32 %v3178, %v3413
      %v3444 = vmul.f32 %v3181, %v3413
      %v3445 = vmul.f32 %v3186, %v3413
      %v3446 = vmul.f32 %v3189, %v3413
      %v3447 = vld [vmem:[%s4] sm:$0x1]
      %v3449 = vlaneseq
      %v3450 = vshrl.u32 %v3449, 7
      %v3451 = vsub.s32 0, %v3450
      %v3452 = vrot.slane %v3447, %v3451
      %v3454 = vadd.f32 %v3415, %v3452
      %v3455 = vadd.f32 %v3416, %v3452
      %v3456 = vadd.f32 %v3417, %v3452
      %v3457 = vadd.f32 %v3418, %v3452
      %v3458 = vadd.f32 %v3419, %v3452
      %v3459 = vadd.f32 %v3420, %v3452
      %v3460 = vadd.f32 %v3421, %v3452
      %v3461 = vadd.f32 %v3422, %v3452
      %v3462 = vadd.f32 %v3423, %v3452
      %v3463 = vadd.f32 %v3424, %v3452
      %v3464 = vadd.f32 %v3425, %v3452
      %v3465 = vadd.f32 %v3426, %v3452
      %v3466 = vadd.f32 %v3427, %v3452
      %v3467 = vadd.f32 %v3428, %v3452
      %v3468 = vadd.f32 %v3429, %v3452
      %v3469 = vadd.f32 %v3430, %v3452
      %v3470 = vadd.f32 %v3431, %v3452
      %v3471 = vadd.f32 %v3432, %v3452
      %v3472 = vadd.f32 %v3433, %v3452
      %v3473 = vadd.f32 %v3434, %v3452
      %v3474 = vadd.f32 %v3435, %v3452
      %v3475 = vadd.f32 %v3436, %v3452
      %v3476 = vadd.f32 %v3437, %v3452
      %v3477 = vadd.f32 %v3438, %v3452
      %v3478 = vadd.f32 %v3439, %v3452
      %v3479 = vadd.f32 %v3440, %v3452
      %v3480 = vadd.f32 %v3441, %v3452
      %v3481 = vadd.f32 %v3442, %v3452
      %v3482 = vadd.f32 %v3443, %v3452
      %v3483 = vadd.f32 %v3444, %v3452
      %v3484 = vadd.f32 %v3445, %v3452
      %v3485 = vadd.f32 %v3446, %v3452
      %v3486 = vmax.f32 %v3454, 0.0
      %v3487 = vmax.f32 %v3455, 0.0
      %v3488 = vmax.f32 %v3456, 0.0
      %v3489 = vmax.f32 %v3457, 0.0
      %v3490 = vmax.f32 %v3458, 0.0
      %v3491 = vmax.f32 %v3459, 0.0
      %v3492 = vmax.f32 %v3460, 0.0
      %v3493 = vmax.f32 %v3461, 0.0
      %v3494 = vmax.f32 %v3462, 0.0
      %v3495 = vmax.f32 %v3463, 0.0
      %v3496 = vmax.f32 %v3464, 0.0
      %v3497 = vmax.f32 %v3465, 0.0
      %v3498 = vmax.f32 %v3466, 0.0
      %v3499 = vmax.f32 %v3467, 0.0
      %v3500 = vmax.f32 %v3468, 0.0
      %v3501 = vmax.f32 %v3469, 0.0
      %v3502 = vmax.f32 %v3470, 0.0
      %v3503 = vmax.f32 %v3471, 0.0
      %v3504 = vmax.f32 %v3472, 0.0
      %v3505 = vmax.f32 %v3473, 0.0
      %v3506 = vmax.f32 %v3474, 0.0
      %v3507 = vmax.f32 %v3475, 0.0
      %v3508 = vmax.f32 %v3476, 0.0
      %v3509 = vmax.f32 %v3477, 0.0
      %v3510 = vmax.f32 %v3478, 0.0
      %v3511 = vmax.f32 %v3479, 0.0
      %v3512 = vmax.f32 %v3480, 0.0
      %v3513 = vmax.f32 %v3481, 0.0
      %v3514 = vmax.f32 %v3482, 0.0
      %v3515 = vmax.f32 %v3483, 0.0
      %v3516 = vmax.f32 %v3484, 0.0
      %v3517 = vmax.f32 %v3485, 0.0
      %v3518 = vld [vmem:[%s5] sm:$0x1]
      %v3520 = vlaneseq
      %v3521 = vshrl.u32 %v3520, 7
      %v3522 = vsub.s32 0, %v3521
      %v3523 = vrot.slane %v3518, %v3522
      %v3525 = vmul.f32 %v3282, %v3523
      %v3526 = vmul.f32 %v3285, %v3523
      %v3527 = vmul.f32 %v3290, %v3523
      %v3528 = vmul.f32 %v3293, %v3523
      %v3529 = vmul.f32 %v3298, %v3523
      %v3530 = vmul.f32 %v3301, %v3523
      %v3531 = vmul.f32 %v3306, %v3523
      %v3532 = vmul.f32 %v3309, %v3523
      %v3533 = vmul.f32 %v3314, %v3523
      %v3534 = vmul.f32 %v3317, %v3523
      %v3535 = vmul.f32 %v3322, %v3523
      %v3536 = vmul.f32 %v3325, %v3523
      %v3537 = vmul.f32 %v3330, %v3523
      %v3538 = vmul.f32 %v3333, %v3523
      %v3539 = vmul.f32 %v3338, %v3523
      %v3540 = vmul.f32 %v3341, %v3523
      %v3541 = vmul.f32 %v3346, %v3523
      %v3542 = vmul.f32 %v3349, %v3523
      %v3543 = vmul.f32 %v3354, %v3523
      %v3544 = vmul.f32 %v3357, %v3523
      %v3545 = vmul.f32 %v3362, %v3523
      %v3546 = vmul.f32 %v3365, %v3523
      %v3547 = vmul.f32 %v3370, %v3523
      %v3548 = vmul.f32 %v3373, %v3523
      %v3549 = vmul.f32 %v3378, %v3523
      %v3550 = vmul.f32 %v3381, %v3523
      %v3551 = vmul.f32 %v3386, %v3523
      %v3552 = vmul.f32 %v3389, %v3523
      %v3553 = vmul.f32 %v3394, %v3523
      %v3554 = vmul.f32 %v3397, %v3523
      %v3555 = vmul.f32 %v3402, %v3523
      %v3556 = vmul.f32 %v3405, %v3523
      %v3557 = vld [vmem:[%s6] sm:$0x1]
      %v3559 = vlaneseq
      %v3560 = vshrl.u32 %v3559, 7
      %v3561 = vsub.s32 0, %v3560
      %v3562 = vrot.slane %v3557, %v3561
      %v3564 = vadd.f32 %v3525, %v3562
      %v3565 = vadd.f32 %v3526, %v3562
      %v3566 = vadd.f32 %v3527, %v3562
      %v3567 = vadd.f32 %v3528, %v3562
      %v3568 = vadd.f32 %v3529, %v3562
      %v3569 = vadd.f32 %v3530, %v3562
      %v3570 = vadd.f32 %v3531, %v3562
      %v3571 = vadd.f32 %v3532, %v3562
      %v3572 = vadd.f32 %v3533, %v3562
      %v3573 = vadd.f32 %v3534, %v3562
      %v3574 = vadd.f32 %v3535, %v3562
      %v3575 = vadd.f32 %v3536, %v3562
      %v3576 = vadd.f32 %v3537, %v3562
      %v3577 = vadd.f32 %v3538, %v3562
      %v3578 = vadd.f32 %v3539, %v3562
      %v3579 = vadd.f32 %v3540, %v3562
      %v3580 = vadd.f32 %v3541, %v3562
      %v3581 = vadd.f32 %v3542, %v3562
      %v3582 = vadd.f32 %v3543, %v3562
      %v3583 = vadd.f32 %v3544, %v3562
      %v3584 = vadd.f32 %v3545, %v3562
      %v3585 = vadd.f32 %v3546, %v3562
      %v3586 = vadd.f32 %v3547, %v3562
      %v3587 = vadd.f32 %v3548, %v3562
      %v3588 = vadd.f32 %v3549, %v3562
      %v3589 = vadd.f32 %v3550, %v3562
      %v3590 = vadd.f32 %v3551, %v3562
      %v3591 = vadd.f32 %v3552, %v3562
      %v3592 = vadd.f32 %v3553, %v3562
      %v3593 = vadd.f32 %v3554, %v3562
      %v3594 = vadd.f32 %v3555, %v3562
      %v3595 = vadd.f32 %v3556, %v3562
      %v3596 = vmax.f32 %v3564, 0.0
      %v3597 = vmax.f32 %v3565, 0.0
      %v3598 = vmax.f32 %v3566, 0.0
      %v3599 = vmax.f32 %v3567, 0.0
      %v3600 = vmax.f32 %v3568, 0.0
      %v3601 = vmax.f32 %v3569, 0.0
      %v3602 = vmax.f32 %v3570, 0.0
      %v3603 = vmax.f32 %v3571, 0.0
      %v3604 = vmax.f32 %v3572, 0.0
      %v3605 = vmax.f32 %v3573, 0.0
      %v3606 = vmax.f32 %v3574, 0.0
      %v3607 = vmax.f32 %v3575, 0.0
      %v3608 = vmax.f32 %v3576, 0.0
      %v3609 = vmax.f32 %v3577, 0.0
      %v3610 = vmax.f32 %v3578, 0.0
      %v3611 = vmax.f32 %v3579, 0.0
      %v3612 = vmax.f32 %v3580, 0.0
      %v3613 = vmax.f32 %v3581, 0.0
      %v3614 = vmax.f32 %v3582, 0.0
      %v3615 = vmax.f32 %v3583, 0.0
      %v3616 = vmax.f32 %v3584, 0.0
      %v3617 = vmax.f32 %v3585, 0.0
      %v3618 = vmax.f32 %v3586, 0.0
      %v3619 = vmax.f32 %v3587, 0.0
      %v3620 = vmax.f32 %v3588, 0.0
      %v3621 = vmax.f32 %v3589, 0.0
      %v3622 = vmax.f32 %v3590, 0.0
      %v3623 = vmax.f32 %v3591, 0.0
      %v3624 = vmax.f32 %v3592, 0.0
      %v3625 = vmax.f32 %v3593, 0.0
      %v3626 = vmax.f32 %v3594, 0.0
      %v3627 = vmax.f32 %v3595, 0.0
      %v3628 = vsel %vm2087, %v3486, 0.0
      %v3629 = vsel %vm2087, %v3487, 0.0
      %v3630 = vadd.f32 %v3628, %v3629
      %v3631 = vsel %vm2087, %v3488, 0.0
      %v3632 = vadd.f32 %v3630, %v3631
      %v3633 = vsel %vm2087, %v3489, 0.0
      %v3634 = vadd.f32 %v3632, %v3633
      %v3635 = vsel %vm2087, %v3490, 0.0
      %v3636 = vadd.f32 %v3634, %v3635
      %v3637 = vsel %vm2087, %v3491, 0.0
      %v3638 = vadd.f32 %v3636, %v3637
      %v3639 = vsel %vm2087, %v3492, 0.0
      %v3640 = vadd.f32 %v3638, %v3639
      %v3641 = vsel %vm2087, %v3493, 0.0
      %v3642 = vadd.f32 %v3640, %v3641
      %v3643 = vsel %vm2087, %v3494, 0.0
      %v3644 = vadd.f32 %v3642, %v3643
      %v3645 = vsel %vm2087, %v3495, 0.0
      %v3646 = vadd.f32 %v3644, %v3645
      %v3647 = vsel %vm2087, %v3496, 0.0
      %v3648 = vadd.f32 %v3646, %v3647
      %v3649 = vsel %vm2087, %v3497, 0.0
      %v3650 = vadd.f32 %v3648, %v3649
      %v3651 = vsel %vm2087, %v3498, 0.0
      %v3652 = vadd.f32 %v3650, %v3651
      %v3653 = vsel %vm2087, %v3499, 0.0
      %v3654 = vadd.f32 %v3652, %v3653
      %v3655 = vsel %vm2087, %v3500, 0.0
      %v3656 = vadd.f32 %v3654, %v3655
      %v3657 = vsel %vm2087, %v3501, 0.0
      %v3658 = vadd.f32 %v3656, %v3657
      %v3659 = vsel %vm2087, %v3502, 0.0
      %v3660 = vadd.f32 %v3658, %v3659
      %v3661 = vsel %vm2087, %v3503, 0.0
      %v3662 = vadd.f32 %v3660, %v3661
      %v3663 = vsel %vm2087, %v3504, 0.0
      %v3664 = vadd.f32 %v3662, %v3663
      %v3665 = vsel %vm2087, %v3505, 0.0
      %v3666 = vadd.f32 %v3664, %v3665
      %v3667 = vsel %vm2087, %v3506, 0.0
      %v3668 = vadd.f32 %v3666, %v3667
      %v3669 = vsel %vm2087, %v3507, 0.0
      %v3670 = vadd.f32 %v3668, %v3669
      %v3671 = vsel %vm2087, %v3508, 0.0
      %v3672 = vadd.f32 %v3670, %v3671
      %v3673 = vsel %vm2087, %v3509, 0.0
      %v3674 = vadd.f32 %v3672, %v3673
      %v3675 = vsel %vm2087, %v3510, 0.0
      %v3676 = vadd.f32 %v3674, %v3675
      %v3677 = vsel %vm2087, %v3511, 0.0
      %v3678 = vadd.f32 %v3676, %v3677
      %v3679 = vsel %vm2087, %v3512, 0.0
      %v3680 = vadd.f32 %v3678, %v3679
      %v3681 = vsel %vm2087, %v3513, 0.0
      %v3682 = vadd.f32 %v3680, %v3681
      %v3683 = vsel %vm2087, %v3514, 0.0
      %v3684 = vadd.f32 %v3682, %v3683
      %v3685 = vsel %vm2087, %v3515, 0.0
      %v3686 = vadd.f32 %v3684, %v3685
      %v3687 = vsel %vm2087, %v3516, 0.0
      %v3688 = vadd.f32 %v3686, %v3687
      %v3689 = vsel %vm2087, %v3517, 0.0
      %v3690 = vadd.f32 %v3688, %v3689
      %v3691 = vrot.slane %v3690, 4
      %v3692 = vadd.f32 %v3690, %v3691
      %v3693 = vrot.slane %v3692, 2
      %v3694 = vadd.f32 %v3692, %v3693
      %v3695 = vrot.slane %v3694, 1
      %v3696 = vadd.f32 %v3694, %v3695
      %v3697 = vsel %vm2087, %v3596, 0.0
      %v3698 = vsel %vm2087, %v3597, 0.0
      %v3699 = vadd.f32 %v3697, %v3698
      %v3700 = vsel %vm2087, %v3598, 0.0
      %v3701 = vadd.f32 %v3699, %v3700
      %v3702 = vsel %vm2087, %v3599, 0.0
      %v3703 = vadd.f32 %v3701, %v3702
      %v3704 = vsel %vm2087, %v3600, 0.0
      %v3705 = vadd.f32 %v3703, %v3704
      %v3706 = vsel %vm2087, %v3601, 0.0
      %v3707 = vadd.f32 %v3705, %v3706
      %v3708 = vsel %vm2087, %v3602, 0.0
      %v3709 = vadd.f32 %v3707, %v3708
      %v3710 = vsel %vm2087, %v3603, 0.0
      %v3711 = vadd.f32 %v3709, %v3710
      %v3712 = vsel %vm2087, %v3604, 0.0
      %v3713 = vadd.f32 %v3711, %v3712
      %v3714 = vsel %vm2087, %v3605, 0.0
      %v3715 = vadd.f32 %v3713, %v3714
      %v3716 = vsel %vm2087, %v3606, 0.0
      %v3717 = vadd.f32 %v3715, %v3716
      %v3718 = vsel %vm2087, %v3607, 0.0
      %v3719 = vadd.f32 %v3717, %v3718
      %v3720 = vsel %vm2087, %v3608, 0.0
      %v3721 = vadd.f32 %v3719, %v3720
      %v3722 = vsel %vm2087, %v3609, 0.0
      %v3723 = vadd.f32 %v3721, %v3722
      %v3724 = vsel %vm2087, %v3610, 0.0
      %v3725 = vadd.f32 %v3723, %v3724
      %v3726 = vsel %vm2087, %v3611, 0.0
      %v3727 = vadd.f32 %v3725, %v3726
      %v3728 = vsel %vm2087, %v3612, 0.0
      %v3729 = vadd.f32 %v3727, %v3728
      %v3730 = vsel %vm2087, %v3613, 0.0
      %v3731 = vadd.f32 %v3729, %v3730
      %v3732 = vsel %vm2087, %v3614, 0.0
      %v3733 = vadd.f32 %v3731, %v3732
      %v3734 = vsel %vm2087, %v3615, 0.0
      %v3735 = vadd.f32 %v3733, %v3734
      %v3736 = vsel %vm2087, %v3616, 0.0
      %v3737 = vadd.f32 %v3735, %v3736
      %v3738 = vsel %vm2087, %v3617, 0.0
      %v3739 = vadd.f32 %v3737, %v3738
      %v3740 = vsel %vm2087, %v3618, 0.0
      %v3741 = vadd.f32 %v3739, %v3740
      %v3742 = vsel %vm2087, %v3619, 0.0
      %v3743 = vadd.f32 %v3741, %v3742
      %v3744 = vsel %vm2087, %v3620, 0.0
      %v3745 = vadd.f32 %v3743, %v3744
      %v3746 = vsel %vm2087, %v3621, 0.0
      %v3747 = vadd.f32 %v3745, %v3746
      %v3748 = vsel %vm2087, %v3622, 0.0
      %v3749 = vadd.f32 %v3747, %v3748
      %v3750 = vsel %vm2087, %v3623, 0.0
      %v3751 = vadd.f32 %v3749, %v3750
      %v3752 = vsel %vm2087, %v3624, 0.0
      %v3753 = vadd.f32 %v3751, %v3752
      %v3754 = vsel %vm2087, %v3625, 0.0
      %v3755 = vadd.f32 %v3753, %v3754
      %v3756 = vsel %vm2087, %v3626, 0.0
      %v3757 = vadd.f32 %v3755, %v3756
      %v3758 = vsel %vm2087, %v3627, 0.0
      %v3759 = vadd.f32 %v3757, %v3758
      %v3760 = vrot.slane %v3759, 4
      %v3761 = vadd.f32 %v3759, %v3760
      %v3762 = vrot.slane %v3761, 2
      %v3763 = vadd.f32 %v3761, %v3762
      %v3764 = vrot.slane %v3763, 1
      %v3765 = vadd.f32 %v3763, %v3764
      %v3766 = vadd.f32 %v3696, %v3765
      %v3767 = vld [vmem:[%s7] sm:$0xff]
      %v3769 = vsel %vm2087, %v3766, 0
      %3771 = vmatprep.subr.mxu0 0.0
      %3772 = vmatpush1.msra.mxu0 %v3767
      %3773 = vmatprep.subr.mxu0 0.0
      %3774 = vmatpush1.msra.mxu0 0.0
      %3775 = vmatprep.subr.mxu0 0.0
      %3776 = vmatpush1.msra.mxu0 0.0
      %3777 = vmatprep.subr.mxu0 0.0
      %3778 = vmatpush1.msra.mxu0 0.0
      %3779 = vmatprep.subr.mxu0 0.0
      %3780 = vmatpush1.msra.mxu0 0.0
      %3781 = vmatprep.subr.mxu0 0.0
      %3782 = vmatpush1.msra.mxu0 0.0
      %3783 = vmatprep.subr.mxu0 0.0
      %3784 = vmatpush1.msra.mxu0 0.0
      %3785 = vmatprep.subr.mxu0 0.0
      %3786 = vmatpush1.msra.mxu0 0.0
      %3787 = vmatprep.subr.mxu0 0.0
      %3788 = vmatpush1.msra.mxu0 0.0
      %3789 = vmatprep.subr.mxu0 0.0
      %3790 = vmatpush1.msra.mxu0 0.0
      %3791 = vmatprep.subr.mxu0 0.0
      %3792 = vmatpush1.msra.mxu0 0.0
      %3793 = vmatprep.subr.mxu0 0.0
      %3794 = vmatpush1.msra.mxu0 0.0
      %3795 = vmatprep.subr.mxu0 0.0
      %3796 = vmatpush1.msra.mxu0 0.0
      %3797 = vmatprep.subr.mxu0 0.0
      %3798 = vmatpush1.msra.mxu0 0.0
      %3799 = vmatprep.subr.mxu0 0.0
      %3800 = vmatpush1.msra.mxu0 0.0
      %3801 = vmatprep.subr.mxu0 0.0
      %3802 = vmatpush1.msra.mxu0 0.0
      %3803 = vmatprep.subr.mxu0 0.0
      %3804 = vmatpush1.msra.mxu0 0.0
      %3805 = vmatprep.subr.mxu0 0.0
      %3806 = vmatpush1.msra.mxu0 0.0
      %3807 = vmatprep.subr.mxu0 0.0
      %3808 = vmatpush1.msra.mxu0 0.0
      %3809 = vmatprep.subr.mxu0 0.0
      %3810 = vmatpush1.msra.mxu0 0.0
      %3811 = vmatprep.subr.mxu0 0.0
      %3812 = vmatpush1.msra.mxu0 0.0
      %3813 = vmatprep.subr.mxu0 0.0
      %3814 = vmatpush1.msra.mxu0 0.0
      %3815 = vmatprep.subr.mxu0 0.0
      %3816 = vmatpush1.msra.mxu0 0.0
      %3817 = vmatprep.subr.mxu0 0.0
      %3818 = vmatpush1.msra.mxu0 0.0
      %3819 = vmatprep.subr.mxu0 0.0
      %3820 = vmatpush1.msra.mxu0 0.0
      %3821 = vmatprep.subr.mxu0 0.0
      %3822 = vmatpush1.msra.mxu0 0.0
      %3823 = vmatprep.subr.mxu0 0.0
      %3824 = vmatpush1.msra.mxu0 0.0
      %3825 = vmatprep.subr.mxu0 0.0
      %3826 = vmatpush1.msra.mxu0 0.0
      %3827 = vmatprep.subr.mxu0 0.0
      %3828 = vmatpush1.msra.mxu0 0.0
      %3829 = vmatprep.subr.mxu0 0.0
      %3830 = vmatpush1.msra.mxu0 0.0
      %3831 = vmatprep.subr.mxu0 0.0
      %3832 = vmatpush1.msra.mxu0 0.0
      %3833 = vmatprep.subr.mxu0 0.0
      %3834 = vmatpush1.msra.mxu0 0.0
      %3835 = vmatprep.mubr.f32.mxu0 0.0
      %3836 = vmatmul.mubr.f32.gmra.mrb[0].mxu0 %v3769
      %v3837 = vpop.f32.mrb[0].mxu0
      %v3838 = vadd.f32 0.0, %v3837
      %v3839 = vpop.f32.mrb[0].mxu0
      %3840 = vdwg.mxu0
      %v3841 = vld [vmem:[%s8] sm:$0x1]
      %v3842 = vmul.f32 %v3838, %v3841
      %v3843 = vld [vmem:[%s9] sm:$0x1]
      %v3844 = vadd.f32 %v3842, %v3843
      %v3845 = vmax.f32 %v3844, 0.0
      %v3846 = vld [vmem:[%s10] sm:$0xff]
      %v3848 = vsel %vm2087, %v3845, 0
      %3850 = vmatprep.subr.mxu0 0.0
      %3851 = vmatpush1.msra.mxu0 %v3846
      %3852 = vmatprep.subr.mxu0 0.0
      %3853 = vmatpush1.msra.mxu0 0.0
      %3854 = vmatprep.subr.mxu0 0.0
      %3855 = vmatpush1.msra.mxu0 0.0
      %3856 = vmatprep.subr.mxu0 0.0
      %3857 = vmatpush1.msra.mxu0 0.0
      %3858 = vmatprep.subr.mxu0 0.0
      %3859 = vmatpush1.msra.mxu0 0.0
      %3860 = vmatprep.subr.mxu0 0.0
      %3861 = vmatpush1.msra.mxu0 0.0
      %3862 = vmatprep.subr.mxu0 0.0
      %3863 = vmatpush1.msra.mxu0 0.0
      %3864 = vmatprep.subr.mxu0 0.0
      %3865 = vmatpush1.msra.mxu0 0.0
      %3866 = vmatprep.subr.mxu0 0.0
      %3867 = vmatpush1.msra.mxu0 0.0
      %3868 = vmatprep.subr.mxu0 0.0
      %3869 = vmatpush1.msra.mxu0 0.0
      %3870 = vmatprep.subr.mxu0 0.0
      %3871 = vmatpush1.msra.mxu0 0.0
      %3872 = vmatprep.subr.mxu0 0.0
      %3873 = vmatpush1.msra.mxu0 0.0
      %3874 = vmatprep.subr.mxu0 0.0
      %3875 = vmatpush1.msra.mxu0 0.0
      %3876 = vmatprep.subr.mxu0 0.0
      %3877 = vmatpush1.msra.mxu0 0.0
      %3878 = vmatprep.subr.mxu0 0.0
      %3879 = vmatpush1.msra.mxu0 0.0
      %3880 = vmatprep.subr.mxu0 0.0
      %3881 = vmatpush1.msra.mxu0 0.0
      %3882 = vmatprep.subr.mxu0 0.0
      %3883 = vmatpush1.msra.mxu0 0.0
      %3884 = vmatprep.subr.mxu0 0.0
      %3885 = vmatpush1.msra.mxu0 0.0
      %3886 = vmatprep.subr.mxu0 0.0
      %3887 = vmatpush1.msra.mxu0 0.0
      %3888 = vmatprep.subr.mxu0 0.0
      %3889 = vmatpush1.msra.mxu0 0.0
      %3890 = vmatprep.subr.mxu0 0.0
      %3891 = vmatpush1.msra.mxu0 0.0
      %3892 = vmatprep.subr.mxu0 0.0
      %3893 = vmatpush1.msra.mxu0 0.0
      %3894 = vmatprep.subr.mxu0 0.0
      %3895 = vmatpush1.msra.mxu0 0.0
      %3896 = vmatprep.subr.mxu0 0.0
      %3897 = vmatpush1.msra.mxu0 0.0
      %3898 = vmatprep.subr.mxu0 0.0
      %3899 = vmatpush1.msra.mxu0 0.0
      %3900 = vmatprep.subr.mxu0 0.0
      %3901 = vmatpush1.msra.mxu0 0.0
      %3902 = vmatprep.subr.mxu0 0.0
      %3903 = vmatpush1.msra.mxu0 0.0
      %3904 = vmatprep.subr.mxu0 0.0
      %3905 = vmatpush1.msra.mxu0 0.0
      %3906 = vmatprep.subr.mxu0 0.0
      %3907 = vmatpush1.msra.mxu0 0.0
      %3908 = vmatprep.subr.mxu0 0.0
      %3909 = vmatpush1.msra.mxu0 0.0
      %3910 = vmatprep.subr.mxu0 0.0
      %3911 = vmatpush1.msra.mxu0 0.0
      %3912 = vmatprep.subr.mxu0 0.0
      %3913 = vmatpush1.msra.mxu0 0.0
      %3914 = vmatprep.mubr.f32.mxu0 0.0
      %3915 = vmatmul.mubr.f32.gmra.mrb[0].mxu0 %v3848
      %v3916 = vpop.f32.mrb[0].mxu0
      %v3917 = vadd.f32 0.0, %v3916
      %v3918 = vpop.f32.mrb[0].mxu0
      %3919 = vdwg.mxu0
      %3921 = vrot.lane.b32.xlu0 %v3917, 120
      %v3922 = vpop.permute.xlu0 %3921
      %v3924 = vmax.f32 %v3917, %v3922
      %v3925 = vsub.f32 %v3917, %v3924
      %v3926 = vmul.f32 %v3925, 1.442695
      %v3927 = vpow.pop %v3926
      %3929 = vrot.lane.b32.xlu0 %v3924, 8
      %v3930 = vpop.permute.xlu0 %3929
      %v3932 = vsub.f32 %v3917, %v3930
      %v3933 = vmul.f32 %v3932, 1.442695
      %v3934 = vpow.pop %v3933
      %3936 = vrot.lane.b32.xlu0 %v3934, 120
      %v3937 = vpop.permute.xlu0 %3936
      %v3939 = vadd.f32 %v3927, %v3937
      %v3940 = vrcp.pop %v3939
      %v3941 = vmul.f32 %v3927, %v3940
      %v3942 = vlaneseq
      %v3943 = vshrl.u32 %v3942, 7
      %v3944 = vsub.s32 0, %v3943
      %v3945 = vrot.slane %v3941, %v3944
      %v3946 = vmul.f32 %v3486, %v3945
      %v3947 = vmul.f32 %v3487, %v3945
      %v3948 = vmul.f32 %v3488, %v3945
      %v3949 = vmul.f32 %v3489, %v3945
      %v3950 = vmul.f32 %v3490, %v3945
      %v3951 = vmul.f32 %v3491, %v3945
      %v3952 = vmul.f32 %v3492, %v3945
      %v3953 = vmul.f32 %v3493, %v3945
      %v3954 = vmul.f32 %v3494, %v3945
      %v3955 = vmul.f32 %v3495, %v3945
      %v3956 = vmul.f32 %v3496, %v3945
      %v3957 = vmul.f32 %v3497, %v3945
      %v3958 = vmul.f32 %v3498, %v3945
      %v3959 = vmul.f32 %v3499, %v3945
      %v3960 = vmul.f32 %v3500, %v3945
      %v3961 = vmul.f32 %v3501, %v3945
      %v3962 = vmul.f32 %v3502, %v3945
      %v3963 = vmul.f32 %v3503, %v3945
      %v3964 = vmul.f32 %v3504, %v3945
      %v3965 = vmul.f32 %v3505, %v3945
      %v3966 = vmul.f32 %v3506, %v3945
      %v3967 = vmul.f32 %v3507, %v3945
      %v3968 = vmul.f32 %v3508, %v3945
      %v3969 = vmul.f32 %v3509, %v3945
      %v3970 = vmul.f32 %v3510, %v3945
      %v3971 = vmul.f32 %v3511, %v3945
      %v3972 = vmul.f32 %v3512, %v3945
      %v3973 = vmul.f32 %v3513, %v3945
      %v3974 = vmul.f32 %v3514, %v3945
      %v3975 = vmul.f32 %v3515, %v3945
      %v3976 = vmul.f32 %v3516, %v3945
      %v3977 = vmul.f32 %v3517, %v3945
      %3979 = vrot.lane.b32.xlu0 %v3940, 8
      %v3980 = vpop.permute.xlu0 %3979
      %v3982 = vmul.f32 %v3934, %v3980
      %v3983 = vlaneseq
      %v3984 = vshrl.u32 %v3983, 7
      %v3985 = vsub.s32 0, %v3984
      %v3986 = vrot.slane %v3982, %v3985
      %3988 = vrot.lane.b32.xlu0 %v3986, 120
      %v3989 = vpop.permute.xlu0 %3988
      %v3991 = vmul.f32 %v3596, %v3989
      %v3992 = vmul.f32 %v3597, %v3989
      %v3993 = vmul.f32 %v3598, %v3989
      %v3994 = vmul.f32 %v3599, %v3989
      %v3995 = vmul.f32 %v3600, %v3989
      %v3996 = vmul.f32 %v3601, %v3989
      %v3997 = vmul.f32 %v3602, %v3989
      %v3998 = vmul.f32 %v3603, %v3989
      %v3999 = vmul.f32 %v3604, %v3989
      %v4000 = vmul.f32 %v3605, %v3989
      %v4001 = vmul.f32 %v3606, %v3989
      %v4002 = vmul.f32 %v3607, %v3989
      %v4003 = vmul.f32 %v3608, %v3989
      %v4004 = vmul.f32 %v3609, %v3989
      %v4005 = vmul.f32 %v3610, %v3989
      %v4006 = vmul.f32 %v3611, %v3989
      %v4007 = vmul.f32 %v3612, %v3989
      %v4008 = vmul.f32 %v3613, %v3989
      %v4009 = vmul.f32 %v3614, %v3989
      %v4010 = vmul.f32 %v3615, %v3989
      %v4011 = vmul.f32 %v3616, %v3989
      %v4012 = vmul.f32 %v3617, %v3989
      %v4013 = vmul.f32 %v3618, %v3989
      %v4014 = vmul.f32 %v3619, %v3989
      %v4015 = vmul.f32 %v3620, %v3989
      %v4016 = vmul.f32 %v3621, %v3989
      %v4017 = vmul.f32 %v3622, %v3989
      %v4018 = vmul.f32 %v3623, %v3989
      %v4019 = vmul.f32 %v3624, %v3989
      %v4020 = vmul.f32 %v3625, %v3989
      %v4021 = vmul.f32 %v3626, %v3989
      %v4022 = vmul.f32 %v3627, %v3989
      %v4023 = vadd.f32 %v3946, %v3991
      %v4024 = vadd.f32 %v3947, %v3992
      %v4025 = vadd.f32 %v3948, %v3993
      %v4026 = vadd.f32 %v3949, %v3994
      %v4027 = vadd.f32 %v3950, %v3995
      %v4028 = vadd.f32 %v3951, %v3996
      %v4029 = vadd.f32 %v3952, %v3997
      %v4030 = vadd.f32 %v3953, %v3998
      %v4031 = vadd.f32 %v3954, %v3999
      %v4032 = vadd.f32 %v3955, %v4000
      %v4033 = vadd.f32 %v3956, %v4001
      %v4034 = vadd.f32 %v3957, %v4002
      %v4035 = vadd.f32 %v3958, %v4003
      %v4036 = vadd.f32 %v3959, %v4004
      %v4037 = vadd.f32 %v3960, %v4005
      %v4038 = vadd.f32 %v3961, %v4006
      %v4039 = vadd.f32 %v3962, %v4007
      %v4040 = vadd.f32 %v3963, %v4008
      %v4041 = vadd.f32 %v3964, %v4009
      %v4042 = vadd.f32 %v3965, %v4010
      %v4043 = vadd.f32 %v3966, %v4011
      %v4044 = vadd.f32 %v3967, %v4012
      %v4045 = vadd.f32 %v3968, %v4013
      %v4046 = vadd.f32 %v3969, %v4014
      %v4047 = vadd.f32 %v3970, %v4015
      %v4048 = vadd.f32 %v3971, %v4016
      %v4049 = vadd.f32 %v3972, %v4017
      %v4050 = vadd.f32 %v3973, %v4018
      %v4051 = vadd.f32 %v3974, %v4019
      %v4052 = vadd.f32 %v3975, %v4020
      %v4053 = vadd.f32 %v3976, %v4021
      %v4054 = vadd.f32 %v3977, %v4022
      %4055 = vst.msk [vmem:[#allocation3] sm:$0xff] %vm2087, 0.0
      %4056 = vst.msk [vmem:[#allocation3 + $0x8] sm:$0xff] %vm2087, 0.0
      %vm4057 = vcmask 58368
      %4058 = vst.msk [vmem:[#allocation3 + $0x10] sm:$0x3] %vm4057, 0.0
      %s4059 = scalar_lea.vmem [#allocation3], 408
      %4060 = vst.msk [vmem:[%s4059] sm:$0xff] %vm2087, 0.0
      %4061 = vst.msk [vmem:[%s4059 + $0x8] sm:$0xff] %vm2087, 0.0
      %4062 = vst.msk [vmem:[%s4059 + $0x10] sm:$0x3] %vm4057, 0.0
      %s4063 = scalar_lea.vmem [#allocation3], 24
      %vm4064 = vcmask 57344
      %4065 = vst.msk [vmem:[%s4063] sm:$0x1] %vm4064, 0.0
      %4066 = vst.msk [vmem:[%s4063 + $0x18] sm:$0x1] %vm4064, 0.0
      %4067 = vst.msk [vmem:[%s4063 + $0x30] sm:$0x1] %vm4064, 0.0
      %4068 = vst.msk [vmem:[%s4063 + $0x48] sm:$0x1] %vm4064, 0.0
      %4069 = vst.msk [vmem:[%s4063 + $0x60] sm:$0x1] %vm4064, 0.0
      %4070 = vst.msk [vmem:[%s4063 + $0x78] sm:$0x1] %vm4064, 0.0
      %4071 = vst.msk [vmem:[%s4063 + $0x90] sm:$0x1] %vm4064, 0.0
      %4072 = vst.msk [vmem:[%s4063 + $0xa8] sm:$0x1] %vm4064, 0.0
      %4073 = vst.msk [vmem:[%s4063 + $0xc0] sm:$0x1] %vm4064, 0.0
      %4074 = vst.msk [vmem:[%s4063 + $0xd8] sm:$0x1] %vm4064, 0.0
      %4075 = vst.msk [vmem:[%s4063 + $0xf0] sm:$0x1] %vm4064, 0.0
      %4076 = vst.msk [vmem:[%s4063 + $0x108] sm:$0x1] %vm4064, 0.0
      %4077 = vst.msk [vmem:[%s4063 + $0x120] sm:$0x1] %vm4064, 0.0
      %4078 = vst.msk [vmem:[%s4063 + $0x138] sm:$0x1] %vm4064, 0.0
      %4079 = vst.msk [vmem:[%s4063 + $0x150] sm:$0x1] %vm4064, 0.0
      %4080 = vst.msk [vmem:[%s4063 + $0x168] sm:$0x1] %vm4064, 0.0
      %4081 = vst.msk [vmem:[%s4063 + $0x11] sm:$0x1] %vm4064, 0.0
      %4082 = vst.msk [vmem:[%s4063 + $0x29] sm:$0x1] %vm4064, 0.0
      %4083 = vst.msk [vmem:[%s4063 + $0x41] sm:$0x1] %vm4064, 0.0
      %4084 = vst.msk [vmem:[%s4063 + $0x59] sm:$0x1] %vm4064, 0.0
      %4085 = vst.msk [vmem:[%s4063 + $0x71] sm:$0x1] %vm4064, 0.0
      %4086 = vst.msk [vmem:[%s4063 + $0x89] sm:$0x1] %vm4064, 0.0
      %4087 = vst.msk [vmem:[%s4063 + $0xa1] sm:$0x1] %vm4064, 0.0
      %4088 = vst.msk [vmem:[%s4063 + $0xb9] sm:$0x1] %vm4064, 0.0
      %4089 = vst.msk [vmem:[%s4063 + $0xd1] sm:$0x1] %vm4064, 0.0
      %4090 = vst.msk [vmem:[%s4063 + $0xe9] sm:$0x1] %vm4064, 0.0
      %4091 = vst.msk [vmem:[%s4063 + $0x101] sm:$0x1] %vm4064, 0.0
      %4092 = vst.msk [vmem:[%s4063 + $0x119] sm:$0x1] %vm4064, 0.0
      %4093 = vst.msk [vmem:[%s4063 + $0x131] sm:$0x1] %vm4064, 0.0
      %4094 = vst.msk [vmem:[%s4063 + $0x149] sm:$0x1] %vm4064, 0.0
      %4095 = vst.msk [vmem:[%s4063 + $0x161] sm:$0x1] %vm4064, 0.0
      %4096 = vst.msk [vmem:[%s4063 + $0x179] sm:$0x1] %vm4064, 0.0
      %4097 = vst.msk [vmem:[%s4063 + $0x1] sm:$0xff] %vm2087, %v4023
      %4098 = vst.msk [vmem:[%s4063 + $0x9] sm:$0xff] %vm2087, %v4024
      %4099 = vst.msk [vmem:[%s4063 + $0x19] sm:$0xff] %vm2087, %v4025
      %4100 = vst.msk [vmem:[%s4063 + $0x21] sm:$0xff] %vm2087, %v4026
      %4101 = vst.msk [vmem:[%s4063 + $0x31] sm:$0xff] %vm2087, %v4027
      %4102 = vst.msk [vmem:[%s4063 + $0x39] sm:$0xff] %vm2087, %v4028
      %4103 = vst.msk [vmem:[%s4063 + $0x49] sm:$0xff] %vm2087, %v4029
      %4104 = vst.msk [vmem:[%s4063 + $0x51] sm:$0xff] %vm2087, %v4030
      %4105 = vst.msk [vmem:[%s4063 + $0x61] sm:$0xff] %vm2087, %v4031
      %4106 = vst.msk [vmem:[%s4063 + $0x69] sm:$0xff] %vm2087, %v4032
      %4107 = vst.msk [vmem:[%s4063 + $0x79] sm:$0xff] %vm2087, %v4033
      %4108 = vst.msk [vmem:[%s4063 + $0x81] sm:$0xff] %vm2087, %v4034
      %4109 = vst.msk [vmem:[%s4063 + $0x91] sm:$0xff] %vm2087, %v4035
      %4110 = vst.msk [vmem:[%s4063 + $0x99] sm:$0xff] %vm2087, %v4036
      %4111 = vst.msk [vmem:[%s4063 + $0xa9] sm:$0xff] %vm2087, %v4037
      %4112 = vst.msk [vmem:[%s4063 + $0xb1] sm:$0xff] %vm2087, %v4038
      %4113 = vst.msk [vmem:[%s4063 + $0xc1] sm:$0xff] %vm2087, %v4039
      %4114 = vst.msk [vmem:[%s4063 + $0xc9] sm:$0xff] %vm2087, %v4040
      %4115 = vst.msk [vmem:[%s4063 + $0xd9] sm:$0xff] %vm2087, %v4041
      %4116 = vst.msk [vmem:[%s4063 + $0xe1] sm:$0xff] %vm2087, %v4042
      %4117 = vst.msk [vmem:[%s4063 + $0xf1] sm:$0xff] %vm2087, %v4043
      %4118 = vst.msk [vmem:[%s4063 + $0xf9] sm:$0xff] %vm2087, %v4044
      %4119 = vst.msk [vmem:[%s4063 + $0x109] sm:$0xff] %vm2087, %v4045
      %4120 = vst.msk [vmem:[%s4063 + $0x111] sm:$0xff] %vm2087, %v4046
      %4121 = vst.msk [vmem:[%s4063 + $0x121] sm:$0xff] %vm2087, %v4047
      %4122 = vst.msk [vmem:[%s4063 + $0x129] sm:$0xff] %vm2087, %v4048
      %4123 = vst.msk [vmem:[%s4063 + $0x139] sm:$0xff] %vm2087, %v4049
      %4124 = vst.msk [vmem:[%s4063 + $0x141] sm:$0xff] %vm2087, %v4050
      %4125 = vst.msk [vmem:[%s4063 + $0x151] sm:$0xff] %vm2087, %v4051
      %4126 = vst.msk [vmem:[%s4063 + $0x159] sm:$0xff] %vm2087, %v4052
      %4127 = vst.msk [vmem:[%s4063 + $0x169] sm:$0xff] %vm2087, %v4053
      %4128 = vst.msk [vmem:[%s4063 + $0x171] sm:$0xff] %vm2087, %v4054
      %v4129 = vld [vmem:[#allocation3] sm:$0xff]
      %v4130 = vld [vmem:[#allocation3 + $0x8] sm:$0xff]
      %v4131 = vld [vmem:[#allocation3 + $0x18] sm:$0xff]
      %v4132 = vld [vmem:[#allocation3 + $0x20] sm:$0xff]
      %v4133 = vld [vmem:[#allocation3 + $0x30] sm:$0xff]
      %v4134 = vld [vmem:[#allocation3 + $0x38] sm:$0xff]
      %v4135 = vld [vmem:[#allocation3 + $0x48] sm:$0xff]
      %v4136 = vld [vmem:[#allocation3 + $0x50] sm:$0xff]
      %v4137 = vld [vmem:[#allocation3 + $0x60] sm:$0xff]
      %v4138 = vld [vmem:[#allocation3 + $0x68] sm:$0xff]
      %v4139 = vld [vmem:[#allocation3 + $0x78] sm:$0xff]
      %v4140 = vld [vmem:[#allocation3 + $0x80] sm:$0xff]
      %v4141 = vld [vmem:[#allocation3 + $0x90] sm:$0xff]
      %v4142 = vld [vmem:[#allocation3 + $0x98] sm:$0xff]
      %v4143 = vld [vmem:[#allocation3 + $0xa8] sm:$0xff]
      %v4144 = vld [vmem:[#allocation3 + $0xb0] sm:$0xff]
      %v4145 = vld [vmem:[#allocation3 + $0xc0] sm:$0xff]
      %v4146 = vld [vmem:[#allocation3 + $0xc8] sm:$0xff]
      %v4147 = vld [vmem:[#allocation3 + $0xd8] sm:$0xff]
      %v4148 = vld [vmem:[#allocation3 + $0xe0] sm:$0xff]
      %v4149 = vld [vmem:[#allocation3 + $0xf0] sm:$0xff]
      %v4150 = vld [vmem:[#allocation3 + $0xf8] sm:$0xff]
      %v4151 = vld [vmem:[#allocation3 + $0x108] sm:$0xff]
      %v4152 = vld [vmem:[#allocation3 + $0x110] sm:$0xff]
      %v4153 = vld [vmem:[#allocation3 + $0x120] sm:$0xff]
      %v4154 = vld [vmem:[#allocation3 + $0x128] sm:$0xff]
      %v4155 = vld [vmem:[#allocation3 + $0x138] sm:$0xff]
      %v4156 = vld [vmem:[#allocation3 + $0x140] sm:$0xff]
      %v4157 = vld [vmem:[#allocation3 + $0x150] sm:$0xff]
      %v4158 = vld [vmem:[#allocation3 + $0x158] sm:$0xff]
      %v4159 = vld [vmem:[#allocation3 + $0x168] sm:$0xff]
      %v4160 = vld [vmem:[#allocation3 + $0x170] sm:$0xff]
      %v4161 = vpack.c.bf16 %v4130, %v4129
      %v4162 = vpack.c.bf16 %v4132, %v4131
      %v4163 = vpack.c.bf16 %v4134, %v4133
      %v4164 = vpack.c.bf16 %v4136, %v4135
      %v4165 = vpack.c.bf16 %v4138, %v4137
      %v4166 = vpack.c.bf16 %v4140, %v4139
      %v4167 = vpack.c.bf16 %v4142, %v4141
      %v4168 = vpack.c.bf16 %v4144, %v4143
      %v4169 = vpack.c.bf16 %v4146, %v4145
      %v4170 = vpack.c.bf16 %v4148, %v4147
      %v4171 = vpack.c.bf16 %v4150, %v4149
      %v4172 = vpack.c.bf16 %v4152, %v4151
      %v4173 = vpack.c.bf16 %v4154, %v4153
      %v4174 = vpack.c.bf16 %v4156, %v4155
      %v4175 = vpack.c.bf16 %v4158, %v4157
      %v4176 = vpack.c.bf16 %v4160, %v4159
      %v4177 = vld [vmem:[%s11] sm:$0xf]
      %v4178 = vld [vmem:[#allocation3 + $0x1] sm:$0xff]
      %v4179 = vld [vmem:[#allocation3 + $0x9] sm:$0xff]
      %v4180 = vld [vmem:[#allocation3 + $0x19] sm:$0xff]
      %v4181 = vld [vmem:[#allocation3 + $0x21] sm:$0xff]
      %v4182 = vld [vmem:[#allocation3 + $0x31] sm:$0xff]
      %v4183 = vld [vmem:[#allocation3 + $0x39] sm:$0xff]
      %v4184 = vld [vmem:[#allocation3 + $0x49] sm:$0xff]
      %v4185 = vld [vmem:[#allocation3 + $0x51] sm:$0xff]
      %v4186 = vld [vmem:[#allocation3 + $0x61] sm:$0xff]
      %v4187 = vld [vmem:[#allocation3 + $0x69] sm:$0xff]
      %v4188 = vld [vmem:[#allocation3 + $0x79] sm:$0xff]
      %v4189 = vld [vmem:[#allocation3 + $0x81] sm:$0xff]
      %v4190 = vld [vmem:[#allocation3 + $0x91] sm:$0xff]
      %v4191 = vld [vmem:[#allocation3 + $0x99] sm:$0xff]
      %v4192 = vld [vmem:[#allocation3 + $0xa9] sm:$0xff]
      %v4193 = vld [vmem:[#allocation3 + $0xb1] sm:$0xff]
      %v4194 = vld [vmem:[#allocation3 + $0xc1] sm:$0xff]
      %v4195 = vld [vmem:[#allocation3 + $0xc9] sm:$0xff]
      %v4196 = vld [vmem:[#allocation3 + $0xd9] sm:$0xff]
      %v4197 = vld [vmem:[#allocation3 + $0xe1] sm:$0xff]
      %v4198 = vld [vmem:[#allocation3 + $0xf1] sm:$0xff]
      %v4199 = vld [vmem:[#allocation3 + $0xf9] sm:$0xff]
      %v4200 = vld [vmem:[#allocation3 + $0x109] sm:$0xff]
      %v4201 = vld [vmem:[#allocation3 + $0x111] sm:$0xff]
      %v4202 = vld [vmem:[#allocation3 + $0x121] sm:$0xff]
      %v4203 = vld [vmem:[#allocation3 + $0x129] sm:$0xff]
      %v4204 = vld [vmem:[#allocation3 + $0x139] sm:$0xff]
      %v4205 = vld [vmem:[#allocation3 + $0x141] sm:$0xff]
      %v4206 = vld [vmem:[#allocation3 + $0x151] sm:$0xff]
      %v4207 = vld [vmem:[#allocation3 + $0x159] sm:$0xff]
      %v4208 = vld [vmem:[#allocation3 + $0x169] sm:$0xff]
      %v4209 = vld [vmem:[#allocation3 + $0x171] sm:$0xff]
      %v4210 = vpack.c.bf16 %v4179, %v4178
      %v4211 = vpack.c.bf16 %v4181, %v4180
      %v4212 = vpack.c.bf16 %v4183, %v4182
      %v4213 = vpack.c.bf16 %v4185, %v4184
      %v4214 = vpack.c.bf16 %v4187, %v4186
      %v4215 = vpack.c.bf16 %v4189, %v4188
      %v4216 = vpack.c.bf16 %v4191, %v4190
      %v4217 = vpack.c.bf16 %v4193, %v4192
      %v4218 = vpack.c.bf16 %v4195, %v4194
      %v4219 = vpack.c.bf16 %v4197, %v4196
      %v4220 = vpack.c.bf16 %v4199, %v4198
      %v4221 = vpack.c.bf16 %v4201, %v4200
      %v4222 = vpack.c.bf16 %v4203, %v4202
      %v4223 = vpack.c.bf16 %v4205, %v4204
      %v4224 = vpack.c.bf16 %v4207, %v4206
      %v4225 = vpack.c.bf16 %v4209, %v4208
      %s4226 = scalar_lea.vmem %s11, 4
      %v4227 = vld [vmem:[%s4226] sm:$0xf]
      %v4229 = vsel %vm2087, %v4210, 0
      %v4232 = vsel %vm2087, %v4211, 0
      %v4235 = vsel %vm2087, %v4212, 0
      %v4238 = vsel %vm2087, %v4213, 0
      %v4241 = vsel %vm2087, %v4214, 0
      %v4244 = vsel %vm2087, %v4215, 0
      %v4247 = vsel %vm2087, %v4216, 0
      %v4250 = vsel %vm2087, %v4217, 0
      %v4253 = vsel %vm2087, %v4218, 0
      %v4256 = vsel %vm2087, %v4219, 0
      %v4259 = vsel %vm2087, %v4220, 0
      %v4262 = vsel %vm2087, %v4221, 0
      %v4265 = vsel %vm2087, %v4222, 0
      %v4268 = vsel %vm2087, %v4223, 0
      %v4271 = vsel %vm2087, %v4224, 0
      %v4274 = vsel %vm2087, %v4225, 0
      %vm4276 = vcmask 1043456
      %v4278 = vsel %vm4276, %v4227, 0
      %4280 = vmatprep.subr.bf16.mxu0 0
      %4281 = vmatpush1.bf16.msra.mxu0 %v4278
      %4282 = vmatprep.subr.bf16.mxu0 0
      %4283 = vmatpush1.bf16.msra.mxu0 0
      %4284 = vmatprep.subr.bf16.mxu0 0
      %4285 = vmatpush1.bf16.msra.mxu0 0
      %4286 = vmatprep.subr.bf16.mxu0 0
      %4287 = vmatpush1.bf16.msra.mxu0 0
      %4288 = vmatprep.subr.bf16.mxu0 0
      %4289 = vmatpush1.bf16.msra.mxu0 0
      %4290 = vmatprep.subr.bf16.mxu0 0
      %4291 = vmatpush1.bf16.msra.mxu0 0
      %4292 = vmatprep.subr.bf16.mxu0 0
      %4293 = vmatpush1.bf16.msra.mxu0 0
      %4294 = vmatprep.subr.bf16.mxu0 0
      %4295 = vmatpush1.bf16.msra.mxu0 0
      %4296 = vmatprep.subr.bf16.mxu0 0
      %4297 = vmatpush1.bf16.msra.mxu0 0
      %4298 = vmatprep.subr.bf16.mxu0 0
      %4299 = vmatpush1.bf16.msra.mxu0 0
      %4300 = vmatprep.subr.bf16.mxu0 0
      %4301 = vmatpush1.bf16.msra.mxu0 0
      %4302 = vmatprep.subr.bf16.mxu0 0
      %4303 = vmatpush1.bf16.msra.mxu0 0
      %4304 = vmatprep.subr.bf16.mxu0 0
      %4305 = vmatpush1.bf16.msra.mxu0 0
      %4306 = vmatprep.subr.bf16.mxu0 0
      %4307 = vmatpush1.bf16.msra.mxu0 0
      %4308 = vmatprep.subr.bf16.mxu0 0
      %4309 = vmatpush1.bf16.msra.mxu0 0
      %4310 = vmatprep.subr.bf16.mxu0 0
      %4311 = vmatpush1.bf16.msra.mxu0 0
      %4312 = vmatprep.mubr.bf16.mxu0 0
      %4313 = vmatmul.mubr.bf16.gmra.mrb[0].mxu0 %v4229
      %v4314 = vpop.f32.mrb[0].mxu0
      %v4315 = vadd.f32 0.0, %v4314
      %v4316 = vpop.f32.mrb[0].mxu0
      %v4317 = vpop.f32.mrb[0].mxu0
      %v4318 = vadd.f32 0.0, %v4317
      %v4319 = vpop.f32.mrb[0].mxu0
      %4320 = vmatprep.mubr.bf16.mxu0 0
      %4321 = vmatmul.mubr.bf16.gmra.mrb[0].mxu0 %v4232
      %v4322 = vpop.f32.mrb[0].mxu0
      %v4323 = vadd.f32 0.0, %v4322
      %v4324 = vpop.f32.mrb[0].mxu0
      %v4325 = vpop.f32.mrb[0].mxu0
      %v4326 = vadd.f32 0.0, %v4325
      %v4327 = vpop.f32.mrb[0].mxu0
      %4328 = vmatprep.mubr.bf16.mxu0 0
      %4329 = vmatmul.mubr.bf16.gmra.mrb[0].mxu0 %v4235
      %v4330 = vpop.f32.mrb[0].mxu0
      %v4331 = vadd.f32 0.0, %v4330
      %v4332 = vpop.f32.mrb[0].mxu0
      %v4333 = vpop.f32.mrb[0].mxu0
      %v4334 = vadd.f32 0.0, %v4333
      %v4335 = vpop.f32.mrb[0].mxu0
      %4336 = vmatprep.mubr.bf16.mxu0 0
      %4337 = vmatmul.mubr.bf16.gmra.mrb[0].mxu0 %v4238
      %v4338 = vpop.f32.mrb[0].mxu0
      %v4339 = vadd.f32 0.0, %v4338
      %v4340 = vpop.f32.mrb[0].mxu0
      %v4341 = vpop.f32.mrb[0].mxu0
      %v4342 = vadd.f32 0.0, %v4341
      %v4343 = vpop.f32.mrb[0].mxu0
      %4344 = vmatprep.mubr.bf16.mxu0 0
      %4345 = vmatmul.mubr.bf16.gmra.mrb[0].mxu0 %v4241
      %v4346 = vpop.f32.mrb[0].mxu0
      %v4347 = vadd.f32 0.0, %v4346
      %v4348 = vpop.f32.mrb[0].mxu0
      %v4349 = vpop.f32.mrb[0].mxu0
      %v4350 = vadd.f32 0.0, %v4349
      %v4351 = vpop.f32.mrb[0].mxu0
      %4352 = vmatprep.mubr.bf16.mxu0 0
      %4353 = vmatmul.mubr.bf16.gmra.mrb[0].mxu0 %v4244
      %v4354 = vpop.f32.mrb[0].mxu0
      %v4355 = vadd.f32 0.0, %v4354
      %v4356 = vpop.f32.mrb[0].mxu0
      %v4357 = vpop.f32.mrb[0].mxu0
      %v4358 = vadd.f32 0.0, %v4357
      %v4359 = vpop.f32.mrb[0].mxu0
      %4360 = vmatprep.mubr.bf16.mxu0 0
      %4361 = vmatmul.mubr.bf16.gmra.mrb[0].mxu0 %v4247
      %v4362 = vpop.f32.mrb[0].mxu0
      %v4363 = vadd.f32 0.0, %v4362
      %v4364 = vpop.f32.mrb[0].mxu0
      %v4365 = vpop.f32.mrb[0].mxu0
      %v4366 = vadd.f32 0.0, %v4365
      %v4367 = vpop.f32.mrb[0].mxu0
      %4368 = vmatprep.mubr.bf16.mxu0 0
      %4369 = vmatmul.mubr.bf16.gmra.mrb[0].mxu0 %v4250
      %v4370 = vpop.f32.mrb[0].mxu0
      %v4371 = vadd.f32 0.0, %v4370
      %v4372 = vpop.f32.mrb[0].mxu0
      %v4373 = vpop.f32.mrb[0].mxu0
      %v4374 = vadd.f32 0.0, %v4373
      %v4375 = vpop.f32.mrb[0].mxu0
      %4376 = vmatprep.mubr.bf16.mxu0 0
      %4377 = vmatmul.mubr.bf16.gmra.mrb[0].mxu0 %v4253
      %v4378 = vpop.f32.mrb[0].mxu0
      %v4379 = vadd.f32 0.0, %v4378
      %v4380 = vpop.f32.mrb[0].mxu0
      %v4381 = vpop.f32.mrb[0].mxu0
      %v4382 = vadd.f32 0.0, %v4381
      %v4383 = vpop.f32.mrb[0].mxu0
      %4384 = vmatprep.mubr.bf16.mxu0 0
      %4385 = vmatmul.mubr.bf16.gmra.mrb[0].mxu0 %v4256
      %v4386 = vpop.f32.mrb[0].mxu0
      %v4387 = vadd.f32 0.0, %v4386
      %v4388 = vpop.f32.mrb[0].mxu0
      %v4389 = vpop.f32.mrb[0].mxu0
      %v4390 = vadd.f32 0.0, %v4389
      %v4391 = vpop.f32.mrb[0].mxu0
      %4392 = vmatprep.mubr.bf16.mxu0 0
      %4393 = vmatmul.mubr.bf16.gmra.mrb[0].mxu0 %v4259
      %v4394 = vpop.f32.mrb[0].mxu0
      %v4395 = vadd.f32 0.0, %v4394
      %v4396 = vpop.f32.mrb[0].mxu0
      %v4397 = vpop.f32.mrb[0].mxu0
      %v4398 = vadd.f32 0.0, %v4397
      %v4399 = vpop.f32.mrb[0].mxu0
      %4400 = vmatprep.mubr.bf16.mxu0 0
      %4401 = vmatmul.mubr.bf16.gmra.mrb[0].mxu0 %v4262
      %v4402 = vpop.f32.mrb[0].mxu0
      %v4403 = vadd.f32 0.0, %v4402
      %v4404 = vpop.f32.mrb[0].mxu0
      %v4405 = vpop.f32.mrb[0].mxu0
      %v4406 = vadd.f32 0.0, %v4405
      %v4407 = vpop.f32.mrb[0].mxu0
      %4408 = vmatprep.mubr.bf16.mxu0 0
      %4409 = vmatmul.mubr.bf16.gmra.mrb[0].mxu0 %v4265
      %v4410 = vpop.f32.mrb[0].mxu0
      %v4411 = vadd.f32 0.0, %v4410
      %v4412 = vpop.f32.mrb[0].mxu0
      %v4413 = vpop.f32.mrb[0].mxu0
      %v4414 = vadd.f32 0.0, %v4413
      %v4415 = vpop.f32.mrb[0].mxu0
      %4416 = vmatprep.mubr.bf16.mxu0 0
      %4417 = vmatmul.mubr.bf16.gmra.mrb[0].mxu0 %v4268
      %v4418 = vpop.f32.mrb[0].mxu0
      %v4419 = vadd.f32 0.0, %v4418
      %v4420 = vpop.f32.mrb[0].mxu0
      %v4421 = vpop.f32.mrb[0].mxu0
      %v4422 = vadd.f32 0.0, %v4421
      %v4423 = vpop.f32.mrb[0].mxu0
      %4424 = vmatprep.mubr.bf16.mxu0 0
      %4425 = vmatmul.mubr.bf16.gmra.mrb[0].mxu0 %v4271
      %v4426 = vpop.f32.mrb[0].mxu0
      %v4427 = vadd.f32 0.0, %v4426
      %v4428 = vpop.f32.mrb[0].mxu0
      %v4429 = vpop.f32.mrb[0].mxu0
      %v4430 = vadd.f32 0.0, %v4429
      %v4431 = vpop.f32.mrb[0].mxu0
      %4432 = vmatprep.mubr.bf16.mxu0 0
      %4433 = vmatmul.mubr.bf16.gmra.mrb[0].mxu0 %v4274
      %v4434 = vpop.f32.mrb[0].mxu0
      %v4435 = vadd.f32 0.0, %v4434
      %v4436 = vpop.f32.mrb[0].mxu0
      %v4437 = vpop.f32.mrb[0].mxu0
      %v4438 = vadd.f32 0.0, %v4437
      %v4439 = vpop.f32.mrb[0].mxu0
      %4440 = vdwg.mxu0
      %v4442 = vsel %vm2087, %v4161, 0
      %v4445 = vsel %vm2087, %v4162, 0
      %v4448 = vsel %vm2087, %v4163, 0
      %v4451 = vsel %vm2087, %v4164, 0
      %v4454 = vsel %vm2087, %v4165, 0
      %v4457 = vsel %vm2087, %v4166, 0
      %v4460 = vsel %vm2087, %v4167, 0
      %v4463 = vsel %vm2087, %v4168, 0
      %v4466 = vsel %vm2087, %v4169, 0
      %v4469 = vsel %vm2087, %v4170, 0
      %v4472 = vsel %vm2087, %v4171, 0
      %v4475 = vsel %vm2087, %v4172, 0
      %v4478 = vsel %vm2087, %v4173, 0
      %v4481 = vsel %vm2087, %v4174, 0
      %v4484 = vsel %vm2087, %v4175, 0
      %v4487 = vsel %vm2087, %v4176, 0
      %v4490 = vsel %vm4276, %v4177, 0
      %4492 = vmatprep.subr.bf16.mxu0 0
      %4493 = vmatpush1.bf16.msra.mxu0 %v4490
      %4494 = vmatprep.subr.bf16.mxu0 0
      %4495 = vmatpush1.bf16.msra.mxu0 0
      %4496 = vmatprep.subr.bf16.mxu0 0
      %4497 = vmatpush1.bf16.msra.mxu0 0
      %4498 = vmatprep.subr.bf16.mxu0 0
      %4499 = vmatpush1.bf16.msra.mxu0 0
      %4500 = vmatprep.subr.bf16.mxu0 0
      %4501 = vmatpush1.bf16.msra.mxu0 0
      %4502 = vmatprep.subr.bf16.mxu0 0
      %4503 = vmatpush1.bf16.msra.mxu0 0
      %4504 = vmatprep.subr.bf16.mxu0 0
      %4505 = vmatpush1.bf16.msra.mxu0 0
      %4506 = vmatprep.subr.bf16.mxu0 0
      %4507 = vmatpush1.bf16.msra.mxu0 0
      %4508 = vmatprep.subr.bf16.mxu0 0
      %4509 = vmatpush1.bf16.msra.mxu0 0
      %4510 = vmatprep.subr.bf16.mxu0 0
      %4511 = vmatpush1.bf16.msra.mxu0 0
      %4512 = vmatprep.subr.bf16.mxu0 0
      %4513 = vmatpush1.bf16.msra.mxu0 0
      %4514 = vmatprep.subr.bf16.mxu0 0
      %4515 = vmatpush1.bf16.msra.mxu0 0
      %4516 = vmatprep.subr.bf16.mxu0 0
      %4517 = vmatpush1.bf16.msra.mxu0 0
      %4518 = vmatprep.subr.bf16.mxu0 0
      %4519 = vmatpush1.bf16.msra.mxu0 0
      %4520 = vmatprep.subr.bf16.mxu0 0
      %4521 = vmatpush1.bf16.msra.mxu0 0
      %4522 = vmatprep.subr.bf16.mxu0 0
      %4523 = vmatpush1.bf16.msra.mxu0 0
      %4524 = vmatprep.mubr.bf16.mxu0 0
      %4525 = vmatmul.mubr.bf16.gmra.mrb[0].mxu0 %v4442
      %v4526 = vpop.f32.mrb[0].mxu0
      %v4527 = vadd.f32 %v4315, %v4526
      %v4528 = vpop.f32.mrb[0].mxu0
      %v4529 = vpop.f32.mrb[0].mxu0
      %v4530 = vadd.f32 %v4318, %v4529
      %v4531 = vpop.f32.mrb[0].mxu0
      %4532 = vmatprep.mubr.bf16.mxu0 0
      %4533 = vmatmul.mubr.bf16.gmra.mrb[0].mxu0 %v4445
      %v4534 = vpop.f32.mrb[0].mxu0
      %v4535 = vadd.f32 %v4323, %v4534
      %v4536 = vpop.f32.mrb[0].mxu0
      %v4537 = vpop.f32.mrb[0].mxu0
      %v4538 = vadd.f32 %v4326, %v4537
      %v4539 = vpop.f32.mrb[0].mxu0
      %4540 = vmatprep.mubr.bf16.mxu0 0
      %4541 = vmatmul.mubr.bf16.gmra.mrb[0].mxu0 %v4448
      %v4542 = vpop.f32.mrb[0].mxu0
      %v4543 = vadd.f32 %v4331, %v4542
      %v4544 = vpop.f32.mrb[0].mxu0
      %v4545 = vpop.f32.mrb[0].mxu0
      %v4546 = vadd.f32 %v4334, %v4545
      %v4547 = vpop.f32.mrb[0].mxu0
      %4548 = vmatprep.mubr.bf16.mxu0 0
      %4549 = vmatmul.mubr.bf16.gmra.mrb[0].mxu0 %v4451
      %v4550 = vpop.f32.mrb[0].mxu0
      %v4551 = vadd.f32 %v4339, %v4550
      %v4552 = vpop.f32.mrb[0].mxu0
      %v4553 = vpop.f32.mrb[0].mxu0
      %v4554 = vadd.f32 %v4342, %v4553
      %v4555 = vpop.f32.mrb[0].mxu0
      %4556 = vmatprep.mubr.bf16.mxu0 0
      %4557 = vmatmul.mubr.bf16.gmra.mrb[0].mxu0 %v4454
      %v4558 = vpop.f32.mrb[0].mxu0
      %v4559 = vadd.f32 %v4347, %v4558
      %v4560 = vpop.f32.mrb[0].mxu0
      %v4561 = vpop.f32.mrb[0].mxu0
      %v4562 = vadd.f32 %v4350, %v4561
      %v4563 = vpop.f32.mrb[0].mxu0
      %4564 = vmatprep.mubr.bf16.mxu0 0
      %4565 = vmatmul.mubr.bf16.gmra.mrb[0].mxu0 %v4457
      %v4566 = vpop.f32.mrb[0].mxu0
      %v4567 = vadd.f32 %v4355, %v4566
      %v4568 = vpop.f32.mrb[0].mxu0
      %v4569 = vpop.f32.mrb[0].mxu0
      %v4570 = vadd.f32 %v4358, %v4569
      %v4571 = vpop.f32.mrb[0].mxu0
      %4572 = vmatprep.mubr.bf16.mxu0 0
      %4573 = vmatmul.mubr.bf16.gmra.mrb[0].mxu0 %v4460
      %v4574 = vpop.f32.mrb[0].mxu0
      %v4575 = vadd.f32 %v4363, %v4574
      %v4576 = vpop.f32.mrb[0].mxu0
      %v4577 = vpop.f32.mrb[0].mxu0
      %v4578 = vadd.f32 %v4366, %v4577
      %v4579 = vpop.f32.mrb[0].mxu0
      %4580 = vmatprep.mubr.bf16.mxu0 0
      %4581 = vmatmul.mubr.bf16.gmra.mrb[0].mxu0 %v4463
      %v4582 = vpop.f32.mrb[0].mxu0
      %v4583 = vadd.f32 %v4371, %v4582
      %v4584 = vpop.f32.mrb[0].mxu0
      %v4585 = vpop.f32.mrb[0].mxu0
      %v4586 = vadd.f32 %v4374, %v4585
      %v4587 = vpop.f32.mrb[0].mxu0
      %4588 = vmatprep.mubr.bf16.mxu0 0
      %4589 = vmatmul.mubr.bf16.gmra.mrb[0].mxu0 %v4466
      %v4590 = vpop.f32.mrb[0].mxu0
      %v4591 = vadd.f32 %v4379, %v4590
      %v4592 = vpop.f32.mrb[0].mxu0
      %v4593 = vpop.f32.mrb[0].mxu0
      %v4594 = vadd.f32 %v4382, %v4593
      %v4595 = vpop.f32.mrb[0].mxu0
      %4596 = vmatprep.mubr.bf16.mxu0 0
      %4597 = vmatmul.mubr.bf16.gmra.mrb[0].mxu0 %v4469
      %v4598 = vpop.f32.mrb[0].mxu0
      %v4599 = vadd.f32 %v4387, %v4598
      %v4600 = vpop.f32.mrb[0].mxu0
      %v4601 = vpop.f32.mrb[0].mxu0
      %v4602 = vadd.f32 %v4390, %v4601
      %v4603 = vpop.f32.mrb[0].mxu0
      %4604 = vmatprep.mubr.bf16.mxu0 0
      %4605 = vmatmul.mubr.bf16.gmra.mrb[0].mxu0 %v4472
      %v4606 = vpop.f32.mrb[0].mxu0
      %v4607 = vadd.f32 %v4395, %v4606
      %v4608 = vpop.f32.mrb[0].mxu0
      %v4609 = vpop.f32.mrb[0].mxu0
      %v4610 = vadd.f32 %v4398, %v4609
      %v4611 = vpop.f32.mrb[0].mxu0
      %4612 = vmatprep.mubr.bf16.mxu0 0
      %4613 = vmatmul.mubr.bf16.gmra.mrb[0].mxu0 %v4475
      %v4614 = vpop.f32.mrb[0].mxu0
      %v4615 = vadd.f32 %v4403, %v4614
      %v4616 = vpop.f32.mrb[0].mxu0
      %v4617 = vpop.f32.mrb[0].mxu0
      %v4618 = vadd.f32 %v4406, %v4617
      %v4619 = vpop.f32.mrb[0].mxu0
      %4620 = vmatprep.mubr.bf16.mxu0 0
      %4621 = vmatmul.mubr.bf16.gmra.mrb[0].mxu0 %v4478
      %v4622 = vpop.f32.mrb[0].mxu0
      %v4623 = vadd.f32 %v4411, %v4622
      %v4624 = vpop.f32.mrb[0].mxu0
      %v4625 = vpop.f32.mrb[0].mxu0
      %v4626 = vadd.f32 %v4414, %v4625
      %v4627 = vpop.f32.mrb[0].mxu0
      %4628 = vmatprep.mubr.bf16.mxu0 0
      %4629 = vmatmul.mubr.bf16.gmra.mrb[0].mxu0 %v4481
      %v4630 = vpop.f32.mrb[0].mxu0
      %v4631 = vadd.f32 %v4419, %v4630
      %v4632 = vpop.f32.mrb[0].mxu0
      %v4633 = vpop.f32.mrb[0].mxu0
      %v4634 = vadd.f32 %v4422, %v4633
      %v4635 = vpop.f32.mrb[0].mxu0
      %4636 = vmatprep.mubr.bf16.mxu0 0
      %4637 = vmatmul.mubr.bf16.gmra.mrb[0].mxu0 %v4484
      %v4638 = vpop.f32.mrb[0].mxu0
      %v4639 = vadd.f32 %v4427, %v4638
      %v4640 = vpop.f32.mrb[0].mxu0
      %v4641 = vpop.f32.mrb[0].mxu0
      %v4642 = vadd.f32 %v4430, %v4641
      %v4643 = vpop.f32.mrb[0].mxu0
      %4644 = vmatprep.mubr.bf16.mxu0 0
      %4645 = vmatmul.mubr.bf16.gmra.mrb[0].mxu0 %v4487
      %v4646 = vpop.f32.mrb[0].mxu0
      %v4647 = vadd.f32 %v4435, %v4646
      %v4648 = vpop.f32.mrb[0].mxu0
      %v4649 = vpop.f32.mrb[0].mxu0
      %v4650 = vadd.f32 %v4438, %v4649
      %v4651 = vpop.f32.mrb[0].mxu0
      %4652 = vdwg.mxu0
      %v4653 = vld [vmem:[#allocation3 + $0x2] sm:$0xff]
      %v4654 = vld [vmem:[#allocation3 + $0xa] sm:$0xff]
      %v4655 = vld [vmem:[#allocation3 + $0x1a] sm:$0xff]
      %v4656 = vld [vmem:[#allocation3 + $0x22] sm:$0xff]
      %v4657 = vld [vmem:[#allocation3 + $0x32] sm:$0xff]
      %v4658 = vld [vmem:[#allocation3 + $0x3a] sm:$0xff]
      %v4659 = vld [vmem:[#allocation3 + $0x4a] sm:$0xff]
      %v4660 = vld [vmem:[#allocation3 + $0x52] sm:$0xff]
      %v4661 = vld [vmem:[#allocation3 + $0x62] sm:$0xff]
      %v4662 = vld [vmem:[#allocation3 + $0x6a] sm:$0xff]
      %v4663 = vld [vmem:[#allocation3 + $0x7a] sm:$0xff]
      %v4664 = vld [vmem:[#allocation3 + $0x82] sm:$0xff]
      %v4665 = vld [vmem:[#allocation3 + $0x92] sm:$0xff]
      %v4666 = vld [vmem:[#allocation3 + $0x9a] sm:$0xff]
      %v4667 = vld [vmem:[#allocation3 + $0xaa] sm:$0xff]
      %v4668 = vld [vmem:[#allocation3 + $0xb2] sm:$0xff]
      %v4669 = vld [vmem:[#allocation3 + $0xc2] sm:$0xff]
      %v4670 = vld [vmem:[#allocation3 + $0xca] sm:$0xff]
      %v4671 = vld [vmem:[#allocation3 + $0xda] sm:$0xff]
      %v4672 = vld [vmem:[#allocation3 + $0xe2] sm:$0xff]
      %v4673 = vld [vmem:[#allocation3 + $0xf2] sm:$0xff]
      %v4674 = vld [vmem:[#allocation3 + $0xfa] sm:$0xff]
      %v4675 = vld [vmem:[#allocation3 + $0x10a] sm:$0xff]
      %v4676 = vld [vmem:[#allocation3 + $0x112] sm:$0xff]
      %v4677 = vld [vmem:[#allocation3 + $0x122] sm:$0xff]
      %v4678 = vld [vmem:[#allocation3 + $0x12a] sm:$0xff]
      %v4679 = vld [vmem:[#allocation3 + $0x13a] sm:$0xff]
      %v4680 = vld [vmem:[#allocation3 + $0x142] sm:$0xff]
      %v4681 = vld [vmem:[#allocation3 + $0x152] sm:$0xff]
      %v4682 = vld [vmem:[#allocation3 + $0x15a] sm:$0xff]
      %v4683 = vld [vmem:[#allocation3 + $0x16a] sm:$0xff]
      %v4684 = vld [vmem:[#allocation3 + $0x172] sm:$0xff]
      %v4685 = vpack.c.bf16 %v4654, %v4653
      %v4686 = vpack.c.bf16 %v4656, %v4655
      %v4687 = vpack.c.bf16 %v4658, %v4657
      %v4688 = vpack.c.bf16 %v4660, %v4659
      %v4689 = vpack.c.bf16 %v4662, %v4661
      %v4690 = vpack.c.bf16 %v4664, %v4663
      %v4691 = vpack.c.bf16 %v4666, %v4665
      %v4692 = vpack.c.bf16 %v4668, %v4667
      %v4693 = vpack.c.bf16 %v4670, %v4669
      %v4694 = vpack.c.bf16 %v4672, %v4671
      %v4695 = vpack.c.bf16 %v4674, %v4673
      %v4696 = vpack.c.bf16 %v4676, %v4675
      %v4697 = vpack.c.bf16 %v4678, %v4677
      %v4698 = vpack.c.bf16 %v4680, %v4679
      %v4699 = vpack.c.bf16 %v4682, %v4681
      %v4700 = vpack.c.bf16 %v4684, %v4683
      %s4701 = scalar_lea.vmem %s11, 8
      %v4702 = vld [vmem:[%s4701] sm:$0xf]
      %v4704 = vsel %vm2087, %v4685, 0
      %v4707 = vsel %vm2087, %v4686, 0
      %v4710 = vsel %vm2087, %v4687, 0
      %v4713 = vsel %vm2087, %v4688, 0
      %v4716 = vsel %vm2087, %v4689, 0
      %v4719 = vsel %vm2087, %v4690, 0
      %v4722 = vsel %vm2087, %v4691, 0
      %v4725 = vsel %vm2087, %v4692, 0
      %v4728 = vsel %vm2087, %v4693, 0
      %v4731 = vsel %vm2087, %v4694, 0
      %v4734 = vsel %vm2087, %v4695, 0
      %v4737 = vsel %vm2087, %v4696, 0
      %v4740 = vsel %vm2087, %v4697, 0
      %v4743 = vsel %vm2087, %v4698, 0
      %v4746 = vsel %vm2087, %v4699, 0
      %v4749 = vsel %vm2087, %v4700, 0
      %v4752 = vsel %vm4276, %v4702, 0
      %4754 = vmatprep.subr.bf16.mxu0 0
      %4755 = vmatpush1.bf16.msra.mxu0 %v4752
      %4756 = vmatprep.subr.bf16.mxu0 0
      %4757 = vmatpush1.bf16.msra.mxu0 0
      %4758 = vmatprep.subr.bf16.mxu0 0
      %4759 = vmatpush1.bf16.msra.mxu0 0
      %4760 = vmatprep.subr.bf16.mxu0 0
      %4761 = vmatpush1.bf16.msra.mxu0 0
      %4762 = vmatprep.subr.bf16.mxu0 0
      %4763 = vmatpush1.bf16.msra.mxu0 0
      %4764 = vmatprep.subr.bf16.mxu0 0
      %4765 = vmatpush1.bf16.msra.mxu0 0
      %4766 = vmatprep.subr.bf16.mxu0 0
      %4767 = vmatpush1.bf16.msra.mxu0 0
      %4768 = vmatprep.subr.bf16.mxu0 0
      %4769 = vmatpush1.bf16.msra.mxu0 0
      %4770 = vmatprep.subr.bf16.mxu0 0
      %4771 = vmatpush1.bf16.msra.mxu0 0
      %4772 = vmatprep.subr.bf16.mxu0 0
      %4773 = vmatpush1.bf16.msra.mxu0 0
      %4774 = vmatprep.subr.bf16.mxu0 0
      %4775 = vmatpush1.bf16.msra.mxu0 0
      %4776 = vmatprep.subr.bf16.mxu0 0
      %4777 = vmatpush1.bf16.msra.mxu0 0
      %4778 = vmatprep.subr.bf16.mxu0 0
      %4779 = vmatpush1.bf16.msra.mxu0 0
      %4780 = vmatprep.subr.bf16.mxu0 0
      %4781 = vmatpush1.bf16.msra.mxu0 0
      %4782 = vmatprep.subr.bf16.mxu0 0
      %4783 = vmatpush1.bf16.msra.mxu0 0
      %4784 = vmatprep.subr.bf16.mxu0 0
      %4785 = vmatpush1.bf16.msra.mxu0 0
      %4786 = vmatprep.mubr.bf16.mxu0 0
      %4787 = vmatmul.mubr.bf16.gmra.mrb[0].mxu0 %v4704
      %v4788 = vpop.f32.mrb[0].mxu0
      %v4789 = vadd.f32 0.0, %v4788
      %v4790 = vpop.f32.mrb[0].mxu0
      %v4791 = vpop.f32.mrb[0].mxu0
      %v4792 = vadd.f32 0.0, %v4791
      %v4793 = vpop.f32.mrb[0].mxu0
      %4794 = vmatprep.mubr.bf16.mxu0 0
      %4795 = vmatmul.mubr.bf16.gmra.mrb[0].mxu0 %v4707
      %v4796 = vpop.f32.mrb[0].mxu0
      %v4797 = vadd.f32 0.0, %v4796
      %v4798 = vpop.f32.mrb[0].mxu0
      %v4799 = vpop.f32.mrb[0].mxu0
      %v4800 = vadd.f32 0.0, %v4799
      %v4801 = vpop.f32.mrb[0].mxu0
      %4802 = vmatprep.mubr.bf16.mxu0 0
      %4803 = vmatmul.mubr.bf16.gmra.mrb[0].mxu0 %v4710
      %v4804 = vpop.f32.mrb[0].mxu0
      %v4805 = vadd.f32 0.0, %v4804
      %v4806 = vpop.f32.mrb[0].mxu0
      %v4807 = vpop.f32.mrb[0].mxu0
      %v4808 = vadd.f32 0.0, %v4807
      %v4809 = vpop.f32.mrb[0].mxu0
      %4810 = vmatprep.mubr.bf16.mxu0 0
      %4811 = vmatmul.mubr.bf16.gmra.mrb[0].mxu0 %v4713
      %v4812 = vpop.f32.mrb[0].mxu0
      %v4813 = vadd.f32 0.0, %v4812
      %v4814 = vpop.f32.mrb[0].mxu0
      %v4815 = vpop.f32.mrb[0].mxu0
      %v4816 = vadd.f32 0.0, %v4815
      %v4817 = vpop.f32.mrb[0].mxu0
      %4818 = vmatprep.mubr.bf16.mxu0 0
      %4819 = vmatmul.mubr.bf16.gmra.mrb[0].mxu0 %v4716
      %v4820 = vpop.f32.mrb[0].mxu0
      %v4821 = vadd.f32 0.0, %v4820
      %v4822 = vpop.f32.mrb[0].mxu0
      %v4823 = vpop.f32.mrb[0].mxu0
      %v4824 = vadd.f32 0.0, %v4823
      %v4825 = vpop.f32.mrb[0].mxu0
      %4826 = vmatprep.mubr.bf16.mxu0 0
      %4827 = vmatmul.mubr.bf16.gmra.mrb[0].mxu0 %v4719
      %v4828 = vpop.f32.mrb[0].mxu0
      %v4829 = vadd.f32 0.0, %v4828
      %v4830 = vpop.f32.mrb[0].mxu0
      %v4831 = vpop.f32.mrb[0].mxu0
      %v4832 = vadd.f32 0.0, %v4831
      %v4833 = vpop.f32.mrb[0].mxu0
      %4834 = vmatprep.mubr.bf16.mxu0 0
      %4835 = vmatmul.mubr.bf16.gmra.mrb[0].mxu0 %v4722
      %v4836 = vpop.f32.mrb[0].mxu0
      %v4837 = vadd.f32 0.0, %v4836
      %v4838 = vpop.f32.mrb[0].mxu0
      %v4839 = vpop.f32.mrb[0].mxu0
      %v4840 = vadd.f32 0.0, %v4839
      %v4841 = vpop.f32.mrb[0].mxu0
      %4842 = vmatprep.mubr.bf16.mxu0 0
      %4843 = vmatmul.mubr.bf16.gmra.mrb[0].mxu0 %v4725
      %v4844 = vpop.f32.mrb[0].mxu0
      %v4845 = vadd.f32 0.0, %v4844
      %v4846 = vpop.f32.mrb[0].mxu0
      %v4847 = vpop.f32.mrb[0].mxu0
      %v4848 = vadd.f32 0.0, %v4847
      %v4849 = vpop.f32.mrb[0].mxu0
      %4850 = vmatprep.mubr.bf16.mxu0 0
      %4851 = vmatmul.mubr.bf16.gmra.mrb[0].mxu0 %v4728
      %v4852 = vpop.f32.mrb[0].mxu0
      %v4853 = vadd.f32 0.0, %v4852
      %v4854 = vpop.f32.mrb[0].mxu0
      %v4855 = vpop.f32.mrb[0].mxu0
      %v4856 = vadd.f32 0.0, %v4855
      %v4857 = vpop.f32.mrb[0].mxu0
      %4858 = vmatprep.mubr.bf16.mxu0 0
      %4859 = vmatmul.mubr.bf16.gmra.mrb[0].mxu0 %v4731
      %v4860 = vpop.f32.mrb[0].mxu0
      %v4861 = vadd.f32 0.0, %v4860
      %v4862 = vpop.f32.mrb[0].mxu0
      %v4863 = vpop.f32.mrb[0].mxu0
      %v4864 = vadd.f32 0.0, %v4863
      %v4865 = vpop.f32.mrb[0].mxu0
      %4866 = vmatprep.mubr.bf16.mxu0 0
      %4867 = vmatmul.mubr.bf16.gmra.mrb[0].mxu0 %v4734
      %v4868 = vpop.f32.mrb[0].mxu0
      %v4869 = vadd.f32 0.0, %v4868
      %v4870 = vpop.f32.mrb[0].mxu0
      %v4871 = vpop.f32.mrb[0].mxu0
      %v4872 = vadd.f32 0.0, %v4871
      %v4873 = vpop.f32.mrb[0].mxu0
      %4874 = vmatprep.mubr.bf16.mxu0 0
      %4875 = vmatmul.mubr.bf16.gmra.mrb[0].mxu0 %v4737
      %v4876 = vpop.f32.mrb[0].mxu0
      %v4877 = vadd.f32 0.0, %v4876
      %v4878 = vpop.f32.mrb[0].mxu0
      %v4879 = vpop.f32.mrb[0].mxu0
      %v4880 = vadd.f32 0.0, %v4879
      %v4881 = vpop.f32.mrb[0].mxu0
      %4882 = vmatprep.mubr.bf16.mxu0 0
      %4883 = vmatmul.mubr.bf16.gmra.mrb[0].mxu0 %v4740
      %v4884 = vpop.f32.mrb[0].mxu0
      %v4885 = vadd.f32 0.0, %v4884
      %v4886 = vpop.f32.mrb[0].mxu0
      %v4887 = vpop.f32.mrb[0].mxu0
      %v4888 = vadd.f32 0.0, %v4887
      %v4889 = vpop.f32.mrb[0].mxu0
      %4890 = vmatprep.mubr.bf16.mxu0 0
      %4891 = vmatmul.mubr.bf16.gmra.mrb[0].mxu0 %v4743
      %v4892 = vpop.f32.mrb[0].mxu0
      %v4893 = vadd.f32 0.0, %v4892
      %v4894 = vpop.f32.mrb[0].mxu0
      %v4895 = vpop.f32.mrb[0].mxu0
      %v4896 = vadd.f32 0.0, %v4895
      %v4897 = vpop.f32.mrb[0].mxu0
      %4898 = vmatprep.mubr.bf16.mxu0 0
      %4899 = vmatmul.mubr.bf16.gmra.mrb[0].mxu0 %v4746
      %v4900 = vpop.f32.mrb[0].mxu0
      %v4901 = vadd.f32 0.0, %v4900
      %v4902 = vpop.f32.mrb[0].mxu0
      %v4903 = vpop.f32.mrb[0].mxu0
      %v4904 = vadd.f32 0.0, %v4903
      %v4905 = vpop.f32.mrb[0].mxu0
      %4906 = vmatprep.mubr.bf16.mxu0 0
      %4907 = vmatmul.mubr.bf16.gmra.mrb[0].mxu0 %v4749
      %v4908 = vpop.f32.mrb[0].mxu0
      %v4909 = vadd.f32 0.0, %v4908
      %v4910 = vpop.f32.mrb[0].mxu0
      %v4911 = vpop.f32.mrb[0].mxu0
      %v4912 = vadd.f32 0.0, %v4911
      %v4913 = vpop.f32.mrb[0].mxu0
      %4914 = vdwg.mxu0
      %v4915 = vadd.f32 %v4527, %v4789
      %v4916 = vadd.f32 %v4530, %v4792
      %v4917 = vadd.f32 %v4535, %v4797
      %v4918 = vadd.f32 %v4538, %v4800
      %v4919 = vadd.f32 %v4543, %v4805
      %v4920 = vadd.f32 %v4546, %v4808
      %v4921 = vadd.f32 %v4551, %v4813
      %v4922 = vadd.f32 %v4554, %v4816
      %v4923 = vadd.f32 %v4559, %v4821
      %v4924 = vadd.f32 %v4562, %v4824
      %v4925 = vadd.f32 %v4567, %v4829
      %v4926 = vadd.f32 %v4570, %v4832
      %v4927 = vadd.f32 %v4575, %v4837
      %v4928 = vadd.f32 %v4578, %v4840
      %v4929 = vadd.f32 %v4583, %v4845
      %v4930 = vadd.f32 %v4586, %v4848
      %v4931 = vadd.f32 %v4591, %v4853
      %v4932 = vadd.f32 %v4594, %v4856
      %v4933 = vadd.f32 %v4599, %v4861
      %v4934 = vadd.f32 %v4602, %v4864
      %v4935 = vadd.f32 %v4607, %v4869
      %v4936 = vadd.f32 %v4610, %v4872
      %v4937 = vadd.f32 %v4615, %v4877
      %v4938 = vadd.f32 %v4618, %v4880
      %v4939 = vadd.f32 %v4623, %v4885
      %v4940 = vadd.f32 %v4626, %v4888
      %v4941 = vadd.f32 %v4631, %v4893
      %v4942 = vadd.f32 %v4634, %v4896
      %v4943 = vadd.f32 %v4639, %v4901
      %v4944 = vadd.f32 %v4642, %v4904
      %v4945 = vadd.f32 %v4647, %v4909
      %v4946 = vadd.f32 %v4650, %v4912
      %v4947 = vld [vmem:[%s4063] sm:$0xff]
      %v4948 = vld [vmem:[%s4063 + $0x8] sm:$0xff]
      %v4949 = vld [vmem:[%s4063 + $0x18] sm:$0xff]
      %v4950 = vld [vmem:[%s4063 + $0x20] sm:$0xff]
      %v4951 = vld [vmem:[%s4063 + $0x30] sm:$0xff]
      %v4952 = vld [vmem:[%s4063 + $0x38] sm:$0xff]
      %v4953 = vld [vmem:[%s4063 + $0x48] sm:$0xff]
      %v4954 = vld [vmem:[%s4063 + $0x50] sm:$0xff]
      %v4955 = vld [vmem:[%s4063 + $0x60] sm:$0xff]
      %v4956 = vld [vmem:[%s4063 + $0x68] sm:$0xff]
      %v4957 = vld [vmem:[%s4063 + $0x78] sm:$0xff]
      %v4958 = vld [vmem:[%s4063 + $0x80] sm:$0xff]
      %v4959 = vld [vmem:[%s4063 + $0x90] sm:$0xff]
      %v4960 = vld [vmem:[%s4063 + $0x98] sm:$0xff]
      %v4961 = vld [vmem:[%s4063 + $0xa8] sm:$0xff]
      %v4962 = vld [vmem:[%s4063 + $0xb0] sm:$0xff]
      %v4963 = vld [vmem:[%s4063 + $0xc0] sm:$0xff]
      %v4964 = vld [vmem:[%s4063 + $0xc8] sm:$0xff]
      %v4965 = vld [vmem:[%s4063 + $0xd8] sm:$0xff]
      %v4966 = vld [vmem:[%s4063 + $0xe0] sm:$0xff]
      %v4967 = vld [vmem:[%s4063 + $0xf0] sm:$0xff]
      %v4968 = vld [vmem:[%s4063 + $0xf8] sm:$0xff]
      %v4969 = vld [vmem:[%s4063 + $0x108] sm:$0xff]
      %v4970 = vld [vmem:[%s4063 + $0x110] sm:$0xff]
      %v4971 = vld [vmem:[%s4063 + $0x120] sm:$0xff]
      %v4972 = vld [vmem:[%s4063 + $0x128] sm:$0xff]
      %v4973 = vld [vmem:[%s4063 + $0x138] sm:$0xff]
      %v4974 = vld [vmem:[%s4063 + $0x140] sm:$0xff]
      %v4975 = vld [vmem:[%s4063 + $0x150] sm:$0xff]
      %v4976 = vld [vmem:[%s4063 + $0x158] sm:$0xff]
      %v4977 = vld [vmem:[%s4063 + $0x168] sm:$0xff]
      %v4978 = vld [vmem:[%s4063 + $0x170] sm:$0xff]
      %v4979 = vpack.c.bf16 %v4948, %v4947
      %v4980 = vpack.c.bf16 %v4950, %v4949
      %v4981 = vpack.c.bf16 %v4952, %v4951
      %v4982 = vpack.c.bf16 %v4954, %v4953
      %v4983 = vpack.c.bf16 %v4956, %v4955
      %v4984 = vpack.c.bf16 %v4958, %v4957
      %v4985 = vpack.c.bf16 %v4960, %v4959
      %v4986 = vpack.c.bf16 %v4962, %v4961
      %v4987 = vpack.c.bf16 %v4964, %v4963
      %v4988 = vpack.c.bf16 %v4966, %v4965
      %v4989 = vpack.c.bf16 %v4968, %v4967
      %v4990 = vpack.c.bf16 %v4970, %v4969
      %v4991 = vpack.c.bf16 %v4972, %v4971
      %v4992 = vpack.c.bf16 %v4974, %v4973
      %v4993 = vpack.c.bf16 %v4976, %v4975
      %v4994 = vpack.c.bf16 %v4978, %v4977
      %s4995 = scalar_lea.vmem %s11, 12
      %v4996 = vld [vmem:[%s4995] sm:$0xf]
      %v4998 = vsel %vm2087, %v4979, 0
      %v5001 = vsel %vm2087, %v4980, 0
      %v5004 = vsel %vm2087, %v4981, 0
      %v5007 = vsel %vm2087, %v4982, 0
      %v5010 = vsel %vm2087, %v4983, 0
      %v5013 = vsel %vm2087, %v4984, 0
      %v5016 = vsel %vm2087, %v4985, 0
      %v5019 = vsel %vm2087, %v4986, 0
      %v5022 = vsel %vm2087, %v4987, 0
      %v5025 = vsel %vm2087, %v4988, 0
      %v5028 = vsel %vm2087, %v4989, 0
      %v5031 = vsel %vm2087, %v4990, 0
      %v5034 = vsel %vm2087, %v4991, 0
      %v5037 = vsel %vm2087, %v4992, 0
      %v5040 = vsel %vm2087, %v4993, 0
      %v5043 = vsel %vm2087, %v4994, 0
      %v5046 = vsel %vm4276, %v4996, 0
      %5048 = vmatprep.subr.bf16.mxu0 0
      %5049 = vmatpush1.bf16.msra.mxu0 %v5046
      %5050 = vmatprep.subr.bf16.mxu0 0
      %5051 = vmatpush1.bf16.msra.mxu0 0
      %5052 = vmatprep.subr.bf16.mxu0 0
      %5053 = vmatpush1.bf16.msra.mxu0 0
      %5054 = vmatprep.subr.bf16.mxu0 0
      %5055 = vmatpush1.bf16.msra.mxu0 0
      %5056 = vmatprep.subr.bf16.mxu0 0
      %5057 = vmatpush1.bf16.msra.mxu0 0
      %5058 = vmatprep.subr.bf16.mxu0 0
      %5059 = vmatpush1.bf16.msra.mxu0 0
      %5060 = vmatprep.subr.bf16.mxu0 0
      %5061 = vmatpush1.bf16.msra.mxu0 0
      %5062 = vmatprep.subr.bf16.mxu0 0
      %5063 = vmatpush1.bf16.msra.mxu0 0
      %5064 = vmatprep.subr.bf16.mxu0 0
      %5065 = vmatpush1.bf16.msra.mxu0 0
      %5066 = vmatprep.subr.bf16.mxu0 0
      %5067 = vmatpush1.bf16.msra.mxu0 0
      %5068 = vmatprep.subr.bf16.mxu0 0
      %5069 = vmatpush1.bf16.msra.mxu0 0
      %5070 = vmatprep.subr.bf16.mxu0 0
      %5071 = vmatpush1.bf16.msra.mxu0 0
      %5072 = vmatprep.subr.bf16.mxu0 0
      %5073 = vmatpush1.bf16.msra.mxu0 0
      %5074 = vmatprep.subr.bf16.mxu0 0
      %5075 = vmatpush1.bf16.msra.mxu0 0
      %5076 = vmatprep.subr.bf16.mxu0 0
      %5077 = vmatpush1.bf16.msra.mxu0 0
      %5078 = vmatprep.subr.bf16.mxu0 0
      %5079 = vmatpush1.bf16.msra.mxu0 0
      %5080 = vmatprep.mubr.bf16.mxu0 0
      %5081 = vmatmul.mubr.bf16.gmra.mrb[0].mxu0 %v4998
      %v5082 = vpop.f32.mrb[0].mxu0
      %v5083 = vadd.f32 0.0, %v5082
      %v5084 = vpop.f32.mrb[0].mxu0
      %v5085 = vpop.f32.mrb[0].mxu0
      %v5086 = vadd.f32 0.0, %v5085
      %v5087 = vpop.f32.mrb[0].mxu0
      %5088 = vmatprep.mubr.bf16.mxu0 0
      %5089 = vmatmul.mubr.bf16.gmra.mrb[0].mxu0 %v5001
      %v5090 = vpop.f32.mrb[0].mxu0
      %v5091 = vadd.f32 0.0, %v5090
      %v5092 = vpop.f32.mrb[0].mxu0
      %v5093 = vpop.f32.mrb[0].mxu0
      %v5094 = vadd.f32 0.0, %v5093
      %v5095 = vpop.f32.mrb[0].mxu0
      %5096 = vmatprep.mubr.bf16.mxu0 0
      %5097 = vmatmul.mubr.bf16.gmra.mrb[0].mxu0 %v5004
      %v5098 = vpop.f32.mrb[0].mxu0
      %v5099 = vadd.f32 0.0, %v5098
      %v5100 = vpop.f32.mrb[0].mxu0
      %v5101 = vpop.f32.mrb[0].mxu0
      %v5102 = vadd.f32 0.0, %v5101
      %v5103 = vpop.f32.mrb[0].mxu0
      %5104 = vmatprep.mubr.bf16.mxu0 0
      %5105 = vmatmul.mubr.bf16.gmra.mrb[0].mxu0 %v5007
      %v5106 = vpop.f32.mrb[0].mxu0
      %v5107 = vadd.f32 0.0, %v5106
      %v5108 = vpop.f32.mrb[0].mxu0
      %v5109 = vpop.f32.mrb[0].mxu0
      %v5110 = vadd.f32 0.0, %v5109
      %v5111 = vpop.f32.mrb[0].mxu0
      %5112 = vmatprep.mubr.bf16.mxu0 0
      %5113 = vmatmul.mubr.bf16.gmra.mrb[0].mxu0 %v5010
      %v5114 = vpop.f32.mrb[0].mxu0
      %v5115 = vadd.f32 0.0, %v5114
      %v5116 = vpop.f32.mrb[0].mxu0
      %v5117 = vpop.f32.mrb[0].mxu0
      %v5118 = vadd.f32 0.0, %v5117
      %v5119 = vpop.f32.mrb[0].mxu0
      %5120 = vmatprep.mubr.bf16.mxu0 0
      %5121 = vmatmul.mubr.bf16.gmra.mrb[0].mxu0 %v5013
      %v5122 = vpop.f32.mrb[0].mxu0
      %v5123 = vadd.f32 0.0, %v5122
      %v5124 = vpop.f32.mrb[0].mxu0
      %v5125 = vpop.f32.mrb[0].mxu0
      %v5126 = vadd.f32 0.0, %v5125
      %v5127 = vpop.f32.mrb[0].mxu0
      %5128 = vmatprep.mubr.bf16.mxu0 0
      %5129 = vmatmul.mubr.bf16.gmra.mrb[0].mxu0 %v5016
      %v5130 = vpop.f32.mrb[0].mxu0
      %v5131 = vadd.f32 0.0, %v5130
      %v5132 = vpop.f32.mrb[0].mxu0
      %v5133 = vpop.f32.mrb[0].mxu0
      %v5134 = vadd.f32 0.0, %v5133
      %v5135 = vpop.f32.mrb[0].mxu0
      %5136 = vmatprep.mubr.bf16.mxu0 0
      %5137 = vmatmul.mubr.bf16.gmra.mrb[0].mxu0 %v5019
      %v5138 = vpop.f32.mrb[0].mxu0
      %v5139 = vadd.f32 0.0, %v5138
      %v5140 = vpop.f32.mrb[0].mxu0
      %v5141 = vpop.f32.mrb[0].mxu0
      %v5142 = vadd.f32 0.0, %v5141
      %v5143 = vpop.f32.mrb[0].mxu0
      %5144 = vmatprep.mubr.bf16.mxu0 0
      %5145 = vmatmul.mubr.bf16.gmra.mrb[0].mxu0 %v5022
      %v5146 = vpop.f32.mrb[0].mxu0
      %v5147 = vadd.f32 0.0, %v5146
      %v5148 = vpop.f32.mrb[0].mxu0
      %v5149 = vpop.f32.mrb[0].mxu0
      %v5150 = vadd.f32 0.0, %v5149
      %v5151 = vpop.f32.mrb[0].mxu0
      %5152 = vmatprep.mubr.bf16.mxu0 0
      %5153 = vmatmul.mubr.bf16.gmra.mrb[0].mxu0 %v5025
      %v5154 = vpop.f32.mrb[0].mxu0
      %v5155 = vadd.f32 0.0, %v5154
      %v5156 = vpop.f32.mrb[0].mxu0
      %v5157 = vpop.f32.mrb[0].mxu0
      %v5158 = vadd.f32 0.0, %v5157
      %v5159 = vpop.f32.mrb[0].mxu0
      %5160 = vmatprep.mubr.bf16.mxu0 0
      %5161 = vmatmul.mubr.bf16.gmra.mrb[0].mxu0 %v5028
      %v5162 = vpop.f32.mrb[0].mxu0
      %v5163 = vadd.f32 0.0, %v5162
      %v5164 = vpop.f32.mrb[0].mxu0
      %v5165 = vpop.f32.mrb[0].mxu0
      %v5166 = vadd.f32 0.0, %v5165
      %v5167 = vpop.f32.mrb[0].mxu0
      %5168 = vmatprep.mubr.bf16.mxu0 0
      %5169 = vmatmul.mubr.bf16.gmra.mrb[0].mxu0 %v5031
      %v5170 = vpop.f32.mrb[0].mxu0
      %v5171 = vadd.f32 0.0, %v5170
      %v5172 = vpop.f32.mrb[0].mxu0
      %v5173 = vpop.f32.mrb[0].mxu0
      %v5174 = vadd.f32 0.0, %v5173
      %v5175 = vpop.f32.mrb[0].mxu0
      %5176 = vmatprep.mubr.bf16.mxu0 0
      %5177 = vmatmul.mubr.bf16.gmra.mrb[0].mxu0 %v5034
      %v5178 = vpop.f32.mrb[0].mxu0
      %v5179 = vadd.f32 0.0, %v5178
      %v5180 = vpop.f32.mrb[0].mxu0
      %v5181 = vpop.f32.mrb[0].mxu0
      %v5182 = vadd.f32 0.0, %v5181
      %v5183 = vpop.f32.mrb[0].mxu0
      %5184 = vmatprep.mubr.bf16.mxu0 0
      %5185 = vmatmul.mubr.bf16.gmra.mrb[0].mxu0 %v5037
      %v5186 = vpop.f32.mrb[0].mxu0
      %v5187 = vadd.f32 0.0, %v5186
      %v5188 = vpop.f32.mrb[0].mxu0
      %v5189 = vpop.f32.mrb[0].mxu0
      %v5190 = vadd.f32 0.0, %v5189
      %v5191 = vpop.f32.mrb[0].mxu0
      %5192 = vmatprep.mubr.bf16.mxu0 0
      %5193 = vmatmul.mubr.bf16.gmra.mrb[0].mxu0 %v5040
      %v5194 = vpop.f32.mrb[0].mxu0
      %v5195 = vadd.f32 0.0, %v5194
      %v5196 = vpop.f32.mrb[0].mxu0
      %v5197 = vpop.f32.mrb[0].mxu0
      %v5198 = vadd.f32 0.0, %v5197
      %v5199 = vpop.f32.mrb[0].mxu0
      %5200 = vmatprep.mubr.bf16.mxu0 0
      %5201 = vmatmul.mubr.bf16.gmra.mrb[0].mxu0 %v5043
      %v5202 = vpop.f32.mrb[0].mxu0
      %v5203 = vadd.f32 0.0, %v5202
      %v5204 = vpop.f32.mrb[0].mxu0
      %v5205 = vpop.f32.mrb[0].mxu0
      %v5206 = vadd.f32 0.0, %v5205
      %v5207 = vpop.f32.mrb[0].mxu0
      %5208 = vdwg.mxu0
      %v5209 = vadd.f32 %v4915, %v5083
      %v5210 = vadd.f32 %v4916, %v5086
      %v5211 = vadd.f32 %v4917, %v5091
      %v5212 = vadd.f32 %v4918, %v5094
      %v5213 = vadd.f32 %v4919, %v5099
      %v5214 = vadd.f32 %v4920, %v5102
      %v5215 = vadd.f32 %v4921, %v5107
      %v5216 = vadd.f32 %v4922, %v5110
      %v5217 = vadd.f32 %v4923, %v5115
      %v5218 = vadd.f32 %v4924, %v5118
      %v5219 = vadd.f32 %v4925, %v5123
      %v5220 = vadd.f32 %v4926, %v5126
      %v5221 = vadd.f32 %v4927, %v5131
      %v5222 = vadd.f32 %v4928, %v5134
      %v5223 = vadd.f32 %v4929, %v5139
      %v5224 = vadd.f32 %v4930, %v5142
      %v5225 = vadd.f32 %v4931, %v5147
      %v5226 = vadd.f32 %v4932, %v5150
      %v5227 = vadd.f32 %v4933, %v5155
      %v5228 = vadd.f32 %v4934, %v5158
      %v5229 = vadd.f32 %v4935, %v5163
      %v5230 = vadd.f32 %v4936, %v5166
      %v5231 = vadd.f32 %v4937, %v5171
      %v5232 = vadd.f32 %v4938, %v5174
      %v5233 = vadd.f32 %v4939, %v5179
      %v5234 = vadd.f32 %v4940, %v5182
      %v5235 = vadd.f32 %v4941, %v5187
      %v5236 = vadd.f32 %v4942, %v5190
      %v5237 = vadd.f32 %v4943, %v5195
      %v5238 = vadd.f32 %v4944, %v5198
      %v5239 = vadd.f32 %v4945, %v5203
      %v5240 = vadd.f32 %v4946, %v5206
      %v5241 = vld [vmem:[%s4063 + $0x1] sm:$0xff]
      %v5242 = vld [vmem:[%s4063 + $0x9] sm:$0xff]
      %v5243 = vld [vmem:[%s4063 + $0x19] sm:$0xff]
      %v5244 = vld [vmem:[%s4063 + $0x21] sm:$0xff]
      %v5245 = vld [vmem:[%s4063 + $0x31] sm:$0xff]
      %v5246 = vld [vmem:[%s4063 + $0x39] sm:$0xff]
      %v5247 = vld [vmem:[%s4063 + $0x49] sm:$0xff]
      %v5248 = vld [vmem:[%s4063 + $0x51] sm:$0xff]
      %v5249 = vld [vmem:[%s4063 + $0x61] sm:$0xff]
      %v5250 = vld [vmem:[%s4063 + $0x69] sm:$0xff]
      %v5251 = vld [vmem:[%s4063 + $0x79] sm:$0xff]
      %v5252 = vld [vmem:[%s4063 + $0x81] sm:$0xff]
      %v5253 = vld [vmem:[%s4063 + $0x91] sm:$0xff]
      %v5254 = vld [vmem:[%s4063 + $0x99] sm:$0xff]
      %v5255 = vld [vmem:[%s4063 + $0xa9] sm:$0xff]
      %v5256 = vld [vmem:[%s4063 + $0xb1] sm:$0xff]
      %v5257 = vld [vmem:[%s4063 + $0xc1] sm:$0xff]
      %v5258 = vld [vmem:[%s4063 + $0xc9] sm:$0xff]
      %v5259 = vld [vmem:[%s4063 + $0xd9] sm:$0xff]
      %v5260 = vld [vmem:[%s4063 + $0xe1] sm:$0xff]
      %v5261 = vld [vmem:[%s4063 + $0xf1] sm:$0xff]
      %v5262 = vld [vmem:[%s4063 + $0xf9] sm:$0xff]
      %v5263 = vld [vmem:[%s4063 + $0x109] sm:$0xff]
      %v5264 = vld [vmem:[%s4063 + $0x111] sm:$0xff]
      %v5265 = vld [vmem:[%s4063 + $0x121] sm:$0xff]
      %v5266 = vld [vmem:[%s4063 + $0x129] sm:$0xff]
      %v5267 = vld [vmem:[%s4063 + $0x139] sm:$0xff]
      %v5268 = vld [vmem:[%s4063 + $0x141] sm:$0xff]
      %v5269 = vld [vmem:[%s4063 + $0x151] sm:$0xff]
      %v5270 = vld [vmem:[%s4063 + $0x159] sm:$0xff]
      %v5271 = vld [vmem:[%s4063 + $0x169] sm:$0xff]
      %v5272 = vld [vmem:[%s4063 + $0x171] sm:$0xff]
      %v5273 = vpack.c.bf16 %v5242, %v5241
      %v5274 = vpack.c.bf16 %v5244, %v5243
      %v5275 = vpack.c.bf16 %v5246, %v5245
      %v5276 = vpack.c.bf16 %v5248, %v5247
      %v5277 = vpack.c.bf16 %v5250, %v5249
      %v5278 = vpack.c.bf16 %v5252, %v5251
      %v5279 = vpack.c.bf16 %v5254, %v5253
      %v5280 = vpack.c.bf16 %v5256, %v5255
      %v5281 = vpack.c.bf16 %v5258, %v5257
      %v5282 = vpack.c.bf16 %v5260, %v5259
      %v5283 = vpack.c.bf16 %v5262, %v5261
      %v5284 = vpack.c.bf16 %v5264, %v5263
      %v5285 = vpack.c.bf16 %v5266, %v5265
      %v5286 = vpack.c.bf16 %v5268, %v5267
      %v5287 = vpack.c.bf16 %v5270, %v5269
      %v5288 = vpack.c.bf16 %v5272, %v5271
      %s5289 = scalar_lea.vmem %s11, 16
      %v5290 = vld [vmem:[%s5289] sm:$0xf]
      %v5292 = vsel %vm2087, %v5273, 0
      %v5295 = vsel %vm2087, %v5274, 0
      %v5298 = vsel %vm2087, %v5275, 0
      %v5301 = vsel %vm2087, %v5276, 0
      %v5304 = vsel %vm2087, %v5277, 0
      %v5307 = vsel %vm2087, %v5278, 0
      %v5310 = vsel %vm2087, %v5279, 0
      %v5313 = vsel %vm2087, %v5280, 0
      %v5316 = vsel %vm2087, %v5281, 0
      %v5319 = vsel %vm2087, %v5282, 0
      %v5322 = vsel %vm2087, %v5283, 0
      %v5325 = vsel %vm2087, %v5284, 0
      %v5328 = vsel %vm2087, %v5285, 0
      %v5331 = vsel %vm2087, %v5286, 0
      %v5334 = vsel %vm2087, %v5287, 0
      %v5337 = vsel %vm2087, %v5288, 0
      %v5340 = vsel %vm4276, %v5290, 0
      %5342 = vmatprep.subr.bf16.mxu0 0
      %5343 = vmatpush1.bf16.msra.mxu0 %v5340
      %5344 = vmatprep.subr.bf16.mxu0 0
      %5345 = vmatpush1.bf16.msra.mxu0 0
      %5346 = vmatprep.subr.bf16.mxu0 0
      %5347 = vmatpush1.bf16.msra.mxu0 0
      %5348 = vmatprep.subr.bf16.mxu0 0
      %5349 = vmatpush1.bf16.msra.mxu0 0
      %5350 = vmatprep.subr.bf16.mxu0 0
      %5351 = vmatpush1.bf16.msra.mxu0 0
      %5352 = vmatprep.subr.bf16.mxu0 0
      %5353 = vmatpush1.bf16.msra.mxu0 0
      %5354 = vmatprep.subr.bf16.mxu0 0
      %5355 = vmatpush1.bf16.msra.mxu0 0
      %5356 = vmatprep.subr.bf16.mxu0 0
      %5357 = vmatpush1.bf16.msra.mxu0 0
      %5358 = vmatprep.subr.bf16.mxu0 0
      %5359 = vmatpush1.bf16.msra.mxu0 0
      %5360 = vmatprep.subr.bf16.mxu0 0
      %5361 = vmatpush1.bf16.msra.mxu0 0
      %5362 = vmatprep.subr.bf16.mxu0 0
      %5363 = vmatpush1.bf16.msra.mxu0 0
      %5364 = vmatprep.subr.bf16.mxu0 0
      %5365 = vmatpush1.bf16.msra.mxu0 0
      %5366 = vmatprep.subr.bf16.mxu0 0
      %5367 = vmatpush1.bf16.msra.mxu0 0
      %5368 = vmatprep.subr.bf16.mxu0 0
      %5369 = vmatpush1.bf16.msra.mxu0 0
      %5370 = vmatprep.subr.bf16.mxu0 0
      %5371 = vmatpush1.bf16.msra.mxu0 0
      %5372 = vmatprep.subr.bf16.mxu0 0
      %5373 = vmatpush1.bf16.msra.mxu0 0
      %5374 = vmatprep.mubr.bf16.mxu0 0
      %5375 = vmatmul.mubr.bf16.gmra.mrb[0].mxu0 %v5292
      %v5376 = vpop.f32.mrb[0].mxu0
      %v5377 = vadd.f32 0.0, %v5376
      %v5378 = vpop.f32.mrb[0].mxu0
      %v5379 = vpop.f32.mrb[0].mxu0
      %v5380 = vadd.f32 0.0, %v5379
      %v5381 = vpop.f32.mrb[0].mxu0
      %5382 = vmatprep.mubr.bf16.mxu0 0
      %5383 = vmatmul.mubr.bf16.gmra.mrb[0].mxu0 %v5295
      %v5384 = vpop.f32.mrb[0].mxu0
      %v5385 = vadd.f32 0.0, %v5384
      %v5386 = vpop.f32.mrb[0].mxu0
      %v5387 = vpop.f32.mrb[0].mxu0
      %v5388 = vadd.f32 0.0, %v5387
      %v5389 = vpop.f32.mrb[0].mxu0
      %5390 = vmatprep.mubr.bf16.mxu0 0
      %5391 = vmatmul.mubr.bf16.gmra.mrb[0].mxu0 %v5298
      %v5392 = vpop.f32.mrb[0].mxu0
      %v5393 = vadd.f32 0.0, %v5392
      %v5394 = vpop.f32.mrb[0].mxu0
      %v5395 = vpop.f32.mrb[0].mxu0
      %v5396 = vadd.f32 0.0, %v5395
      %v5397 = vpop.f32.mrb[0].mxu0
      %5398 = vmatprep.mubr.bf16.mxu0 0
      %5399 = vmatmul.mubr.bf16.gmra.mrb[0].mxu0 %v5301
      %v5400 = vpop.f32.mrb[0].mxu0
      %v5401 = vadd.f32 0.0, %v5400
      %v5402 = vpop.f32.mrb[0].mxu0
      %v5403 = vpop.f32.mrb[0].mxu0
      %v5404 = vadd.f32 0.0, %v5403
      %v5405 = vpop.f32.mrb[0].mxu0
      %5406 = vmatprep.mubr.bf16.mxu0 0
      %5407 = vmatmul.mubr.bf16.gmra.mrb[0].mxu0 %v5304
      %v5408 = vpop.f32.mrb[0].mxu0
      %v5409 = vadd.f32 0.0, %v5408
      %v5410 = vpop.f32.mrb[0].mxu0
      %v5411 = vpop.f32.mrb[0].mxu0
      %v5412 = vadd.f32 0.0, %v5411
      %v5413 = vpop.f32.mrb[0].mxu0
      %5414 = vmatprep.mubr.bf16.mxu0 0
      %5415 = vmatmul.mubr.bf16.gmra.mrb[0].mxu0 %v5307
      %v5416 = vpop.f32.mrb[0].mxu0
      %v5417 = vadd.f32 0.0, %v5416
      %v5418 = vpop.f32.mrb[0].mxu0
      %v5419 = vpop.f32.mrb[0].mxu0
      %v5420 = vadd.f32 0.0, %v5419
      %v5421 = vpop.f32.mrb[0].mxu0
      %5422 = vmatprep.mubr.bf16.mxu0 0
      %5423 = vmatmul.mubr.bf16.gmra.mrb[0].mxu0 %v5310
      %v5424 = vpop.f32.mrb[0].mxu0
      %v5425 = vadd.f32 0.0, %v5424
      %v5426 = vpop.f32.mrb[0].mxu0
      %v5427 = vpop.f32.mrb[0].mxu0
      %v5428 = vadd.f32 0.0, %v5427
      %v5429 = vpop.f32.mrb[0].mxu0
      %5430 = vmatprep.mubr.bf16.mxu0 0
      %5431 = vmatmul.mubr.bf16.gmra.mrb[0].mxu0 %v5313
      %v5432 = vpop.f32.mrb[0].mxu0
      %v5433 = vadd.f32 0.0, %v5432
      %v5434 = vpop.f32.mrb[0].mxu0
      %v5435 = vpop.f32.mrb[0].mxu0
      %v5436 = vadd.f32 0.0, %v5435
      %v5437 = vpop.f32.mrb[0].mxu0
      %5438 = vmatprep.mubr.bf16.mxu0 0
      %5439 = vmatmul.mubr.bf16.gmra.mrb[0].mxu0 %v5316
      %v5440 = vpop.f32.mrb[0].mxu0
      %v5441 = vadd.f32 0.0, %v5440
      %v5442 = vpop.f32.mrb[0].mxu0
      %v5443 = vpop.f32.mrb[0].mxu0
      %v5444 = vadd.f32 0.0, %v5443
      %v5445 = vpop.f32.mrb[0].mxu0
      %5446 = vmatprep.mubr.bf16.mxu0 0
      %5447 = vmatmul.mubr.bf16.gmra.mrb[0].mxu0 %v5319
      %v5448 = vpop.f32.mrb[0].mxu0
      %v5449 = vadd.f32 0.0, %v5448
      %v5450 = vpop.f32.mrb[0].mxu0
      %v5451 = vpop.f32.mrb[0].mxu0
      %v5452 = vadd.f32 0.0, %v5451
      %v5453 = vpop.f32.mrb[0].mxu0
      %5454 = vmatprep.mubr.bf16.mxu0 0
      %5455 = vmatmul.mubr.bf16.gmra.mrb[0].mxu0 %v5322
      %v5456 = vpop.f32.mrb[0].mxu0
      %v5457 = vadd.f32 0.0, %v5456
      %v5458 = vpop.f32.mrb[0].mxu0
      %v5459 = vpop.f32.mrb[0].mxu0
      %v5460 = vadd.f32 0.0, %v5459
      %v5461 = vpop.f32.mrb[0].mxu0
      %5462 = vmatprep.mubr.bf16.mxu0 0
      %5463 = vmatmul.mubr.bf16.gmra.mrb[0].mxu0 %v5325
      %v5464 = vpop.f32.mrb[0].mxu0
      %v5465 = vadd.f32 0.0, %v5464
      %v5466 = vpop.f32.mrb[0].mxu0
      %v5467 = vpop.f32.mrb[0].mxu0
      %v5468 = vadd.f32 0.0, %v5467
      %v5469 = vpop.f32.mrb[0].mxu0
      %5470 = vmatprep.mubr.bf16.mxu0 0
      %5471 = vmatmul.mubr.bf16.gmra.mrb[0].mxu0 %v5328
      %v5472 = vpop.f32.mrb[0].mxu0
      %v5473 = vadd.f32 0.0, %v5472
      %v5474 = vpop.f32.mrb[0].mxu0
      %v5475 = vpop.f32.mrb[0].mxu0
      %v5476 = vadd.f32 0.0, %v5475
      %v5477 = vpop.f32.mrb[0].mxu0
      %5478 = vmatprep.mubr.bf16.mxu0 0
      %5479 = vmatmul.mubr.bf16.gmra.mrb[0].mxu0 %v5331
      %v5480 = vpop.f32.mrb[0].mxu0
      %v5481 = vadd.f32 0.0, %v5480
      %v5482 = vpop.f32.mrb[0].mxu0
      %v5483 = vpop.f32.mrb[0].mxu0
      %v5484 = vadd.f32 0.0, %v5483
      %v5485 = vpop.f32.mrb[0].mxu0
      %5486 = vmatprep.mubr.bf16.mxu0 0
      %5487 = vmatmul.mubr.bf16.gmra.mrb[0].mxu0 %v5334
      %v5488 = vpop.f32.mrb[0].mxu0
      %v5489 = vadd.f32 0.0, %v5488
      %v5490 = vpop.f32.mrb[0].mxu0
      %v5491 = vpop.f32.mrb[0].mxu0
      %v5492 = vadd.f32 0.0, %v5491
      %v5493 = vpop.f32.mrb[0].mxu0
      %5494 = vmatprep.mubr.bf16.mxu0 0
      %5495 = vmatmul.mubr.bf16.gmra.mrb[0].mxu0 %v5337
      %v5496 = vpop.f32.mrb[0].mxu0
      %v5497 = vadd.f32 0.0, %v5496
      %v5498 = vpop.f32.mrb[0].mxu0
      %v5499 = vpop.f32.mrb[0].mxu0
      %v5500 = vadd.f32 0.0, %v5499
      %v5501 = vpop.f32.mrb[0].mxu0
      %5502 = vdwg.mxu0
      %v5503 = vadd.f32 %v5209, %v5377
      %v5504 = vadd.f32 %v5210, %v5380
      %v5505 = vadd.f32 %v5211, %v5385
      %v5506 = vadd.f32 %v5212, %v5388
      %v5507 = vadd.f32 %v5213, %v5393
      %v5508 = vadd.f32 %v5214, %v5396
      %v5509 = vadd.f32 %v5215, %v5401
      %v5510 = vadd.f32 %v5216, %v5404
      %v5511 = vadd.f32 %v5217, %v5409
      %v5512 = vadd.f32 %v5218, %v5412
      %v5513 = vadd.f32 %v5219, %v5417
      %v5514 = vadd.f32 %v5220, %v5420
      %v5515 = vadd.f32 %v5221, %v5425
      %v5516 = vadd.f32 %v5222, %v5428
      %v5517 = vadd.f32 %v5223, %v5433
      %v5518 = vadd.f32 %v5224, %v5436
      %v5519 = vadd.f32 %v5225, %v5441
      %v5520 = vadd.f32 %v5226, %v5444
      %v5521 = vadd.f32 %v5227, %v5449
      %v5522 = vadd.f32 %v5228, %v5452
      %v5523 = vadd.f32 %v5229, %v5457
      %v5524 = vadd.f32 %v5230, %v5460
      %v5525 = vadd.f32 %v5231, %v5465
      %v5526 = vadd.f32 %v5232, %v5468
      %v5527 = vadd.f32 %v5233, %v5473
      %v5528 = vadd.f32 %v5234, %v5476
      %v5529 = vadd.f32 %v5235, %v5481
      %v5530 = vadd.f32 %v5236, %v5484
      %v5531 = vadd.f32 %v5237, %v5489
      %v5532 = vadd.f32 %v5238, %v5492
      %v5533 = vadd.f32 %v5239, %v5497
      %v5534 = vadd.f32 %v5240, %v5500
      %v5535 = vld [vmem:[%s4063 + $0x2] sm:$0xff]
      %v5536 = vld [vmem:[%s4063 + $0xa] sm:$0xff]
      %v5537 = vld [vmem:[%s4063 + $0x1a] sm:$0xff]
      %v5538 = vld [vmem:[%s4063 + $0x22] sm:$0xff]
      %v5539 = vld [vmem:[%s4063 + $0x32] sm:$0xff]
      %v5540 = vld [vmem:[%s4063 + $0x3a] sm:$0xff]
      %v5541 = vld [vmem:[%s4063 + $0x4a] sm:$0xff]
      %v5542 = vld [vmem:[%s4063 + $0x52] sm:$0xff]
      %v5543 = vld [vmem:[%s4063 + $0x62] sm:$0xff]
      %v5544 = vld [vmem:[%s4063 + $0x6a] sm:$0xff]
      %v5545 = vld [vmem:[%s4063 + $0x7a] sm:$0xff]
      %v5546 = vld [vmem:[%s4063 + $0x82] sm:$0xff]
      %v5547 = vld [vmem:[%s4063 + $0x92] sm:$0xff]
      %v5548 = vld [vmem:[%s4063 + $0x9a] sm:$0xff]
      %v5549 = vld [vmem:[%s4063 + $0xaa] sm:$0xff]
      %v5550 = vld [vmem:[%s4063 + $0xb2] sm:$0xff]
      %v5551 = vld [vmem:[%s4063 + $0xc2] sm:$0xff]
      %v5552 = vld [vmem:[%s4063 + $0xca] sm:$0xff]
      %v5553 = vld [vmem:[%s4063 + $0xda] sm:$0xff]
      %v5554 = vld [vmem:[%s4063 + $0xe2] sm:$0xff]
      %v5555 = vld [vmem:[%s4063 + $0xf2] sm:$0xff]
      %v5556 = vld [vmem:[%s4063 + $0xfa] sm:$0xff]
      %v5557 = vld [vmem:[%s4063 + $0x10a] sm:$0xff]
      %v5558 = vld [vmem:[%s4063 + $0x112] sm:$0xff]
      %v5559 = vld [vmem:[%s4063 + $0x122] sm:$0xff]
      %v5560 = vld [vmem:[%s4063 + $0x12a] sm:$0xff]
      %v5561 = vld [vmem:[%s4063 + $0x13a] sm:$0xff]
      %v5562 = vld [vmem:[%s4063 + $0x142] sm:$0xff]
      %v5563 = vld [vmem:[%s4063 + $0x152] sm:$0xff]
      %v5564 = vld [vmem:[%s4063 + $0x15a] sm:$0xff]
      %v5565 = vld [vmem:[%s4063 + $0x16a] sm:$0xff]
      %v5566 = vld [vmem:[%s4063 + $0x172] sm:$0xff]
      %v5567 = vpack.c.bf16 %v5536, %v5535
      %v5568 = vpack.c.bf16 %v5538, %v5537
      %v5569 = vpack.c.bf16 %v5540, %v5539
      %v5570 = vpack.c.bf16 %v5542, %v5541
      %v5571 = vpack.c.bf16 %v5544, %v5543
      %v5572 = vpack.c.bf16 %v5546, %v5545
      %v5573 = vpack.c.bf16 %v5548, %v5547
      %v5574 = vpack.c.bf16 %v5550, %v5549
      %v5575 = vpack.c.bf16 %v5552, %v5551
      %v5576 = vpack.c.bf16 %v5554, %v5553
      %v5577 = vpack.c.bf16 %v5556, %v5555
      %v5578 = vpack.c.bf16 %v5558, %v5557
      %v5579 = vpack.c.bf16 %v5560, %v5559
      %v5580 = vpack.c.bf16 %v5562, %v5561
      %v5581 = vpack.c.bf16 %v5564, %v5563
      %v5582 = vpack.c.bf16 %v5566, %v5565
      %s5583 = scalar_lea.vmem %s11, 20
      %v5584 = vld [vmem:[%s5583] sm:$0xf]
      %v5586 = vsel %vm2087, %v5567, 0
      %v5589 = vsel %vm2087, %v5568, 0
      %v5592 = vsel %vm2087, %v5569, 0
      %v5595 = vsel %vm2087, %v5570, 0
      %v5598 = vsel %vm2087, %v5571, 0
      %v5601 = vsel %vm2087, %v5572, 0
      %v5604 = vsel %vm2087, %v5573, 0
      %v5607 = vsel %vm2087, %v5574, 0
      %v5610 = vsel %vm2087, %v5575, 0
      %v5613 = vsel %vm2087, %v5576, 0
      %v5616 = vsel %vm2087, %v5577, 0
      %v5619 = vsel %vm2087, %v5578, 0
      %v5622 = vsel %vm2087, %v5579, 0
      %v5625 = vsel %vm2087, %v5580, 0
      %v5628 = vsel %vm2087, %v5581, 0
      %v5631 = vsel %vm2087, %v5582, 0
      %v5634 = vsel %vm4276, %v5584, 0
      %5636 = vmatprep.subr.bf16.mxu0 0
      %5637 = vmatpush1.bf16.msra.mxu0 %v5634
      %5638 = vmatprep.subr.bf16.mxu0 0
      %5639 = vmatpush1.bf16.msra.mxu0 0
      %5640 = vmatprep.subr.bf16.mxu0 0
      %5641 = vmatpush1.bf16.msra.mxu0 0
      %5642 = vmatprep.subr.bf16.mxu0 0
      %5643 = vmatpush1.bf16.msra.mxu0 0
      %5644 = vmatprep.subr.bf16.mxu0 0
      %5645 = vmatpush1.bf16.msra.mxu0 0
      %5646 = vmatprep.subr.bf16.mxu0 0
      %5647 = vmatpush1.bf16.msra.mxu0 0
      %5648 = vmatprep.subr.bf16.mxu0 0
      %5649 = vmatpush1.bf16.msra.mxu0 0
      %5650 = vmatprep.subr.bf16.mxu0 0
      %5651 = vmatpush1.bf16.msra.mxu0 0
      %5652 = vmatprep.subr.bf16.mxu0 0
      %5653 = vmatpush1.bf16.msra.mxu0 0
      %5654 = vmatprep.subr.bf16.mxu0 0
      %5655 = vmatpush1.bf16.msra.mxu0 0
      %5656 = vmatprep.subr.bf16.mxu0 0
      %5657 = vmatpush1.bf16.msra.mxu0 0
      %5658 = vmatprep.subr.bf16.mxu0 0
      %5659 = vmatpush1.bf16.msra.mxu0 0
      %5660 = vmatprep.subr.bf16.mxu0 0
      %5661 = vmatpush1.bf16.msra.mxu0 0
      %5662 = vmatprep.subr.bf16.mxu0 0
      %5663 = vmatpush1.bf16.msra.mxu0 0
      %5664 = vmatprep.subr.bf16.mxu0 0
      %5665 = vmatpush1.bf16.msra.mxu0 0
      %5666 = vmatprep.subr.bf16.mxu0 0
      %5667 = vmatpush1.bf16.msra.mxu0 0
      %5668 = vmatprep.mubr.bf16.mxu0 0
      %5669 = vmatmul.mubr.bf16.gmra.mrb[0].mxu0 %v5586
      %v5670 = vpop.f32.mrb[0].mxu0
      %v5671 = vadd.f32 0.0, %v5670
      %v5672 = vpop.f32.mrb[0].mxu0
      %v5673 = vpop.f32.mrb[0].mxu0
      %v5674 = vadd.f32 0.0, %v5673
      %v5675 = vpop.f32.mrb[0].mxu0
      %5676 = vmatprep.mubr.bf16.mxu0 0
      %5677 = vmatmul.mubr.bf16.gmra.mrb[0].mxu0 %v5589
      %v5678 = vpop.f32.mrb[0].mxu0
      %v5679 = vadd.f32 0.0, %v5678
      %v5680 = vpop.f32.mrb[0].mxu0
      %v5681 = vpop.f32.mrb[0].mxu0
      %v5682 = vadd.f32 0.0, %v5681
      %v5683 = vpop.f32.mrb[0].mxu0
      %5684 = vmatprep.mubr.bf16.mxu0 0
      %5685 = vmatmul.mubr.bf16.gmra.mrb[0].mxu0 %v5592
      %v5686 = vpop.f32.mrb[0].mxu0
      %v5687 = vadd.f32 0.0, %v5686
      %v5688 = vpop.f32.mrb[0].mxu0
      %v5689 = vpop.f32.mrb[0].mxu0
      %v5690 = vadd.f32 0.0, %v5689
      %v5691 = vpop.f32.mrb[0].mxu0
      %5692 = vmatprep.mubr.bf16.mxu0 0
      %5693 = vmatmul.mubr.bf16.gmra.mrb[0].mxu0 %v5595
      %v5694 = vpop.f32.mrb[0].mxu0
      %v5695 = vadd.f32 0.0, %v5694
      %v5696 = vpop.f32.mrb[0].mxu0
      %v5697 = vpop.f32.mrb[0].mxu0
      %v5698 = vadd.f32 0.0, %v5697
      %v5699 = vpop.f32.mrb[0].mxu0
      %5700 = vmatprep.mubr.bf16.mxu0 0
      %5701 = vmatmul.mubr.bf16.gmra.mrb[0].mxu0 %v5598
      %v5702 = vpop.f32.mrb[0].mxu0
      %v5703 = vadd.f32 0.0, %v5702
      %v5704 = vpop.f32.mrb[0].mxu0
      %v5705 = vpop.f32.mrb[0].mxu0
      %v5706 = vadd.f32 0.0, %v5705
      %v5707 = vpop.f32.mrb[0].mxu0
      %5708 = vmatprep.mubr.bf16.mxu0 0
      %5709 = vmatmul.mubr.bf16.gmra.mrb[0].mxu0 %v5601
      %v5710 = vpop.f32.mrb[0].mxu0
      %v5711 = vadd.f32 0.0, %v5710
      %v5712 = vpop.f32.mrb[0].mxu0
      %v5713 = vpop.f32.mrb[0].mxu0
      %v5714 = vadd.f32 0.0, %v5713
      %v5715 = vpop.f32.mrb[0].mxu0
      %5716 = vmatprep.mubr.bf16.mxu0 0
      %5717 = vmatmul.mubr.bf16.gmra.mrb[0].mxu0 %v5604
      %v5718 = vpop.f32.mrb[0].mxu0
      %v5719 = vadd.f32 0.0, %v5718
      %v5720 = vpop.f32.mrb[0].mxu0
      %v5721 = vpop.f32.mrb[0].mxu0
      %v5722 = vadd.f32 0.0, %v5721
      %v5723 = vpop.f32.mrb[0].mxu0
      %5724 = vmatprep.mubr.bf16.mxu0 0
      %5725 = vmatmul.mubr.bf16.gmra.mrb[0].mxu0 %v5607
      %v5726 = vpop.f32.mrb[0].mxu0
      %v5727 = vadd.f32 0.0, %v5726
      %v5728 = vpop.f32.mrb[0].mxu0
      %v5729 = vpop.f32.mrb[0].mxu0
      %v5730 = vadd.f32 0.0, %v5729
      %v5731 = vpop.f32.mrb[0].mxu0
      %5732 = vmatprep.mubr.bf16.mxu0 0
      %5733 = vmatmul.mubr.bf16.gmra.mrb[0].mxu0 %v5610
      %v5734 = vpop.f32.mrb[0].mxu0
      %v5735 = vadd.f32 0.0, %v5734
      %v5736 = vpop.f32.mrb[0].mxu0
      %v5737 = vpop.f32.mrb[0].mxu0
      %v5738 = vadd.f32 0.0, %v5737
      %v5739 = vpop.f32.mrb[0].mxu0
      %5740 = vmatprep.mubr.bf16.mxu0 0
      %5741 = vmatmul.mubr.bf16.gmra.mrb[0].mxu0 %v5613
      %v5742 = vpop.f32.mrb[0].mxu0
      %v5743 = vadd.f32 0.0, %v5742
      %v5744 = vpop.f32.mrb[0].mxu0
      %v5745 = vpop.f32.mrb[0].mxu0
      %v5746 = vadd.f32 0.0, %v5745
      %v5747 = vpop.f32.mrb[0].mxu0
      %5748 = vmatprep.mubr.bf16.mxu0 0
      %5749 = vmatmul.mubr.bf16.gmra.mrb[0].mxu0 %v5616
      %v5750 = vpop.f32.mrb[0].mxu0
      %v5751 = vadd.f32 0.0, %v5750
      %v5752 = vpop.f32.mrb[0].mxu0
      %v5753 = vpop.f32.mrb[0].mxu0
      %v5754 = vadd.f32 0.0, %v5753
      %v5755 = vpop.f32.mrb[0].mxu0
      %5756 = vmatprep.mubr.bf16.mxu0 0
      %5757 = vmatmul.mubr.bf16.gmra.mrb[0].mxu0 %v5619
      %v5758 = vpop.f32.mrb[0].mxu0
      %v5759 = vadd.f32 0.0, %v5758
      %v5760 = vpop.f32.mrb[0].mxu0
      %v5761 = vpop.f32.mrb[0].mxu0
      %v5762 = vadd.f32 0.0, %v5761
      %v5763 = vpop.f32.mrb[0].mxu0
      %5764 = vmatprep.mubr.bf16.mxu0 0
      %5765 = vmatmul.mubr.bf16.gmra.mrb[0].mxu0 %v5622
      %v5766 = vpop.f32.mrb[0].mxu0
      %v5767 = vadd.f32 0.0, %v5766
      %v5768 = vpop.f32.mrb[0].mxu0
      %v5769 = vpop.f32.mrb[0].mxu0
      %v5770 = vadd.f32 0.0, %v5769
      %v5771 = vpop.f32.mrb[0].mxu0
      %5772 = vmatprep.mubr.bf16.mxu0 0
      %5773 = vmatmul.mubr.bf16.gmra.mrb[0].mxu0 %v5625
      %v5774 = vpop.f32.mrb[0].mxu0
      %v5775 = vadd.f32 0.0, %v5774
      %v5776 = vpop.f32.mrb[0].mxu0
      %v5777 = vpop.f32.mrb[0].mxu0
      %v5778 = vadd.f32 0.0, %v5777
      %v5779 = vpop.f32.mrb[0].mxu0
      %5780 = vmatprep.mubr.bf16.mxu0 0
      %5781 = vmatmul.mubr.bf16.gmra.mrb[0].mxu0 %v5628
      %v5782 = vpop.f32.mrb[0].mxu0
      %v5783 = vadd.f32 0.0, %v5782
      %v5784 = vpop.f32.mrb[0].mxu0
      %v5785 = vpop.f32.mrb[0].mxu0
      %v5786 = vadd.f32 0.0, %v5785
      %v5787 = vpop.f32.mrb[0].mxu0
      %5788 = vmatprep.mubr.bf16.mxu0 0
      %5789 = vmatmul.mubr.bf16.gmra.mrb[0].mxu0 %v5631
      %v5790 = vpop.f32.mrb[0].mxu0
      %v5791 = vadd.f32 0.0, %v5790
      %v5792 = vpop.f32.mrb[0].mxu0
      %v5793 = vpop.f32.mrb[0].mxu0
      %v5794 = vadd.f32 0.0, %v5793
      %v5795 = vpop.f32.mrb[0].mxu0
      %5796 = vdwg.mxu0
      %v5797 = vadd.f32 %v5503, %v5671
      %v5798 = vadd.f32 %v5504, %v5674
      %v5799 = vadd.f32 %v5505, %v5679
      %v5800 = vadd.f32 %v5506, %v5682
      %v5801 = vadd.f32 %v5507, %v5687
      %v5802 = vadd.f32 %v5508, %v5690
      %v5803 = vadd.f32 %v5509, %v5695
      %v5804 = vadd.f32 %v5510, %v5698
      %v5805 = vadd.f32 %v5511, %v5703
      %v5806 = vadd.f32 %v5512, %v5706
      %v5807 = vadd.f32 %v5513, %v5711
      %v5808 = vadd.f32 %v5514, %v5714
      %v5809 = vadd.f32 %v5515, %v5719
      %v5810 = vadd.f32 %v5516, %v5722
      %v5811 = vadd.f32 %v5517, %v5727
      %v5812 = vadd.f32 %v5518, %v5730
      %v5813 = vadd.f32 %v5519, %v5735
      %v5814 = vadd.f32 %v5520, %v5738
      %v5815 = vadd.f32 %v5521, %v5743
      %v5816 = vadd.f32 %v5522, %v5746
      %v5817 = vadd.f32 %v5523, %v5751
      %v5818 = vadd.f32 %v5524, %v5754
      %v5819 = vadd.f32 %v5525, %v5759
      %v5820 = vadd.f32 %v5526, %v5762
      %v5821 = vadd.f32 %v5527, %v5767
      %v5822 = vadd.f32 %v5528, %v5770
      %v5823 = vadd.f32 %v5529, %v5775
      %v5824 = vadd.f32 %v5530, %v5778
      %v5825 = vadd.f32 %v5531, %v5783
      %v5826 = vadd.f32 %v5532, %v5786
      %v5827 = vadd.f32 %v5533, %v5791
      %v5828 = vadd.f32 %v5534, %v5794
      %s5829 = scalar_lea.vmem [#allocation3], 48
      %v5830 = vld [vmem:[%s5829] sm:$0xff]
      %v5831 = vld [vmem:[%s5829 + $0x8] sm:$0xff]
      %v5832 = vld [vmem:[%s5829 + $0x18] sm:$0xff]
      %v5833 = vld [vmem:[%s5829 + $0x20] sm:$0xff]
      %v5834 = vld [vmem:[%s5829 + $0x30] sm:$0xff]
      %v5835 = vld [vmem:[%s5829 + $0x38] sm:$0xff]
      %v5836 = vld [vmem:[%s5829 + $0x48] sm:$0xff]
      %v5837 = vld [vmem:[%s5829 + $0x50] sm:$0xff]
      %v5838 = vld [vmem:[%s5829 + $0x60] sm:$0xff]
      %v5839 = vld [vmem:[%s5829 + $0x68] sm:$0xff]
      %v5840 = vld [vmem:[%s5829 + $0x78] sm:$0xff]
      %v5841 = vld [vmem:[%s5829 + $0x80] sm:$0xff]
      %v5842 = vld [vmem:[%s5829 + $0x90] sm:$0xff]
      %v5843 = vld [vmem:[%s5829 + $0x98] sm:$0xff]
      %v5844 = vld [vmem:[%s5829 + $0xa8] sm:$0xff]
      %v5845 = vld [vmem:[%s5829 + $0xb0] sm:$0xff]
      %v5846 = vld [vmem:[%s5829 + $0xc0] sm:$0xff]
      %v5847 = vld [vmem:[%s5829 + $0xc8] sm:$0xff]
      %v5848 = vld [vmem:[%s5829 + $0xd8] sm:$0xff]
      %v5849 = vld [vmem:[%s5829 + $0xe0] sm:$0xff]
      %v5850 = vld [vmem:[%s5829 + $0xf0] sm:$0xff]
      %v5851 = vld [vmem:[%s5829 + $0xf8] sm:$0xff]
      %v5852 = vld [vmem:[%s5829 + $0x108] sm:$0xff]
      %v5853 = vld [vmem:[%s5829 + $0x110] sm:$0xff]
      %v5854 = vld [vmem:[%s5829 + $0x120] sm:$0xff]
      %v5855 = vld [vmem:[%s5829 + $0x128] sm:$0xff]
      %v5856 = vld [vmem:[%s5829 + $0x138] sm:$0xff]
      %v5857 = vld [vmem:[%s5829 + $0x140] sm:$0xff]
      %v5858 = vld [vmem:[%s5829 + $0x150] sm:$0xff]
      %v5859 = vld [vmem:[%s5829 + $0x158] sm:$0xff]
      %v5860 = vld [vmem:[%s5829 + $0x168] sm:$0xff]
      %v5861 = vld [vmem:[%s5829 + $0x170] sm:$0xff]
      %v5862 = vpack.c.bf16 %v5831, %v5830
      %v5863 = vpack.c.bf16 %v5833, %v5832
      %v5864 = vpack.c.bf16 %v5835, %v5834
      %v5865 = vpack.c.bf16 %v5837, %v5836
      %v5866 = vpack.c.bf16 %v5839, %v5838
      %v5867 = vpack.c.bf16 %v5841, %v5840
      %v5868 = vpack.c.bf16 %v5843, %v5842
      %v5869 = vpack.c.bf16 %v5845, %v5844
      %v5870 = vpack.c.bf16 %v5847, %v5846
      %v5871 = vpack.c.bf16 %v5849, %v5848
      %v5872 = vpack.c.bf16 %v5851, %v5850
      %v5873 = vpack.c.bf16 %v5853, %v5852
      %v5874 = vpack.c.bf16 %v5855, %v5854
      %v5875 = vpack.c.bf16 %v5857, %v5856
      %v5876 = vpack.c.bf16 %v5859, %v5858
      %v5877 = vpack.c.bf16 %v5861, %v5860
      %s5878 = scalar_lea.vmem %s11, 24
      %v5879 = vld [vmem:[%s5878] sm:$0xf]
      %v5881 = vsel %vm2087, %v5862, 0
      %v5884 = vsel %vm2087, %v5863, 0
      %v5887 = vsel %vm2087, %v5864, 0
      %v5890 = vsel %vm2087, %v5865, 0
      %v5893 = vsel %vm2087, %v5866, 0
      %v5896 = vsel %vm2087, %v5867, 0
      %v5899 = vsel %vm2087, %v5868, 0
      %v5902 = vsel %vm2087, %v5869, 0
      %v5905 = vsel %vm2087, %v5870, 0
      %v5908 = vsel %vm2087, %v5871, 0
      %v5911 = vsel %vm2087, %v5872, 0
      %v5914 = vsel %vm2087, %v5873, 0
      %v5917 = vsel %vm2087, %v5874, 0
      %v5920 = vsel %vm2087, %v5875, 0
      %v5923 = vsel %vm2087, %v5876, 0
      %v5926 = vsel %vm2087, %v5877, 0
      %v5929 = vsel %vm4276, %v5879, 0
      %5931 = vmatprep.subr.bf16.mxu0 0
      %5932 = vmatpush1.bf16.msra.mxu0 %v5929
      %5933 = vmatprep.subr.bf16.mxu0 0
      %5934 = vmatpush1.bf16.msra.mxu0 0
      %5935 = vmatprep.subr.bf16.mxu0 0
      %5936 = vmatpush1.bf16.msra.mxu0 0
      %5937 = vmatprep.subr.bf16.mxu0 0
      %5938 = vmatpush1.bf16.msra.mxu0 0
      %5939 = vmatprep.subr.bf16.mxu0 0
      %5940 = vmatpush1.bf16.msra.mxu0 0
      %5941 = vmatprep.subr.bf16.mxu0 0
      %5942 = vmatpush1.bf16.msra.mxu0 0
      %5943 = vmatprep.subr.bf16.mxu0 0
      %5944 = vmatpush1.bf16.msra.mxu0 0
      %5945 = vmatprep.subr.bf16.mxu0 0
      %5946 = vmatpush1.bf16.msra.mxu0 0
      %5947 = vmatprep.subr.bf16.mxu0 0
      %5948 = vmatpush1.bf16.msra.mxu0 0
      %5949 = vmatprep.subr.bf16.mxu0 0
      %5950 = vmatpush1.bf16.msra.mxu0 0
      %5951 = vmatprep.subr.bf16.mxu0 0
      %5952 = vmatpush1.bf16.msra.mxu0 0
      %5953 = vmatprep.subr.bf16.mxu0 0
      %5954 = vmatpush1.bf16.msra.mxu0 0
      %5955 = vmatprep.subr.bf16.mxu0 0
      %5956 = vmatpush1.bf16.msra.mxu0 0
      %5957 = vmatprep.subr.bf16.mxu0 0
      %5958 = vmatpush1.bf16.msra.mxu0 0
      %5959 = vmatprep.subr.bf16.mxu0 0
      %5960 = vmatpush1.bf16.msra.mxu0 0
      %5961 = vmatprep.subr.bf16.mxu0 0
      %5962 = vmatpush1.bf16.msra.mxu0 0
      %5963 = vmatprep.mubr.bf16.mxu0 0
      %5964 = vmatmul.mubr.bf16.gmra.mrb[0].mxu0 %v5881
      %v5965 = vpop.f32.mrb[0].mxu0
      %v5966 = vadd.f32 0.0, %v5965
      %v5967 = vpop.f32.mrb[0].mxu0
      %v5968 = vpop.f32.mrb[0].mxu0
      %v5969 = vadd.f32 0.0, %v5968
      %v5970 = vpop.f32.mrb[0].mxu0
      %5971 = vmatprep.mubr.bf16.mxu0 0
      %5972 = vmatmul.mubr.bf16.gmra.mrb[0].mxu0 %v5884
      %v5973 = vpop.f32.mrb[0].mxu0
      %v5974 = vadd.f32 0.0, %v5973
      %v5975 = vpop.f32.mrb[0].mxu0
      %v5976 = vpop.f32.mrb[0].mxu0
      %v5977 = vadd.f32 0.0, %v5976
      %v5978 = vpop.f32.mrb[0].mxu0
      %5979 = vmatprep.mubr.bf16.mxu0 0
      %5980 = vmatmul.mubr.bf16.gmra.mrb[0].mxu0 %v5887
      %v5981 = vpop.f32.mrb[0].mxu0
      %v5982 = vadd.f32 0.0, %v5981
      %v5983 = vpop.f32.mrb[0].mxu0
      %v5984 = vpop.f32.mrb[0].mxu0
      %v5985 = vadd.f32 0.0, %v5984
      %v5986 = vpop.f32.mrb[0].mxu0
      %5987 = vmatprep.mubr.bf16.mxu0 0
      %5988 = vmatmul.mubr.bf16.gmra.mrb[0].mxu0 %v5890
      %v5989 = vpop.f32.mrb[0].mxu0
      %v5990 = vadd.f32 0.0, %v5989
      %v5991 = vpop.f32.mrb[0].mxu0
      %v5992 = vpop.f32.mrb[0].mxu0
      %v5993 = vadd.f32 0.0, %v5992
      %v5994 = vpop.f32.mrb[0].mxu0
      %5995 = vmatprep.mubr.bf16.mxu0 0
      %5996 = vmatmul.mubr.bf16.gmra.mrb[0].mxu0 %v5893
      %v5997 = vpop.f32.mrb[0].mxu0
      %v5998 = vadd.f32 0.0, %v5997
      %v5999 = vpop.f32.mrb[0].mxu0
      %v6000 = vpop.f32.mrb[0].mxu0
      %v6001 = vadd.f32 0.0, %v6000
      %v6002 = vpop.f32.mrb[0].mxu0
      %6003 = vmatprep.mubr.bf16.mxu0 0
      %6004 = vmatmul.mubr.bf16.gmra.mrb[0].mxu0 %v5896
      %v6005 = vpop.f32.mrb[0].mxu0
      %v6006 = vadd.f32 0.0, %v6005
      %v6007 = vpop.f32.mrb[0].mxu0
      %v6008 = vpop.f32.mrb[0].mxu0
      %v6009 = vadd.f32 0.0, %v6008
      %v6010 = vpop.f32.mrb[0].mxu0
      %6011 = vmatprep.mubr.bf16.mxu0 0
      %6012 = vmatmul.mubr.bf16.gmra.mrb[0].mxu0 %v5899
      %v6013 = vpop.f32.mrb[0].mxu0
      %v6014 = vadd.f32 0.0, %v6013
      %v6015 = vpop.f32.mrb[0].mxu0
      %v6016 = vpop.f32.mrb[0].mxu0
      %v6017 = vadd.f32 0.0, %v6016
      %v6018 = vpop.f32.mrb[0].mxu0
      %6019 = vmatprep.mubr.bf16.mxu0 0
      %6020 = vmatmul.mubr.bf16.gmra.mrb[0].mxu0 %v5902
      %v6021 = vpop.f32.mrb[0].mxu0
      %v6022 = vadd.f32 0.0, %v6021
      %v6023 = vpop.f32.mrb[0].mxu0
      %v6024 = vpop.f32.mrb[0].mxu0
      %v6025 = vadd.f32 0.0, %v6024
      %v6026 = vpop.f32.mrb[0].mxu0
      %6027 = vmatprep.mubr.bf16.mxu0 0
      %6028 = vmatmul.mubr.bf16.gmra.mrb[0].mxu0 %v5905
      %v6029 = vpop.f32.mrb[0].mxu0
      %v6030 = vadd.f32 0.0, %v6029
      %v6031 = vpop.f32.mrb[0].mxu0
      %v6032 = vpop.f32.mrb[0].mxu0
      %v6033 = vadd.f32 0.0, %v6032
      %v6034 = vpop.f32.mrb[0].mxu0
      %6035 = vmatprep.mubr.bf16.mxu0 0
      %6036 = vmatmul.mubr.bf16.gmra.mrb[0].mxu0 %v5908
      %v6037 = vpop.f32.mrb[0].mxu0
      %v6038 = vadd.f32 0.0, %v6037
      %v6039 = vpop.f32.mrb[0].mxu0
      %v6040 = vpop.f32.mrb[0].mxu0
      %v6041 = vadd.f32 0.0, %v6040
      %v6042 = vpop.f32.mrb[0].mxu0
      %6043 = vmatprep.mubr.bf16.mxu0 0
      %6044 = vmatmul.mubr.bf16.gmra.mrb[0].mxu0 %v5911
      %v6045 = vpop.f32.mrb[0].mxu0
      %v6046 = vadd.f32 0.0, %v6045
      %v6047 = vpop.f32.mrb[0].mxu0
      %v6048 = vpop.f32.mrb[0].mxu0
      %v6049 = vadd.f32 0.0, %v6048
      %v6050 = vpop.f32.mrb[0].mxu0
      %6051 = vmatprep.mubr.bf16.mxu0 0
      %6052 = vmatmul.mubr.bf16.gmra.mrb[0].mxu0 %v5914
      %v6053 = vpop.f32.mrb[0].mxu0
      %v6054 = vadd.f32 0.0, %v6053
      %v6055 = vpop.f32.mrb[0].mxu0
      %v6056 = vpop.f32.mrb[0].mxu0
      %v6057 = vadd.f32 0.0, %v6056
      %v6058 = vpop.f32.mrb[0].mxu0
      %6059 = vmatprep.mubr.bf16.mxu0 0
      %6060 = vmatmul.mubr.bf16.gmra.mrb[0].mxu0 %v5917
      %v6061 = vpop.f32.mrb[0].mxu0
      %v6062 = vadd.f32 0.0, %v6061
      %v6063 = vpop.f32.mrb[0].mxu0
      %v6064 = vpop.f32.mrb[0].mxu0
      %v6065 = vadd.f32 0.0, %v6064
      %v6066 = vpop.f32.mrb[0].mxu0
      %6067 = vmatprep.mubr.bf16.mxu0 0
      %6068 = vmatmul.mubr.bf16.gmra.mrb[0].mxu0 %v5920
      %v6069 = vpop.f32.mrb[0].mxu0
      %v6070 = vadd.f32 0.0, %v6069
      %v6071 = vpop.f32.mrb[0].mxu0
      %v6072 = vpop.f32.mrb[0].mxu0
      %v6073 = vadd.f32 0.0, %v6072
      %v6074 = vpop.f32.mrb[0].mxu0
      %6075 = vmatprep.mubr.bf16.mxu0 0
      %6076 = vmatmul.mubr.bf16.gmra.mrb[0].mxu0 %v5923
      %v6077 = vpop.f32.mrb[0].mxu0
      %v6078 = vadd.f32 0.0, %v6077
      %v6079 = vpop.f32.mrb[0].mxu0
      %v6080 = vpop.f32.mrb[0].mxu0
      %v6081 = vadd.f32 0.0, %v6080
      %v6082 = vpop.f32.mrb[0].mxu0
      %6083 = vmatprep.mubr.bf16.mxu0 0
      %6084 = vmatmul.mubr.bf16.gmra.mrb[0].mxu0 %v5926
      %v6085 = vpop.f32.mrb[0].mxu0
      %v6086 = vadd.f32 0.0, %v6085
      %v6087 = vpop.f32.mrb[0].mxu0
      %v6088 = vpop.f32.mrb[0].mxu0
      %v6089 = vadd.f32 0.0, %v6088
      %v6090 = vpop.f32.mrb[0].mxu0
      %6091 = vdwg.mxu0
      %v6092 = vadd.f32 %v5797, %v5966
      %v6093 = vadd.f32 %v5798, %v5969
      %v6094 = vadd.f32 %v5799, %v5974
      %v6095 = vadd.f32 %v5800, %v5977
      %v6096 = vadd.f32 %v5801, %v5982
      %v6097 = vadd.f32 %v5802, %v5985
      %v6098 = vadd.f32 %v5803, %v5990
      %v6099 = vadd.f32 %v5804, %v5993
      %v6100 = vadd.f32 %v5805, %v5998
      %v6101 = vadd.f32 %v5806, %v6001
      %v6102 = vadd.f32 %v5807, %v6006
      %v6103 = vadd.f32 %v5808, %v6009
      %v6104 = vadd.f32 %v5809, %v6014
      %v6105 = vadd.f32 %v5810, %v6017
      %v6106 = vadd.f32 %v5811, %v6022
      %v6107 = vadd.f32 %v5812, %v6025
      %v6108 = vadd.f32 %v5813, %v6030
      %v6109 = vadd.f32 %v5814, %v6033
      %v6110 = vadd.f32 %v5815, %v6038
      %v6111 = vadd.f32 %v5816, %v6041
      %v6112 = vadd.f32 %v5817, %v6046
      %v6113 = vadd.f32 %v5818, %v6049
      %v6114 = vadd.f32 %v5819, %v6054
      %v6115 = vadd.f32 %v5820, %v6057
      %v6116 = vadd.f32 %v5821, %v6062
      %v6117 = vadd.f32 %v5822, %v6065
      %v6118 = vadd.f32 %v5823, %v6070
      %v6119 = vadd.f32 %v5824, %v6073
      %v6120 = vadd.f32 %v5825, %v6078
      %v6121 = vadd.f32 %v5826, %v6081
      %v6122 = vadd.f32 %v5827, %v6086
      %v6123 = vadd.f32 %v5828, %v6089
      %v6124 = vld [vmem:[%s5829 + $0x1] sm:$0xff]
      %v6125 = vld [vmem:[%s5829 + $0x9] sm:$0xff]
      %v6126 = vld [vmem:[%s5829 + $0x19] sm:$0xff]
      %v6127 = vld [vmem:[%s5829 + $0x21] sm:$0xff]
      %v6128 = vld [vmem:[%s5829 + $0x31] sm:$0xff]
      %v6129 = vld [vmem:[%s5829 + $0x39] sm:$0xff]
      %v6130 = vld [vmem:[%s5829 + $0x49] sm:$0xff]
      %v6131 = vld [vmem:[%s5829 + $0x51] sm:$0xff]
      %v6132 = vld [vmem:[%s5829 + $0x61] sm:$0xff]
      %v6133 = vld [vmem:[%s5829 + $0x69] sm:$0xff]
      %v6134 = vld [vmem:[%s5829 + $0x79] sm:$0xff]
      %v6135 = vld [vmem:[%s5829 + $0x81] sm:$0xff]
      %v6136 = vld [vmem:[%s5829 + $0x91] sm:$0xff]
      %v6137 = vld [vmem:[%s5829 + $0x99] sm:$0xff]
      %v6138 = vld [vmem:[%s5829 + $0xa9] sm:$0xff]
      %v6139 = vld [vmem:[%s5829 + $0xb1] sm:$0xff]
      %v6140 = vld [vmem:[%s5829 + $0xc1] sm:$0xff]
      %v6141 = vld [vmem:[%s5829 + $0xc9] sm:$0xff]
      %v6142 = vld [vmem:[%s5829 + $0xd9] sm:$0xff]
      %v6143 = vld [vmem:[%s5829 + $0xe1] sm:$0xff]
      %v6144 = vld [vmem:[%s5829 + $0xf1] sm:$0xff]
      %v6145 = vld [vmem:[%s5829 + $0xf9] sm:$0xff]
      %v6146 = vld [vmem:[%s5829 + $0x109] sm:$0xff]
      %v6147 = vld [vmem:[%s5829 + $0x111] sm:$0xff]
      %v6148 = vld [vmem:[%s5829 + $0x121] sm:$0xff]
      %v6149 = vld [vmem:[%s5829 + $0x129] sm:$0xff]
      %v6150 = vld [vmem:[%s5829 + $0x139] sm:$0xff]
      %v6151 = vld [vmem:[%s5829 + $0x141] sm:$0xff]
      %v6152 = vld [vmem:[%s5829 + $0x151] sm:$0xff]
      %v6153 = vld [vmem:[%s5829 + $0x159] sm:$0xff]
      %v6154 = vld [vmem:[%s5829 + $0x169] sm:$0xff]
      %v6155 = vld [vmem:[%s5829 + $0x171] sm:$0xff]
      %v6156 = vpack.c.bf16 %v6125, %v6124
      %v6157 = vpack.c.bf16 %v6127, %v6126
      %v6158 = vpack.c.bf16 %v6129, %v6128
      %v6159 = vpack.c.bf16 %v6131, %v6130
      %v6160 = vpack.c.bf16 %v6133, %v6132
      %v6161 = vpack.c.bf16 %v6135, %v6134
      %v6162 = vpack.c.bf16 %v6137, %v6136
      %v6163 = vpack.c.bf16 %v6139, %v6138
      %v6164 = vpack.c.bf16 %v6141, %v6140
      %v6165 = vpack.c.bf16 %v6143, %v6142
      %v6166 = vpack.c.bf16 %v6145, %v6144
      %v6167 = vpack.c.bf16 %v6147, %v6146
      %v6168 = vpack.c.bf16 %v6149, %v6148
      %v6169 = vpack.c.bf16 %v6151, %v6150
      %v6170 = vpack.c.bf16 %v6153, %v6152
      %v6171 = vpack.c.bf16 %v6155, %v6154
      %s6172 = scalar_lea.vmem %s11, 28
      %v6173 = vld [vmem:[%s6172] sm:$0xf]
      %v6175 = vsel %vm2087, %v6156, 0
      %v6178 = vsel %vm2087, %v6157, 0
      %v6181 = vsel %vm2087, %v6158, 0
      %v6184 = vsel %vm2087, %v6159, 0
      %v6187 = vsel %vm2087, %v6160, 0
      %v6190 = vsel %vm2087, %v6161, 0
      %v6193 = vsel %vm2087, %v6162, 0
      %v6196 = vsel %vm2087, %v6163, 0
      %v6199 = vsel %vm2087, %v6164, 0
      %v6202 = vsel %vm2087, %v6165, 0
      %v6205 = vsel %vm2087, %v6166, 0
      %v6208 = vsel %vm2087, %v6167, 0
      %v6211 = vsel %vm2087, %v6168, 0
      %v6214 = vsel %vm2087, %v6169, 0
      %v6217 = vsel %vm2087, %v6170, 0
      %v6220 = vsel %vm2087, %v6171, 0
      %v6223 = vsel %vm4276, %v6173, 0
      %6225 = vmatprep.subr.bf16.mxu0 0
      %6226 = vmatpush1.bf16.msra.mxu0 %v6223
      %6227 = vmatprep.subr.bf16.mxu0 0
      %6228 = vmatpush1.bf16.msra.mxu0 0
      %6229 = vmatprep.subr.bf16.mxu0 0
      %6230 = vmatpush1.bf16.msra.mxu0 0
      %6231 = vmatprep.subr.bf16.mxu0 0
      %6232 = vmatpush1.bf16.msra.mxu0 0
      %6233 = vmatprep.subr.bf16.mxu0 0
      %6234 = vmatpush1.bf16.msra.mxu0 0
      %6235 = vmatprep.subr.bf16.mxu0 0
      %6236 = vmatpush1.bf16.msra.mxu0 0
      %6237 = vmatprep.subr.bf16.mxu0 0
      %6238 = vmatpush1.bf16.msra.mxu0 0
      %6239 = vmatprep.subr.bf16.mxu0 0
      %6240 = vmatpush1.bf16.msra.mxu0 0
      %6241 = vmatprep.subr.bf16.mxu0 0
      %6242 = vmatpush1.bf16.msra.mxu0 0
      %6243 = vmatprep.subr.bf16.mxu0 0
      %6244 = vmatpush1.bf16.msra.mxu0 0
      %6245 = vmatprep.subr.bf16.mxu0 0
      %6246 = vmatpush1.bf16.msra.mxu0 0
      %6247 = vmatprep.subr.bf16.mxu0 0
      %6248 = vmatpush1.bf16.msra.mxu0 0
      %6249 = vmatprep.subr.bf16.mxu0 0
      %6250 = vmatpush1.bf16.msra.mxu0 0
      %6251 = vmatprep.subr.bf16.mxu0 0
      %6252 = vmatpush1.bf16.msra.mxu0 0
      %6253 = vmatprep.subr.bf16.mxu0 0
      %6254 = vmatpush1.bf16.msra.mxu0 0
      %6255 = vmatprep.subr.bf16.mxu0 0
      %6256 = vmatpush1.bf16.msra.mxu0 0
      %6257 = vmatprep.mubr.bf16.mxu0 0
      %6258 = vmatmul.mubr.bf16.gmra.mrb[0].mxu0 %v6175
      %v6259 = vpop.f32.mrb[0].mxu0
      %v6260 = vadd.f32 0.0, %v6259
      %v6261 = vpop.f32.mrb[0].mxu0
      %v6262 = vpop.f32.mrb[0].mxu0
      %v6263 = vadd.f32 0.0, %v6262
      %v6264 = vpop.f32.mrb[0].mxu0
      %6265 = vmatprep.mubr.bf16.mxu0 0
      %6266 = vmatmul.mubr.bf16.gmra.mrb[0].mxu0 %v6178
      %v6267 = vpop.f32.mrb[0].mxu0
      %v6268 = vadd.f32 0.0, %v6267
      %v6269 = vpop.f32.mrb[0].mxu0
      %v6270 = vpop.f32.mrb[0].mxu0
      %v6271 = vadd.f32 0.0, %v6270
      %v6272 = vpop.f32.mrb[0].mxu0
      %6273 = vmatprep.mubr.bf16.mxu0 0
      %6274 = vmatmul.mubr.bf16.gmra.mrb[0].mxu0 %v6181
      %v6275 = vpop.f32.mrb[0].mxu0
      %v6276 = vadd.f32 0.0, %v6275
      %v6277 = vpop.f32.mrb[0].mxu0
      %v6278 = vpop.f32.mrb[0].mxu0
      %v6279 = vadd.f32 0.0, %v6278
      %v6280 = vpop.f32.mrb[0].mxu0
      %6281 = vmatprep.mubr.bf16.mxu0 0
      %6282 = vmatmul.mubr.bf16.gmra.mrb[0].mxu0 %v6184
      %v6283 = vpop.f32.mrb[0].mxu0
      %v6284 = vadd.f32 0.0, %v6283
      %v6285 = vpop.f32.mrb[0].mxu0
      %v6286 = vpop.f32.mrb[0].mxu0
      %v6287 = vadd.f32 0.0, %v6286
      %v6288 = vpop.f32.mrb[0].mxu0
      %6289 = vmatprep.mubr.bf16.mxu0 0
      %6290 = vmatmul.mubr.bf16.gmra.mrb[0].mxu0 %v6187
      %v6291 = vpop.f32.mrb[0].mxu0
      %v6292 = vadd.f32 0.0, %v6291
      %v6293 = vpop.f32.mrb[0].mxu0
      %v6294 = vpop.f32.mrb[0].mxu0
      %v6295 = vadd.f32 0.0, %v6294
      %v6296 = vpop.f32.mrb[0].mxu0
      %6297 = vmatprep.mubr.bf16.mxu0 0
      %6298 = vmatmul.mubr.bf16.gmra.mrb[0].mxu0 %v6190
      %v6299 = vpop.f32.mrb[0].mxu0
      %v6300 = vadd.f32 0.0, %v6299
      %v6301 = vpop.f32.mrb[0].mxu0
      %v6302 = vpop.f32.mrb[0].mxu0
      %v6303 = vadd.f32 0.0, %v6302
      %v6304 = vpop.f32.mrb[0].mxu0
      %6305 = vmatprep.mubr.bf16.mxu0 0
      %6306 = vmatmul.mubr.bf16.gmra.mrb[0].mxu0 %v6193
      %v6307 = vpop.f32.mrb[0].mxu0
      %v6308 = vadd.f32 0.0, %v6307
      %v6309 = vpop.f32.mrb[0].mxu0
      %v6310 = vpop.f32.mrb[0].mxu0
      %v6311 = vadd.f32 0.0, %v6310
      %v6312 = vpop.f32.mrb[0].mxu0
      %6313 = vmatprep.mubr.bf16.mxu0 0
      %6314 = vmatmul.mubr.bf16.gmra.mrb[0].mxu0 %v6196
      %v6315 = vpop.f32.mrb[0].mxu0
      %v6316 = vadd.f32 0.0, %v6315
      %v6317 = vpop.f32.mrb[0].mxu0
      %v6318 = vpop.f32.mrb[0].mxu0
      %v6319 = vadd.f32 0.0, %v6318
      %v6320 = vpop.f32.mrb[0].mxu0
      %6321 = vmatprep.mubr.bf16.mxu0 0
      %6322 = vmatmul.mubr.bf16.gmra.mrb[0].mxu0 %v6199
      %v6323 = vpop.f32.mrb[0].mxu0
      %v6324 = vadd.f32 0.0, %v6323
      %v6325 = vpop.f32.mrb[0].mxu0
      %v6326 = vpop.f32.mrb[0].mxu0
      %v6327 = vadd.f32 0.0, %v6326
      %v6328 = vpop.f32.mrb[0].mxu0
      %6329 = vmatprep.mubr.bf16.mxu0 0
      %6330 = vmatmul.mubr.bf16.gmra.mrb[0].mxu0 %v6202
      %v6331 = vpop.f32.mrb[0].mxu0
      %v6332 = vadd.f32 0.0, %v6331
      %v6333 = vpop.f32.mrb[0].mxu0
      %v6334 = vpop.f32.mrb[0].mxu0
      %v6335 = vadd.f32 0.0, %v6334
      %v6336 = vpop.f32.mrb[0].mxu0
      %6337 = vmatprep.mubr.bf16.mxu0 0
      %6338 = vmatmul.mubr.bf16.gmra.mrb[0].mxu0 %v6205
      %v6339 = vpop.f32.mrb[0].mxu0
      %v6340 = vadd.f32 0.0, %v6339
      %v6341 = vpop.f32.mrb[0].mxu0
      %v6342 = vpop.f32.mrb[0].mxu0
      %v6343 = vadd.f32 0.0, %v6342
      %v6344 = vpop.f32.mrb[0].mxu0
      %6345 = vmatprep.mubr.bf16.mxu0 0
      %6346 = vmatmul.mubr.bf16.gmra.mrb[0].mxu0 %v6208
      %v6347 = vpop.f32.mrb[0].mxu0
      %v6348 = vadd.f32 0.0, %v6347
      %v6349 = vpop.f32.mrb[0].mxu0
      %v6350 = vpop.f32.mrb[0].mxu0
      %v6351 = vadd.f32 0.0, %v6350
      %v6352 = vpop.f32.mrb[0].mxu0
      %6353 = vmatprep.mubr.bf16.mxu0 0
      %6354 = vmatmul.mubr.bf16.gmra.mrb[0].mxu0 %v6211
      %v6355 = vpop.f32.mrb[0].mxu0
      %v6356 = vadd.f32 0.0, %v6355
      %v6357 = vpop.f32.mrb[0].mxu0
      %v6358 = vpop.f32.mrb[0].mxu0
      %v6359 = vadd.f32 0.0, %v6358
      %v6360 = vpop.f32.mrb[0].mxu0
      %6361 = vmatprep.mubr.bf16.mxu0 0
      %6362 = vmatmul.mubr.bf16.gmra.mrb[0].mxu0 %v6214
      %v6363 = vpop.f32.mrb[0].mxu0
      %v6364 = vadd.f32 0.0, %v6363
      %v6365 = vpop.f32.mrb[0].mxu0
      %v6366 = vpop.f32.mrb[0].mxu0
      %v6367 = vadd.f32 0.0, %v6366
      %v6368 = vpop.f32.mrb[0].mxu0
      %6369 = vmatprep.mubr.bf16.mxu0 0
      %6370 = vmatmul.mubr.bf16.gmra.mrb[0].mxu0 %v6217
      %v6371 = vpop.f32.mrb[0].mxu0
      %v6372 = vadd.f32 0.0, %v6371
      %v6373 = vpop.f32.mrb[0].mxu0
      %v6374 = vpop.f32.mrb[0].mxu0
      %v6375 = vadd.f32 0.0, %v6374
      %v6376 = vpop.f32.mrb[0].mxu0
      %6377 = vmatprep.mubr.bf16.mxu0 0
      %6378 = vmatmul.mubr.bf16.gmra.mrb[0].mxu0 %v6220
      %v6379 = vpop.f32.mrb[0].mxu0
      %v6380 = vadd.f32 0.0, %v6379
      %v6381 = vpop.f32.mrb[0].mxu0
      %v6382 = vpop.f32.mrb[0].mxu0
      %v6383 = vadd.f32 0.0, %v6382
      %v6384 = vpop.f32.mrb[0].mxu0
      %6385 = vdwg.mxu0
      %v6386 = vadd.f32 %v6092, %v6260
      %v6387 = vadd.f32 %v6093, %v6263
      %v6388 = vadd.f32 %v6094, %v6268
      %v6389 = vadd.f32 %v6095, %v6271
      %v6390 = vadd.f32 %v6096, %v6276
      %v6391 = vadd.f32 %v6097, %v6279
      %v6392 = vadd.f32 %v6098, %v6284
      %v6393 = vadd.f32 %v6099, %v6287
      %v6394 = vadd.f32 %v6100, %v6292
      %v6395 = vadd.f32 %v6101, %v6295
      %v6396 = vadd.f32 %v6102, %v6300
      %v6397 = vadd.f32 %v6103, %v6303
      %v6398 = vadd.f32 %v6104, %v6308
      %v6399 = vadd.f32 %v6105, %v6311
      %v6400 = vadd.f32 %v6106, %v6316
      %v6401 = vadd.f32 %v6107, %v6319
      %v6402 = vadd.f32 %v6108, %v6324
      %v6403 = vadd.f32 %v6109, %v6327
      %v6404 = vadd.f32 %v6110, %v6332
      %v6405 = vadd.f32 %v6111, %v6335
      %v6406 = vadd.f32 %v6112, %v6340
      %v6407 = vadd.f32 %v6113, %v6343
      %v6408 = vadd.f32 %v6114, %v6348
      %v6409 = vadd.f32 %v6115, %v6351
      %v6410 = vadd.f32 %v6116, %v6356
      %v6411 = vadd.f32 %v6117, %v6359
      %v6412 = vadd.f32 %v6118, %v6364
      %v6413 = vadd.f32 %v6119, %v6367
      %v6414 = vadd.f32 %v6120, %v6372
      %v6415 = vadd.f32 %v6121, %v6375
      %v6416 = vadd.f32 %v6122, %v6380
      %v6417 = vadd.f32 %v6123, %v6383
      %v6418 = vld [vmem:[%s5829 + $0x2] sm:$0xff]
      %v6419 = vld [vmem:[%s5829 + $0xa] sm:$0xff]
      %v6420 = vld [vmem:[%s5829 + $0x1a] sm:$0xff]
      %v6421 = vld [vmem:[%s5829 + $0x22] sm:$0xff]
      %v6422 = vld [vmem:[%s5829 + $0x32] sm:$0xff]
      %v6423 = vld [vmem:[%s5829 + $0x3a] sm:$0xff]
      %v6424 = vld [vmem:[%s5829 + $0x4a] sm:$0xff]
      %v6425 = vld [vmem:[%s5829 + $0x52] sm:$0xff]
      %v6426 = vld [vmem:[%s5829 + $0x62] sm:$0xff]
      %v6427 = vld [vmem:[%s5829 + $0x6a] sm:$0xff]
      %v6428 = vld [vmem:[%s5829 + $0x7a] sm:$0xff]
      %v6429 = vld [vmem:[%s5829 + $0x82] sm:$0xff]
      %v6430 = vld [vmem:[%s5829 + $0x92] sm:$0xff]
      %v6431 = vld [vmem:[%s5829 + $0x9a] sm:$0xff]
      %v6432 = vld [vmem:[%s5829 + $0xaa] sm:$0xff]
      %v6433 = vld [vmem:[%s5829 + $0xb2] sm:$0xff]
      %v6434 = vld [vmem:[%s5829 + $0xc2] sm:$0xff]
      %v6435 = vld [vmem:[%s5829 + $0xca] sm:$0xff]
      %v6436 = vld [vmem:[%s5829 + $0xda] sm:$0xff]
      %v6437 = vld [vmem:[%s5829 + $0xe2] sm:$0xff]
      %v6438 = vld [vmem:[%s5829 + $0xf2] sm:$0xff]
      %v6439 = vld [vmem:[%s5829 + $0xfa] sm:$0xff]
      %v6440 = vld [vmem:[%s5829 + $0x10a] sm:$0xff]
      %v6441 = vld [vmem:[%s5829 + $0x112] sm:$0xff]
      %v6442 = vld [vmem:[%s5829 + $0x122] sm:$0xff]
      %v6443 = vld [vmem:[%s5829 + $0x12a] sm:$0xff]
      %v6444 = vld [vmem:[%s5829 + $0x13a] sm:$0xff]
      %v6445 = vld [vmem:[%s5829 + $0x142] sm:$0xff]
      %v6446 = vld [vmem:[%s5829 + $0x152] sm:$0xff]
      %v6447 = vld [vmem:[%s5829 + $0x15a] sm:$0xff]
      %v6448 = vld [vmem:[%s5829 + $0x16a] sm:$0xff]
      %v6449 = vld [vmem:[%s5829 + $0x172] sm:$0xff]
      %v6450 = vpack.c.bf16 %v6419, %v6418
      %v6451 = vpack.c.bf16 %v6421, %v6420
      %v6452 = vpack.c.bf16 %v6423, %v6422
      %v6453 = vpack.c.bf16 %v6425, %v6424
      %v6454 = vpack.c.bf16 %v6427, %v6426
      %v6455 = vpack.c.bf16 %v6429, %v6428
      %v6456 = vpack.c.bf16 %v6431, %v6430
      %v6457 = vpack.c.bf16 %v6433, %v6432
      %v6458 = vpack.c.bf16 %v6435, %v6434
      %v6459 = vpack.c.bf16 %v6437, %v6436
      %v6460 = vpack.c.bf16 %v6439, %v6438
      %v6461 = vpack.c.bf16 %v6441, %v6440
      %v6462 = vpack.c.bf16 %v6443, %v6442
      %v6463 = vpack.c.bf16 %v6445, %v6444
      %v6464 = vpack.c.bf16 %v6447, %v6446
      %v6465 = vpack.c.bf16 %v6449, %v6448
      %s6466 = scalar_lea.vmem %s11, 32
      %v6467 = vld [vmem:[%s6466] sm:$0xf]
      %v6469 = vsel %vm2087, %v6450, 0
      %v6472 = vsel %vm2087, %v6451, 0
      %v6475 = vsel %vm2087, %v6452, 0
      %v6478 = vsel %vm2087, %v6453, 0
      %v6481 = vsel %vm2087, %v6454, 0
      %v6484 = vsel %vm2087, %v6455, 0
      %v6487 = vsel %vm2087, %v6456, 0
      %v6490 = vsel %vm2087, %v6457, 0
      %v6493 = vsel %vm2087, %v6458, 0
      %v6496 = vsel %vm2087, %v6459, 0
      %v6499 = vsel %vm2087, %v6460, 0
      %v6502 = vsel %vm2087, %v6461, 0
      %v6505 = vsel %vm2087, %v6462, 0
      %v6508 = vsel %vm2087, %v6463, 0
      %v6511 = vsel %vm2087, %v6464, 0
      %v6514 = vsel %vm2087, %v6465, 0
      %v6517 = vsel %vm4276, %v6467, 0
      %6519 = vmatprep.subr.bf16.mxu0 0
      %6520 = vmatpush1.bf16.msra.mxu0 %v6517
      %6521 = vmatprep.subr.bf16.mxu0 0
      %6522 = vmatpush1.bf16.msra.mxu0 0
      %6523 = vmatprep.subr.bf16.mxu0 0
      %6524 = vmatpush1.bf16.msra.mxu0 0
      %6525 = vmatprep.subr.bf16.mxu0 0
      %6526 = vmatpush1.bf16.msra.mxu0 0
      %6527 = vmatprep.subr.bf16.mxu0 0
      %6528 = vmatpush1.bf16.msra.mxu0 0
      %6529 = vmatprep.subr.bf16.mxu0 0
      %6530 = vmatpush1.bf16.msra.mxu0 0
      %6531 = vmatprep.subr.bf16.mxu0 0
      %6532 = vmatpush1.bf16.msra.mxu0 0
      %6533 = vmatprep.subr.bf16.mxu0 0
      %6534 = vmatpush1.bf16.msra.mxu0 0
      %6535 = vmatprep.subr.bf16.mxu0 0
      %6536 = vmatpush1.bf16.msra.mxu0 0
      %6537 = vmatprep.subr.bf16.mxu0 0
      %6538 = vmatpush1.bf16.msra.mxu0 0
      %6539 = vmatprep.subr.bf16.mxu0 0
      %6540 = vmatpush1.bf16.msra.mxu0 0
      %6541 = vmatprep.subr.bf16.mxu0 0
      %6542 = vmatpush1.bf16.msra.mxu0 0
      %6543 = vmatprep.subr.bf16.mxu0 0
      %6544 = vmatpush1.bf16.msra.mxu0 0
      %6545 = vmatprep.subr.bf16.mxu0 0
      %6546 = vmatpush1.bf16.msra.mxu0 0
      %6547 = vmatprep.subr.bf16.mxu0 0
      %6548 = vmatpush1.bf16.msra.mxu0 0
      %6549 = vmatprep.subr.bf16.mxu0 0
      %6550 = vmatpush1.bf16.msra.mxu0 0
      %6551 = vmatprep.mubr.bf16.mxu0 0
      %6552 = vmatmul.mubr.bf16.gmra.mrb[0].mxu0 %v6469
      %v6553 = vpop.f32.mrb[0].mxu0
      %v6554 = vadd.f32 0.0, %v6553
      %v6555 = vpop.f32.mrb[0].mxu0
      %v6556 = vpop.f32.mrb[0].mxu0
      %v6557 = vadd.f32 0.0, %v6556
      %v6558 = vpop.f32.mrb[0].mxu0
      %6559 = vmatprep.mubr.bf16.mxu0 0
      %6560 = vmatmul.mubr.bf16.gmra.mrb[0].mxu0 %v6472
      %v6561 = vpop.f32.mrb[0].mxu0
      %v6562 = vadd.f32 0.0, %v6561
      %v6563 = vpop.f32.mrb[0].mxu0
      %v6564 = vpop.f32.mrb[0].mxu0
      %v6565 = vadd.f32 0.0, %v6564
      %v6566 = vpop.f32.mrb[0].mxu0
      %6567 = vmatprep.mubr.bf16.mxu0 0
      %6568 = vmatmul.mubr.bf16.gmra.mrb[0].mxu0 %v6475
      %v6569 = vpop.f32.mrb[0].mxu0
      %v6570 = vadd.f32 0.0, %v6569
      %v6571 = vpop.f32.mrb[0].mxu0
      %v6572 = vpop.f32.mrb[0].mxu0
      %v6573 = vadd.f32 0.0, %v6572
      %v6574 = vpop.f32.mrb[0].mxu0
      %6575 = vmatprep.mubr.bf16.mxu0 0
      %6576 = vmatmul.mubr.bf16.gmra.mrb[0].mxu0 %v6478
      %v6577 = vpop.f32.mrb[0].mxu0
      %v6578 = vadd.f32 0.0, %v6577
      %v6579 = vpop.f32.mrb[0].mxu0
      %v6580 = vpop.f32.mrb[0].mxu0
      %v6581 = vadd.f32 0.0, %v6580
      %v6582 = vpop.f32.mrb[0].mxu0
      %6583 = vmatprep.mubr.bf16.mxu0 0
      %6584 = vmatmul.mubr.bf16.gmra.mrb[0].mxu0 %v6481
      %v6585 = vpop.f32.mrb[0].mxu0
      %v6586 = vadd.f32 0.0, %v6585
      %v6587 = vpop.f32.mrb[0].mxu0
      %v6588 = vpop.f32.mrb[0].mxu0
      %v6589 = vadd.f32 0.0, %v6588
      %v6590 = vpop.f32.mrb[0].mxu0
      %6591 = vmatprep.mubr.bf16.mxu0 0
      %6592 = vmatmul.mubr.bf16.gmra.mrb[0].mxu0 %v6484
      %v6593 = vpop.f32.mrb[0].mxu0
      %v6594 = vadd.f32 0.0, %v6593
      %v6595 = vpop.f32.mrb[0].mxu0
      %v6596 = vpop.f32.mrb[0].mxu0
      %v6597 = vadd.f32 0.0, %v6596
      %v6598 = vpop.f32.mrb[0].mxu0
      %6599 = vmatprep.mubr.bf16.mxu0 0
      %6600 = vmatmul.mubr.bf16.gmra.mrb[0].mxu0 %v6487
      %v6601 = vpop.f32.mrb[0].mxu0
      %v6602 = vadd.f32 0.0, %v6601
      %v6603 = vpop.f32.mrb[0].mxu0
      %v6604 = vpop.f32.mrb[0].mxu0
      %v6605 = vadd.f32 0.0, %v6604
      %v6606 = vpop.f32.mrb[0].mxu0
      %6607 = vmatprep.mubr.bf16.mxu0 0
      %6608 = vmatmul.mubr.bf16.gmra.mrb[0].mxu0 %v6490
      %v6609 = vpop.f32.mrb[0].mxu0
      %v6610 = vadd.f32 0.0, %v6609
      %v6611 = vpop.f32.mrb[0].mxu0
      %v6612 = vpop.f32.mrb[0].mxu0
      %v6613 = vadd.f32 0.0, %v6612
      %v6614 = vpop.f32.mrb[0].mxu0
      %6615 = vmatprep.mubr.bf16.mxu0 0
      %6616 = vmatmul.mubr.bf16.gmra.mrb[0].mxu0 %v6493
      %v6617 = vpop.f32.mrb[0].mxu0
      %v6618 = vadd.f32 0.0, %v6617
      %v6619 = vpop.f32.mrb[0].mxu0
      %v6620 = vpop.f32.mrb[0].mxu0
      %v6621 = vadd.f32 0.0, %v6620
      %v6622 = vpop.f32.mrb[0].mxu0
      %6623 = vmatprep.mubr.bf16.mxu0 0
      %6624 = vmatmul.mubr.bf16.gmra.mrb[0].mxu0 %v6496
      %v6625 = vpop.f32.mrb[0].mxu0
      %v6626 = vadd.f32 0.0, %v6625
      %v6627 = vpop.f32.mrb[0].mxu0
      %v6628 = vpop.f32.mrb[0].mxu0
      %v6629 = vadd.f32 0.0, %v6628
      %v6630 = vpop.f32.mrb[0].mxu0
      %6631 = vmatprep.mubr.bf16.mxu0 0
      %6632 = vmatmul.mubr.bf16.gmra.mrb[0].mxu0 %v6499
      %v6633 = vpop.f32.mrb[0].mxu0
      %v6634 = vadd.f32 0.0, %v6633
      %v6635 = vpop.f32.mrb[0].mxu0
      %v6636 = vpop.f32.mrb[0].mxu0
      %v6637 = vadd.f32 0.0, %v6636
      %v6638 = vpop.f32.mrb[0].mxu0
      %6639 = vmatprep.mubr.bf16.mxu0 0
      %6640 = vmatmul.mubr.bf16.gmra.mrb[0].mxu0 %v6502
      %v6641 = vpop.f32.mrb[0].mxu0
      %v6642 = vadd.f32 0.0, %v6641
      %v6643 = vpop.f32.mrb[0].mxu0
      %v6644 = vpop.f32.mrb[0].mxu0
      %v6645 = vadd.f32 0.0, %v6644
      %v6646 = vpop.f32.mrb[0].mxu0
      %6647 = vmatprep.mubr.bf16.mxu0 0
      %6648 = vmatmul.mubr.bf16.gmra.mrb[0].mxu0 %v6505
      %v6649 = vpop.f32.mrb[0].mxu0
      %v6650 = vadd.f32 0.0, %v6649
      %v6651 = vpop.f32.mrb[0].mxu0
      %v6652 = vpop.f32.mrb[0].mxu0
      %v6653 = vadd.f32 0.0, %v6652
      %v6654 = vpop.f32.mrb[0].mxu0
      %6655 = vmatprep.mubr.bf16.mxu0 0
      %6656 = vmatmul.mubr.bf16.gmra.mrb[0].mxu0 %v6508
      %v6657 = vpop.f32.mrb[0].mxu0
      %v6658 = vadd.f32 0.0, %v6657
      %v6659 = vpop.f32.mrb[0].mxu0
      %v6660 = vpop.f32.mrb[0].mxu0
      %v6661 = vadd.f32 0.0, %v6660
      %v6662 = vpop.f32.mrb[0].mxu0
      %6663 = vmatprep.mubr.bf16.mxu0 0
      %6664 = vmatmul.mubr.bf16.gmra.mrb[0].mxu0 %v6511
      %v6665 = vpop.f32.mrb[0].mxu0
      %v6666 = vadd.f32 0.0, %v6665
      %v6667 = vpop.f32.mrb[0].mxu0
      %v6668 = vpop.f32.mrb[0].mxu0
      %v6669 = vadd.f32 0.0, %v6668
      %v6670 = vpop.f32.mrb[0].mxu0
      %6671 = vmatprep.mubr.bf16.mxu0 0
      %6672 = vmatmul.mubr.bf16.gmra.mrb[0].mxu0 %v6514
      %v6673 = vpop.f32.mrb[0].mxu0
      %v6674 = vadd.f32 0.0, %v6673
      %v6675 = vpop.f32.mrb[0].mxu0
      %v6676 = vpop.f32.mrb[0].mxu0
      %v6677 = vadd.f32 0.0, %v6676
      %v6678 = vpop.f32.mrb[0].mxu0
      %6679 = vdwg.mxu0
      %v6680 = vadd.f32 %v6386, %v6554
      %v6681 = vadd.f32 %v6387, %v6557
      %v6682 = vadd.f32 %v6388, %v6562
      %v6683 = vadd.f32 %v6389, %v6565
      %v6684 = vadd.f32 %v6390, %v6570
      %v6685 = vadd.f32 %v6391, %v6573
      %v6686 = vadd.f32 %v6392, %v6578
      %v6687 = vadd.f32 %v6393, %v6581
      %v6688 = vadd.f32 %v6394, %v6586
      %v6689 = vadd.f32 %v6395, %v6589
      %v6690 = vadd.f32 %v6396, %v6594
      %v6691 = vadd.f32 %v6397, %v6597
      %v6692 = vadd.f32 %v6398, %v6602
      %v6693 = vadd.f32 %v6399, %v6605
      %v6694 = vadd.f32 %v6400, %v6610
      %v6695 = vadd.f32 %v6401, %v6613
      %v6696 = vadd.f32 %v6402, %v6618
      %v6697 = vadd.f32 %v6403, %v6621
      %v6698 = vadd.f32 %v6404, %v6626
      %v6699 = vadd.f32 %v6405, %v6629
      %v6700 = vadd.f32 %v6406, %v6634
      %v6701 = vadd.f32 %v6407, %v6637
      %v6702 = vadd.f32 %v6408, %v6642
      %v6703 = vadd.f32 %v6409, %v6645
      %v6704 = vadd.f32 %v6410, %v6650
      %v6705 = vadd.f32 %v6411, %v6653
      %v6706 = vadd.f32 %v6412, %v6658
      %v6707 = vadd.f32 %v6413, %v6661
      %v6708 = vadd.f32 %v6414, %v6666
      %v6709 = vadd.f32 %v6415, %v6669
      %v6710 = vadd.f32 %v6416, %v6674
      %v6711 = vadd.f32 %v6417, %v6677
      %v6712 = vld [vmem:[%s12] sm:$0x1]
      %v6714 = vlaneseq
      %v6715 = vshrl.u32 %v6714, 7
      %v6716 = vsub.s32 0, %v6715
      %v6717 = vrot.slane %v6712, %v6716
      %v6719 = vmul.f32 %v6680, %v6717
      %v6720 = vmul.f32 %v6681, %v6717
      %v6721 = vmul.f32 %v6682, %v6717
      %v6722 = vmul.f32 %v6683, %v6717
      %v6723 = vmul.f32 %v6684, %v6717
      %v6724 = vmul.f32 %v6685, %v6717
      %v6725 = vmul.f32 %v6686, %v6717
      %v6726 = vmul.f32 %v6687, %v6717
      %v6727 = vmul.f32 %v6688, %v6717
      %v6728 = vmul.f32 %v6689, %v6717
      %v6729 = vmul.f32 %v6690, %v6717
      %v6730 = vmul.f32 %v6691, %v6717
      %v6731 = vmul.f32 %v6692, %v6717
      %v6732 = vmul.f32 %v6693, %v6717
      %v6733 = vmul.f32 %v6694, %v6717
      %v6734 = vmul.f32 %v6695, %v6717
      %v6735 = vmul.f32 %v6696, %v6717
      %v6736 = vmul.f32 %v6697, %v6717
      %v6737 = vmul.f32 %v6698, %v6717
      %v6738 = vmul.f32 %v6699, %v6717
      %v6739 = vmul.f32 %v6700, %v6717
      %v6740 = vmul.f32 %v6701, %v6717
      %v6741 = vmul.f32 %v6702, %v6717
      %v6742 = vmul.f32 %v6703, %v6717
      %v6743 = vmul.f32 %v6704, %v6717
      %v6744 = vmul.f32 %v6705, %v6717
      %v6745 = vmul.f32 %v6706, %v6717
      %v6746 = vmul.f32 %v6707, %v6717
      %v6747 = vmul.f32 %v6708, %v6717
      %v6748 = vmul.f32 %v6709, %v6717
      %v6749 = vmul.f32 %v6710, %v6717
      %v6750 = vmul.f32 %v6711, %v6717
      %v6751 = vld [vmem:[%s13] sm:$0x1]
      %v6753 = vlaneseq
      %v6754 = vshrl.u32 %v6753, 7
      %v6755 = vsub.s32 0, %v6754
      %v6756 = vrot.slane %v6751, %v6755
      %v6758 = vadd.f32 %v6719, %v6756
      %v6759 = vadd.f32 %v6720, %v6756
      %v6760 = vadd.f32 %v6721, %v6756
      %v6761 = vadd.f32 %v6722, %v6756
      %v6762 = vadd.f32 %v6723, %v6756
      %v6763 = vadd.f32 %v6724, %v6756
      %v6764 = vadd.f32 %v6725, %v6756
      %v6765 = vadd.f32 %v6726, %v6756
      %v6766 = vadd.f32 %v6727, %v6756
      %v6767 = vadd.f32 %v6728, %v6756
      %v6768 = vadd.f32 %v6729, %v6756
      %v6769 = vadd.f32 %v6730, %v6756
      %v6770 = vadd.f32 %v6731, %v6756
      %v6771 = vadd.f32 %v6732, %v6756
      %v6772 = vadd.f32 %v6733, %v6756
      %v6773 = vadd.f32 %v6734, %v6756
      %v6774 = vadd.f32 %v6735, %v6756
      %v6775 = vadd.f32 %v6736, %v6756
      %v6776 = vadd.f32 %v6737, %v6756
      %v6777 = vadd.f32 %v6738, %v6756
      %v6778 = vadd.f32 %v6739, %v6756
      %v6779 = vadd.f32 %v6740, %v6756
      %v6780 = vadd.f32 %v6741, %v6756
      %v6781 = vadd.f32 %v6742, %v6756
      %v6782 = vadd.f32 %v6743, %v6756
      %v6783 = vadd.f32 %v6744, %v6756
      %v6784 = vadd.f32 %v6745, %v6756
      %v6785 = vadd.f32 %v6746, %v6756
      %v6786 = vadd.f32 %v6747, %v6756
      %v6787 = vadd.f32 %v6748, %v6756
      %v6788 = vadd.f32 %v6749, %v6756
      %v6789 = vadd.f32 %v6750, %v6756
      %v6790 = vadd.f32 %v6758, %v469
      %v6791 = vadd.f32 %v6759, %v470
      %v6792 = vadd.f32 %v6760, %v471
      %v6793 = vadd.f32 %v6761, %v472
      %v6794 = vadd.f32 %v6762, %v473
      %v6795 = vadd.f32 %v6763, %v474
      %v6796 = vadd.f32 %v6764, %v475
      %v6797 = vadd.f32 %v6765, %v476
      %v6798 = vadd.f32 %v6766, %v477
      %v6799 = vadd.f32 %v6767, %v478
      %v6800 = vadd.f32 %v6768, %v479
      %v6801 = vadd.f32 %v6769, %v480
      %v6802 = vadd.f32 %v6770, %v481
      %v6803 = vadd.f32 %v6771, %v482
      %v6804 = vadd.f32 %v6772, %v483
      %v6805 = vadd.f32 %v6773, %v484
      %v6806 = vadd.f32 %v6774, %v485
      %v6807 = vadd.f32 %v6775, %v486
      %v6808 = vadd.f32 %v6776, %v487
      %v6809 = vadd.f32 %v6777, %v488
      %v6810 = vadd.f32 %v6778, %v489
      %v6811 = vadd.f32 %v6779, %v490
      %v6812 = vadd.f32 %v6780, %v491
      %v6813 = vadd.f32 %v6781, %v492
      %v6814 = vadd.f32 %v6782, %v493
      %v6815 = vadd.f32 %v6783, %v494
      %v6816 = vadd.f32 %v6784, %v495
      %v6817 = vadd.f32 %v6785, %v496
      %v6818 = vadd.f32 %v6786, %v497
      %v6819 = vadd.f32 %v6787, %v498
      %v6820 = vadd.f32 %v6788, %v499
      %v6821 = vadd.f32 %v6789, %v500
      %v6822 = vmax.f32 %v6790, 0.0
      %v6823 = vmax.f32 %v6791, 0.0
      %v6824 = vmax.f32 %v6792, 0.0
      %v6825 = vmax.f32 %v6793, 0.0
      %v6826 = vmax.f32 %v6794, 0.0
      %v6827 = vmax.f32 %v6795, 0.0
      %v6828 = vmax.f32 %v6796, 0.0
      %v6829 = vmax.f32 %v6797, 0.0
      %v6830 = vmax.f32 %v6798, 0.0
      %v6831 = vmax.f32 %v6799, 0.0
      %v6832 = vmax.f32 %v6800, 0.0
      %v6833 = vmax.f32 %v6801, 0.0
      %v6834 = vmax.f32 %v6802, 0.0
      %v6835 = vmax.f32 %v6803, 0.0
      %v6836 = vmax.f32 %v6804, 0.0
      %v6837 = vmax.f32 %v6805, 0.0
      %v6838 = vmax.f32 %v6806, 0.0
      %v6839 = vmax.f32 %v6807, 0.0
      %v6840 = vmax.f32 %v6808, 0.0
      %v6841 = vmax.f32 %v6809, 0.0
      %v6842 = vmax.f32 %v6810, 0.0
      %v6843 = vmax.f32 %v6811, 0.0
      %v6844 = vmax.f32 %v6812, 0.0
      %v6845 = vmax.f32 %v6813, 0.0
      %v6846 = vmax.f32 %v6814, 0.0
      %v6847 = vmax.f32 %v6815, 0.0
      %v6848 = vmax.f32 %v6816, 0.0
      %v6849 = vmax.f32 %v6817, 0.0
      %v6850 = vmax.f32 %v6818, 0.0
      %v6851 = vmax.f32 %v6819, 0.0
      %v6852 = vmax.f32 %v6820, 0.0
      %v6853 = vmax.f32 %v6821, 0.0
      %6854 = vst.msk [vmem:[%s467] sm:$0xff] %vm2087, %v6822
      %6855 = vst.msk [vmem:[%s467 + $0x8] sm:$0xff] %vm2087, %v6823
      %6856 = vst.msk [vmem:[%s467 + $0x10] sm:$0xff] %vm2087, %v6824
      %6857 = vst.msk [vmem:[%s467 + $0x18] sm:$0xff] %vm2087, %v6825
      %6858 = vst.msk [vmem:[%s467 + $0x20] sm:$0xff] %vm2087, %v6826
      %6859 = vst.msk [vmem:[%s467 + $0x28] sm:$0xff] %vm2087, %v6827
      %6860 = vst.msk [vmem:[%s467 + $0x30] sm:$0xff] %vm2087, %v6828
      %6861 = vst.msk [vmem:[%s467 + $0x38] sm:$0xff] %vm2087, %v6829
      %6862 = vst.msk [vmem:[%s467 + $0x40] sm:$0xff] %vm2087, %v6830
      %6863 = vst.msk [vmem:[%s467 + $0x48] sm:$0xff] %vm2087, %v6831
      %6864 = vst.msk [vmem:[%s467 + $0x50] sm:$0xff] %vm2087, %v6832
      %6865 = vst.msk [vmem:[%s467 + $0x58] sm:$0xff] %vm2087, %v6833
      %6866 = vst.msk [vmem:[%s467 + $0x60] sm:$0xff] %vm2087, %v6834
      %6867 = vst.msk [vmem:[%s467 + $0x68] sm:$0xff] %vm2087, %v6835
      %6868 = vst.msk [vmem:[%s467 + $0x70] sm:$0xff] %vm2087, %v6836
      %6869 = vst.msk [vmem:[%s467 + $0x78] sm:$0xff] %vm2087, %v6837
      %6870 = vst.msk [vmem:[%s467 + $0x80] sm:$0xff] %vm2087, %v6838
      %6871 = vst.msk [vmem:[%s467 + $0x88] sm:$0xff] %vm2087, %v6839
      %6872 = vst.msk [vmem:[%s467 + $0x90] sm:$0xff] %vm2087, %v6840
      %6873 = vst.msk [vmem:[%s467 + $0x98] sm:$0xff] %vm2087, %v6841
      %6874 = vst.msk [vmem:[%s467 + $0xa0] sm:$0xff] %vm2087, %v6842
      %6875 = vst.msk [vmem:[%s467 + $0xa8] sm:$0xff] %vm2087, %v6843
      %6876 = vst.msk [vmem:[%s467 + $0xb0] sm:$0xff] %vm2087, %v6844
      %6877 = vst.msk [vmem:[%s467 + $0xb8] sm:$0xff] %vm2087, %v6845
      %6878 = vst.msk [vmem:[%s467 + $0xc0] sm:$0xff] %vm2087, %v6846
      %6879 = vst.msk [vmem:[%s467 + $0xc8] sm:$0xff] %vm2087, %v6847
      %6880 = vst.msk [vmem:[%s467 + $0xd0] sm:$0xff] %vm2087, %v6848
      %6881 = vst.msk [vmem:[%s467 + $0xd8] sm:$0xff] %vm2087, %v6849
      %6882 = vst.msk [vmem:[%s467 + $0xe0] sm:$0xff] %vm2087, %v6850
      %6883 = vst.msk [vmem:[%s467 + $0xe8] sm:$0xff] %vm2087, %v6851
      %6884 = vst.msk [vmem:[%s467 + $0xf0] sm:$0xff] %vm2087, %v6852
      %6885 = vst.msk [vmem:[%s467 + $0xf8] sm:$0xff] %vm2087, %v6853
      %p6886 = scmp.lt.s32.totalorder %s25, 1
      %s6887 = scalar_select %p6886, %s25, 1
      %s6888 = smul.addr %s6887, 32
      %s6889 = smul.addr %s6888, 8
      %s6890 = scalar_lea.vmem %s14, %s6889
      // Predicated region
      $region77: #{tpu_custom_call.1} parent=75 // pred_check
        %p6891 = pneg %p342
      $region78: #{tpu_custom_call.1} parent=75 // pred_check_branch
        %6893 = sbr.rel (%p6891) target = $region80
      $region79: #{tpu_custom_call.1} parent=75 // pred_region
        _
      $region80: #{tpu_custom_call.1} parent=75 // pred_fallthru
        _
    $region76: #{tpu_custom_call.1} parent=5 // pred_fallthru
      _
    %p6894 = scmp.le.s32.totalorder 2, %s20
    // Predicated region
    $region81: #{tpu_custom_call.1} parent=5 // pred_check
      %p6895 = pneg %p6894
    $region82: #{tpu_custom_call.1} parent=5 // pred_check_branch
      %6897 = sbr.rel (%p6895) target = $region84
    $region83: #{tpu_custom_call.1} parent=5 // pred_region
      %s6898 = ssub.s32 %s20, 2
      // Predicated region
      $region85: #{tpu_custom_call.1} parent=83 // pred_check
        %p6899 = pneg %p348
      $region86: #{tpu_custom_call.1} parent=83 // pred_check_branch
        %6901 = sbr.rel (%p6899) target = $region88
      $region87: #{tpu_custom_call.1} parent=83 // pred_region
        %p6902 = scmp.lt.s32.totalorder %s26, 1
        %s6903 = scalar_select %p6902, %s26, 1
        %s6904 = smul.addr %s6903, 32
        %s6905 = smul.addr %s6904, 8
        %s6906 = scalar_lea.vmem %s14, %s6905
      $region88: #{tpu_custom_call.1} parent=83 // pred_fallthru
        _
    $region84: #{tpu_custom_call.1} parent=5 // pred_fallthru
      _
  $region6: #{tpu_custom_call.1} parent=0 // loop_footer
    %s24 = sadd.s32 1, %s20
  $region7: #{tpu_custom_call.1} parent=0 // loop_footer_branch
    %19 = sbr.rel target = $region3
  $region8: #{tpu_custom_call.1} parent=0 // loop_exit
    _

</llo_original>
